<compile_context>
chip_gen: v7x
topology: tpu7x:2x2x1
jax: 0.10.0
libtpu: 0.0.40
codegen_flags: <defaults>
</compile_context>

<pallas_src>
import jax
import jax.numpy as jnp
from jax.experimental import pallas as pl
from jax.experimental.pallas import tpu as pltpu

H = W = 32
CIN = 3
COUT = 64
HID = 256
NCLS = 10
KFEAT = COUT * H * W          # 65536, fc1 input features
KPAD = 32                     # 9*CIN = 27 patch-channels padded to 32 (sublane aligned)
TK = 8192                     # fc1 K-tile (bf16 tile = 4 MiB, 2x buffered = 8 MiB)


# ---------------------------------------------------------------------------
# Kernel 1: 3x3 conv as patch-major im2col matmul + bias, channel-major output
# ---------------------------------------------------------------------------
def conv_mm_kernel(xc_ref, w_ref, b_ref, o_ref):
    # xc_ref: (B, KPAD, H*W)   w_ref: (COUT, KPAD)   b_ref: (COUT, 1)
    # o_ref : (B, COUT, H*W)
    w = w_ref[...]
    b = b_ref[...]
    for i in range(xc_ref.shape[0]):          # static, small B
        acc = jnp.dot(w, xc_ref[i], preferred_element_type=jnp.float32)
        o_ref[i] = (acc + b).astype(o_ref.dtype)   # lane-dense (COUT, 1024) store


def conv3x3(x_nchw, conv_w, conv_b):
    n = x_nchw.shape[0]
    # --- glue: patch-major im2col in plain JAX (layout plumbing only) ---
    x_nhwc = jnp.transpose(x_nchw, (0, 2, 3, 1))
    xp = jnp.pad(x_nhwc, ((0, 0), (1, 1), (1, 1), (0, 0)))
    slabs = []
    for dy in range(3):
        for dx in range(3):
            patch = xp[:, dy:dy + H, dx:dx + W, :]                    # (n, H, W, CIN)
            slabs.append(jnp.transpose(patch, (0, 3, 1, 2)).reshape(n, CIN, H * W))
    x_col = jnp.concatenate(slabs, axis=1)                            # (n, 27, H*W)
    x_col = jnp.pad(x_col, ((0, 0), (0, KPAD - 9 * CIN), (0, 0)))     # (n, 32, H*W)

    # weight (COUT, CIN, 3, 3) -> (co, dy, dx, ci) -> (COUT, 27) -> pad to (COUT, 32)
    w_mat = jnp.transpose(conv_w, (0, 2, 3, 1)).reshape(COUT, 9 * CIN)
    w_mat = jnp.pad(w_mat, ((0, 0), (0, KPAD - 9 * CIN)))
    b_col = conv_b.reshape(COUT, 1)

    # Block several images per grid step (all of them at small batch).
    b_blk = n if n <= 8 else 8
    assert n % b_blk == 0, "batch must be a multiple of the image block"

    return pl.pallas_call(
        conv_mm_kernel,
        out_shape=jax.ShapeDtypeStruct((n, COUT, H * W), jnp.float32),
        grid_spec=pltpu.PrefetchScalarGridSpec(
            num_scalar_prefetch=0,
            grid=(n // b_blk,),
            in_specs=[
                pl.BlockSpec((b_blk, KPAD, H * W), lambda b: (b, 0, 0)),
                pl.BlockSpec((COUT, KPAD), lambda b: (0, 0)),
                pl.BlockSpec((COUT, 1), lambda b: (0, 0)),
            ],
            out_specs=pl.BlockSpec((b_blk, COUT, H * W), lambda b: (b, 0, 0)),
        ),
        compiler_params=pltpu.CompilerParams(
            dimension_semantics=("parallel",)),
    )(x_col, w_mat, b_col)


# ---------------------------------------------------------------------------
# Kernel 2: fc1 (K-tiled accumulation, bf16 weight stream) + fc2 + fc3 fused
# ---------------------------------------------------------------------------
def mlp_kernel(x_ref, w1_ref, b1_ref, w2_ref, b2_ref, w3_ref, b3_ref,
               o_ref, acc_ref):
    k = pl.program_id(0)

    @pl.when(k == 0)
    def _():
        acc_ref[...] = jnp.zeros_like(acc_ref)

    # bf16 x bf16 MXU matmul, f32 accumulation (x tile cast is tiny).
    xb = x_ref[...].astype(jnp.bfloat16)
    acc_ref[...] += jnp.dot(xb, w1_ref[...],
                            preferred_element_type=jnp.float32)

    @pl.when(k == pl.num_programs(0) - 1)
    def _():
        h1 = acc_ref[...] + b1_ref[...]
        h2 = jnp.dot(h1, w2_ref[...],
                     preferred_element_type=jnp.float32) + b2_ref[...]
        h3 = jnp.dot(h2, w3_ref[...],
                     preferred_element_type=jnp.float32) + b3_ref[...]
        o_ref[...] = h3.astype(o_ref.dtype)


def mlp_head(x_flat, w1, b1, w2, b2, w3, b3):
    n = x_flat.shape[0]
    w1t = w1.T.astype(jnp.bfloat16)           # (KFEAT, 256), halve the HBM stream
    w2t, w3t = w2.T, w3.T                     # (256,256) (256,10), kept f32
    b1r, b2r, b3r = b1.reshape(1, HID), b2.reshape(1, HID), b3.reshape(1, NCLS)
    n_k = KFEAT // TK                         # 8 K-steps at TK=8192

    # TODO(synk): on v7x the fc1 K-stream could additionally be split across the
    # two TensorCores (core_map over a 2-core mesh, partial-sum epilogue).
    return pl.pallas_call(
        mlp_kernel,
        out_shape=jax.ShapeDtypeStruct((n, NCLS), jnp.float32),
        grid_spec=pltpu.PrefetchScalarGridSpec(
            num_scalar_prefetch=0,
            grid=(n_k,),
            in_specs=[
                pl.BlockSpec((n, TK), lambda k: (0, k)),
                pl.BlockSpec((TK, HID), lambda k: (k, 0)),
                pl.BlockSpec((1, HID), lambda k: (0, 0)),
                pl.BlockSpec((HID, HID), lambda k: (0, 0)),
                pl.BlockSpec((1, HID), lambda k: (0, 0)),
                pl.BlockSpec((HID, NCLS), lambda k: (0, 0)),
                pl.BlockSpec((1, NCLS), lambda k: (0, 0)),
            ],
            out_specs=pl.BlockSpec((n, NCLS), lambda k: (0, 0)),
            scratch_shapes=[pltpu.VMEM((n, HID), jnp.float32)],
        ),
        compiler_params=pltpu.CompilerParams(
            dimension_semantics=("arbitrary",),
            vmem_limit_bytes=32 << 20),       # headroom on v5e; well under v7x 64 MiB
    )(x_flat, w1t, b1r, w2t, b2r, w3t, b3r)


# ---------------------------------------------------------------------------
# Full forward pass
# ---------------------------------------------------------------------------
def forward(x, params):
    conv_w, conv_b, w1, b1, w2, b2, w3, b3 = params
    y = conv3x3(x, conv_w, conv_b)              # (N, 64, 1024), channel-major
    y = y.reshape(y.shape[0], -1)               # == PyTorch x.view(N, -1)
    return mlp_head(y, w1, b1, w2, b2, w3, b3)  # (N, 10)


def reference(x, params):
    conv_w, conv_b, w1, b1, w2, b2, w3, b3 = params
    y = jax.lax.conv_general_dilated(
        x, conv_w, window_strides=(1, 1), padding=((1, 1), (1, 1)),
        dimension_numbers=("NCHW", "OIHW", "NCHW"))
    y = y + conv_b[None, :, None, None]
    y = y.reshape(y.shape[0], -1)
    y = y @ w1.T + b1
    y = y @ w2.T + b2
    y = y @ w3.T + b3
    return y


def make_params(key):
    ks = jax.random.split(key, 8)
    conv_w = 0.1 * jax.random.normal(ks[0], (COUT, CIN, 3, 3), jnp.float32)
    conv_b = 0.1 * jax.random.normal(ks[1], (COUT,), jnp.float32)
    w1 = 0.01 * jax.random.normal(ks[2], (HID, KFEAT), jnp.float32)
    b1 = 0.1 * jax.random.normal(ks[3], (HID,), jnp.float32)
    w2 = 0.05 * jax.random.normal(ks[4], (HID, HID), jnp.float32)
    b2 = 0.1 * jax.random.normal(ks[5], (HID,), jnp.float32)
    w3 = 0.05 * jax.random.normal(ks[6], (NCLS, HID), jnp.float32)
    b3 = 0.1 * jax.random.normal(ks[7], (NCLS,), jnp.float32)
    return (conv_w, conv_b, w1, b1, w2, b2, w3, b3)


if __name__ == "__main__":
    key = jax.random.PRNGKey(0)
    kx, kp = jax.random.split(key)
    # fc1 expects 64*32*32 features, so the module implies 3x32x32 inputs.
    x = jax.random.normal(kx, (2, CIN, H, W), jnp.float32)
    params = make_params(kp)

    out = jax.jit(forward)(x, params)
    out = jax.block_until_ready(out)

    ref = reference(x, params)
    assert out.shape == (2, NCLS)
    # Tolerance accounts for fc1 streaming w1 in bf16 (K = 65536 reduction,
    # f32 accumulation); expected |err| is a few 1e-3.
    assert jnp.allclose(out, ref, rtol=1e-2, atol=1e-2), (
        float(jnp.max(jnp.abs(out - ref))))

    print("KERNEL_OK")
</pallas_src>

<mosaic_0001>
module attributes {stable_mosaic.version = 11 : i64} {
  func.func @conv_mm_kernel(%arg0: i32, %arg1: memref<2x32x1024xf32, #tpu.memory_space<vmem>>, %arg2: memref<64x32xf32, #tpu.memory_space<vmem>>, %arg3: memref<64x1xf32, #tpu.memory_space<vmem>>, %arg4: memref<2x64x1024xf32, #tpu.memory_space<vmem>>) attributes {dimension_semantics = [#tpu.dimension_semantics<parallel>], iteration_bounds = array<i64: 1>, scalar_prefetch = 0 : i64, scratch_operands = 0 : i64, tpu.core_type = #tpu.core_type<tc>, window_params = [{transform_indices = @transform_0, window_bounds = array<i64: 2, 32, 1024>}, {pipeline_mode = #tpu.pipeline_mode<synchronous>, transform_indices = @transform_1, window_bounds = array<i64: 64, 32>}, {pipeline_mode = #tpu.pipeline_mode<synchronous>, transform_indices = @transform_2, window_bounds = array<i64: 64, 1>}, {transform_indices = @transform_3, window_bounds = array<i64: 2, 64, 1024>}]} {
    %c0 = arith.constant 0 : index
    %c0_0 = arith.constant 0 : index
    %0 = vector.load %arg2[%c0, %c0_0] : memref<64x32xf32, #tpu.memory_space<vmem>>, vector<64x32xf32>
    %c0_1 = arith.constant 0 : index
    %c0_2 = arith.constant 0 : index
    %1 = vector.load %arg3[%c0_1, %c0_2] : memref<64x1xf32, #tpu.memory_space<vmem>>, vector<64x1xf32>
    %c0_3 = arith.constant 0 : index
    %c0_4 = arith.constant 0 : index
    %c0_5 = arith.constant 0 : index
    %2 = vector.load %arg1[%c0_3, %c0_4, %c0_5] : memref<2x32x1024xf32, #tpu.memory_space<vmem>>, vector<1x32x1024xf32>
    %3 = vector.shape_cast %2 : vector<1x32x1024xf32> to vector<32x1024xf32>
    %cst = arith.constant dense<0.000000e+00> : vector<64x1024xf32>
    %4 = tpu.matmul %0, %3, %cst {dimension_numbers = #tpu.dot_dimension_numbers<[1], [0], [0], [1], [0, 0, 1, 1], [], []>} : vector<64x32xf32>, vector<32x1024xf32>, vector<64x1024xf32> -> vector<64x1024xf32>
    %5 = vector.broadcast %1 : vector<64x1xf32> to vector<64x1024xf32>
    %6 = arith.addf %4, %5 : vector<64x1024xf32>
    %c0_6 = arith.constant 0 : index
    %c0_7 = arith.constant 0 : index
    %c0_8 = arith.constant 0 : index
    %7 = vector.load %arg4[%c0_6, %c0_7, %c0_8] : memref<2x64x1024xf32, #tpu.memory_space<vmem>>, vector<1x64x1024xf32>
    %8 = vector.shape_cast %7 : vector<1x64x1024xf32> to vector<64x1024xf32>
    %9 = vector.shape_cast %6 : vector<64x1024xf32> to vector<1x64x1024xf32>
    tpu.vector_store %arg4[%c0_6, %c0_7, %c0_8], %9 {strides = array<i32>} : memref<2x64x1024xf32, #tpu.memory_space<vmem>>, vector<1x64x1024xf32>,
    %c1 = arith.constant 1 : index
    %c0_9 = arith.constant 0 : index
    %c0_10 = arith.constant 0 : index
    %10 = vector.load %arg1[%c1, %c0_9, %c0_10] : memref<2x32x1024xf32, #tpu.memory_space<vmem>>, vector<1x32x1024xf32>
    %11 = vector.shape_cast %10 : vector<1x32x1024xf32> to vector<32x1024xf32>
    %cst_11 = arith.constant dense<0.000000e+00> : vector<64x1024xf32>
    %12 = tpu.matmul %0, %11, %cst_11 {dimension_numbers = #tpu.dot_dimension_numbers<[1], [0], [0], [1], [0, 0, 1, 1], [], []>} : vector<64x32xf32>, vector<32x1024xf32>, vector<64x1024xf32> -> vector<64x1024xf32>
    %13 = vector.broadcast %1 : vector<64x1xf32> to vector<64x1024xf32>
    %14 = arith.addf %12, %13 : vector<64x1024xf32>
    %c1_12 = arith.constant 1 : index
    %c0_13 = arith.constant 0 : index
    %c0_14 = arith.constant 0 : index
    %15 = vector.load %arg4[%c1_12, %c0_13, %c0_14] : memref<2x64x1024xf32, #tpu.memory_space<vmem>>, vector<1x64x1024xf32>
    %16 = vector.shape_cast %15 : vector<1x64x1024xf32> to vector<64x1024xf32>
    %17 = vector.shape_cast %14 : vector<64x1024xf32> to vector<1x64x1024xf32>
    tpu.vector_store %arg4[%c1_12, %c0_13, %c0_14], %17 {strides = array<i32>} : memref<2x64x1024xf32, #tpu.memory_space<vmem>>, vector<1x64x1024xf32>,
    return
  }
  func.func @transform_0(%arg0: i32) -> (i32, i32, i32) {
    %c0_i32 = arith.constant 0 : i32
    %c0_i32_0 = arith.constant 0 : i32
    %c0_i32_1 = arith.constant 0 : i32
    return %arg0, %c0_i32, %c0_i32_0 : i32, i32, i32
  }
  func.func @transform_1(%arg0: i32) -> (i32, i32) {
    %c0_i32 = arith.constant 0 : i32
    %c0_i32_0 = arith.constant 0 : i32
    %c0_i32_1 = arith.constant 0 : i32
    return %c0_i32, %c0_i32_0 : i32, i32
  }
  func.func @transform_2(%arg0: i32) -> (i32, i32) {
    %c0_i32 = arith.constant 0 : i32
    %c0_i32_0 = arith.constant 0 : i32
    %c0_i32_1 = arith.constant 0 : i32
    return %c0_i32, %c0_i32_0 : i32, i32
  }
  func.func @transform_3(%arg0: i32) -> (i32, i32, i32) {
    %c0_i32 = arith.constant 0 : i32
    %c0_i32_0 = arith.constant 0 : i32
    %c0_i32_1 = arith.constant 0 : i32
    return %arg0, %c0_i32, %c0_i32_0 : i32, i32, i32
  }
}

module attributes {stable_mosaic.version = 11 : i64} {
  func.func @mlp_kernel(%arg0: i32, %arg1: memref<2x8192xf32, #tpu.memory_space<vmem>>, %arg2: memref<8192x256xbf16, #tpu.memory_space<vmem>>, %arg3: memref<1x256xf32, #tpu.memory_space<vmem>>, %arg4: memref<256x256xf32, #tpu.memory_space<vmem>>, %arg5: memref<1x256xf32, #tpu.memory_space<vmem>>, %arg6: memref<256x10xf32, #tpu.memory_space<vmem>>, %arg7: memref<1x10xf32, #tpu.memory_space<vmem>>, %arg8: memref<2x10xf32, #tpu.memory_space<vmem>>, %arg9: memref<2x256xf32, #tpu.memory_space<vmem>>) attributes {dimension_semantics = [#tpu.dimension_semantics<arbitrary>], iteration_bounds = array<i64: 8>, scalar_prefetch = 0 : i64, scratch_operands = 1 : i64, tpu.core_type = #tpu.core_type<tc>, window_params = [{transform_indices = @transform_0, window_bounds = array<i64: 2, 8192>}, {transform_indices = @transform_1, window_bounds = array<i64: 8192, 256>}, {pipeline_mode = #tpu.pipeline_mode<synchronous>, transform_indices = @transform_2, window_bounds = array<i64: 1, 256>}, {pipeline_mode = #tpu.pipeline_mode<synchronous>, transform_indices = @transform_3, window_bounds = array<i64: 256, 256>}, {pipeline_mode = #tpu.pipeline_mode<synchronous>, transform_indices = @transform_4, window_bounds = array<i64: 1, 256>}, {pipeline_mode = #tpu.pipeline_mode<synchronous>, transform_indices = @transform_5, window_bounds = array<i64: 256, 10>}, {pipeline_mode = #tpu.pipeline_mode<synchronous>, transform_indices = @transform_6, window_bounds = array<i64: 1, 10>}, {pipeline_mode = #tpu.pipeline_mode<synchronous>, transform_indices = @transform_7, window_bounds = array<i64: 2, 10>}]} {
    %c0_i32 = arith.constant 0 : i32
    %0 = arith.cmpi eq, %arg0, %c0_i32 : i32
    %1 = arith.extui %0 : i1 to i32
    %c0_i32_0 = arith.constant 0 : i32
    %2 = arith.cmpi ne, %1, %c0_i32_0 : i32
    scf.if %2 {
      %cst_9 = arith.constant 0.000000e+00 : f32
      %13 = vector.broadcast %cst_9 : f32 to vector<2x256xf32>
      %c0_10 = arith.constant 0 : index
      %c0_11 = arith.constant 0 : index
      %14 = vector.load %arg9[%c0_10, %c0_11] : memref<2x256xf32, #tpu.memory_space<vmem>>, vector<2x256xf32>
      tpu.vector_store %arg9[%c0_10, %c0_11], %13 {strides = array<i32>} : memref<2x256xf32, #tpu.memory_space<vmem>>, vector<2x256xf32>,
    } else {
    }
    %c0 = arith.constant 0 : index
    %c0_1 = arith.constant 0 : index
    %3 = vector.load %arg1[%c0, %c0_1] : memref<2x8192xf32, #tpu.memory_space<vmem>>, vector<2x8192xf32>
    %4 = arith.truncf %3 : vector<2x8192xf32> to vector<2x8192xbf16>
    %c0_2 = arith.constant 0 : index
    %c0_3 = arith.constant 0 : index
    %5 = vector.load %arg9[%c0_2, %c0_3] : memref<2x256xf32, #tpu.memory_space<vmem>>, vector<2x256xf32>
    %c0_4 = arith.constant 0 : index
    %c0_5 = arith.constant 0 : index
    %6 = vector.load %arg2[%c0_4, %c0_5] : memref<8192x256xbf16, #tpu.memory_space<vmem>>, vector<8192x256xbf16>
    %cst = arith.constant dense<0.000000e+00> : vector<2x256xf32>
    %7 = tpu.matmul %4, %6, %cst {dimension_numbers = #tpu.dot_dimension_numbers<[1], [0], [0], [1], [0, 0, 1, 1], [], []>} : vector<2x8192xbf16>, vector<8192x256xbf16>, vector<2x256xf32> -> vector<2x256xf32>
    %8 = arith.addf %5, %7 : vector<2x256xf32>
    %c0_6 = arith.constant 0 : index
    %c0_7 = arith.constant 0 : index
    %9 = vector.load %arg9[%c0_6, %c0_7] : memref<2x256xf32, #tpu.memory_space<vmem>>, vector<2x256xf32>
    tpu.vector_store %arg9[%c0_6, %c0_7], %8 {strides = array<i32>} : memref<2x256xf32, #tpu.memory_space<vmem>>, vector<2x256xf32>,
    %c7_i32 = arith.constant 7 : i32
    %10 = arith.cmpi eq, %arg0, %c7_i32 : i32
    %11 = arith.extui %10 : i1 to i32
    %c0_i32_8 = arith.constant 0 : i32
    %12 = arith.cmpi ne, %11, %c0_i32_8 : i32
    scf.if %12 {
      %c0_9 = arith.constant 0 : index
      %c0_10 = arith.constant 0 : index
      %13 = vector.load %arg9[%c0_9, %c0_10] : memref<2x256xf32, #tpu.memory_space<vmem>>, vector<2x256xf32>
      %c0_11 = arith.constant 0 : index
      %c0_12 = arith.constant 0 : index
      %14 = vector.load %arg3[%c0_11, %c0_12] : memref<1x256xf32, #tpu.memory_space<vmem>>, vector<1x256xf32>
      %15 = vector.broadcast %14 : vector<1x256xf32> to vector<2x256xf32>
      %16 = arith.addf %13, %15 : vector<2x256xf32>
      %c0_13 = arith.constant 0 : index
      %c0_14 = arith.constant 0 : index
      %17 = vector.load %arg4[%c0_13, %c0_14] : memref<256x256xf32, #tpu.memory_space<vmem>>, vector<256x256xf32>
      %cst_15 = arith.constant dense<0.000000e+00> : vector<2x256xf32>
      %18 = tpu.matmul %16, %17, %cst_15 {dimension_numbers = #tpu.dot_dimension_numbers<[1], [0], [0], [1], [0, 0, 1, 1], [], []>} : vector<2x256xf32>, vector<256x256xf32>, vector<2x256xf32> -> vector<2x256xf32>
      %c0_16 = arith.constant 0 : index
      %c0_17 = arith.constant 0 : index
      %19 = vector.load %arg5[%c0_16, %c0_17] : memref<1x256xf32, #tpu.memory_space<vmem>>, vector<1x256xf32>
      %20 = vector.broadcast %19 : vector<1x256xf32> to vector<2x256xf32>
      %21 = arith.addf %18, %20 : vector<2x256xf32>
      %c0_18 = arith.constant 0 : index
      %c0_19 = arith.constant 0 : index
      %22 = vector.load %arg6[%c0_18, %c0_19] : memref<256x10xf32, #tpu.memory_space<vmem>>, vector<256x10xf32>
      %cst_20 = arith.constant dense<0.000000e+00> : vector<2x10xf32>
      %23 = tpu.matmul %21, %22, %cst_20 {dimension_numbers = #tpu.dot_dimension_numbers<[1], [0], [0], [1], [0, 0, 1, 1], [], []>} : vector<2x256xf32>, vector<256x10xf32>, vector<2x10xf32> -> vector<2x10xf32>
      %c0_21 = arith.constant 0 : index
      %c0_22 = arith.constant 0 : index
      %24 = vector.load %arg7[%c0_21, %c0_22] : memref<1x10xf32, #tpu.memory_space<vmem>>, vector<1x10xf32>
      %25 = vector.broadcast %24 : vector<1x10xf32> to vector<2x10xf32>
      %26 = arith.addf %23, %25 : vector<2x10xf32>
      %c0_23 = arith.constant 0 : index
      %c0_24 = arith.constant 0 : index
      %27 = vector.load %arg8[%c0_23, %c0_24] : memref<2x10xf32, #tpu.memory_space<vmem>>, vector<2x10xf32>
      tpu.vector_store %arg8[%c0_23, %c0_24], %26 {strides = array<i32>} : memref<2x10xf32, #tpu.memory_space<vmem>>, vector<2x10xf32>,
    } else {
    }
    return
  }
  func.func @transform_0(%arg0: i32) -> (i32, i32) {
    %c0_i32 = arith.constant 0 : i32
    %c0_i32_0 = arith.constant 0 : i32
    return %c0_i32, %arg0 : i32, i32
  }
  func.func @transform_1(%arg0: i32) -> (i32, i32) {
    %c0_i32 = arith.constant 0 : i32
    %c0_i32_0 = arith.constant 0 : i32
    return %arg0, %c0_i32 : i32, i32
  }
  func.func @transform_2(%arg0: i32) -> (i32, i32) {
    %c0_i32 = arith.constant 0 : i32
    %c0_i32_0 = arith.constant 0 : i32
    %c0_i32_1 = arith.constant 0 : i32
    return %c0_i32, %c0_i32_0 : i32, i32
  }
  func.func @transform_3(%arg0: i32) -> (i32, i32) {
    %c0_i32 = arith.constant 0 : i32
    %c0_i32_0 = arith.constant 0 : i32
    %c0_i32_1 = arith.constant 0 : i32
    return %c0_i32, %c0_i32_0 : i32, i32
  }
  func.func @transform_4(%arg0: i32) -> (i32, i32) {
    %c0_i32 = arith.constant 0 : i32
    %c0_i32_0 = arith.constant 0 : i32
    %c0_i32_1 = arith.constant 0 : i32
    return %c0_i32, %c0_i32_0 : i32, i32
  }
  func.func @transform_5(%arg0: i32) -> (i32, i32) {
    %c0_i32 = arith.constant 0 : i32
    %c0_i32_0 = arith.constant 0 : i32
    %c0_i32_1 = arith.constant 0 : i32
    return %c0_i32, %c0_i32_0 : i32, i32
  }
  func.func @transform_6(%arg0: i32) -> (i32, i32) {
    %c0_i32 = arith.constant 0 : i32
    %c0_i32_0 = arith.constant 0 : i32
    %c0_i32_1 = arith.constant 0 : i32
    return %c0_i32, %c0_i32_0 : i32, i32
  }
  func.func @transform_7(%arg0: i32) -> (i32, i32) {
    %c0_i32 = arith.constant 0 : i32
    %c0_i32_0 = arith.constant 0 : i32
    %c0_i32_1 = arith.constant 0 : i32
    return %c0_i32, %c0_i32_0 : i32, i32
  }
}

</mosaic_0001>

<llo_original>
// kernel: forward.2
$region0: #{forward.2}
  #allocation0 [shape = 'u32[]', space=smem, size = 0x4, offset = 0x4, fixed_abs, tag = 'smem constant byte address 0x4 - core index']
  #allocation1 [shape = 'u32[144,128]{1,0:T(1,128)}', space=vmem, size = 0x12000, scoped, tag = 'internal scratch']
  %s0 = inlined_call_operand.vmem [shape: f32[2,32,1024], index: 0, kind: input, shape index: {}]
  %s1 = inlined_call_operand.vmem [shape: f32[64,32], index: 1, kind: input, shape index: {}]
  %s2 = inlined_call_operand.vmem [shape: f32[64,1], index: 2, kind: input, shape index: {}]
  %s3 = inlined_call_operand.vmem [shape: f32[2,64,1024], index: 3, kind: output, shape index: {}]
  %s4 = sld [smem:[#allocation0]]
  $region22: #{forward.2} parent=0
    _
  %s6 = ssub.s32 1, %s4
  %s7 = scalar_select 0, %s6, %s4
  // Predicated region
  $region2: #{forward.2} parent=0 // pred_check
    _
  $region3: #{forward.2} parent=0 // pred_check_branch
    %9 = sbr.rel (0) target = $region5
  $region4: #{forward.2} parent=0 // pred_region
    _
  $region5: #{forward.2} parent=0 // pred_fallthru
    _
  // Predicated region
  $region6: #{forward.2} parent=0 // pred_check
    _
  $region7: #{forward.2} parent=0 // pred_check_branch
    %11 = sbr.rel (0) target = $region9
  $region8: #{forward.2} parent=0 // pred_region
    _
  $region9: #{forward.2} parent=0 // pred_fallthru
    _
  // Predicated region
  $region10: #{forward.2} parent=0 // pred_check
    _
  $region11: #{forward.2} parent=0 // pred_check_branch
    %13 = sbr.rel (0) target = $region13
  $region12: #{forward.2} parent=0 // pred_region
    _
  $region13: #{forward.2} parent=0 // pred_fallthru
    _
  %v14 = vld [vmem:[%s1] sm:$0xff]
  %v15 = vld [vmem:[%s1 + $0x8] sm:$0xff]
  %v16 = vld [vmem:[%s1 + $0x10] sm:$0xff]
  %v17 = vld [vmem:[%s1 + $0x18] sm:$0xff]
  %v18 = vld [vmem:[%s1 + $0x20] sm:$0xff]
  %v19 = vld [vmem:[%s1 + $0x28] sm:$0xff]
  %v20 = vld [vmem:[%s1 + $0x30] sm:$0xff]
  %v21 = vld [vmem:[%s1 + $0x38] sm:$0xff]
  %v22 = vld [vmem:[%s2] sm:$0xff]
  %v23 = vld [vmem:[%s2 + $0x8] sm:$0xff]
  %v24 = vld [vmem:[%s2 + $0x10] sm:$0xff]
  %v25 = vld [vmem:[%s2 + $0x18] sm:$0xff]
  %v26 = vld [vmem:[%s2 + $0x20] sm:$0xff]
  %v27 = vld [vmem:[%s2 + $0x28] sm:$0xff]
  %v28 = vld [vmem:[%s2 + $0x30] sm:$0xff]
  %v29 = vld [vmem:[%s2 + $0x38] sm:$0xff]
  %v30 = vld [vmem:[%s0] sm:$0xff]
  %v31 = vld [vmem:[%s0 + $0x8] sm:$0xff]
  %v32 = vld [vmem:[%s0 + $0x10] sm:$0xff]
  %v33 = vld [vmem:[%s0 + $0x18] sm:$0xff]
  %v34 = vld [vmem:[%s0 + $0x20] sm:$0xff]
  %v35 = vld [vmem:[%s0 + $0x28] sm:$0xff]
  %v36 = vld [vmem:[%s0 + $0x30] sm:$0xff]
  %v37 = vld [vmem:[%s0 + $0x38] sm:$0xff]
  %v38 = vld [vmem:[%s0 + $0x40] sm:$0xff]
  %v39 = vld [vmem:[%s0 + $0x48] sm:$0xff]
  %v40 = vld [vmem:[%s0 + $0x50] sm:$0xff]
  %v41 = vld [vmem:[%s0 + $0x58] sm:$0xff]
  %v42 = vld [vmem:[%s0 + $0x60] sm:$0xff]
  %v43 = vld [vmem:[%s0 + $0x68] sm:$0xff]
  %v44 = vld [vmem:[%s0 + $0x70] sm:$0xff]
  %v45 = vld [vmem:[%s0 + $0x78] sm:$0xff]
  %v46 = vld [vmem:[%s0 + $0x80] sm:$0xff]
  %v47 = vld [vmem:[%s0 + $0x88] sm:$0xff]
  %v48 = vld [vmem:[%s0 + $0x90] sm:$0xff]
  %v49 = vld [vmem:[%s0 + $0x98] sm:$0xff]
  %v50 = vld [vmem:[%s0 + $0xa0] sm:$0xff]
  %v51 = vld [vmem:[%s0 + $0xa8] sm:$0xff]
  %v52 = vld [vmem:[%s0 + $0xb0] sm:$0xff]
  %v53 = vld [vmem:[%s0 + $0xb8] sm:$0xff]
  %v54 = vld [vmem:[%s0 + $0xc0] sm:$0xff]
  %v55 = vld [vmem:[%s0 + $0xc8] sm:$0xff]
  %v56 = vld [vmem:[%s0 + $0xd0] sm:$0xff]
  %v57 = vld [vmem:[%s0 + $0xd8] sm:$0xff]
  %v58 = vld [vmem:[%s0 + $0xe0] sm:$0xff]
  %v59 = vld [vmem:[%s0 + $0xe8] sm:$0xff]
  %v60 = vld [vmem:[%s0 + $0xf0] sm:$0xff]
  %v61 = vld [vmem:[%s0 + $0xf8] sm:$0xff]
  %63 = vset.pattern.permute.xlu0 0
  %64 = vperm.xlu0 %63, %v22
  %v65 = vpop.permute.xlu0 %64
  %68 = vset.pattern.permute.xlu0 0
  %69 = vperm.xlu0 %68, %v23
  %v70 = vpop.permute.xlu0 %69
  %73 = vset.pattern.permute.xlu0 0
  %74 = vperm.xlu0 %73, %v24
  %v75 = vpop.permute.xlu0 %74
  %78 = vset.pattern.permute.xlu0 0
  %79 = vperm.xlu0 %78, %v25
  %v80 = vpop.permute.xlu0 %79
  %83 = vset.pattern.permute.xlu0 0
  %84 = vperm.xlu0 %83, %v26
  %v85 = vpop.permute.xlu0 %84
  %88 = vset.pattern.permute.xlu0 0
  %89 = vperm.xlu0 %88, %v27
  %v90 = vpop.permute.xlu0 %89
  %93 = vset.pattern.permute.xlu0 0
  %94 = vperm.xlu0 %93, %v28
  %v95 = vpop.permute.xlu0 %94
  %98 = vset.pattern.permute.xlu0 0
  %99 = vperm.xlu0 %98, %v29
  %v100 = vpop.permute.xlu0 %99
  %vm102 = vcmask 261120
  %v104 = vsel %vm102, %v14, 0
  %v107 = vsel %vm102, %v15, 0
  %v110 = vsel %vm102, %v16, 0
  %v113 = vsel %vm102, %v17, 0
  %v116 = vsel %vm102, %v18, 0
  %v119 = vsel %vm102, %v19, 0
  %v122 = vsel %vm102, %v20, 0
  %v125 = vsel %vm102, %v21, 0
  %127 = vmatprep.subr.mxu0 %v31
  %128 = vmatpush1.msra.mxu0 %v30
  %129 = vmatprep.subr.mxu0 %v39
  %130 = vmatpush1.msra.mxu0 %v38
  %131 = vmatprep.subr.mxu0 %v47
  %132 = vmatpush1.msra.mxu0 %v46
  %133 = vmatprep.subr.mxu0 %v55
  %134 = vmatpush1.msra.mxu0 %v54
  %135 = vmatprep.subr.mxu0 0.0
  %136 = vmatpush1.msra.mxu0 0.0
  %137 = vmatprep.subr.mxu0 0.0
  %138 = vmatpush1.msra.mxu0 0.0
  %139 = vmatprep.subr.mxu0 0.0
  %140 = vmatpush1.msra.mxu0 0.0
  %141 = vmatprep.subr.mxu0 0.0
  %142 = vmatpush1.msra.mxu0 0.0
  %143 = vmatprep.subr.mxu0 0.0
  %144 = vmatpush1.msra.mxu0 0.0
  %145 = vmatprep.subr.mxu0 0.0
  %146 = vmatpush1.msra.mxu0 0.0
  %147 = vmatprep.subr.mxu0 0.0
  %148 = vmatpush1.msra.mxu0 0.0
  %149 = vmatprep.subr.mxu0 0.0
  %150 = vmatpush1.msra.mxu0 0.0
  %151 = vmatprep.subr.mxu0 0.0
  %152 = vmatpush1.msra.mxu0 0.0
  %153 = vmatprep.subr.mxu0 0.0
  %154 = vmatpush1.msra.mxu0 0.0
  %155 = vmatprep.subr.mxu0 0.0
  %156 = vmatpush1.msra.mxu0 0.0
  %157 = vmatprep.subr.mxu0 0.0
  %158 = vmatpush1.msra.mxu0 0.0
  %159 = vmatprep.subr.mxu0 0.0
  %160 = vmatpush1.msra.mxu0 0.0
  %161 = vmatprep.subr.mxu0 0.0
  %162 = vmatpush1.msra.mxu0 0.0
  %163 = vmatprep.subr.mxu0 0.0
  %164 = vmatpush1.msra.mxu0 0.0
  %165 = vmatprep.subr.mxu0 0.0
  %166 = vmatpush1.msra.mxu0 0.0
  %167 = vmatprep.subr.mxu0 0.0
  %168 = vmatpush1.msra.mxu0 0.0
  %169 = vmatprep.subr.mxu0 0.0
  %170 = vmatpush1.msra.mxu0 0.0
  %171 = vmatprep.subr.mxu0 0.0
  %172 = vmatpush1.msra.mxu0 0.0
  %173 = vmatprep.subr.mxu0 0.0
  %174 = vmatpush1.msra.mxu0 0.0
  %175 = vmatprep.subr.mxu0 0.0
  %176 = vmatpush1.msra.mxu0 0.0
  %177 = vmatprep.subr.mxu0 0.0
  %178 = vmatpush1.msra.mxu0 0.0
  %179 = vmatprep.subr.mxu0 0.0
  %180 = vmatpush1.msra.mxu0 0.0
  %181 = vmatprep.subr.mxu0 0.0
  %182 = vmatpush1.msra.mxu0 0.0
  %183 = vmatprep.subr.mxu0 0.0
  %184 = vmatpush1.msra.mxu0 0.0
  %185 = vmatprep.subr.mxu0 0.0
  %186 = vmatpush1.msra.mxu0 0.0
  %187 = vmatprep.subr.mxu0 0.0
  %188 = vmatpush1.msra.mxu0 0.0
  %189 = vmatprep.subr.mxu0 0.0
  %190 = vmatpush1.msra.mxu0 0.0
  %191 = vmatprep.mubr.f32.mxu0 0.0
  %192 = vmatmul.mubr.f32.gmra.mrb[0].mxu0 %v104
  %v193 = vpop.f32.mrb[0].mxu0
  %v194 = vadd.f32 %v65, %v193
  %v195 = vpop.f32.mrb[0].mxu0
  %v196 = vadd.f32 %v65, %v195
  %197 = vmatprep.mubr.f32.mxu0 0.0
  %198 = vmatmul.mubr.f32.gmra.mrb[0].mxu0 %v107
  %v199 = vpop.f32.mrb[0].mxu0
  %v200 = vadd.f32 %v70, %v199
  %v201 = vpop.f32.mrb[0].mxu0
  %v202 = vadd.f32 %v70, %v201
  %203 = vmatprep.mubr.f32.mxu0 0.0
  %204 = vmatmul.mubr.f32.gmra.mrb[0].mxu0 %v110
  %v205 = vpop.f32.mrb[0].mxu0
  %v206 = vadd.f32 %v75, %v205
  %v207 = vpop.f32.mrb[0].mxu0
  %v208 = vadd.f32 %v75, %v207
  %209 = vmatprep.mubr.f32.mxu0 0.0
  %210 = vmatmul.mubr.f32.gmra.mrb[0].mxu0 %v113
  %v211 = vpop.f32.mrb[0].mxu0
  %v212 = vadd.f32 %v80, %v211
  %v213 = vpop.f32.mrb[0].mxu0
  %v214 = vadd.f32 %v80, %v213
  %215 = vmatprep.mubr.f32.mxu0 0.0
  %216 = vmatmul.mubr.f32.gmra.mrb[0].mxu0 %v116
  %v217 = vpop.f32.mrb[0].mxu0
  %v218 = vadd.f32 %v85, %v217
  %v219 = vpop.f32.mrb[0].mxu0
  %v220 = vadd.f32 %v85, %v219
  %221 = vmatprep.mubr.f32.mxu0 0.0
  %222 = vmatmul.mubr.f32.gmra.mrb[0].mxu0 %v119
  %v223 = vpop.f32.mrb[0].mxu0
  %v224 = vadd.f32 %v90, %v223
  %v225 = vpop.f32.mrb[0].mxu0
  %v226 = vadd.f32 %v90, %v225
  %227 = vmatprep.mubr.f32.mxu0 0.0
  %228 = vmatmul.mubr.f32.gmra.mrb[0].mxu0 %v122
  %v229 = vpop.f32.mrb[0].mxu0
  %v230 = vadd.f32 %v95, %v229
  %v231 = vpop.f32.mrb[0].mxu0
  %v232 = vadd.f32 %v95, %v231
  %233 = vmatprep.mubr.f32.mxu0 0.0
  %234 = vmatmul.mubr.f32.gmra.mrb[0].mxu0 %v125
  %v235 = vpop.f32.mrb[0].mxu0
  %v236 = vadd.f32 %v100, %v235
  %v237 = vpop.f32.mrb[0].mxu0
  %v238 = vadd.f32 %v100, %v237
  %239 = vdwg.mxu0
  %240 = vmatprep.subr.mxu0 %v33
  %241 = vmatpush1.msra.mxu0 %v32
  %242 = vmatprep.subr.mxu0 %v41
  %243 = vmatpush1.msra.mxu0 %v40
  %244 = vmatprep.subr.mxu0 %v49
  %245 = vmatpush1.msra.mxu0 %v48
  %246 = vmatprep.subr.mxu0 %v57
  %247 = vmatpush1.msra.mxu0 %v56
  %248 = vmatprep.subr.mxu0 0.0
  %249 = vmatpush1.msra.mxu0 0.0
  %250 = vmatprep.subr.mxu0 0.0
  %251 = vmatpush1.msra.mxu0 0.0
  %252 = vmatprep.subr.mxu0 0.0
  %253 = vmatpush1.msra.mxu0 0.0
  %254 = vmatprep.subr.mxu0 0.0
  %255 = vmatpush1.msra.mxu0 0.0
  %256 = vmatprep.subr.mxu0 0.0
  %257 = vmatpush1.msra.mxu0 0.0
  %258 = vmatprep.subr.mxu0 0.0
  %259 = vmatpush1.msra.mxu0 0.0
  %260 = vmatprep.subr.mxu0 0.0
  %261 = vmatpush1.msra.mxu0 0.0
  %262 = vmatprep.subr.mxu0 0.0
  %263 = vmatpush1.msra.mxu0 0.0
  %264 = vmatprep.subr.mxu0 0.0
  %265 = vmatpush1.msra.mxu0 0.0
  %266 = vmatprep.subr.mxu0 0.0
  %267 = vmatpush1.msra.mxu0 0.0
  %268 = vmatprep.subr.mxu0 0.0
  %269 = vmatpush1.msra.mxu0 0.0
  %270 = vmatprep.subr.mxu0 0.0
  %271 = vmatpush1.msra.mxu0 0.0
  %272 = vmatprep.subr.mxu0 0.0
  %273 = vmatpush1.msra.mxu0 0.0
  %274 = vmatprep.subr.mxu0 0.0
  %275 = vmatpush1.msra.mxu0 0.0
  %276 = vmatprep.subr.mxu0 0.0
  %277 = vmatpush1.msra.mxu0 0.0
  %278 = vmatprep.subr.mxu0 0.0
  %279 = vmatpush1.msra.mxu0 0.0
  %280 = vmatprep.subr.mxu0 0.0
  %281 = vmatpush1.msra.mxu0 0.0
  %282 = vmatprep.subr.mxu0 0.0
  %283 = vmatpush1.msra.mxu0 0.0
  %284 = vmatprep.subr.mxu0 0.0
  %285 = vmatpush1.msra.mxu0 0.0
  %286 = vmatprep.subr.mxu0 0.0
  %287 = vmatpush1.msra.mxu0 0.0
  %288 = vmatprep.subr.mxu0 0.0
  %289 = vmatpush1.msra.mxu0 0.0
  %290 = vmatprep.subr.mxu0 0.0
  %291 = vmatpush1.msra.mxu0 0.0
  %292 = vmatprep.subr.mxu0 0.0
  %293 = vmatpush1.msra.mxu0 0.0
  %294 = vmatprep.subr.mxu0 0.0
  %295 = vmatpush1.msra.mxu0 0.0
  %296 = vmatprep.subr.mxu0 0.0
  %297 = vmatpush1.msra.mxu0 0.0
  %298 = vmatprep.subr.mxu0 0.0
  %299 = vmatpush1.msra.mxu0 0.0
  %300 = vmatprep.subr.mxu0 0.0
  %301 = vmatpush1.msra.mxu0 0.0
  %302 = vmatprep.subr.mxu0 0.0
  %303 = vmatpush1.msra.mxu0 0.0
  %304 = vmatprep.mubr.f32.mxu0 0.0
  %305 = vmatmul.mubr.f32.gmra.mrb[0].mxu0 %v104
  %v306 = vpop.f32.mrb[0].mxu0
  %v307 = vadd.f32 %v65, %v306
  %v308 = vpop.f32.mrb[0].mxu0
  %v309 = vadd.f32 %v65, %v308
  %310 = vmatprep.mubr.f32.mxu0 0.0
  %311 = vmatmul.mubr.f32.gmra.mrb[0].mxu0 %v107
  %v312 = vpop.f32.mrb[0].mxu0
  %v313 = vadd.f32 %v70, %v312
  %v314 = vpop.f32.mrb[0].mxu0
  %v315 = vadd.f32 %v70, %v314
  %316 = vmatprep.mubr.f32.mxu0 0.0
  %317 = vmatmul.mubr.f32.gmra.mrb[0].mxu0 %v110
  %v318 = vpop.f32.mrb[0].mxu0
  %v319 = vadd.f32 %v75, %v318
  %v320 = vpop.f32.mrb[0].mxu0
  %v321 = vadd.f32 %v75, %v320
  %322 = vmatprep.mubr.f32.mxu0 0.0
  %323 = vmatmul.mubr.f32.gmra.mrb[0].mxu0 %v113
  %v324 = vpop.f32.mrb[0].mxu0
  %v325 = vadd.f32 %v80, %v324
  %v326 = vpop.f32.mrb[0].mxu0
  %v327 = vadd.f32 %v80, %v326
  %328 = vmatprep.mubr.f32.mxu0 0.0
  %329 = vmatmul.mubr.f32.gmra.mrb[0].mxu0 %v116
  %v330 = vpop.f32.mrb[0].mxu0
  %v331 = vadd.f32 %v85, %v330
  %v332 = vpop.f32.mrb[0].mxu0
  %v333 = vadd.f32 %v85, %v332
  %334 = vmatprep.mubr.f32.mxu0 0.0
  %335 = vmatmul.mubr.f32.gmra.mrb[0].mxu0 %v119
  %v336 = vpop.f32.mrb[0].mxu0
  %v337 = vadd.f32 %v90, %v336
  %v338 = vpop.f32.mrb[0].mxu0
  %v339 = vadd.f32 %v90, %v338
  %340 = vmatprep.mubr.f32.mxu0 0.0
  %341 = vmatmul.mubr.f32.gmra.mrb[0].mxu0 %v122
  %v342 = vpop.f32.mrb[0].mxu0
  %v343 = vadd.f32 %v95, %v342
  %v344 = vpop.f32.mrb[0].mxu0
  %v345 = vadd.f32 %v95, %v344
  %346 = vmatprep.mubr.f32.mxu0 0.0
  %347 = vmatmul.mubr.f32.gmra.mrb[0].mxu0 %v125
  %v348 = vpop.f32.mrb[0].mxu0
  %v349 = vadd.f32 %v100, %v348
  %v350 = vpop.f32.mrb[0].mxu0
  %v351 = vadd.f32 %v100, %v350
  %352 = vdwg.mxu0
  %353 = vmatprep.subr.mxu0 %v35
  %354 = vmatpush1.msra.mxu0 %v34
  %355 = vmatprep.subr.mxu0 %v43
  %356 = vmatpush1.msra.mxu0 %v42
  %357 = vmatprep.subr.mxu0 %v51
  %358 = vmatpush1.msra.mxu0 %v50
  %359 = vmatprep.subr.mxu0 %v59
  %360 = vmatpush1.msra.mxu0 %v58
  %361 = vmatprep.subr.mxu0 0.0
  %362 = vmatpush1.msra.mxu0 0.0
  %363 = vmatprep.subr.mxu0 0.0
  %364 = vmatpush1.msra.mxu0 0.0
  %365 = vmatprep.subr.mxu0 0.0
  %366 = vmatpush1.msra.mxu0 0.0
  %367 = vmatprep.subr.mxu0 0.0
  %368 = vmatpush1.msra.mxu0 0.0
  %369 = vmatprep.subr.mxu0 0.0
  %370 = vmatpush1.msra.mxu0 0.0
  %371 = vmatprep.subr.mxu0 0.0
  %372 = vmatpush1.msra.mxu0 0.0
  %373 = vmatprep.subr.mxu0 0.0
  %374 = vmatpush1.msra.mxu0 0.0
  %375 = vmatprep.subr.mxu0 0.0
  %376 = vmatpush1.msra.mxu0 0.0
  %377 = vmatprep.subr.mxu0 0.0
  %378 = vmatpush1.msra.mxu0 0.0
  %379 = vmatprep.subr.mxu0 0.0
  %380 = vmatpush1.msra.mxu0 0.0
  %381 = vmatprep.subr.mxu0 0.0
  %382 = vmatpush1.msra.mxu0 0.0
  %383 = vmatprep.subr.mxu0 0.0
  %384 = vmatpush1.msra.mxu0 0.0
  %385 = vmatprep.subr.mxu0 0.0
  %386 = vmatpush1.msra.mxu0 0.0
  %387 = vmatprep.subr.mxu0 0.0
  %388 = vmatpush1.msra.mxu0 0.0
  %389 = vmatprep.subr.mxu0 0.0
  %390 = vmatpush1.msra.mxu0 0.0
  %391 = vmatprep.subr.mxu0 0.0
  %392 = vmatpush1.msra.mxu0 0.0
  %393 = vmatprep.subr.mxu0 0.0
  %394 = vmatpush1.msra.mxu0 0.0
  %395 = vmatprep.subr.mxu0 0.0
  %396 = vmatpush1.msra.mxu0 0.0
  %397 = vmatprep.subr.mxu0 0.0
  %398 = vmatpush1.msra.mxu0 0.0
  %399 = vmatprep.subr.mxu0 0.0
  %400 = vmatpush1.msra.mxu0 0.0
  %401 = vmatprep.subr.mxu0 0.0
  %402 = vmatpush1.msra.mxu0 0.0
  %403 = vmatprep.subr.mxu0 0.0
  %404 = vmatpush1.msra.mxu0 0.0
  %405 = vmatprep.subr.mxu0 0.0
  %406 = vmatpush1.msra.mxu0 0.0
  %407 = vmatprep.subr.mxu0 0.0
  %408 = vmatpush1.msra.mxu0 0.0
  %409 = vmatprep.subr.mxu0 0.0
  %410 = vmatpush1.msra.mxu0 0.0
  %411 = vmatprep.subr.mxu0 0.0
  %412 = vmatpush1.msra.mxu0 0.0
  %413 = vmatprep.subr.mxu0 0.0
  %414 = vmatpush1.msra.mxu0 0.0
  %415 = vmatprep.subr.mxu0 0.0
  %416 = vmatpush1.msra.mxu0 0.0
  %417 = vmatprep.mubr.f32.mxu0 0.0
  %418 = vmatmul.mubr.f32.gmra.mrb[0].mxu0 %v104
  %v419 = vpop.f32.mrb[0].mxu0
  %v420 = vadd.f32 %v65, %v419
  %v421 = vpop.f32.mrb[0].mxu0
  %v422 = vadd.f32 %v65, %v421
  %423 = vmatprep.mubr.f32.mxu0 0.0
  %424 = vmatmul.mubr.f32.gmra.mrb[0].mxu0 %v107
  %v425 = vpop.f32.mrb[0].mxu0
  %v426 = vadd.f32 %v70, %v425
  %v427 = vpop.f32.mrb[0].mxu0
  %v428 = vadd.f32 %v70, %v427
  %429 = vmatprep.mubr.f32.mxu0 0.0
  %430 = vmatmul.mubr.f32.gmra.mrb[0].mxu0 %v110
  %v431 = vpop.f32.mrb[0].mxu0
  %v432 = vadd.f32 %v75, %v431
  %v433 = vpop.f32.mrb[0].mxu0
  %v434 = vadd.f32 %v75, %v433
  %435 = vmatprep.mubr.f32.mxu0 0.0
  %436 = vmatmul.mubr.f32.gmra.mrb[0].mxu0 %v113
  %v437 = vpop.f32.mrb[0].mxu0
  %v438 = vadd.f32 %v80, %v437
  %v439 = vpop.f32.mrb[0].mxu0
  %v440 = vadd.f32 %v80, %v439
  %441 = vmatprep.mubr.f32.mxu0 0.0
  %442 = vmatmul.mubr.f32.gmra.mrb[0].mxu0 %v116
  %v443 = vpop.f32.mrb[0].mxu0
  %v444 = vadd.f32 %v85, %v443
  %v445 = vpop.f32.mrb[0].mxu0
  %v446 = vadd.f32 %v85, %v445
  %447 = vmatprep.mubr.f32.mxu0 0.0
  %448 = vmatmul.mubr.f32.gmra.mrb[0].mxu0 %v119
  %v449 = vpop.f32.mrb[0].mxu0
  %v450 = vadd.f32 %v90, %v449
  %v451 = vpop.f32.mrb[0].mxu0
  %v452 = vadd.f32 %v90, %v451
  %453 = vmatprep.mubr.f32.mxu0 0.0
  %454 = vmatmul.mubr.f32.gmra.mrb[0].mxu0 %v122
  %v455 = vpop.f32.mrb[0].mxu0
  %v456 = vadd.f32 %v95, %v455
  %v457 = vpop.f32.mrb[0].mxu0
  %v458 = vadd.f32 %v95, %v457
  %459 = vmatprep.mubr.f32.mxu0 0.0
  %460 = vmatmul.mubr.f32.gmra.mrb[0].mxu0 %v125
  %v461 = vpop.f32.mrb[0].mxu0
  %v462 = vadd.f32 %v100, %v461
  %v463 = vpop.f32.mrb[0].mxu0
  %v464 = vadd.f32 %v100, %v463
  %465 = vdwg.mxu0
  %466 = vmatprep.subr.mxu0 %v37
  %467 = vmatpush1.msra.mxu0 %v36
  %468 = vmatprep.subr.mxu0 %v45
  %469 = vmatpush1.msra.mxu0 %v44
  %470 = vmatprep.subr.mxu0 %v53
  %471 = vmatpush1.msra.mxu0 %v52
  %472 = vmatprep.subr.mxu0 %v61
  %473 = vmatpush1.msra.mxu0 %v60
  %474 = vmatprep.subr.mxu0 0.0
  %475 = vmatpush1.msra.mxu0 0.0
  %476 = vmatprep.subr.mxu0 0.0
  %477 = vmatpush1.msra.mxu0 0.0
  %478 = vmatprep.subr.mxu0 0.0
  %479 = vmatpush1.msra.mxu0 0.0
  %480 = vmatprep.subr.mxu0 0.0
  %481 = vmatpush1.msra.mxu0 0.0
  %482 = vmatprep.subr.mxu0 0.0
  %483 = vmatpush1.msra.mxu0 0.0
  %484 = vmatprep.subr.mxu0 0.0
  %485 = vmatpush1.msra.mxu0 0.0
  %486 = vmatprep.subr.mxu0 0.0
  %487 = vmatpush1.msra.mxu0 0.0
  %488 = vmatprep.subr.mxu0 0.0
  %489 = vmatpush1.msra.mxu0 0.0
  %490 = vmatprep.subr.mxu0 0.0
  %491 = vmatpush1.msra.mxu0 0.0
  %492 = vmatprep.subr.mxu0 0.0
  %493 = vmatpush1.msra.mxu0 0.0
  %494 = vmatprep.subr.mxu0 0.0
  %495 = vmatpush1.msra.mxu0 0.0
  %496 = vmatprep.subr.mxu0 0.0
  %497 = vmatpush1.msra.mxu0 0.0
  %498 = vmatprep.subr.mxu0 0.0
  %499 = vmatpush1.msra.mxu0 0.0
  %500 = vmatprep.subr.mxu0 0.0
  %501 = vmatpush1.msra.mxu0 0.0
  %502 = vmatprep.subr.mxu0 0.0
  %503 = vmatpush1.msra.mxu0 0.0
  %504 = vmatprep.subr.mxu0 0.0
  %505 = vmatpush1.msra.mxu0 0.0
  %506 = vmatprep.subr.mxu0 0.0
  %507 = vmatpush1.msra.mxu0 0.0
  %508 = vmatprep.subr.mxu0 0.0
  %509 = vmatpush1.msra.mxu0 0.0
  %510 = vmatprep.subr.mxu0 0.0
  %511 = vmatpush1.msra.mxu0 0.0
  %512 = vmatprep.subr.mxu0 0.0
  %513 = vmatpush1.msra.mxu0 0.0
  %514 = vmatprep.subr.mxu0 0.0
  %515 = vmatpush1.msra.mxu0 0.0
  %516 = vmatprep.subr.mxu0 0.0
  %517 = vmatpush1.msra.mxu0 0.0
  %518 = vmatprep.subr.mxu0 0.0
  %519 = vmatpush1.msra.mxu0 0.0
  %520 = vmatprep.subr.mxu0 0.0
  %521 = vmatpush1.msra.mxu0 0.0
  %522 = vmatprep.subr.mxu0 0.0
  %523 = vmatpush1.msra.mxu0 0.0
  %524 = vmatprep.subr.mxu0 0.0
  %525 = vmatpush1.msra.mxu0 0.0
  %526 = vmatprep.subr.mxu0 0.0
  %527 = vmatpush1.msra.mxu0 0.0
  %528 = vmatprep.subr.mxu0 0.0
  %529 = vmatpush1.msra.mxu0 0.0
  %530 = vmatprep.mubr.f32.mxu0 0.0
  %531 = vmatmul.mubr.f32.gmra.mrb[0].mxu0 %v104
  %v532 = vpop.f32.mrb[0].mxu0
  %v533 = vadd.f32 %v65, %v532
  %v534 = vpop.f32.mrb[0].mxu0
  %v535 = vadd.f32 %v65, %v534
  %536 = vmatprep.mubr.f32.mxu0 0.0
  %537 = vmatmul.mubr.f32.gmra.mrb[0].mxu0 %v107
  %v538 = vpop.f32.mrb[0].mxu0
  %v539 = vadd.f32 %v70, %v538
  %v540 = vpop.f32.mrb[0].mxu0
  %v541 = vadd.f32 %v70, %v540
  %542 = vmatprep.mubr.f32.mxu0 0.0
  %543 = vmatmul.mubr.f32.gmra.mrb[0].mxu0 %v110
  %v544 = vpop.f32.mrb[0].mxu0
  %v545 = vadd.f32 %v75, %v544
  %v546 = vpop.f32.mrb[0].mxu0
  %v547 = vadd.f32 %v75, %v546
  %548 = vmatprep.mubr.f32.mxu0 0.0
  %549 = vmatmul.mubr.f32.gmra.mrb[0].mxu0 %v113
  %v550 = vpop.f32.mrb[0].mxu0
  %v551 = vadd.f32 %v80, %v550
  %v552 = vpop.f32.mrb[0].mxu0
  %v553 = vadd.f32 %v80, %v552
  %554 = vmatprep.mubr.f32.mxu0 0.0
  %555 = vmatmul.mubr.f32.gmra.mrb[0].mxu0 %v116
  %v556 = vpop.f32.mrb[0].mxu0
  %v557 = vadd.f32 %v85, %v556
  %v558 = vpop.f32.mrb[0].mxu0
  %v559 = vadd.f32 %v85, %v558
  %560 = vmatprep.mubr.f32.mxu0 0.0
  %561 = vmatmul.mubr.f32.gmra.mrb[0].mxu0 %v119
  %v562 = vpop.f32.mrb[0].mxu0
  %v563 = vadd.f32 %v90, %v562
  %v564 = vpop.f32.mrb[0].mxu0
  %v565 = vadd.f32 %v90, %v564
  %566 = vmatprep.mubr.f32.mxu0 0.0
  %567 = vmatmul.mubr.f32.gmra.mrb[0].mxu0 %v122
  %v568 = vpop.f32.mrb[0].mxu0
  %v569 = vadd.f32 %v95, %v568
  %v570 = vpop.f32.mrb[0].mxu0
  %v571 = vadd.f32 %v95, %v570
  %572 = vmatprep.mubr.f32.mxu0 0.0
  %573 = vmatmul.mubr.f32.gmra.mrb[0].mxu0 %v125
  %v574 = vpop.f32.mrb[0].mxu0
  %v575 = vadd.f32 %v100, %v574
  %v576 = vpop.f32.mrb[0].mxu0
  %v577 = vadd.f32 %v100, %v576
  %578 = vdwg.mxu0
  %579 = vst [vmem:[%s3] sm:$0xff] %v194
  %580 = vst [vmem:[%s3 + $0x8] sm:$0xff] %v196
  %581 = vst [vmem:[%s3 + $0x10] sm:$0xff] %v307
  %582 = vst [vmem:[%s3 + $0x18] sm:$0xff] %v309
  %583 = vst [vmem:[%s3 + $0x20] sm:$0xff] %v420
  %584 = vst [vmem:[%s3 + $0x28] sm:$0xff] %v422
  %585 = vst [vmem:[%s3 + $0x30] sm:$0xff] %v533
  %586 = vst [vmem:[%s3 + $0x38] sm:$0xff] %v535
  %587 = vst [vmem:[%s3 + $0x40] sm:$0xff] %v200
  %588 = vst [vmem:[%s3 + $0x48] sm:$0xff] %v202
  %589 = vst [vmem:[%s3 + $0x50] sm:$0xff] %v313
  %590 = vst [vmem:[%s3 + $0x58] sm:$0xff] %v315
  %591 = vst [vmem:[%s3 + $0x60] sm:$0xff] %v426
  %592 = vst [vmem:[%s3 + $0x68] sm:$0xff] %v428
  %593 = vst [vmem:[%s3 + $0x70] sm:$0xff] %v539
  %594 = vst [vmem:[%s3 + $0x78] sm:$0xff] %v541
  %595 = vst [vmem:[%s3 + $0x80] sm:$0xff] %v206
  %596 = vst [vmem:[%s3 + $0x88] sm:$0xff] %v208
  %597 = vst [vmem:[%s3 + $0x90] sm:$0xff] %v319
  %598 = vst [vmem:[%s3 + $0x98] sm:$0xff] %v321
  %599 = vst [vmem:[%s3 + $0xa0] sm:$0xff] %v432
  %600 = vst [vmem:[%s3 + $0xa8] sm:$0xff] %v434
  %601 = vst [vmem:[%s3 + $0xb0] sm:$0xff] %v545
  %602 = vst [vmem:[%s3 + $0xb8] sm:$0xff] %v547
  %603 = vst [vmem:[%s3 + $0xc0] sm:$0xff] %v212
  %604 = vst [vmem:[%s3 + $0xc8] sm:$0xff] %v214
  %605 = vst [vmem:[%s3 + $0xd0] sm:$0xff] %v325
  %606 = vst [vmem:[%s3 + $0xd8] sm:$0xff] %v327
  %607 = vst [vmem:[%s3 + $0xe0] sm:$0xff] %v438
  %608 = vst [vmem:[%s3 + $0xe8] sm:$0xff] %v440
  %609 = vst [vmem:[%s3 + $0xf0] sm:$0xff] %v551
  %610 = vst [vmem:[%s3 + $0xf8] sm:$0xff] %v553
  %611 = vst [vmem:[%s3 + $0x100] sm:$0xff] %v218
  %612 = vst [vmem:[%s3 + $0x108] sm:$0xff] %v220
  %613 = vst [vmem:[%s3 + $0x110] sm:$0xff] %v331
  %614 = vst [vmem:[%s3 + $0x118] sm:$0xff] %v333
  %615 = vst [vmem:[%s3 + $0x120] sm:$0xff] %v444
  %616 = vst [vmem:[%s3 + $0x128] sm:$0xff] %v446
  %617 = vst [vmem:[%s3 + $0x130] sm:$0xff] %v557
  %618 = vst [vmem:[%s3 + $0x138] sm:$0xff] %v559
  %619 = vst [vmem:[%s3 + $0x140] sm:$0xff] %v224
  %620 = vst [vmem:[%s3 + $0x148] sm:$0xff] %v226
  %621 = vst [vmem:[%s3 + $0x150] sm:$0xff] %v337
  %622 = vst [vmem:[%s3 + $0x158] sm:$0xff] %v339
  %623 = vst [vmem:[%s3 + $0x160] sm:$0xff] %v450
  %624 = vst [vmem:[%s3 + $0x168] sm:$0xff] %v452
  %625 = vst [vmem:[%s3 + $0x170] sm:$0xff] %v563
  %626 = vst [vmem:[%s3 + $0x178] sm:$0xff] %v565
  %627 = vst [vmem:[%s3 + $0x180] sm:$0xff] %v230
  %628 = vst [vmem:[%s3 + $0x188] sm:$0xff] %v232
  %629 = vst [vmem:[%s3 + $0x190] sm:$0xff] %v343
  %630 = vst [vmem:[%s3 + $0x198] sm:$0xff] %v345
  %631 = vst [vmem:[%s3 + $0x1a0] sm:$0xff] %v456
  %632 = vst [vmem:[%s3 + $0x1a8] sm:$0xff] %v458
  %633 = vst [vmem:[%s3 + $0x1b0] sm:$0xff] %v569
  %634 = vst [vmem:[%s3 + $0x1b8] sm:$0xff] %v571
  %635 = vst [vmem:[%s3 + $0x1c0] sm:$0xff] %v236
  %636 = vst [vmem:[%s3 + $0x1c8] sm:$0xff] %v238
  %637 = vst [vmem:[%s3 + $0x1d0] sm:$0xff] %v349
  %638 = vst [vmem:[%s3 + $0x1d8] sm:$0xff] %v351
  %639 = vst [vmem:[%s3 + $0x1e0] sm:$0xff] %v462
  %640 = vst [vmem:[%s3 + $0x1e8] sm:$0xff] %v464
  %641 = vst [vmem:[%s3 + $0x1f0] sm:$0xff] %v575
  %642 = vst [vmem:[%s3 + $0x1f8] sm:$0xff] %v577
  %s643 = scalar_lea.vmem %s0, 256
  %v644 = vld [vmem:[%s643] sm:$0xff]
  %v645 = vld [vmem:[%s643 + $0x8] sm:$0xff]
  %v646 = vld [vmem:[%s643 + $0x10] sm:$0xff]
  %v647 = vld [vmem:[%s643 + $0x18] sm:$0xff]
  %v648 = vld [vmem:[%s643 + $0x20] sm:$0xff]
  %v649 = vld [vmem:[%s643 + $0x28] sm:$0xff]
  %v650 = vld [vmem:[%s643 + $0x30] sm:$0xff]
  %v651 = vld [vmem:[%s643 + $0x38] sm:$0xff]
  %v652 = vld [vmem:[%s643 + $0x40] sm:$0xff]
  %v653 = vld [vmem:[%s643 + $0x48] sm:$0xff]
  %v654 = vld [vmem:[%s643 + $0x50] sm:$0xff]
  %v655 = vld [vmem:[%s643 + $0x58] sm:$0xff]
  %v656 = vld [vmem:[%s643 + $0x60] sm:$0xff]
  %v657 = vld [vmem:[%s643 + $0x68] sm:$0xff]
  %v658 = vld [vmem:[%s643 + $0x70] sm:$0xff]
  %v659 = vld [vmem:[%s643 + $0x78] sm:$0xff]
  %v660 = vld [vmem:[%s643 + $0x80] sm:$0xff]
  %v661 = vld [vmem:[%s643 + $0x88] sm:$0xff]
  %v662 = vld [vmem:[%s643 + $0x90] sm:$0xff]
  %v663 = vld [vmem:[%s643 + $0x98] sm:$0xff]
  %v664 = vld [vmem:[%s643 + $0xa0] sm:$0xff]
  %v665 = vld [vmem:[%s643 + $0xa8] sm:$0xff]
  %v666 = vld [vmem:[%s643 + $0xb0] sm:$0xff]
  %v667 = vld [vmem:[%s643 + $0xb8] sm:$0xff]
  %v668 = vld [vmem:[%s643 + $0xc0] sm:$0xff]
  %v669 = vld [vmem:[%s643 + $0xc8] sm:$0xff]
  %v670 = vld [vmem:[%s643 + $0xd0] sm:$0xff]
  %v671 = vld [vmem:[%s643 + $0xd8] sm:$0xff]
  %v672 = vld [vmem:[%s643 + $0xe0] sm:$0xff]
  %v673 = vld [vmem:[%s643 + $0xe8] sm:$0xff]
  %v674 = vld [vmem:[%s643 + $0xf0] sm:$0xff]
  %v675 = vld [vmem:[%s643 + $0xf8] sm:$0xff]
  %676 = vmatprep.subr.mxu0 %v645
  %677 = vmatpush1.msra.mxu0 %v644
  %678 = vmatprep.subr.mxu0 %v653
  %679 = vmatpush1.msra.mxu0 %v652
  %680 = vmatprep.subr.mxu0 %v661
  %681 = vmatpush1.msra.mxu0 %v660
  %682 = vmatprep.subr.mxu0 %v669
  %683 = vmatpush1.msra.mxu0 %v668
  %684 = vmatprep.subr.mxu0 0.0
  %685 = vmatpush1.msra.mxu0 0.0
  %686 = vmatprep.subr.mxu0 0.0
  %687 = vmatpush1.msra.mxu0 0.0
  %688 = vmatprep.subr.mxu0 0.0
  %689 = vmatpush1.msra.mxu0 0.0
  %690 = vmatprep.subr.mxu0 0.0
  %691 = vmatpush1.msra.mxu0 0.0
  %692 = vmatprep.subr.mxu0 0.0
  %693 = vmatpush1.msra.mxu0 0.0
  %694 = vmatprep.subr.mxu0 0.0
  %695 = vmatpush1.msra.mxu0 0.0
  %696 = vmatprep.subr.mxu0 0.0
  %697 = vmatpush1.msra.mxu0 0.0
  %698 = vmatprep.subr.mxu0 0.0
  %699 = vmatpush1.msra.mxu0 0.0
  %700 = vmatprep.subr.mxu0 0.0
  %701 = vmatpush1.msra.mxu0 0.0
  %702 = vmatprep.subr.mxu0 0.0
  %703 = vmatpush1.msra.mxu0 0.0
  %704 = vmatprep.subr.mxu0 0.0
  %705 = vmatpush1.msra.mxu0 0.0
  %706 = vmatprep.subr.mxu0 0.0
  %707 = vmatpush1.msra.mxu0 0.0
  %708 = vmatprep.subr.mxu0 0.0
  %709 = vmatpush1.msra.mxu0 0.0
  %710 = vmatprep.subr.mxu0 0.0
  %711 = vmatpush1.msra.mxu0 0.0
  %712 = vmatprep.subr.mxu0 0.0
  %713 = vmatpush1.msra.mxu0 0.0
  %714 = vmatprep.subr.mxu0 0.0
  %715 = vmatpush1.msra.mxu0 0.0
  %716 = vmatprep.subr.mxu0 0.0
  %717 = vmatpush1.msra.mxu0 0.0
  %718 = vmatprep.subr.mxu0 0.0
  %719 = vmatpush1.msra.mxu0 0.0
  %720 = vmatprep.subr.mxu0 0.0
  %721 = vmatpush1.msra.mxu0 0.0
  %722 = vmatprep.subr.mxu0 0.0
  %723 = vmatpush1.msra.mxu0 0.0
  %724 = vmatprep.subr.mxu0 0.0
  %725 = vmatpush1.msra.mxu0 0.0
  %726 = vmatprep.subr.mxu0 0.0
  %727 = vmatpush1.msra.mxu0 0.0
  %728 = vmatprep.subr.mxu0 0.0
  %729 = vmatpush1.msra.mxu0 0.0
  %730 = vmatprep.subr.mxu0 0.0
  %731 = vmatpush1.msra.mxu0 0.0
  %732 = vmatprep.subr.mxu0 0.0
  %733 = vmatpush1.msra.mxu0 0.0
  %734 = vmatprep.subr.mxu0 0.0
  %735 = vmatpush1.msra.mxu0 0.0
  %736 = vmatprep.subr.mxu0 0.0
  %737 = vmatpush1.msra.mxu0 0.0
  %738 = vmatprep.subr.mxu0 0.0
  %739 = vmatpush1.msra.mxu0 0.0
  %740 = vmatprep.mubr.f32.mxu0 0.0
  %741 = vmatmul.mubr.f32.gmra.mrb[0].mxu0 %v104
  %v742 = vpop.f32.mrb[0].mxu0
  %v743 = vadd.f32 %v65, %v742
  %v744 = vpop.f32.mrb[0].mxu0
  %v745 = vadd.f32 %v65, %v744
  %746 = vmatprep.mubr.f32.mxu0 0.0
  %747 = vmatmul.mubr.f32.gmra.mrb[0].mxu0 %v107
  %v748 = vpop.f32.mrb[0].mxu0
  %v749 = vadd.f32 %v70, %v748
  %v750 = vpop.f32.mrb[0].mxu0
  %v751 = vadd.f32 %v70, %v750
  %752 = vmatprep.mubr.f32.mxu0 0.0
  %753 = vmatmul.mubr.f32.gmra.mrb[0].mxu0 %v110
  %v754 = vpop.f32.mrb[0].mxu0
  %v755 = vadd.f32 %v75, %v754
  %v756 = vpop.f32.mrb[0].mxu0
  %v757 = vadd.f32 %v75, %v756
  %758 = vmatprep.mubr.f32.mxu0 0.0
  %759 = vmatmul.mubr.f32.gmra.mrb[0].mxu0 %v113
  %v760 = vpop.f32.mrb[0].mxu0
  %v761 = vadd.f32 %v80, %v760
  %v762 = vpop.f32.mrb[0].mxu0
  %v763 = vadd.f32 %v80, %v762
  %764 = vmatprep.mubr.f32.mxu0 0.0
  %765 = vmatmul.mubr.f32.gmra.mrb[0].mxu0 %v116
  %v766 = vpop.f32.mrb[0].mxu0
  %v767 = vadd.f32 %v85, %v766
  %v768 = vpop.f32.mrb[0].mxu0
  %v769 = vadd.f32 %v85, %v768
  %770 = vmatprep.mubr.f32.mxu0 0.0
  %771 = vmatmul.mubr.f32.gmra.mrb[0].mxu0 %v119
  %v772 = vpop.f32.mrb[0].mxu0
  %v773 = vadd.f32 %v90, %v772
  %v774 = vpop.f32.mrb[0].mxu0
  %v775 = vadd.f32 %v90, %v774
  %776 = vmatprep.mubr.f32.mxu0 0.0
  %777 = vmatmul.mubr.f32.gmra.mrb[0].mxu0 %v122
  %v778 = vpop.f32.mrb[0].mxu0
  %v779 = vadd.f32 %v95, %v778
  %v780 = vpop.f32.mrb[0].mxu0
  %v781 = vadd.f32 %v95, %v780
  %782 = vmatprep.mubr.f32.mxu0 0.0
  %783 = vmatmul.mubr.f32.gmra.mrb[0].mxu0 %v125
  %v784 = vpop.f32.mrb[0].mxu0
  %v785 = vadd.f32 %v100, %v784
  %v786 = vpop.f32.mrb[0].mxu0
  %v787 = vadd.f32 %v100, %v786
  %788 = vdwg.mxu0
  %789 = vmatprep.subr.mxu0 %v647
  %790 = vmatpush1.msra.mxu0 %v646
  %791 = vmatprep.subr.mxu0 %v655
  %792 = vmatpush1.msra.mxu0 %v654
  %793 = vmatprep.subr.mxu0 %v663
  %794 = vmatpush1.msra.mxu0 %v662
  %795 = vmatprep.subr.mxu0 %v671
  %796 = vmatpush1.msra.mxu0 %v670
  %797 = vmatprep.subr.mxu0 0.0
  %798 = vmatpush1.msra.mxu0 0.0
  %799 = vmatprep.subr.mxu0 0.0
  %800 = vmatpush1.msra.mxu0 0.0
  %801 = vmatprep.subr.mxu0 0.0
  %802 = vmatpush1.msra.mxu0 0.0
  %803 = vmatprep.subr.mxu0 0.0
  %804 = vmatpush1.msra.mxu0 0.0
  %805 = vmatprep.subr.mxu0 0.0
  %806 = vmatpush1.msra.mxu0 0.0
  %807 = vmatprep.subr.mxu0 0.0
  %808 = vmatpush1.msra.mxu0 0.0
  %809 = vmatprep.subr.mxu0 0.0
  %810 = vmatpush1.msra.mxu0 0.0
  %811 = vmatprep.subr.mxu0 0.0
  %812 = vmatpush1.msra.mxu0 0.0
  %813 = vmatprep.subr.mxu0 0.0
  %814 = vmatpush1.msra.mxu0 0.0
  %815 = vmatprep.subr.mxu0 0.0
  %816 = vmatpush1.msra.mxu0 0.0
  %817 = vmatprep.subr.mxu0 0.0
  %818 = vmatpush1.msra.mxu0 0.0
  %819 = vmatprep.subr.mxu0 0.0
  %820 = vmatpush1.msra.mxu0 0.0
  %821 = vmatprep.subr.mxu0 0.0
  %822 = vmatpush1.msra.mxu0 0.0
  %823 = vmatprep.subr.mxu0 0.0
  %824 = vmatpush1.msra.mxu0 0.0
  %825 = vmatprep.subr.mxu0 0.0
  %826 = vmatpush1.msra.mxu0 0.0
  %827 = vmatprep.subr.mxu0 0.0
  %828 = vmatpush1.msra.mxu0 0.0
  %829 = vmatprep.subr.mxu0 0.0
  %830 = vmatpush1.msra.mxu0 0.0
  %831 = vmatprep.subr.mxu0 0.0
  %832 = vmatpush1.msra.mxu0 0.0
  %833 = vmatprep.subr.mxu0 0.0
  %834 = vmatpush1.msra.mxu0 0.0
  %835 = vmatprep.subr.mxu0 0.0
  %836 = vmatpush1.msra.mxu0 0.0
  %837 = vmatprep.subr.mxu0 0.0
  %838 = vmatpush1.msra.mxu0 0.0
  %839 = vmatprep.subr.mxu0 0.0
  %840 = vmatpush1.msra.mxu0 0.0
  %841 = vmatprep.subr.mxu0 0.0
  %842 = vmatpush1.msra.mxu0 0.0
  %843 = vmatprep.subr.mxu0 0.0
  %844 = vmatpush1.msra.mxu0 0.0
  %845 = vmatprep.subr.mxu0 0.0
  %846 = vmatpush1.msra.mxu0 0.0
  %847 = vmatprep.subr.mxu0 0.0
  %848 = vmatpush1.msra.mxu0 0.0
  %849 = vmatprep.subr.mxu0 0.0
  %850 = vmatpush1.msra.mxu0 0.0
  %851 = vmatprep.subr.mxu0 0.0
  %852 = vmatpush1.msra.mxu0 0.0
  %853 = vmatprep.mubr.f32.mxu0 0.0
  %854 = vmatmul.mubr.f32.gmra.mrb[0].mxu0 %v104
  %v855 = vpop.f32.mrb[0].mxu0
  %v856 = vadd.f32 %v65, %v855
  %v857 = vpop.f32.mrb[0].mxu0
  %v858 = vadd.f32 %v65, %v857
  %859 = vmatprep.mubr.f32.mxu0 0.0
  %860 = vmatmul.mubr.f32.gmra.mrb[0].mxu0 %v107
  %v861 = vpop.f32.mrb[0].mxu0
  %v862 = vadd.f32 %v70, %v861
  %v863 = vpop.f32.mrb[0].mxu0
  %v864 = vadd.f32 %v70, %v863
  %865 = vmatprep.mubr.f32.mxu0 0.0
  %866 = vmatmul.mubr.f32.gmra.mrb[0].mxu0 %v110
  %v867 = vpop.f32.mrb[0].mxu0
  %v868 = vadd.f32 %v75, %v867
  %v869 = vpop.f32.mrb[0].mxu0
  %v870 = vadd.f32 %v75, %v869
  %871 = vmatprep.mubr.f32.mxu0 0.0
  %872 = vmatmul.mubr.f32.gmra.mrb[0].mxu0 %v113
  %v873 = vpop.f32.mrb[0].mxu0
  %v874 = vadd.f32 %v80, %v873
  %v875 = vpop.f32.mrb[0].mxu0
  %v876 = vadd.f32 %v80, %v875
  %877 = vmatprep.mubr.f32.mxu0 0.0
  %878 = vmatmul.mubr.f32.gmra.mrb[0].mxu0 %v116
  %v879 = vpop.f32.mrb[0].mxu0
  %v880 = vadd.f32 %v85, %v879
  %v881 = vpop.f32.mrb[0].mxu0
  %v882 = vadd.f32 %v85, %v881
  %883 = vmatprep.mubr.f32.mxu0 0.0
  %884 = vmatmul.mubr.f32.gmra.mrb[0].mxu0 %v119
  %v885 = vpop.f32.mrb[0].mxu0
  %v886 = vadd.f32 %v90, %v885
  %v887 = vpop.f32.mrb[0].mxu0
  %v888 = vadd.f32 %v90, %v887
  %889 = vmatprep.mubr.f32.mxu0 0.0
  %890 = vmatmul.mubr.f32.gmra.mrb[0].mxu0 %v122
  %v891 = vpop.f32.mrb[0].mxu0
  %v892 = vadd.f32 %v95, %v891
  %v893 = vpop.f32.mrb[0].mxu0
  %v894 = vadd.f32 %v95, %v893
  %895 = vmatprep.mubr.f32.mxu0 0.0
  %896 = vmatmul.mubr.f32.gmra.mrb[0].mxu0 %v125
  %v897 = vpop.f32.mrb[0].mxu0
  %v898 = vadd.f32 %v100, %v897
  %v899 = vpop.f32.mrb[0].mxu0
  %v900 = vadd.f32 %v100, %v899
  %901 = vdwg.mxu0
  %902 = vmatprep.subr.mxu0 %v649
  %903 = vmatpush1.msra.mxu0 %v648
  %904 = vmatprep.subr.mxu0 %v657
  %905 = vmatpush1.msra.mxu0 %v656
  %906 = vmatprep.subr.mxu0 %v665
  %907 = vmatpush1.msra.mxu0 %v664
  %908 = vmatprep.subr.mxu0 %v673
  %909 = vmatpush1.msra.mxu0 %v672
  %910 = vmatprep.subr.mxu0 0.0
  %911 = vmatpush1.msra.mxu0 0.0
  %912 = vmatprep.subr.mxu0 0.0
  %913 = vmatpush1.msra.mxu0 0.0
  %914 = vmatprep.subr.mxu0 0.0
  %915 = vmatpush1.msra.mxu0 0.0
  %916 = vmatprep.subr.mxu0 0.0
  %917 = vmatpush1.msra.mxu0 0.0
  %918 = vmatprep.subr.mxu0 0.0
  %919 = vmatpush1.msra.mxu0 0.0
  %920 = vmatprep.subr.mxu0 0.0
  %921 = vmatpush1.msra.mxu0 0.0
  %922 = vmatprep.subr.mxu0 0.0
  %923 = vmatpush1.msra.mxu0 0.0
  %924 = vmatprep.subr.mxu0 0.0
  %925 = vmatpush1.msra.mxu0 0.0
  %926 = vmatprep.subr.mxu0 0.0
  %927 = vmatpush1.msra.mxu0 0.0
  %928 = vmatprep.subr.mxu0 0.0
  %929 = vmatpush1.msra.mxu0 0.0
  %930 = vmatprep.subr.mxu0 0.0
  %931 = vmatpush1.msra.mxu0 0.0
  %932 = vmatprep.subr.mxu0 0.0
  %933 = vmatpush1.msra.mxu0 0.0
  %934 = vmatprep.subr.mxu0 0.0
  %935 = vmatpush1.msra.mxu0 0.0
  %936 = vmatprep.subr.mxu0 0.0
  %937 = vmatpush1.msra.mxu0 0.0
  %938 = vmatprep.subr.mxu0 0.0
  %939 = vmatpush1.msra.mxu0 0.0
  %940 = vmatprep.subr.mxu0 0.0
  %941 = vmatpush1.msra.mxu0 0.0
  %942 = vmatprep.subr.mxu0 0.0
  %943 = vmatpush1.msra.mxu0 0.0
  %944 = vmatprep.subr.mxu0 0.0
  %945 = vmatpush1.msra.mxu0 0.0
  %946 = vmatprep.subr.mxu0 0.0
  %947 = vmatpush1.msra.mxu0 0.0
  %948 = vmatprep.subr.mxu0 0.0
  %949 = vmatpush1.msra.mxu0 0.0
  %950 = vmatprep.subr.mxu0 0.0
  %951 = vmatpush1.msra.mxu0 0.0
  %952 = vmatprep.subr.mxu0 0.0
  %953 = vmatpush1.msra.mxu0 0.0
  %954 = vmatprep.subr.mxu0 0.0
  %955 = vmatpush1.msra.mxu0 0.0
  %956 = vmatprep.subr.mxu0 0.0
  %957 = vmatpush1.msra.mxu0 0.0
  %958 = vmatprep.subr.mxu0 0.0
  %959 = vmatpush1.msra.mxu0 0.0
  %960 = vmatprep.subr.mxu0 0.0
  %961 = vmatpush1.msra.mxu0 0.0
  %962 = vmatprep.subr.mxu0 0.0
  %963 = vmatpush1.msra.mxu0 0.0
  %964 = vmatprep.subr.mxu0 0.0
  %965 = vmatpush1.msra.mxu0 0.0
  %966 = vmatprep.mubr.f32.mxu0 0.0
  %967 = vmatmul.mubr.f32.gmra.mrb[0].mxu0 %v104
  %v968 = vpop.f32.mrb[0].mxu0
  %v969 = vadd.f32 %v65, %v968
  %v970 = vpop.f32.mrb[0].mxu0
  %v971 = vadd.f32 %v65, %v970
  %972 = vmatprep.mubr.f32.mxu0 0.0
  %973 = vmatmul.mubr.f32.gmra.mrb[0].mxu0 %v107
  %v974 = vpop.f32.mrb[0].mxu0
  %v975 = vadd.f32 %v70, %v974
  %v976 = vpop.f32.mrb[0].mxu0
  %v977 = vadd.f32 %v70, %v976
  %978 = vmatprep.mubr.f32.mxu0 0.0
  %979 = vmatmul.mubr.f32.gmra.mrb[0].mxu0 %v110
  %v980 = vpop.f32.mrb[0].mxu0
  %v981 = vadd.f32 %v75, %v980
  %v982 = vpop.f32.mrb[0].mxu0
  %v983 = vadd.f32 %v75, %v982
  %984 = vmatprep.mubr.f32.mxu0 0.0
  %985 = vmatmul.mubr.f32.gmra.mrb[0].mxu0 %v113
  %v986 = vpop.f32.mrb[0].mxu0
  %v987 = vadd.f32 %v80, %v986
  %v988 = vpop.f32.mrb[0].mxu0
  %v989 = vadd.f32 %v80, %v988
  %990 = vmatprep.mubr.f32.mxu0 0.0
  %991 = vmatmul.mubr.f32.gmra.mrb[0].mxu0 %v116
  %v992 = vpop.f32.mrb[0].mxu0
  %v993 = vadd.f32 %v85, %v992
  %v994 = vpop.f32.mrb[0].mxu0
  %v995 = vadd.f32 %v85, %v994
  %996 = vmatprep.mubr.f32.mxu0 0.0
  %997 = vmatmul.mubr.f32.gmra.mrb[0].mxu0 %v119
  %v998 = vpop.f32.mrb[0].mxu0
  %v999 = vadd.f32 %v90, %v998
  %v1000 = vpop.f32.mrb[0].mxu0
  %v1001 = vadd.f32 %v90, %v1000
  %1002 = vmatprep.mubr.f32.mxu0 0.0
  %1003 = vmatmul.mubr.f32.gmra.mrb[0].mxu0 %v122
  %v1004 = vpop.f32.mrb[0].mxu0
  %v1005 = vadd.f32 %v95, %v1004
  %v1006 = vpop.f32.mrb[0].mxu0
  %v1007 = vadd.f32 %v95, %v1006
  %1008 = vmatprep.mubr.f32.mxu0 0.0
  %1009 = vmatmul.mubr.f32.gmra.mrb[0].mxu0 %v125
  %v1010 = vpop.f32.mrb[0].mxu0
  %v1011 = vadd.f32 %v100, %v1010
  %v1012 = vpop.f32.mrb[0].mxu0
  %v1013 = vadd.f32 %v100, %v1012
  %1014 = vdwg.mxu0
  %1015 = vmatprep.subr.mxu0 %v651
  %1016 = vmatpush1.msra.mxu0 %v650
  %1017 = vmatprep.subr.mxu0 %v659
  %1018 = vmatpush1.msra.mxu0 %v658
  %1019 = vmatprep.subr.mxu0 %v667
  %1020 = vmatpush1.msra.mxu0 %v666
  %1021 = vmatprep.subr.mxu0 %v675
  %1022 = vmatpush1.msra.mxu0 %v674
  %1023 = vmatprep.subr.mxu0 0.0
  %1024 = vmatpush1.msra.mxu0 0.0
  %1025 = vmatprep.subr.mxu0 0.0
  %1026 = vmatpush1.msra.mxu0 0.0
  %1027 = vmatprep.subr.mxu0 0.0
  %1028 = vmatpush1.msra.mxu0 0.0
  %1029 = vmatprep.subr.mxu0 0.0
  %1030 = vmatpush1.msra.mxu0 0.0
  %1031 = vmatprep.subr.mxu0 0.0
  %1032 = vmatpush1.msra.mxu0 0.0
  %1033 = vmatprep.subr.mxu0 0.0
  %1034 = vmatpush1.msra.mxu0 0.0
  %1035 = vmatprep.subr.mxu0 0.0
  %1036 = vmatpush1.msra.mxu0 0.0
  %1037 = vmatprep.subr.mxu0 0.0
  %1038 = vmatpush1.msra.mxu0 0.0
  %1039 = vmatprep.subr.mxu0 0.0
  %1040 = vmatpush1.msra.mxu0 0.0
  %1041 = vmatprep.subr.mxu0 0.0
  %1042 = vmatpush1.msra.mxu0 0.0
  %1043 = vmatprep.subr.mxu0 0.0
  %1044 = vmatpush1.msra.mxu0 0.0
  %1045 = vmatprep.subr.mxu0 0.0
  %1046 = vmatpush1.msra.mxu0 0.0
  %1047 = vmatprep.subr.mxu0 0.0
  %1048 = vmatpush1.msra.mxu0 0.0
  %1049 = vmatprep.subr.mxu0 0.0
  %1050 = vmatpush1.msra.mxu0 0.0
  %1051 = vmatprep.subr.mxu0 0.0
  %1052 = vmatpush1.msra.mxu0 0.0
  %1053 = vmatprep.subr.mxu0 0.0
  %1054 = vmatpush1.msra.mxu0 0.0
  %1055 = vmatprep.subr.mxu0 0.0
  %1056 = vmatpush1.msra.mxu0 0.0
  %1057 = vmatprep.subr.mxu0 0.0
  %1058 = vmatpush1.msra.mxu0 0.0
  %1059 = vmatprep.subr.mxu0 0.0
  %1060 = vmatpush1.msra.mxu0 0.0
  %1061 = vmatprep.subr.mxu0 0.0
  %1062 = vmatpush1.msra.mxu0 0.0
  %1063 = vmatprep.subr.mxu0 0.0
  %1064 = vmatpush1.msra.mxu0 0.0
  %1065 = vmatprep.subr.mxu0 0.0
  %1066 = vmatpush1.msra.mxu0 0.0
  %1067 = vmatprep.subr.mxu0 0.0
  %1068 = vmatpush1.msra.mxu0 0.0
  %1069 = vmatprep.subr.mxu0 0.0
  %1070 = vmatpush1.msra.mxu0 0.0
  %1071 = vmatprep.subr.mxu0 0.0
  %1072 = vmatpush1.msra.mxu0 0.0
  %1073 = vmatprep.subr.mxu0 0.0
  %1074 = vmatpush1.msra.mxu0 0.0
  %1075 = vmatprep.subr.mxu0 0.0
  %1076 = vmatpush1.msra.mxu0 0.0
  %1077 = vmatprep.subr.mxu0 0.0
  %1078 = vmatpush1.msra.mxu0 0.0
  %1079 = vmatprep.mubr.f32.mxu0 0.0
  %1080 = vmatmul.mubr.f32.gmra.mrb[0].mxu0 %v104
  %v1081 = vpop.f32.mrb[0].mxu0
  %v1082 = vadd.f32 %v65, %v1081
  %v1083 = vpop.f32.mrb[0].mxu0
  %v1084 = vadd.f32 %v65, %v1083
  %1085 = vmatprep.mubr.f32.mxu0 0.0
  %1086 = vmatmul.mubr.f32.gmra.mrb[0].mxu0 %v107
  %v1087 = vpop.f32.mrb[0].mxu0
  %v1088 = vadd.f32 %v70, %v1087
  %v1089 = vpop.f32.mrb[0].mxu0
  %v1090 = vadd.f32 %v70, %v1089
  %1091 = vmatprep.mubr.f32.mxu0 0.0
  %1092 = vmatmul.mubr.f32.gmra.mrb[0].mxu0 %v110
  %v1093 = vpop.f32.mrb[0].mxu0
  %v1094 = vadd.f32 %v75, %v1093
  %v1095 = vpop.f32.mrb[0].mxu0
  %v1096 = vadd.f32 %v75, %v1095
  %1097 = vmatprep.mubr.f32.mxu0 0.0
  %1098 = vmatmul.mubr.f32.gmra.mrb[0].mxu0 %v113
  %v1099 = vpop.f32.mrb[0].mxu0
  %v1100 = vadd.f32 %v80, %v1099
  %v1101 = vpop.f32.mrb[0].mxu0
  %v1102 = vadd.f32 %v80, %v1101
  %1103 = vmatprep.mubr.f32.mxu0 0.0
  %1104 = vmatmul.mubr.f32.gmra.mrb[0].mxu0 %v116
  %v1105 = vpop.f32.mrb[0].mxu0
  %v1106 = vadd.f32 %v85, %v1105
  %v1107 = vpop.f32.mrb[0].mxu0
  %v1108 = vadd.f32 %v85, %v1107
  %1109 = vmatprep.mubr.f32.mxu0 0.0
  %1110 = vmatmul.mubr.f32.gmra.mrb[0].mxu0 %v119
  %v1111 = vpop.f32.mrb[0].mxu0
  %v1112 = vadd.f32 %v90, %v1111
  %v1113 = vpop.f32.mrb[0].mxu0
  %v1114 = vadd.f32 %v90, %v1113
  %1115 = vmatprep.mubr.f32.mxu0 0.0
  %1116 = vmatmul.mubr.f32.gmra.mrb[0].mxu0 %v122
  %v1117 = vpop.f32.mrb[0].mxu0
  %v1118 = vadd.f32 %v95, %v1117
  %v1119 = vpop.f32.mrb[0].mxu0
  %v1120 = vadd.f32 %v95, %v1119
  %1121 = vmatprep.mubr.f32.mxu0 0.0
  %1122 = vmatmul.mubr.f32.gmra.mrb[0].mxu0 %v125
  %v1123 = vpop.f32.mrb[0].mxu0
  %v1124 = vadd.f32 %v100, %v1123
  %v1125 = vpop.f32.mrb[0].mxu0
  %v1126 = vadd.f32 %v100, %v1125
  %1127 = vdwg.mxu0
  %s1128 = scalar_lea.vmem %s3, 512
  %1129 = vst [vmem:[%s1128] sm:$0xff] %v743
  %1130 = vst [vmem:[%s1128 + $0x8] sm:$0xff] %v745
  %1131 = vst [vmem:[%s1128 + $0x10] sm:$0xff] %v856
  %1132 = vst [vmem:[%s1128 + $0x18] sm:$0xff] %v858
  %1133 = vst [vmem:[%s1128 + $0x20] sm:$0xff] %v969
  %1134 = vst [vmem:[%s1128 + $0x28] sm:$0xff] %v971
  %1135 = vst [vmem:[%s1128 + $0x30] sm:$0xff] %v1082
  %1136 = vst [vmem:[%s1128 + $0x38] sm:$0xff] %v1084
  %1137 = vst [vmem:[%s1128 + $0x40] sm:$0xff] %v749
  %1138 = vst [vmem:[%s1128 + $0x48] sm:$0xff] %v751
  %1139 = vst [vmem:[%s1128 + $0x50] sm:$0xff] %v862
  %1140 = vst [vmem:[%s1128 + $0x58] sm:$0xff] %v864
  %1141 = vst [vmem:[%s1128 + $0x60] sm:$0xff] %v975
  %1142 = vst [vmem:[%s1128 + $0x68] sm:$0xff] %v977
  %1143 = vst [vmem:[%s1128 + $0x70] sm:$0xff] %v1088
  %1144 = vst [vmem:[%s1128 + $0x78] sm:$0xff] %v1090
  %1145 = vst [vmem:[%s1128 + $0x80] sm:$0xff] %v755
  %1146 = vst [vmem:[%s1128 + $0x88] sm:$0xff] %v757
  %1147 = vst [vmem:[%s1128 + $0x90] sm:$0xff] %v868
  %1148 = vst [vmem:[%s1128 + $0x98] sm:$0xff] %v870
  %1149 = vst [vmem:[%s1128 + $0xa0] sm:$0xff] %v981
  %1150 = vst [vmem:[%s1128 + $0xa8] sm:$0xff] %v983
  %1151 = vst [vmem:[%s1128 + $0xb0] sm:$0xff] %v1094
  %1152 = vst [vmem:[%s1128 + $0xb8] sm:$0xff] %v1096
  %1153 = vst [vmem:[%s1128 + $0xc0] sm:$0xff] %v761
  %1154 = vst [vmem:[%s1128 + $0xc8] sm:$0xff] %v763
  %1155 = vst [vmem:[%s1128 + $0xd0] sm:$0xff] %v874
  %1156 = vst [vmem:[%s1128 + $0xd8] sm:$0xff] %v876
  %1157 = vst [vmem:[%s1128 + $0xe0] sm:$0xff] %v987
  %1158 = vst [vmem:[%s1128 + $0xe8] sm:$0xff] %v989
  %1159 = vst [vmem:[%s1128 + $0xf0] sm:$0xff] %v1100
  %1160 = vst [vmem:[%s1128 + $0xf8] sm:$0xff] %v1102
  %1161 = vst [vmem:[%s1128 + $0x100] sm:$0xff] %v767
  %1162 = vst [vmem:[%s1128 + $0x108] sm:$0xff] %v769
  %1163 = vst [vmem:[%s1128 + $0x110] sm:$0xff] %v880
  %1164 = vst [vmem:[%s1128 + $0x118] sm:$0xff] %v882
  %1165 = vst [vmem:[%s1128 + $0x120] sm:$0xff] %v993
  %1166 = vst [vmem:[%s1128 + $0x128] sm:$0xff] %v995
  %1167 = vst [vmem:[%s1128 + $0x130] sm:$0xff] %v1106
  %1168 = vst [vmem:[%s1128 + $0x138] sm:$0xff] %v1108
  %1169 = vst [vmem:[%s1128 + $0x140] sm:$0xff] %v773
  %1170 = vst [vmem:[%s1128 + $0x148] sm:$0xff] %v775
  %1171 = vst [vmem:[%s1128 + $0x150] sm:$0xff] %v886
  %1172 = vst [vmem:[%s1128 + $0x158] sm:$0xff] %v888
  %1173 = vst [vmem:[%s1128 + $0x160] sm:$0xff] %v999
  %1174 = vst [vmem:[%s1128 + $0x168] sm:$0xff] %v1001
  %1175 = vst [vmem:[%s1128 + $0x170] sm:$0xff] %v1112
  %1176 = vst [vmem:[%s1128 + $0x178] sm:$0xff] %v1114
  %1177 = vst [vmem:[%s1128 + $0x180] sm:$0xff] %v779
  %1178 = vst [vmem:[%s1128 + $0x188] sm:$0xff] %v781
  %1179 = vst [vmem:[%s1128 + $0x190] sm:$0xff] %v892
  %1180 = vst [vmem:[%s1128 + $0x198] sm:$0xff] %v894
  %1181 = vst [vmem:[%s1128 + $0x1a0] sm:$0xff] %v1005
  %1182 = vst [vmem:[%s1128 + $0x1a8] sm:$0xff] %v1007
  %1183 = vst [vmem:[%s1128 + $0x1b0] sm:$0xff] %v1118
  %1184 = vst [vmem:[%s1128 + $0x1b8] sm:$0xff] %v1120
  %1185 = vst [vmem:[%s1128 + $0x1c0] sm:$0xff] %v785
  %1186 = vst [vmem:[%s1128 + $0x1c8] sm:$0xff] %v787
  %1187 = vst [vmem:[%s1128 + $0x1d0] sm:$0xff] %v898
  %1188 = vst [vmem:[%s1128 + $0x1d8] sm:$0xff] %v900
  %1189 = vst [vmem:[%s1128 + $0x1e0] sm:$0xff] %v1011
  %1190 = vst [vmem:[%s1128 + $0x1e8] sm:$0xff] %v1013
  %1191 = vst [vmem:[%s1128 + $0x1f0] sm:$0xff] %v1124
  %1192 = vst [vmem:[%s1128 + $0x1f8] sm:$0xff] %v1126
  // Predicated region
  $region14: #{forward.2} parent=0 // pred_check
    _
  $region15: #{forward.2} parent=0 // pred_check_branch
    %1194 = sbr.rel (0) target = $region17
  $region16: #{forward.2} parent=0 // pred_region
    _
  $region17: #{forward.2} parent=0 // pred_fallthru
    _
  // Predicated region
  $region18: #{forward.2} parent=0 // pred_check
    _
  $region19: #{forward.2} parent=0 // pred_check_branch
    %1196 = sbr.rel (0) target = $region21
  $region20: #{forward.2} parent=0 // pred_region
    _
  $region21: #{forward.2} parent=0 // pred_fallthru
    _

// kernel: forward.3
$region0: #{forward.3}
  #allocation0 [shape = 'u32[]', space=smem, size = 0x4, offset = 0x4, fixed_abs, tag = 'smem constant byte address 0x4 - core index']
  #allocation1 [shape = 'u32[144,128]{1,0:T(1,128)}', space=vmem, size = 0x12000, scoped, tag = 'internal scratch']
  #allocation2 [shape = 'f32[2,256]{1,0:T(2,128)}', space=vmem, size = 0x800, scoped, tag = 'scratch operand']
  %s0 = inlined_call_operand.hbm [shape: f32[2,65536], index: 0, kind: input, shape index: {}]
  %s1 = inlined_call_operand.vmem [shape: bf16[65536,256], index: 1, kind: input, shape index: {}]
  %s2 = inlined_call_operand.hbm [shape: f32[1,256], index: 2, kind: input, shape index: {}]
  %s3 = inlined_call_operand.hbm [shape: f32[256,256], index: 3, kind: input, shape index: {}]
  %s4 = inlined_call_operand.hbm [shape: f32[1,256], index: 4, kind: input, shape index: {}]
  %s5 = inlined_call_operand.hbm [shape: f32[256,10], index: 5, kind: input, shape index: {}]
  %s6 = inlined_call_operand.hbm [shape: f32[1,10], index: 6, kind: input, shape index: {}]
  %s7 = inlined_call_operand.hbm [shape: f32[2,10], index: 7, kind: output, shape index: {}]
  %s8 = sld [smem:[#allocation0]]
  $region93: #{forward.3} parent=0
    _
  %s10 = ssub.s32 1, %s8
  %s11 = scalar_select 0, %s10, %s8
  $region1: #{forward.3} parent=0
    #allocation3 [shape = 'u8[131072]{0}', space=vmem, size = 0x20000, scoped, tag = 'input window, operand 0']
    #allocation4 [shape = 's32[2]{0}', space=sflag, size = 0x8, scoped, tag = 'scoped memory for forward.3']
    #allocation5 [shape = 's32[2]{0}', space=sflag, size = 0x8, scoped, tag = 'scoped memory for forward.3']
    #allocation6 [shape = 'u8[1024]{0}', space=vmem, size = 0x400, scoped, tag = 'input window, operand 2, single buffered']
    #allocation7 [shape = 's32[1]{0}', space=sflag, size = 0x4, scoped, tag = 'scoped memory for forward.3']
    #allocation8 [shape = 'u8[262144]{0}', space=vmem, size = 0x40000, scoped, tag = 'input window, operand 3, single buffered']
    #allocation9 [shape = 'u8[1024]{0}', space=vmem, size = 0x400, scoped, tag = 'input window, operand 4, single buffered']
    #allocation10 [shape = 's32[1]{0}', space=sflag, size = 0x4, scoped, tag = 'scoped memory for forward.3']
    #allocation11 [shape = 'u8[131072]{0}', space=vmem, size = 0x20000, scoped, tag = 'input window, operand 5, single buffered']
    #allocation12 [shape = 'u8[512]{0}', space=vmem, size = 0x400, scoped, tag = 'input window, operand 6, single buffered']
    #allocation13 [shape = 's32[1]{0}', space=sflag, size = 0x4, scoped, tag = 'scoped memory for forward.3']
    #allocation14 [shape = 'u8[1024]{0}', space=vmem, size = 0x400, scoped, tag = 'output window, operand 0, single buffered']
    %12 = vsyncpa [#allocation4], 0
    %s13 = scalar_lea.sflag [#allocation4], 1
    %14 = vsyncpa %s13, 0
    %15 = vsyncpa [#allocation7], 0
    %16 = vsyncpa [#allocation10], 0
    %17 = vsyncpa [#allocation13], 0
    %18 = vsyncpa [#allocation5], 0
    loop: start=0, step=1, limit=10
    $region2: #{forward.3} parent=1 // loop_pre_header
      _
    $region3: #{forward.3} parent=1 // loop_header
      %s20 = sphi 0, %s24
      %p21 = scmp.ge.s32.totalorder %s20, 10
      %s30 = sphi 0, %s32
      %s33 = sphi 0, %s30
      %s34 = sphi 0, %s33
      %s50 = sphi 0, %s34
      %s56 = sphi 0, %s58
      %s59 = sphi 0, %s56
      %s60 = sphi 0, %s59
      %s76 = sphi 0, %s60
      %s80 = sphi 0, %s80
      %s82 = sphi 0, %s80
      %s83 = sphi 0, %s82
      %s97 = sphi 0, %s83
      %s101 = sphi 0, %s101
      %s103 = sphi 0, %s101
      %s104 = sphi 0, %s103
      %s118 = sphi 0, %s104
      %s122 = sphi 0, %s122
      %s124 = sphi 0, %s122
      %s125 = sphi 0, %s124
      %s139 = sphi 0, %s125
      %s143 = sphi 0, %s143
      %s145 = sphi 0, %s143
      %s146 = sphi 0, %s145
      %s160 = sphi 0, %s146
      %s164 = sphi 0, %s164
      %s166 = sphi 0, %s164
      %s167 = sphi 0, %s166
      %s181 = sphi 0, %s167
      %s185 = sphi 0, %s185
      %s187 = sphi 0, %s185
      %s188 = sphi 0, %s187
      %s202 = sphi 0, %s188
    $region4: #{forward.3} parent=1 // loop_header_branch
      %23 = sbr.rel (%p21) target = $region8
    $region5: #{forward.3} parent=1 // loop_body
      %s25 = ssub.s32 %s20, 1
      %s26 = ssub.s32 %s20, 2
      %s27 = sadd.s32 %s20, 1
      %s28 = ssub.s32 %s20, %s27
      %p29 = scmp.eq.s32.totalorder %s28, 0
      %s31 = sadd.s32 %s30, 1
      %s32 = scalar_select %p29, %s30, %s31
      %p35 = pneg %p29
      %p36 = scmp.eq.s32.totalorder %s20, 7
      %p37 = por %p35, %p36
      %p38 = scmp.ne.s32.totalorder %s30, %s33
      %p39 = scmp.eq.s32.totalorder %s20, 0
      %p40 = por %p38, %p39
      %p41 = scmp.ne.s32.totalorder %s30, %s33
      %p42 = scmp.eq.s32.totalorder %s25, 7
      %p43 = por %p41, %p42
      %p44 = scmp.ne.s32.totalorder %s33, %s34
      %p45 = scmp.eq.s32.totalorder %s25, 0
      %p46 = por %p44, %p45
      %p47 = scmp.ne.s32.totalorder %s33, %s34
      %p48 = scmp.eq.s32.totalorder %s26, 7
      %p49 = por %p47, %p48
      %p51 = scmp.ne.s32.totalorder %s34, %s50
      %p52 = scmp.eq.s32.totalorder %s26, 0
      %p53 = por %p51, %p52
      %s54 = ssub.s32 %s20, %s27
      %p55 = scmp.eq.s32.totalorder %s54, 0
      %s57 = sadd.s32 %s56, 1
      %s58 = scalar_select %p55, %s56, %s57
      %p61 = pneg %p55
      %p62 = scmp.eq.s32.totalorder %s20, 7
      %p63 = por %p61, %p62
      %p64 = scmp.ne.s32.totalorder %s56, %s59
      %p65 = scmp.eq.s32.totalorder %s20, 0
      %p66 = por %p64, %p65
      %p67 = scmp.ne.s32.totalorder %s56, %s59
      %p68 = scmp.eq.s32.totalorder %s25, 7
      %p69 = por %p67, %p68
      %p70 = scmp.ne.s32.totalorder %s59, %s60
      %p71 = scmp.eq.s32.totalorder %s25, 0
      %p72 = por %p70, %p71
      %p73 = scmp.ne.s32.totalorder %s59, %s60
      %p74 = scmp.eq.s32.totalorder %s26, 7
      %p75 = por %p73, %p74
      %p77 = scmp.ne.s32.totalorder %s60, %s76
      %p78 = scmp.eq.s32.totalorder %s26, 0
      %p79 = por %p77, %p78
      %s81 = sadd.s32 %s80, 1
      %p84 = scmp.eq.s32.totalorder %s20, 7
      %p85 = scmp.ne.s32.totalorder %s80, %s82
      %p86 = scmp.eq.s32.totalorder %s20, 0
      %p87 = por %p85, %p86
      %p88 = scmp.ne.s32.totalorder %s80, %s82
      %p89 = scmp.eq.s32.totalorder %s25, 7
      %p90 = por %p88, %p89
      %p91 = scmp.ne.s32.totalorder %s82, %s83
      %p92 = scmp.eq.s32.totalorder %s25, 0
      %p93 = por %p91, %p92
      %p94 = scmp.ne.s32.totalorder %s82, %s83
      %p95 = scmp.eq.s32.totalorder %s26, 7
      %p96 = por %p94, %p95
      %p98 = scmp.ne.s32.totalorder %s83, %s97
      %p99 = scmp.eq.s32.totalorder %s26, 0
      %p100 = por %p98, %p99
      %s102 = sadd.s32 %s101, 1
      %p105 = scmp.eq.s32.totalorder %s20, 7
      %p106 = scmp.ne.s32.totalorder %s101, %s103
      %p107 = scmp.eq.s32.totalorder %s20, 0
      %p108 = por %p106, %p107
      %p109 = scmp.ne.s32.totalorder %s101, %s103
      %p110 = scmp.eq.s32.totalorder %s25, 7
      %p111 = por %p109, %p110
      %p112 = scmp.ne.s32.totalorder %s103, %s104
      %p113 = scmp.eq.s32.totalorder %s25, 0
      %p114 = por %p112, %p113
      %p115 = scmp.ne.s32.totalorder %s103, %s104
      %p116 = scmp.eq.s32.totalorder %s26, 7
      %p117 = por %p115, %p116
      %p119 = scmp.ne.s32.totalorder %s104, %s118
      %p120 = scmp.eq.s32.totalorder %s26, 0
      %p121 = por %p119, %p120
      %s123 = sadd.s32 %s122, 1
      %p126 = scmp.eq.s32.totalorder %s20, 7
      %p127 = scmp.ne.s32.totalorder %s122, %s124
      %p128 = scmp.eq.s32.totalorder %s20, 0
      %p129 = por %p127, %p128
      %p130 = scmp.ne.s32.totalorder %s122, %s124
      %p131 = scmp.eq.s32.totalorder %s25, 7
      %p132 = por %p130, %p131
      %p133 = scmp.ne.s32.totalorder %s124, %s125
      %p134 = scmp.eq.s32.totalorder %s25, 0
      %p135 = por %p133, %p134
      %p136 = scmp.ne.s32.totalorder %s124, %s125
      %p137 = scmp.eq.s32.totalorder %s26, 7
      %p138 = por %p136, %p137
      %p140 = scmp.ne.s32.totalorder %s125, %s139
      %p141 = scmp.eq.s32.totalorder %s26, 0
      %p142 = por %p140, %p141
      %s144 = sadd.s32 %s143, 1
      %p147 = scmp.eq.s32.totalorder %s20, 7
      %p148 = scmp.ne.s32.totalorder %s143, %s145
      %p149 = scmp.eq.s32.totalorder %s20, 0
      %p150 = por %p148, %p149
      %p151 = scmp.ne.s32.totalorder %s143, %s145
      %p152 = scmp.eq.s32.totalorder %s25, 7
      %p153 = por %p151, %p152
      %p154 = scmp.ne.s32.totalorder %s145, %s146
      %p155 = scmp.eq.s32.totalorder %s25, 0
      %p156 = por %p154, %p155
      %p157 = scmp.ne.s32.totalorder %s145, %s146
      %p158 = scmp.eq.s32.totalorder %s26, 7
      %p159 = por %p157, %p158
      %p161 = scmp.ne.s32.totalorder %s146, %s160
      %p162 = scmp.eq.s32.totalorder %s26, 0
      %p163 = por %p161, %p162
      %s165 = sadd.s32 %s164, 1
      %p168 = scmp.eq.s32.totalorder %s20, 7
      %p169 = scmp.ne.s32.totalorder %s164, %s166
      %p170 = scmp.eq.s32.totalorder %s20, 0
      %p171 = por %p169, %p170
      %p172 = scmp.ne.s32.totalorder %s164, %s166
      %p173 = scmp.eq.s32.totalorder %s25, 7
      %p174 = por %p172, %p173
      %p175 = scmp.ne.s32.totalorder %s166, %s167
      %p176 = scmp.eq.s32.totalorder %s25, 0
      %p177 = por %p175, %p176
      %p178 = scmp.ne.s32.totalorder %s166, %s167
      %p179 = scmp.eq.s32.totalorder %s26, 7
      %p180 = por %p178, %p179
      %p182 = scmp.ne.s32.totalorder %s167, %s181
      %p183 = scmp.eq.s32.totalorder %s26, 0
      %p184 = por %p182, %p183
      %s186 = sadd.s32 %s185, 1
      %p189 = scmp.eq.s32.totalorder %s20, 7
      %p190 = scmp.ne.s32.totalorder %s185, %s187
      %p191 = scmp.eq.s32.totalorder %s20, 0
      %p192 = por %p190, %p191
      %p193 = scmp.ne.s32.totalorder %s185, %s187
      %p194 = scmp.eq.s32.totalorder %s25, 7
      %p195 = por %p193, %p194
      %p196 = scmp.ne.s32.totalorder %s187, %s188
      %p197 = scmp.eq.s32.totalorder %s25, 0
      %p198 = por %p196, %p197
      %p199 = scmp.ne.s32.totalorder %s187, %s188
      %p200 = scmp.eq.s32.totalorder %s26, 7
      %p201 = por %p199, %p200
      %p203 = scmp.ne.s32.totalorder %s188, %s202
      %p204 = scmp.eq.s32.totalorder %s26, 0
      %p205 = por %p203, %p204
      %p206 = scmp.le.s32.totalorder 1, %s20
      %p207 = scmp.lt.s32.totalorder %s20, 9
      %p208 = pnand %p206, %p207
      %p209 = pneg %p208
      // Predicated region
      $region9: #{forward.3} parent=5 // pred_check
        _
      $region10: #{forward.3} parent=5 // pred_check_branch
        %211 = sbr.rel (%p208) target = $region12
      $region11: #{forward.3} parent=5 // pred_region
        %s212 = ssub.s32 %s20, 1
        // Predicated region
        $region13: #{forward.3} parent=11 // pred_check
          %p213 = pneg %p93
        $region14: #{forward.3} parent=11 // pred_check_branch
          %215 = sbr.rel (%p213) target = $region16
        $region15: #{forward.3} parent=11 // pred_region
          %s217 = ssub.s32 32, 32
          %218 = vsyncadd [#allocation7], %s217
          %s220 = sshll.u32 [#allocation6], 4
          %s221 = int_to_ptr.vmem [resolvable:$true] %s220
          %223 = dma.hbm_to_vmem [thread:$0]  %s2, 32, %s221, [#allocation7]
        $region16: #{forward.3} parent=11 // pred_fallthru
          _
        // Predicated region
        $region17: #{forward.3} parent=11 // pred_check
          %p224 = pneg %p114
        $region18: #{forward.3} parent=11 // pred_check_branch
          %226 = sbr.rel (%p224) target = $region20
        $region19: #{forward.3} parent=11 // pred_region
          %s228 = ssub.s32 8192, 8192
          %229 = vsyncadd [#allocation7], %s228
          %s230 = sshll.u32 [#allocation8], 4
          %s231 = int_to_ptr.vmem [resolvable:$true] %s230
          %236 = dma.hbm_to_vmem [thread:$0]  %s3, 8192, %s231, [#allocation7], 256, 256, 16
        $region20: #{forward.3} parent=11 // pred_fallthru
          _
        // Predicated region
        $region21: #{forward.3} parent=11 // pred_check
          %p237 = pneg %p135
        $region22: #{forward.3} parent=11 // pred_check_branch
          %239 = sbr.rel (%p237) target = $region24
        $region23: #{forward.3} parent=11 // pred_region
          %s241 = ssub.s32 32, 32
          %242 = vsyncadd [#allocation10], %s241
          %s244 = sshll.u32 [#allocation9], 4
          %s245 = int_to_ptr.vmem [resolvable:$true] %s244
          %247 = dma.hbm_to_vmem [thread:$0]  %s4, 32, %s245, [#allocation10]
        $region24: #{forward.3} parent=11 // pred_fallthru
          _
        // Predicated region
        $region25: #{forward.3} parent=11 // pred_check
          %p248 = pneg %p156
        $region26: #{forward.3} parent=11 // pred_check_branch
          %250 = sbr.rel (%p248) target = $region28
        $region27: #{forward.3} parent=11 // pred_region
          %s252 = ssub.s32 4096, 4096
          %253 = vsyncadd [#allocation10], %s252
          %s254 = sshll.u32 [#allocation11], 4
          %s255 = int_to_ptr.vmem [resolvable:$true] %s254
          %260 = dma.hbm_to_vmem [thread:$0]  %s5, 4096, %s255, [#allocation10], 128, 128, 8
        $region28: #{forward.3} parent=11 // pred_fallthru
          _
        // Predicated region
        $region29: #{forward.3} parent=11 // pred_check
          %p261 = pneg %p177
        $region30: #{forward.3} parent=11 // pred_check_branch
          %263 = sbr.rel (%p261) target = $region32
        $region31: #{forward.3} parent=11 // pred_region
          %s265 = ssub.s32 16, 16
          %266 = vsyncadd [#allocation13], %s265
          %s268 = sshll.u32 [#allocation12], 4
          %s269 = int_to_ptr.vmem [resolvable:$true] %s268
          %271 = dma.hbm_to_vmem [thread:$0]  %s6, 16, %s269, [#allocation13]
        $region32: #{forward.3} parent=11 // pred_fallthru
          _
      $region12: #{forward.3} parent=5 // pred_fallthru
        _
      %p272 = scmp.lt.s32.totalorder %s20, 8
      // Predicated region
      $region33: #{forward.3} parent=5 // pred_check
        %p273 = pneg %p272
      $region34: #{forward.3} parent=5 // pred_check_branch
        %275 = sbr.rel (%p273) target = $region36
      $region35: #{forward.3} parent=5 // pred_region
        // Predicated region
        $region37: #{forward.3} parent=35 // pred_check
          %p276 = pneg %p40
        $region38: #{forward.3} parent=35 // pred_check_branch
          %278 = sbr.rel (%p276) target = $region40
        $region39: #{forward.3} parent=35 // pred_region
          %s279 = sand.u32 %s30, 1
          %s280 = scalar_lea.sflag [#allocation4], %s279
          %s281 = sand.u32 %s30, 1
          %s282 = smul.addr %s281, 128
          %s283 = scalar_lea.vmem [#allocation3], %s282
          %s284 = smul.u32 64, %s20
          %s286 = ssub.s32 2048, 2048
          %287 = vsyncadd %s280, %s286
          %s288 = smul.addr %s284, 32
          %s289 = scalar_lea.hbm %s0, %s288
          %s291 = sshll.u32 %s283, 4
          %s292 = int_to_ptr.vmem [resolvable:$true] %s291
          %294 = dma.hbm_to_vmem [thread:$0]  %s289, 2048, %s292, %s280
        $region40: #{forward.3} parent=35 // pred_fallthru
          _
        // Predicated region
        $region41: #{forward.3} parent=35 // pred_check
          %p295 = pneg %p66
        $region42: #{forward.3} parent=35 // pred_check_branch
          %297 = sbr.rel (%p295) target = $region44
        $region43: #{forward.3} parent=35 // pred_region
          %s298 = smul.u32 1024, %s20
          %p299 = scmp.lt.s32.totalorder %s298, 8191
          %s300 = scalar_select %p299, %s298, 8191
          %s301 = smul.addr %s300, 2
          %s302 = smul.addr %s301, 4
          %s303 = scalar_lea.vmem %s1, %s302
          %s304 = smul.u32 1024, %s20
        $region44: #{forward.3} parent=35 // pred_fallthru
          _
      $region36: #{forward.3} parent=5 // pred_fallthru
        _
      %p305 = scmp.le.s32.totalorder 1, %s20
      %p306 = scmp.lt.s32.totalorder %s20, 9
      %p307 = pnand %p305, %p306
      %p308 = pneg %p307
      // Predicated region
      $region45: #{forward.3} parent=5 // pred_check
        _
      $region46: #{forward.3} parent=5 // pred_check_branch
        %310 = sbr.rel (%p307) target = $region48
      $region47: #{forward.3} parent=5 // pred_region
        %s311 = ssub.s32 %s20, 1
        %s312 = sand.u32 %s33, 1
        %s313 = scalar_lea.sflag [#allocation4], %s312
        %s314 = sand.u32 %s33, 1
        %s315 = smul.addr %s314, 128
        %s316 = scalar_lea.vmem [#allocation3], %s315
        // Predicated region
        $region49: #{forward.3} parent=47 // pred_check
          %p317 = pneg %p46
        $region50: #{forward.3} parent=47 // pred_check_branch
          %319 = sbr.rel (%p317) target = $region52
        $region51: #{forward.3} parent=47 // pred_region
          %320 = dma.done %s313, 2048
        $region52: #{forward.3} parent=47 // pred_fallthru
          _
        // Predicated region
        $region53: #{forward.3} parent=47 // pred_check
          %p321 = pneg %p93
        $region54: #{forward.3} parent=47 // pred_check_branch
          %323 = sbr.rel (%p321) target = $region56
        $region55: #{forward.3} parent=47 // pred_region
          %324 = dma.done [#allocation7], 32
        $region56: #{forward.3} parent=47 // pred_fallthru
          _
        // Predicated region
        $region57: #{forward.3} parent=47 // pred_check
          %p325 = pneg %p114
        $region58: #{forward.3} parent=47 // pred_check_branch
          %327 = sbr.rel (%p325) target = $region60
        $region59: #{forward.3} parent=47 // pred_region
          %328 = dma.done [#allocation7], 8192
        $region60: #{forward.3} parent=47 // pred_fallthru
          _
        // Predicated region
        $region61: #{forward.3} parent=47 // pred_check
          %p329 = pneg %p135
        $region62: #{forward.3} parent=47 // pred_check_branch
          %331 = sbr.rel (%p329) target = $region64
        $region63: #{forward.3} parent=47 // pred_region
          %332 = dma.done [#allocation10], 32
        $region64: #{forward.3} parent=47 // pred_fallthru
          _
        // Predicated region
        $region65: #{forward.3} parent=47 // pred_check
          %p333 = pneg %p156
        $region66: #{forward.3} parent=47 // pred_check_branch
          %335 = sbr.rel (%p333) target = $region68
        $region67: #{forward.3} parent=47 // pred_region
          %336 = dma.done [#allocation10], 4096
        $region68: #{forward.3} parent=47 // pred_fallthru
          _
        // Predicated region
        $region69: #{forward.3} parent=47 // pred_check
          %p337 = pneg %p177
        $region70: #{forward.3} parent=47 // pred_check_branch
          %339 = sbr.rel (%p337) target = $region72
        $region71: #{forward.3} parent=47 // pred_region
          %340 = dma.done [#allocation13], 16
        $region72: #{forward.3} parent=47 // pred_fallthru
          _
        %s341 = sand.u32 %s33, 1
        %s342 = scalar_lea.sflag [#allocation4], %s341
        %s343 = sand.u32 %s33, 1
        %s344 = smul.addr %s343, 128
        %s345 = scalar_lea.vmem [#allocation3], %s344
        %p346 = pneg %p46
        %p347 = pneg %p43
        %s348 = smul.u32 1024, %s25
        %p349 = scmp.lt.s32.totalorder %s348, 8191
        %s350 = scalar_select %p349, %s348, 8191
        %s351 = smul.addr %s350, 2
        %s352 = smul.addr %s351, 4
        %s353 = scalar_lea.vmem %s1, %s352
        %p354 = pneg %p72
        %p355 = pneg %p69
        %p356 = pneg %p93
        %p357 = pneg %p90
        %p358 = pneg %p114
        %p359 = pneg %p111
        %p360 = pneg %p135
        %p361 = pneg %p132
        %p362 = pneg %p156
        %p363 = pneg %p153
        %p364 = pneg %p177
        %p365 = pneg %p174
        %p366 = pneg %p198
        %p367 = pneg %p195
        %s368 = smul.u32 64, %s25
        %s369 = smul.u32 1024, %s25
        %p370 = scmp.lt.s32.totalorder %s369, 8191
        %s371 = scalar_select %p370, %s369, 8191
        %s372 = smul.addr %s371, 2
        %s373 = smul.addr %s372, 4
        %s374 = scalar_lea.vmem %s1, %s373
        %s375 = smul.u32 1024, %s25
        %p376 = scmp.eq.s32.totalorder %s25, 0
        // Predicated region
        $region73: #{forward.3} parent=47 // pred_check
          %p377 = pneg %p376
        $region74: #{forward.3} parent=47 // pred_check_branch
          %379 = sbr.rel (%p377) target = $region76
        $region75: #{forward.3} parent=47 // pred_region
          %380 = vst [vmem:[#allocation2] sm:$0xf] 0.0
        $region76: #{forward.3} parent=47 // pred_fallthru
          _
        %v381 = vld [vmem:[%s316] sm:$0xff]
        %v382 = vld [vmem:[%s316 + $0x8] sm:$0xff]
        %v383 = vld [vmem:[%s316 + $0x10] sm:$0xff]
        %v384 = vld [vmem:[%s316 + $0x18] sm:$0xff]
        %v385 = vld [vmem:[%s316 + $0x20] sm:$0xff]
        %v386 = vld [vmem:[%s316 + $0x28] sm:$0xff]
        %v387 = vld [vmem:[%s316 + $0x30] sm:$0xff]
        %v388 = vld [vmem:[%s316 + $0x38] sm:$0xff]
        %v389 = vld [vmem:[%s316 + $0x40] sm:$0xff]
        %v390 = vld [vmem:[%s316 + $0x48] sm:$0xff]
        %v391 = vld [vmem:[%s316 + $0x50] sm:$0xff]
        %v392 = vld [vmem:[%s316 + $0x58] sm:$0xff]
        %v393 = vld [vmem:[%s316 + $0x60] sm:$0xff]
        %v394 = vld [vmem:[%s316 + $0x68] sm:$0xff]
        %v395 = vld [vmem:[%s316 + $0x70] sm:$0xff]
        %v396 = vld [vmem:[%s316 + $0x78] sm:$0xff]
        %v413 = vcombine.high %v381, %v381
        %v415 = vunpack.c.l.s4 1983009808
        %v416 = vunpack.c.0.s8 %v415
        %v417 = vlaneseq
        %v418 = vshrl.u32 %v417, 7
        %v419 = vsub.s32 %v416, %v418
        %v420 = vrot.slane %v381, %v419
        %v422 = vunpack.c.l.s4 1983009808
        %v423 = vunpack.c.0.s8 %v422
        %v424 = vlaneseq
        %v425 = vshrl.u32 %v424, 7
        %v426 = vsub.s32 %v423, %v425
        %v427 = vrot.slane %v413, %v426
        %v428 = vcombine.high %v420, %v420
        %v429 = vcombine.high %v427, %v427
        %v430 = vcombine.high %v382, %v382
        %v432 = vunpack.c.l.s4 1983009808
        %v433 = vunpack.c.0.s8 %v432
        %v434 = vlaneseq
        %v435 = vshrl.u32 %v434, 7
        %v436 = vsub.s32 %v433, %v435
        %v437 = vrot.slane %v382, %v436
        %v439 = vunpack.c.l.s4 1983009808
        %v440 = vunpack.c.0.s8 %v439
        %v441 = vlaneseq
        %v442 = vshrl.u32 %v441, 7
        %v443 = vsub.s32 %v440, %v442
        %v444 = vrot.slane %v430, %v443
        %v445 = vcombine.high %v437, %v437
        %v446 = vcombine.high %v444, %v444
        %v447 = vcombine.high %v383, %v383
        %v449 = vunpack.c.l.s4 1983009808
        %v450 = vunpack.c.0.s8 %v449
        %v451 = vlaneseq
        %v452 = vshrl.u32 %v451, 7
        %v453 = vsub.s32 %v450, %v452
        %v454 = vrot.slane %v383, %v453
        %v456 = vunpack.c.l.s4 1983009808
        %v457 = vunpack.c.0.s8 %v456
        %v458 = vlaneseq
        %v459 = vshrl.u32 %v458, 7
        %v460 = vsub.s32 %v457, %v459
        %v461 = vrot.slane %v447, %v460
        %v462 = vcombine.high %v454, %v454
        %v463 = vcombine.high %v461, %v461
        %v464 = vcombine.high %v384, %v384
        %v466 = vunpack.c.l.s4 1983009808
        %v467 = vunpack.c.0.s8 %v466
        %v468 = vlaneseq
        %v469 = vshrl.u32 %v468, 7
        %v470 = vsub.s32 %v467, %v469
        %v471 = vrot.slane %v384, %v470
        %v473 = vunpack.c.l.s4 1983009808
        %v474 = vunpack.c.0.s8 %v473
        %v475 = vlaneseq
        %v476 = vshrl.u32 %v475, 7
        %v477 = vsub.s32 %v474, %v476
        %v478 = vrot.slane %v464, %v477
        %v479 = vcombine.high %v471, %v471
        %v480 = vcombine.high %v478, %v478
        %v481 = vcombine.high %v385, %v385
        %v483 = vunpack.c.l.s4 1983009808
        %v484 = vunpack.c.0.s8 %v483
        %v485 = vlaneseq
        %v486 = vshrl.u32 %v485, 7
        %v487 = vsub.s32 %v484, %v486
        %v488 = vrot.slane %v385, %v487
        %v490 = vunpack.c.l.s4 1983009808
        %v491 = vunpack.c.0.s8 %v490
        %v492 = vlaneseq
        %v493 = vshrl.u32 %v492, 7
        %v494 = vsub.s32 %v491, %v493
        %v495 = vrot.slane %v481, %v494
        %v496 = vcombine.high %v488, %v488
        %v497 = vcombine.high %v495, %v495
        %v498 = vcombine.high %v386, %v386
        %v500 = vunpack.c.l.s4 1983009808
        %v501 = vunpack.c.0.s8 %v500
        %v502 = vlaneseq
        %v503 = vshrl.u32 %v502, 7
        %v504 = vsub.s32 %v501, %v503
        %v505 = vrot.slane %v386, %v504
        %v507 = vunpack.c.l.s4 1983009808
        %v508 = vunpack.c.0.s8 %v507
        %v509 = vlaneseq
        %v510 = vshrl.u32 %v509, 7
        %v511 = vsub.s32 %v508, %v510
        %v512 = vrot.slane %v498, %v511
        %v513 = vcombine.high %v505, %v505
        %v514 = vcombine.high %v512, %v512
        %v515 = vcombine.high %v387, %v387
        %v517 = vunpack.c.l.s4 1983009808
        %v518 = vunpack.c.0.s8 %v517
        %v519 = vlaneseq
        %v520 = vshrl.u32 %v519, 7
        %v521 = vsub.s32 %v518, %v520
        %v522 = vrot.slane %v387, %v521
        %v524 = vunpack.c.l.s4 1983009808
        %v525 = vunpack.c.0.s8 %v524
        %v526 = vlaneseq
        %v527 = vshrl.u32 %v526, 7
        %v528 = vsub.s32 %v525, %v527
        %v529 = vrot.slane %v515, %v528
        %v530 = vcombine.high %v522, %v522
        %v531 = vcombine.high %v529, %v529
        %v532 = vcombine.high %v388, %v388
        %v534 = vunpack.c.l.s4 1983009808
        %v535 = vunpack.c.0.s8 %v534
        %v536 = vlaneseq
        %v537 = vshrl.u32 %v536, 7
        %v538 = vsub.s32 %v535, %v537
        %v539 = vrot.slane %v388, %v538
        %v541 = vunpack.c.l.s4 1983009808
        %v542 = vunpack.c.0.s8 %v541
        %v543 = vlaneseq
        %v544 = vshrl.u32 %v543, 7
        %v545 = vsub.s32 %v542, %v544
        %v546 = vrot.slane %v532, %v545
        %v547 = vcombine.high %v539, %v539
        %v548 = vcombine.high %v546, %v546
        %v549 = vcombine.high %v389, %v389
        %v551 = vunpack.c.l.s4 1983009808
        %v552 = vunpack.c.0.s8 %v551
        %v553 = vlaneseq
        %v554 = vshrl.u32 %v553, 7
        %v555 = vsub.s32 %v552, %v554
        %v556 = vrot.slane %v389, %v555
        %v558 = vunpack.c.l.s4 1983009808
        %v559 = vunpack.c.0.s8 %v558
        %v560 = vlaneseq
        %v561 = vshrl.u32 %v560, 7
        %v562 = vsub.s32 %v559, %v561
        %v563 = vrot.slane %v549, %v562
        %v564 = vcombine.high %v556, %v556
        %v565 = vcombine.high %v563, %v563
        %v566 = vcombine.high %v390, %v390
        %v568 = vunpack.c.l.s4 1983009808
        %v569 = vunpack.c.0.s8 %v568
        %v570 = vlaneseq
        %v571 = vshrl.u32 %v570, 7
        %v572 = vsub.s32 %v569, %v571
        %v573 = vrot.slane %v390, %v572
        %v575 = vunpack.c.l.s4 1983009808
        %v576 = vunpack.c.0.s8 %v575
        %v577 = vlaneseq
        %v578 = vshrl.u32 %v577, 7
        %v579 = vsub.s32 %v576, %v578
        %v580 = vrot.slane %v566, %v579
        %v581 = vcombine.high %v573, %v573
        %v582 = vcombine.high %v580, %v580
        %v583 = vcombine.high %v391, %v391
        %v585 = vunpack.c.l.s4 1983009808
        %v586 = vunpack.c.0.s8 %v585
        %v587 = vlaneseq
        %v588 = vshrl.u32 %v587, 7
        %v589 = vsub.s32 %v586, %v588
        %v590 = vrot.slane %v391, %v589
        %v592 = vunpack.c.l.s4 1983009808
        %v593 = vunpack.c.0.s8 %v592
        %v594 = vlaneseq
        %v595 = vshrl.u32 %v594, 7
        %v596 = vsub.s32 %v593, %v595
        %v597 = vrot.slane %v583, %v596
        %v598 = vcombine.high %v590, %v590
        %v599 = vcombine.high %v597, %v597
        %v600 = vcombine.high %v392, %v392
        %v602 = vunpack.c.l.s4 1983009808
        %v603 = vunpack.c.0.s8 %v602
        %v604 = vlaneseq
        %v605 = vshrl.u32 %v604, 7
        %v606 = vsub.s32 %v603, %v605
        %v607 = vrot.slane %v392, %v606
        %v609 = vunpack.c.l.s4 1983009808
        %v610 = vunpack.c.0.s8 %v609
        %v611 = vlaneseq
        %v612 = vshrl.u32 %v611, 7
        %v613 = vsub.s32 %v610, %v612
        %v614 = vrot.slane %v600, %v613
        %v615 = vcombine.high %v607, %v607
        %v616 = vcombine.high %v614, %v614
        %v617 = vcombine.high %v393, %v393
        %v619 = vunpack.c.l.s4 1983009808
        %v620 = vunpack.c.0.s8 %v619
        %v621 = vlaneseq
        %v622 = vshrl.u32 %v621, 7
        %v623 = vsub.s32 %v620, %v622
        %v624 = vrot.slane %v393, %v623
        %v626 = vunpack.c.l.s4 1983009808
        %v627 = vunpack.c.0.s8 %v626
        %v628 = vlaneseq
        %v629 = vshrl.u32 %v628, 7
        %v630 = vsub.s32 %v627, %v629
        %v631 = vrot.slane %v617, %v630
        %v632 = vcombine.high %v624, %v624
        %v633 = vcombine.high %v631, %v631
        %v634 = vcombine.high %v394, %v394
        %v636 = vunpack.c.l.s4 1983009808
        %v637 = vunpack.c.0.s8 %v636
        %v638 = vlaneseq
        %v639 = vshrl.u32 %v638, 7
        %v640 = vsub.s32 %v637, %v639
        %v641 = vrot.slane %v394, %v640
        %v643 = vunpack.c.l.s4 1983009808
        %v644 = vunpack.c.0.s8 %v643
        %v645 = vlaneseq
        %v646 = vshrl.u32 %v645, 7
        %v647 = vsub.s32 %v644, %v646
        %v648 = vrot.slane %v634, %v647
        %v649 = vcombine.high %v641, %v641
        %v650 = vcombine.high %v648, %v648
        %v651 = vcombine.high %v395, %v395
        %v653 = vunpack.c.l.s4 1983009808
        %v654 = vunpack.c.0.s8 %v653
        %v655 = vlaneseq
        %v656 = vshrl.u32 %v655, 7
        %v657 = vsub.s32 %v654, %v656
        %v658 = vrot.slane %v395, %v657
        %v660 = vunpack.c.l.s4 1983009808
        %v661 = vunpack.c.0.s8 %v660
        %v662 = vlaneseq
        %v663 = vshrl.u32 %v662, 7
        %v664 = vsub.s32 %v661, %v663
        %v665 = vrot.slane %v651, %v664
        %v666 = vcombine.high %v658, %v658
        %v667 = vcombine.high %v665, %v665
        %v668 = vcombine.high %v396, %v396
        %v670 = vunpack.c.l.s4 1983009808
        %v671 = vunpack.c.0.s8 %v670
        %v672 = vlaneseq
        %v673 = vshrl.u32 %v672, 7
        %v674 = vsub.s32 %v671, %v673
        %v675 = vrot.slane %v396, %v674
        %v677 = vunpack.c.l.s4 1983009808
        %v678 = vunpack.c.0.s8 %v677
        %v679 = vlaneseq
        %v680 = vshrl.u32 %v679, 7
        %v681 = vsub.s32 %v678, %v680
        %v682 = vrot.slane %v668, %v681
        %v683 = vcombine.high %v675, %v675
        %v684 = vcombine.high %v682, %v682
        %v749 = vpack.c.bf16 %v420, %v420
        %v750 = vpack.c.bf16 %v428, %v428
        %v751 = vpack.c.bf16 %v427, %v427
        %v752 = vpack.c.bf16 %v429, %v429
        %v753 = vpack.c.bf16 %v437, %v437
        %v754 = vpack.c.bf16 %v445, %v445
        %v755 = vpack.c.bf16 %v444, %v444
        %v756 = vpack.c.bf16 %v446, %v446
        %v757 = vpack.c.bf16 %v454, %v454
        %v758 = vpack.c.bf16 %v462, %v462
        %v759 = vpack.c.bf16 %v461, %v461
        %v760 = vpack.c.bf16 %v463, %v463
        %v761 = vpack.c.bf16 %v471, %v471
        %v762 = vpack.c.bf16 %v479, %v479
        %v763 = vpack.c.bf16 %v478, %v478
        %v764 = vpack.c.bf16 %v480, %v480
        %v765 = vpack.c.bf16 %v488, %v488
        %v766 = vpack.c.bf16 %v496, %v496
        %v767 = vpack.c.bf16 %v495, %v495
        %v768 = vpack.c.bf16 %v497, %v497
        %v769 = vpack.c.bf16 %v505, %v505
        %v770 = vpack.c.bf16 %v513, %v513
        %v771 = vpack.c.bf16 %v512, %v512
        %v772 = vpack.c.bf16 %v514, %v514
        %v773 = vpack.c.bf16 %v522, %v522
        %v774 = vpack.c.bf16 %v530, %v530
        %v775 = vpack.c.bf16 %v529, %v529
        %v776 = vpack.c.bf16 %v531, %v531
        %v777 = vpack.c.bf16 %v539, %v539
        %v778 = vpack.c.bf16 %v547, %v547
        %v779 = vpack.c.bf16 %v546, %v546
        %v780 = vpack.c.bf16 %v548, %v548
        %v781 = vpack.c.bf16 %v556, %v556
        %v782 = vpack.c.bf16 %v564, %v564
        %v783 = vpack.c.bf16 %v563, %v563
        %v784 = vpack.c.bf16 %v565, %v565
        %v785 = vpack.c.bf16 %v573, %v573
        %v786 = vpack.c.bf16 %v581, %v581
        %v787 = vpack.c.bf16 %v580, %v580
        %v788 = vpack.c.bf16 %v582, %v582
        %v789 = vpack.c.bf16 %v590, %v590
        %v790 = vpack.c.bf16 %v598, %v598
        %v791 = vpack.c.bf16 %v597, %v597
        %v792 = vpack.c.bf16 %v599, %v599
        %v793 = vpack.c.bf16 %v607, %v607
        %v794 = vpack.c.bf16 %v615, %v615
        %v795 = vpack.c.bf16 %v614, %v614
        %v796 = vpack.c.bf16 %v616, %v616
        %v797 = vpack.c.bf16 %v624, %v624
        %v798 = vpack.c.bf16 %v632, %v632
        %v799 = vpack.c.bf16 %v631, %v631
        %v800 = vpack.c.bf16 %v633, %v633
        %v801 = vpack.c.bf16 %v641, %v641
        %v802 = vpack.c.bf16 %v649, %v649
        %v803 = vpack.c.bf16 %v648, %v648
        %v804 = vpack.c.bf16 %v650, %v650
        %v805 = vpack.c.bf16 %v658, %v658
        %v806 = vpack.c.bf16 %v666, %v666
        %v807 = vpack.c.bf16 %v665, %v665
        %v808 = vpack.c.bf16 %v667, %v667
        %v809 = vpack.c.bf16 %v675, %v675
        %v810 = vpack.c.bf16 %v683, %v683
        %v811 = vpack.c.bf16 %v682, %v682
        %v812 = vpack.c.bf16 %v684, %v684
        %v813 = vld [vmem:[#allocation2] sm:$0xf]
        %v814 = vld [vmem:[%s374] sm:$0xff]
        %v815 = vld [vmem:[%s374 + $0x8] sm:$0xff]
        %v816 = vld [vmem:[%s374 + $0x10] sm:$0xff]
        %v817 = vld [vmem:[%s374 + $0x18] sm:$0xff]
        %v818 = vld [vmem:[%s374 + $0x20] sm:$0xff]
        %v819 = vld [vmem:[%s374 + $0x28] sm:$0xff]
        %v820 = vld [vmem:[%s374 + $0x30] sm:$0xff]
        %v821 = vld [vmem:[%s374 + $0x38] sm:$0xff]
        %v822 = vld [vmem:[%s374 + $0x40] sm:$0xff]
        %v823 = vld [vmem:[%s374 + $0x48] sm:$0xff]
        %v824 = vld [vmem:[%s374 + $0x50] sm:$0xff]
        %v825 = vld [vmem:[%s374 + $0x58] sm:$0xff]
        %v826 = vld [vmem:[%s374 + $0x60] sm:$0xff]
        %v827 = vld [vmem:[%s374 + $0x68] sm:$0xff]
        %v828 = vld [vmem:[%s374 + $0x70] sm:$0xff]
        %v829 = vld [vmem:[%s374 + $0x78] sm:$0xff]
        %v830 = vld [vmem:[%s374 + $0x80] sm:$0xff]
        %v831 = vld [vmem:[%s374 + $0x88] sm:$0xff]
        %v832 = vld [vmem:[%s374 + $0x90] sm:$0xff]
        %v833 = vld [vmem:[%s374 + $0x98] sm:$0xff]
        %v834 = vld [vmem:[%s374 + $0xa0] sm:$0xff]
        %v835 = vld [vmem:[%s374 + $0xa8] sm:$0xff]
        %v836 = vld [vmem:[%s374 + $0xb0] sm:$0xff]
        %v837 = vld [vmem:[%s374 + $0xb8] sm:$0xff]
        %v838 = vld [vmem:[%s374 + $0xc0] sm:$0xff]
        %v839 = vld [vmem:[%s374 + $0xc8] sm:$0xff]
        %v840 = vld [vmem:[%s374 + $0xd0] sm:$0xff]
        %v841 = vld [vmem:[%s374 + $0xd8] sm:$0xff]
        %v842 = vld [vmem:[%s374 + $0xe0] sm:$0xff]
        %v843 = vld [vmem:[%s374 + $0xe8] sm:$0xff]
        %v844 = vld [vmem:[%s374 + $0xf0] sm:$0xff]
        %v845 = vld [vmem:[%s374 + $0xf8] sm:$0xff]
        %v846 = vld [vmem:[%s374 + $0x100] sm:$0xff]
        %v847 = vld [vmem:[%s374 + $0x108] sm:$0xff]
        %v848 = vld [vmem:[%s374 + $0x110] sm:$0xff]
        %v849 = vld [vmem:[%s374 + $0x118] sm:$0xff]
        %v850 = vld [vmem:[%s374 + $0x120] sm:$0xff]
        %v851 = vld [vmem:[%s374 + $0x128] sm:$0xff]
        %v852 = vld [vmem:[%s374 + $0x130] sm:$0xff]
        %v853 = vld [vmem:[%s374 + $0x138] sm:$0xff]
        %v854 = vld [vmem:[%s374 + $0x140] sm:$0xff]
        %v855 = vld [vmem:[%s374 + $0x148] sm:$0xff]
        %v856 = vld [vmem:[%s374 + $0x150] sm:$0xff]
        %v857 = vld [vmem:[%s374 + $0x158] sm:$0xff]
        %v858 = vld [vmem:[%s374 + $0x160] sm:$0xff]
        %v859 = vld [vmem:[%s374 + $0x168] sm:$0xff]
        %v860 = vld [vmem:[%s374 + $0x170] sm:$0xff]
        %v861 = vld [vmem:[%s374 + $0x178] sm:$0xff]
        %v862 = vld [vmem:[%s374 + $0x180] sm:$0xff]
        %v863 = vld [vmem:[%s374 + $0x188] sm:$0xff]
        %v864 = vld [vmem:[%s374 + $0x190] sm:$0xff]
        %v865 = vld [vmem:[%s374 + $0x198] sm:$0xff]
        %v866 = vld [vmem:[%s374 + $0x1a0] sm:$0xff]
        %v867 = vld [vmem:[%s374 + $0x1a8] sm:$0xff]
        %v868 = vld [vmem:[%s374 + $0x1b0] sm:$0xff]
        %v869 = vld [vmem:[%s374 + $0x1b8] sm:$0xff]
        %v870 = vld [vmem:[%s374 + $0x1c0] sm:$0xff]
        %v871 = vld [vmem:[%s374 + $0x1c8] sm:$0xff]
        %v872 = vld [vmem:[%s374 + $0x1d0] sm:$0xff]
        %v873 = vld [vmem:[%s374 + $0x1d8] sm:$0xff]
        %v874 = vld [vmem:[%s374 + $0x1e0] sm:$0xff]
        %v875 = vld [vmem:[%s374 + $0x1e8] sm:$0xff]
        %v876 = vld [vmem:[%s374 + $0x1f0] sm:$0xff]
        %v877 = vld [vmem:[%s374 + $0x1f8] sm:$0xff]
        %v878 = vld [vmem:[%s374 + $0x200] sm:$0xff]
        %v879 = vld [vmem:[%s374 + $0x208] sm:$0xff]
        %v880 = vld [vmem:[%s374 + $0x210] sm:$0xff]
        %v881 = vld [vmem:[%s374 + $0x218] sm:$0xff]
        %v882 = vld [vmem:[%s374 + $0x220] sm:$0xff]
        %v883 = vld [vmem:[%s374 + $0x228] sm:$0xff]
        %v884 = vld [vmem:[%s374 + $0x230] sm:$0xff]
        %v885 = vld [vmem:[%s374 + $0x238] sm:$0xff]
        %v886 = vld [vmem:[%s374 + $0x240] sm:$0xff]
        %v887 = vld [vmem:[%s374 + $0x248] sm:$0xff]
        %v888 = vld [vmem:[%s374 + $0x250] sm:$0xff]
        %v889 = vld [vmem:[%s374 + $0x258] sm:$0xff]
        %v890 = vld [vmem:[%s374 + $0x260] sm:$0xff]
        %v891 = vld [vmem:[%s374 + $0x268] sm:$0xff]
        %v892 = vld [vmem:[%s374 + $0x270] sm:$0xff]
        %v893 = vld [vmem:[%s374 + $0x278] sm:$0xff]
        %v894 = vld [vmem:[%s374 + $0x280] sm:$0xff]
        %v895 = vld [vmem:[%s374 + $0x288] sm:$0xff]
        %v896 = vld [vmem:[%s374 + $0x290] sm:$0xff]
        %v897 = vld [vmem:[%s374 + $0x298] sm:$0xff]
        %v898 = vld [vmem:[%s374 + $0x2a0] sm:$0xff]
        %v899 = vld [vmem:[%s374 + $0x2a8] sm:$0xff]
        %v900 = vld [vmem:[%s374 + $0x2b0] sm:$0xff]
        %v901 = vld [vmem:[%s374 + $0x2b8] sm:$0xff]
        %v902 = vld [vmem:[%s374 + $0x2c0] sm:$0xff]
        %v903 = vld [vmem:[%s374 + $0x2c8] sm:$0xff]
        %v904 = vld [vmem:[%s374 + $0x2d0] sm:$0xff]
        %v905 = vld [vmem:[%s374 + $0x2d8] sm:$0xff]
        %v906 = vld [vmem:[%s374 + $0x2e0] sm:$0xff]
        %v907 = vld [vmem:[%s374 + $0x2e8] sm:$0xff]
        %v908 = vld [vmem:[%s374 + $0x2f0] sm:$0xff]
        %v909 = vld [vmem:[%s374 + $0x2f8] sm:$0xff]
        %v910 = vld [vmem:[%s374 + $0x300] sm:$0xff]
        %v911 = vld [vmem:[%s374 + $0x308] sm:$0xff]
        %v912 = vld [vmem:[%s374 + $0x310] sm:$0xff]
        %v913 = vld [vmem:[%s374 + $0x318] sm:$0xff]
        %v914 = vld [vmem:[%s374 + $0x320] sm:$0xff]
        %v915 = vld [vmem:[%s374 + $0x328] sm:$0xff]
        %v916 = vld [vmem:[%s374 + $0x330] sm:$0xff]
        %v917 = vld [vmem:[%s374 + $0x338] sm:$0xff]
        %v918 = vld [vmem:[%s374 + $0x340] sm:$0xff]
        %v919 = vld [vmem:[%s374 + $0x348] sm:$0xff]
        %v920 = vld [vmem:[%s374 + $0x350] sm:$0xff]
        %v921 = vld [vmem:[%s374 + $0x358] sm:$0xff]
        %v922 = vld [vmem:[%s374 + $0x360] sm:$0xff]
        %v923 = vld [vmem:[%s374 + $0x368] sm:$0xff]
        %v924 = vld [vmem:[%s374 + $0x370] sm:$0xff]
        %v925 = vld [vmem:[%s374 + $0x378] sm:$0xff]
        %v926 = vld [vmem:[%s374 + $0x380] sm:$0xff]
        %v927 = vld [vmem:[%s374 + $0x388] sm:$0xff]
        %v928 = vld [vmem:[%s374 + $0x390] sm:$0xff]
        %v929 = vld [vmem:[%s374 + $0x398] sm:$0xff]
        %v930 = vld [vmem:[%s374 + $0x3a0] sm:$0xff]
        %v931 = vld [vmem:[%s374 + $0x3a8] sm:$0xff]
        %v932 = vld [vmem:[%s374 + $0x3b0] sm:$0xff]
        %v933 = vld [vmem:[%s374 + $0x3b8] sm:$0xff]
        %v934 = vld [vmem:[%s374 + $0x3c0] sm:$0xff]
        %v935 = vld [vmem:[%s374 + $0x3c8] sm:$0xff]
        %v936 = vld [vmem:[%s374 + $0x3d0] sm:$0xff]
        %v937 = vld [vmem:[%s374 + $0x3d8] sm:$0xff]
        %v938 = vld [vmem:[%s374 + $0x3e0] sm:$0xff]
        %v939 = vld [vmem:[%s374 + $0x3e8] sm:$0xff]
        %v940 = vld [vmem:[%s374 + $0x3f0] sm:$0xff]
        %v941 = vld [vmem:[%s374 + $0x3f8] sm:$0xff]
        %v942 = vld [vmem:[%s374 + $0x400] sm:$0xff]
        %v943 = vld [vmem:[%s374 + $0x408] sm:$0xff]
        %v944 = vld [vmem:[%s374 + $0x410] sm:$0xff]
        %v945 = vld [vmem:[%s374 + $0x418] sm:$0xff]
        %v946 = vld [vmem:[%s374 + $0x420] sm:$0xff]
        %v947 = vld [vmem:[%s374 + $0x428] sm:$0xff]
        %v948 = vld [vmem:[%s374 + $0x430] sm:$0xff]
        %v949 = vld [vmem:[%s374 + $0x438] sm:$0xff]
        %v950 = vld [vmem:[%s374 + $0x440] sm:$0xff]
        %v951 = vld [vmem:[%s374 + $0x448] sm:$0xff]
        %v952 = vld [vmem:[%s374 + $0x450] sm:$0xff]
        %v953 = vld [vmem:[%s374 + $0x458] sm:$0xff]
        %v954 = vld [vmem:[%s374 + $0x460] sm:$0xff]
        %v955 = vld [vmem:[%s374 + $0x468] sm:$0xff]
        %v956 = vld [vmem:[%s374 + $0x470] sm:$0xff]
        %v957 = vld [vmem:[%s374 + $0x478] sm:$0xff]
        %v958 = vld [vmem:[%s374 + $0x480] sm:$0xff]
        %v959 = vld [vmem:[%s374 + $0x488] sm:$0xff]
        %v960 = vld [vmem:[%s374 + $0x490] sm:$0xff]
        %v961 = vld [vmem:[%s374 + $0x498] sm:$0xff]
        %v962 = vld [vmem:[%s374 + $0x4a0] sm:$0xff]
        %v963 = vld [vmem:[%s374 + $0x4a8] sm:$0xff]
        %v964 = vld [vmem:[%s374 + $0x4b0] sm:$0xff]
        %v965 = vld [vmem:[%s374 + $0x4b8] sm:$0xff]
        %v966 = vld [vmem:[%s374 + $0x4c0] sm:$0xff]
        %v967 = vld [vmem:[%s374 + $0x4c8] sm:$0xff]
        %v968 = vld [vmem:[%s374 + $0x4d0] sm:$0xff]
        %v969 = vld [vmem:[%s374 + $0x4d8] sm:$0xff]
        %v970 = vld [vmem:[%s374 + $0x4e0] sm:$0xff]
        %v971 = vld [vmem:[%s374 + $0x4e8] sm:$0xff]
        %v972 = vld [vmem:[%s374 + $0x4f0] sm:$0xff]
        %v973 = vld [vmem:[%s374 + $0x4f8] sm:$0xff]
        %v974 = vld [vmem:[%s374 + $0x500] sm:$0xff]
        %v975 = vld [vmem:[%s374 + $0x508] sm:$0xff]
        %v976 = vld [vmem:[%s374 + $0x510] sm:$0xff]
        %v977 = vld [vmem:[%s374 + $0x518] sm:$0xff]
        %v978 = vld [vmem:[%s374 + $0x520] sm:$0xff]
        %v979 = vld [vmem:[%s374 + $0x528] sm:$0xff]
        %v980 = vld [vmem:[%s374 + $0x530] sm:$0xff]
        %v981 = vld [vmem:[%s374 + $0x538] sm:$0xff]
        %v982 = vld [vmem:[%s374 + $0x540] sm:$0xff]
        %v983 = vld [vmem:[%s374 + $0x548] sm:$0xff]
        %v984 = vld [vmem:[%s374 + $0x550] sm:$0xff]
        %v985 = vld [vmem:[%s374 + $0x558] sm:$0xff]
        %v986 = vld [vmem:[%s374 + $0x560] sm:$0xff]
        %v987 = vld [vmem:[%s374 + $0x568] sm:$0xff]
        %v988 = vld [vmem:[%s374 + $0x570] sm:$0xff]
        %v989 = vld [vmem:[%s374 + $0x578] sm:$0xff]
        %v990 = vld [vmem:[%s374 + $0x580] sm:$0xff]
        %v991 = vld [vmem:[%s374 + $0x588] sm:$0xff]
        %v992 = vld [vmem:[%s374 + $0x590] sm:$0xff]
        %v993 = vld [vmem:[%s374 + $0x598] sm:$0xff]
        %v994 = vld [vmem:[%s374 + $0x5a0] sm:$0xff]
        %v995 = vld [vmem:[%s374 + $0x5a8] sm:$0xff]
        %v996 = vld [vmem:[%s374 + $0x5b0] sm:$0xff]
        %v997 = vld [vmem:[%s374 + $0x5b8] sm:$0xff]
        %v998 = vld [vmem:[%s374 + $0x5c0] sm:$0xff]
        %v999 = vld [vmem:[%s374 + $0x5c8] sm:$0xff]
        %v1000 = vld [vmem:[%s374 + $0x5d0] sm:$0xff]
        %v1001 = vld [vmem:[%s374 + $0x5d8] sm:$0xff]
        %v1002 = vld [vmem:[%s374 + $0x5e0] sm:$0xff]
        %v1003 = vld [vmem:[%s374 + $0x5e8] sm:$0xff]
        %v1004 = vld [vmem:[%s374 + $0x5f0] sm:$0xff]
        %v1005 = vld [vmem:[%s374 + $0x5f8] sm:$0xff]
        %v1006 = vld [vmem:[%s374 + $0x600] sm:$0xff]
        %v1007 = vld [vmem:[%s374 + $0x608] sm:$0xff]
        %v1008 = vld [vmem:[%s374 + $0x610] sm:$0xff]
        %v1009 = vld [vmem:[%s374 + $0x618] sm:$0xff]
        %v1010 = vld [vmem:[%s374 + $0x620] sm:$0xff]
        %v1011 = vld [vmem:[%s374 + $0x628] sm:$0xff]
        %v1012 = vld [vmem:[%s374 + $0x630] sm:$0xff]
        %v1013 = vld [vmem:[%s374 + $0x638] sm:$0xff]
        %v1014 = vld [vmem:[%s374 + $0x640] sm:$0xff]
        %v1015 = vld [vmem:[%s374 + $0x648] sm:$0xff]
        %v1016 = vld [vmem:[%s374 + $0x650] sm:$0xff]
        %v1017 = vld [vmem:[%s374 + $0x658] sm:$0xff]
        %v1018 = vld [vmem:[%s374 + $0x660] sm:$0xff]
        %v1019 = vld [vmem:[%s374 + $0x668] sm:$0xff]
        %v1020 = vld [vmem:[%s374 + $0x670] sm:$0xff]
        %v1021 = vld [vmem:[%s374 + $0x678] sm:$0xff]
        %v1022 = vld [vmem:[%s374 + $0x680] sm:$0xff]
        %v1023 = vld [vmem:[%s374 + $0x688] sm:$0xff]
        %v1024 = vld [vmem:[%s374 + $0x690] sm:$0xff]
        %v1025 = vld [vmem:[%s374 + $0x698] sm:$0xff]
        %v1026 = vld [vmem:[%s374 + $0x6a0] sm:$0xff]
        %v1027 = vld [vmem:[%s374 + $0x6a8] sm:$0xff]
        %v1028 = vld [vmem:[%s374 + $0x6b0] sm:$0xff]
        %v1029 = vld [vmem:[%s374 + $0x6b8] sm:$0xff]
        %v1030 = vld [vmem:[%s374 + $0x6c0] sm:$0xff]
        %v1031 = vld [vmem:[%s374 + $0x6c8] sm:$0xff]
        %v1032 = vld [vmem:[%s374 + $0x6d0] sm:$0xff]
        %v1033 = vld [vmem:[%s374 + $0x6d8] sm:$0xff]
        %v1034 = vld [vmem:[%s374 + $0x6e0] sm:$0xff]
        %v1035 = vld [vmem:[%s374 + $0x6e8] sm:$0xff]
        %v1036 = vld [vmem:[%s374 + $0x6f0] sm:$0xff]
        %v1037 = vld [vmem:[%s374 + $0x6f8] sm:$0xff]
        %v1038 = vld [vmem:[%s374 + $0x700] sm:$0xff]
        %v1039 = vld [vmem:[%s374 + $0x708] sm:$0xff]
        %v1040 = vld [vmem:[%s374 + $0x710] sm:$0xff]
        %v1041 = vld [vmem:[%s374 + $0x718] sm:$0xff]
        %v1042 = vld [vmem:[%s374 + $0x720] sm:$0xff]
        %v1043 = vld [vmem:[%s374 + $0x728] sm:$0xff]
        %v1044 = vld [vmem:[%s374 + $0x730] sm:$0xff]
        %v1045 = vld [vmem:[%s374 + $0x738] sm:$0xff]
        %v1046 = vld [vmem:[%s374 + $0x740] sm:$0xff]
        %v1047 = vld [vmem:[%s374 + $0x748] sm:$0xff]
        %v1048 = vld [vmem:[%s374 + $0x750] sm:$0xff]
        %v1049 = vld [vmem:[%s374 + $0x758] sm:$0xff]
        %v1050 = vld [vmem:[%s374 + $0x760] sm:$0xff]
        %v1051 = vld [vmem:[%s374 + $0x768] sm:$0xff]
        %v1052 = vld [vmem:[%s374 + $0x770] sm:$0xff]
        %v1053 = vld [vmem:[%s374 + $0x778] sm:$0xff]
        %v1054 = vld [vmem:[%s374 + $0x780] sm:$0xff]
        %v1055 = vld [vmem:[%s374 + $0x788] sm:$0xff]
        %v1056 = vld [vmem:[%s374 + $0x790] sm:$0xff]
        %v1057 = vld [vmem:[%s374 + $0x798] sm:$0xff]
        %v1058 = vld [vmem:[%s374 + $0x7a0] sm:$0xff]
        %v1059 = vld [vmem:[%s374 + $0x7a8] sm:$0xff]
        %v1060 = vld [vmem:[%s374 + $0x7b0] sm:$0xff]
        %v1061 = vld [vmem:[%s374 + $0x7b8] sm:$0xff]
        %v1062 = vld [vmem:[%s374 + $0x7c0] sm:$0xff]
        %v1063 = vld [vmem:[%s374 + $0x7c8] sm:$0xff]
        %v1064 = vld [vmem:[%s374 + $0x7d0] sm:$0xff]
        %v1065 = vld [vmem:[%s374 + $0x7d8] sm:$0xff]
        %v1066 = vld [vmem:[%s374 + $0x7e0] sm:$0xff]
        %v1067 = vld [vmem:[%s374 + $0x7e8] sm:$0xff]
        %v1068 = vld [vmem:[%s374 + $0x7f0] sm:$0xff]
        %v1069 = vld [vmem:[%s374 + $0x7f8] sm:$0xff]
        %v1070 = vld [vmem:[%s374 + $0x800] sm:$0xff]
        %v1071 = vld [vmem:[%s374 + $0x808] sm:$0xff]
        %v1072 = vld [vmem:[%s374 + $0x810] sm:$0xff]
        %v1073 = vld [vmem:[%s374 + $0x818] sm:$0xff]
        %v1074 = vld [vmem:[%s374 + $0x820] sm:$0xff]
        %v1075 = vld [vmem:[%s374 + $0x828] sm:$0xff]
        %v1076 = vld [vmem:[%s374 + $0x830] sm:$0xff]
        %v1077 = vld [vmem:[%s374 + $0x838] sm:$0xff]
        %v1078 = vld [vmem:[%s374 + $0x840] sm:$0xff]
        %v1079 = vld [vmem:[%s374 + $0x848] sm:$0xff]
        %v1080 = vld [vmem:[%s374 + $0x850] sm:$0xff]
        %v1081 = vld [vmem:[%s374 + $0x858] sm:$0xff]
        %v1082 = vld [vmem:[%s374 + $0x860] sm:$0xff]
        %v1083 = vld [vmem:[%s374 + $0x868] sm:$0xff]
        %v1084 = vld [vmem:[%s374 + $0x870] sm:$0xff]
        %v1085 = vld [vmem:[%s374 + $0x878] sm:$0xff]
        %v1086 = vld [vmem:[%s374 + $0x880] sm:$0xff]
        %v1087 = vld [vmem:[%s374 + $0x888] sm:$0xff]
        %v1088 = vld [vmem:[%s374 + $0x890] sm:$0xff]
        %v1089 = vld [vmem:[%s374 + $0x898] sm:$0xff]
        %v1090 = vld [vmem:[%s374 + $0x8a0] sm:$0xff]
        %v1091 = vld [vmem:[%s374 + $0x8a8] sm:$0xff]
        %v1092 = vld [vmem:[%s374 + $0x8b0] sm:$0xff]
        %v1093 = vld [vmem:[%s374 + $0x8b8] sm:$0xff]
        %v1094 = vld [vmem:[%s374 + $0x8c0] sm:$0xff]
        %v1095 = vld [vmem:[%s374 + $0x8c8] sm:$0xff]
        %v1096 = vld [vmem:[%s374 + $0x8d0] sm:$0xff]
        %v1097 = vld [vmem:[%s374 + $0x8d8] sm:$0xff]
        %v1098 = vld [vmem:[%s374 + $0x8e0] sm:$0xff]
        %v1099 = vld [vmem:[%s374 + $0x8e8] sm:$0xff]
        %v1100 = vld [vmem:[%s374 + $0x8f0] sm:$0xff]
        %v1101 = vld [vmem:[%s374 + $0x8f8] sm:$0xff]
        %v1102 = vld [vmem:[%s374 + $0x900] sm:$0xff]
        %v1103 = vld [vmem:[%s374 + $0x908] sm:$0xff]
        %v1104 = vld [vmem:[%s374 + $0x910] sm:$0xff]
        %v1105 = vld [vmem:[%s374 + $0x918] sm:$0xff]
        %v1106 = vld [vmem:[%s374 + $0x920] sm:$0xff]
        %v1107 = vld [vmem:[%s374 + $0x928] sm:$0xff]
        %v1108 = vld [vmem:[%s374 + $0x930] sm:$0xff]
        %v1109 = vld [vmem:[%s374 + $0x938] sm:$0xff]
        %v1110 = vld [vmem:[%s374 + $0x940] sm:$0xff]
        %v1111 = vld [vmem:[%s374 + $0x948] sm:$0xff]
        %v1112 = vld [vmem:[%s374 + $0x950] sm:$0xff]
        %v1113 = vld [vmem:[%s374 + $0x958] sm:$0xff]
        %v1114 = vld [vmem:[%s374 + $0x960] sm:$0xff]
        %v1115 = vld [vmem:[%s374 + $0x968] sm:$0xff]
        %v1116 = vld [vmem:[%s374 + $0x970] sm:$0xff]
        %v1117 = vld [vmem:[%s374 + $0x978] sm:$0xff]
        %v1118 = vld [vmem:[%s374 + $0x980] sm:$0xff]
        %v1119 = vld [vmem:[%s374 + $0x988] sm:$0xff]
        %v1120 = vld [vmem:[%s374 + $0x990] sm:$0xff]
        %v1121 = vld [vmem:[%s374 + $0x998] sm:$0xff]
        %v1122 = vld [vmem:[%s374 + $0x9a0] sm:$0xff]
        %v1123 = vld [vmem:[%s374 + $0x9a8] sm:$0xff]
        %v1124 = vld [vmem:[%s374 + $0x9b0] sm:$0xff]
        %v1125 = vld [vmem:[%s374 + $0x9b8] sm:$0xff]
        %v1126 = vld [vmem:[%s374 + $0x9c0] sm:$0xff]
        %v1127 = vld [vmem:[%s374 + $0x9c8] sm:$0xff]
        %v1128 = vld [vmem:[%s374 + $0x9d0] sm:$0xff]
        %v1129 = vld [vmem:[%s374 + $0x9d8] sm:$0xff]
        %v1130 = vld [vmem:[%s374 + $0x9e0] sm:$0xff]
        %v1131 = vld [vmem:[%s374 + $0x9e8] sm:$0xff]
        %v1132 = vld [vmem:[%s374 + $0x9f0] sm:$0xff]
        %v1133 = vld [vmem:[%s374 + $0x9f8] sm:$0xff]
        %v1134 = vld [vmem:[%s374 + $0xa00] sm:$0xff]
        %v1135 = vld [vmem:[%s374 + $0xa08] sm:$0xff]
        %v1136 = vld [vmem:[%s374 + $0xa10] sm:$0xff]
        %v1137 = vld [vmem:[%s374 + $0xa18] sm:$0xff]
        %v1138 = vld [vmem:[%s374 + $0xa20] sm:$0xff]
        %v1139 = vld [vmem:[%s374 + $0xa28] sm:$0xff]
        %v1140 = vld [vmem:[%s374 + $0xa30] sm:$0xff]
        %v1141 = vld [vmem:[%s374 + $0xa38] sm:$0xff]
        %v1142 = vld [vmem:[%s374 + $0xa40] sm:$0xff]
        %v1143 = vld [vmem:[%s374 + $0xa48] sm:$0xff]
        %v1144 = vld [vmem:[%s374 + $0xa50] sm:$0xff]
        %v1145 = vld [vmem:[%s374 + $0xa58] sm:$0xff]
        %v1146 = vld [vmem:[%s374 + $0xa60] sm:$0xff]
        %v1147 = vld [vmem:[%s374 + $0xa68] sm:$0xff]
        %v1148 = vld [vmem:[%s374 + $0xa70] sm:$0xff]
        %v1149 = vld [vmem:[%s374 + $0xa78] sm:$0xff]
        %v1150 = vld [vmem:[%s374 + $0xa80] sm:$0xff]
        %v1151 = vld [vmem:[%s374 + $0xa88] sm:$0xff]
        %v1152 = vld [vmem:[%s374 + $0xa90] sm:$0xff]
        %v1153 = vld [vmem:[%s374 + $0xa98] sm:$0xff]
        %v1154 = vld [vmem:[%s374 + $0xaa0] sm:$0xff]
        %v1155 = vld [vmem:[%s374 + $0xaa8] sm:$0xff]
        %v1156 = vld [vmem:[%s374 + $0xab0] sm:$0xff]
        %v1157 = vld [vmem:[%s374 + $0xab8] sm:$0xff]
        %v1158 = vld [vmem:[%s374 + $0xac0] sm:$0xff]
        %v1159 = vld [vmem:[%s374 + $0xac8] sm:$0xff]
        %v1160 = vld [vmem:[%s374 + $0xad0] sm:$0xff]
        %v1161 = vld [vmem:[%s374 + $0xad8] sm:$0xff]
        %v1162 = vld [vmem:[%s374 + $0xae0] sm:$0xff]
        %v1163 = vld [vmem:[%s374 + $0xae8] sm:$0xff]
        %v1164 = vld [vmem:[%s374 + $0xaf0] sm:$0xff]
        %v1165 = vld [vmem:[%s374 + $0xaf8] sm:$0xff]
        %v1166 = vld [vmem:[%s374 + $0xb00] sm:$0xff]
        %v1167 = vld [vmem:[%s374 + $0xb08] sm:$0xff]
        %v1168 = vld [vmem:[%s374 + $0xb10] sm:$0xff]
        %v1169 = vld [vmem:[%s374 + $0xb18] sm:$0xff]
        %v1170 = vld [vmem:[%s374 + $0xb20] sm:$0xff]
        %v1171 = vld [vmem:[%s374 + $0xb28] sm:$0xff]
        %v1172 = vld [vmem:[%s374 + $0xb30] sm:$0xff]
        %v1173 = vld [vmem:[%s374 + $0xb38] sm:$0xff]
        %v1174 = vld [vmem:[%s374 + $0xb40] sm:$0xff]
        %v1175 = vld [vmem:[%s374 + $0xb48] sm:$0xff]
        %v1176 = vld [vmem:[%s374 + $0xb50] sm:$0xff]
        %v1177 = vld [vmem:[%s374 + $0xb58] sm:$0xff]
        %v1178 = vld [vmem:[%s374 + $0xb60] sm:$0xff]
        %v1179 = vld [vmem:[%s374 + $0xb68] sm:$0xff]
        %v1180 = vld [vmem:[%s374 + $0xb70] sm:$0xff]
        %v1181 = vld [vmem:[%s374 + $0xb78] sm:$0xff]
        %v1182 = vld [vmem:[%s374 + $0xb80] sm:$0xff]
        %v1183 = vld [vmem:[%s374 + $0xb88] sm:$0xff]
        %v1184 = vld [vmem:[%s374 + $0xb90] sm:$0xff]
        %v1185 = vld [vmem:[%s374 + $0xb98] sm:$0xff]
        %v1186 = vld [vmem:[%s374 + $0xba0] sm:$0xff]
        %v1187 = vld [vmem:[%s374 + $0xba8] sm:$0xff]
        %v1188 = vld [vmem:[%s374 + $0xbb0] sm:$0xff]
        %v1189 = vld [vmem:[%s374 + $0xbb8] sm:$0xff]
        %v1190 = vld [vmem:[%s374 + $0xbc0] sm:$0xff]
        %v1191 = vld [vmem:[%s374 + $0xbc8] sm:$0xff]
        %v1192 = vld [vmem:[%s374 + $0xbd0] sm:$0xff]
        %v1193 = vld [vmem:[%s374 + $0xbd8] sm:$0xff]
        %v1194 = vld [vmem:[%s374 + $0xbe0] sm:$0xff]
        %v1195 = vld [vmem:[%s374 + $0xbe8] sm:$0xff]
        %v1196 = vld [vmem:[%s374 + $0xbf0] sm:$0xff]
        %v1197 = vld [vmem:[%s374 + $0xbf8] sm:$0xff]
        %v1198 = vld [vmem:[%s374 + $0xc00] sm:$0xff]
        %v1199 = vld [vmem:[%s374 + $0xc08] sm:$0xff]
        %v1200 = vld [vmem:[%s374 + $0xc10] sm:$0xff]
        %v1201 = vld [vmem:[%s374 + $0xc18] sm:$0xff]
        %v1202 = vld [vmem:[%s374 + $0xc20] sm:$0xff]
        %v1203 = vld [vmem:[%s374 + $0xc28] sm:$0xff]
        %v1204 = vld [vmem:[%s374 + $0xc30] sm:$0xff]
        %v1205 = vld [vmem:[%s374 + $0xc38] sm:$0xff]
        %v1206 = vld [vmem:[%s374 + $0xc40] sm:$0xff]
        %v1207 = vld [vmem:[%s374 + $0xc48] sm:$0xff]
        %v1208 = vld [vmem:[%s374 + $0xc50] sm:$0xff]
        %v1209 = vld [vmem:[%s374 + $0xc58] sm:$0xff]
        %v1210 = vld [vmem:[%s374 + $0xc60] sm:$0xff]
        %v1211 = vld [vmem:[%s374 + $0xc68] sm:$0xff]
        %v1212 = vld [vmem:[%s374 + $0xc70] sm:$0xff]
        %v1213 = vld [vmem:[%s374 + $0xc78] sm:$0xff]
        %v1214 = vld [vmem:[%s374 + $0xc80] sm:$0xff]
        %v1215 = vld [vmem:[%s374 + $0xc88] sm:$0xff]
        %v1216 = vld [vmem:[%s374 + $0xc90] sm:$0xff]
        %v1217 = vld [vmem:[%s374 + $0xc98] sm:$0xff]
        %v1218 = vld [vmem:[%s374 + $0xca0] sm:$0xff]
        %v1219 = vld [vmem:[%s374 + $0xca8] sm:$0xff]
        %v1220 = vld [vmem:[%s374 + $0xcb0] sm:$0xff]
        %v1221 = vld [vmem:[%s374 + $0xcb8] sm:$0xff]
        %v1222 = vld [vmem:[%s374 + $0xcc0] sm:$0xff]
        %v1223 = vld [vmem:[%s374 + $0xcc8] sm:$0xff]
        %v1224 = vld [vmem:[%s374 + $0xcd0] sm:$0xff]
        %v1225 = vld [vmem:[%s374 + $0xcd8] sm:$0xff]
        %v1226 = vld [vmem:[%s374 + $0xce0] sm:$0xff]
        %v1227 = vld [vmem:[%s374 + $0xce8] sm:$0xff]
        %v1228 = vld [vmem:[%s374 + $0xcf0] sm:$0xff]
        %v1229 = vld [vmem:[%s374 + $0xcf8] sm:$0xff]
        %v1230 = vld [vmem:[%s374 + $0xd00] sm:$0xff]
        %v1231 = vld [vmem:[%s374 + $0xd08] sm:$0xff]
        %v1232 = vld [vmem:[%s374 + $0xd10] sm:$0xff]
        %v1233 = vld [vmem:[%s374 + $0xd18] sm:$0xff]
        %v1234 = vld [vmem:[%s374 + $0xd20] sm:$0xff]
        %v1235 = vld [vmem:[%s374 + $0xd28] sm:$0xff]
        %v1236 = vld [vmem:[%s374 + $0xd30] sm:$0xff]
        %v1237 = vld [vmem:[%s374 + $0xd38] sm:$0xff]
        %v1238 = vld [vmem:[%s374 + $0xd40] sm:$0xff]
        %v1239 = vld [vmem:[%s374 + $0xd48] sm:$0xff]
        %v1240 = vld [vmem:[%s374 + $0xd50] sm:$0xff]
        %v1241 = vld [vmem:[%s374 + $0xd58] sm:$0xff]
        %v1242 = vld [vmem:[%s374 + $0xd60] sm:$0xff]
        %v1243 = vld [vmem:[%s374 + $0xd68] sm:$0xff]
        %v1244 = vld [vmem:[%s374 + $0xd70] sm:$0xff]
        %v1245 = vld [vmem:[%s374 + $0xd78] sm:$0xff]
        %v1246 = vld [vmem:[%s374 + $0xd80] sm:$0xff]
        %v1247 = vld [vmem:[%s374 + $0xd88] sm:$0xff]
        %v1248 = vld [vmem:[%s374 + $0xd90] sm:$0xff]
        %v1249 = vld [vmem:[%s374 + $0xd98] sm:$0xff]
        %v1250 = vld [vmem:[%s374 + $0xda0] sm:$0xff]
        %v1251 = vld [vmem:[%s374 + $0xda8] sm:$0xff]
        %v1252 = vld [vmem:[%s374 + $0xdb0] sm:$0xff]
        %v1253 = vld [vmem:[%s374 + $0xdb8] sm:$0xff]
        %v1254 = vld [vmem:[%s374 + $0xdc0] sm:$0xff]
        %v1255 = vld [vmem:[%s374 + $0xdc8] sm:$0xff]
        %v1256 = vld [vmem:[%s374 + $0xdd0] sm:$0xff]
        %v1257 = vld [vmem:[%s374 + $0xdd8] sm:$0xff]
        %v1258 = vld [vmem:[%s374 + $0xde0] sm:$0xff]
        %v1259 = vld [vmem:[%s374 + $0xde8] sm:$0xff]
        %v1260 = vld [vmem:[%s374 + $0xdf0] sm:$0xff]
        %v1261 = vld [vmem:[%s374 + $0xdf8] sm:$0xff]
        %v1262 = vld [vmem:[%s374 + $0xe00] sm:$0xff]
        %v1263 = vld [vmem:[%s374 + $0xe08] sm:$0xff]
        %v1264 = vld [vmem:[%s374 + $0xe10] sm:$0xff]
        %v1265 = vld [vmem:[%s374 + $0xe18] sm:$0xff]
        %v1266 = vld [vmem:[%s374 + $0xe20] sm:$0xff]
        %v1267 = vld [vmem:[%s374 + $0xe28] sm:$0xff]
        %v1268 = vld [vmem:[%s374 + $0xe30] sm:$0xff]
        %v1269 = vld [vmem:[%s374 + $0xe38] sm:$0xff]
        %v1270 = vld [vmem:[%s374 + $0xe40] sm:$0xff]
        %v1271 = vld [vmem:[%s374 + $0xe48] sm:$0xff]
        %v1272 = vld [vmem:[%s374 + $0xe50] sm:$0xff]
        %v1273 = vld [vmem:[%s374 + $0xe58] sm:$0xff]
        %v1274 = vld [vmem:[%s374 + $0xe60] sm:$0xff]
        %v1275 = vld [vmem:[%s374 + $0xe68] sm:$0xff]
        %v1276 = vld [vmem:[%s374 + $0xe70] sm:$0xff]
        %v1277 = vld [vmem:[%s374 + $0xe78] sm:$0xff]
        %v1278 = vld [vmem:[%s374 + $0xe80] sm:$0xff]
        %v1279 = vld [vmem:[%s374 + $0xe88] sm:$0xff]
        %v1280 = vld [vmem:[%s374 + $0xe90] sm:$0xff]
        %v1281 = vld [vmem:[%s374 + $0xe98] sm:$0xff]
        %v1282 = vld [vmem:[%s374 + $0xea0] sm:$0xff]
        %v1283 = vld [vmem:[%s374 + $0xea8] sm:$0xff]
        %v1284 = vld [vmem:[%s374 + $0xeb0] sm:$0xff]
        %v1285 = vld [vmem:[%s374 + $0xeb8] sm:$0xff]
        %v1286 = vld [vmem:[%s374 + $0xec0] sm:$0xff]
        %v1287 = vld [vmem:[%s374 + $0xec8] sm:$0xff]
        %v1288 = vld [vmem:[%s374 + $0xed0] sm:$0xff]
        %v1289 = vld [vmem:[%s374 + $0xed8] sm:$0xff]
        %v1290 = vld [vmem:[%s374 + $0xee0] sm:$0xff]
        %v1291 = vld [vmem:[%s374 + $0xee8] sm:$0xff]
        %v1292 = vld [vmem:[%s374 + $0xef0] sm:$0xff]
        %v1293 = vld [vmem:[%s374 + $0xef8] sm:$0xff]
        %v1294 = vld [vmem:[%s374 + $0xf00] sm:$0xff]
        %v1295 = vld [vmem:[%s374 + $0xf08] sm:$0xff]
        %v1296 = vld [vmem:[%s374 + $0xf10] sm:$0xff]
        %v1297 = vld [vmem:[%s374 + $0xf18] sm:$0xff]
        %v1298 = vld [vmem:[%s374 + $0xf20] sm:$0xff]
        %v1299 = vld [vmem:[%s374 + $0xf28] sm:$0xff]
        %v1300 = vld [vmem:[%s374 + $0xf30] sm:$0xff]
        %v1301 = vld [vmem:[%s374 + $0xf38] sm:$0xff]
        %v1302 = vld [vmem:[%s374 + $0xf40] sm:$0xff]
        %v1303 = vld [vmem:[%s374 + $0xf48] sm:$0xff]
        %v1304 = vld [vmem:[%s374 + $0xf50] sm:$0xff]
        %v1305 = vld [vmem:[%s374 + $0xf58] sm:$0xff]
        %v1306 = vld [vmem:[%s374 + $0xf60] sm:$0xff]
        %v1307 = vld [vmem:[%s374 + $0xf68] sm:$0xff]
        %v1308 = vld [vmem:[%s374 + $0xf70] sm:$0xff]
        %v1309 = vld [vmem:[%s374 + $0xf78] sm:$0xff]
        %v1310 = vld [vmem:[%s374 + $0xf80] sm:$0xff]
        %v1311 = vld [vmem:[%s374 + $0xf88] sm:$0xff]
        %v1312 = vld [vmem:[%s374 + $0xf90] sm:$0xff]
        %v1313 = vld [vmem:[%s374 + $0xf98] sm:$0xff]
        %v1314 = vld [vmem:[%s374 + $0xfa0] sm:$0xff]
        %v1315 = vld [vmem:[%s374 + $0xfa8] sm:$0xff]
        %v1316 = vld [vmem:[%s374 + $0xfb0] sm:$0xff]
        %v1317 = vld [vmem:[%s374 + $0xfb8] sm:$0xff]
        %v1318 = vld [vmem:[%s374 + $0xfc0] sm:$0xff]
        %v1319 = vld [vmem:[%s374 + $0xfc8] sm:$0xff]
        %v1320 = vld [vmem:[%s374 + $0xfd0] sm:$0xff]
        %v1321 = vld [vmem:[%s374 + $0xfd8] sm:$0xff]
        %v1322 = vld [vmem:[%s374 + $0xfe0] sm:$0xff]
        %v1323 = vld [vmem:[%s374 + $0xfe8] sm:$0xff]
        %v1324 = vld [vmem:[%s374 + $0xff0] sm:$0xff]
        %v1325 = vld [vmem:[%s374 + $0xff8] sm:$0xff]
        %v1326 = vld [vmem:[%s374 + $0x1000] sm:$0xff]
        %v1327 = vld [vmem:[%s374 + $0x1008] sm:$0xff]
        %v1328 = vld [vmem:[%s374 + $0x1010] sm:$0xff]
        %v1329 = vld [vmem:[%s374 + $0x1018] sm:$0xff]
        %v1330 = vld [vmem:[%s374 + $0x1020] sm:$0xff]
        %v1331 = vld [vmem:[%s374 + $0x1028] sm:$0xff]
        %v1332 = vld [vmem:[%s374 + $0x1030] sm:$0xff]
        %v1333 = vld [vmem:[%s374 + $0x1038] sm:$0xff]
        %v1334 = vld [vmem:[%s374 + $0x1040] sm:$0xff]
        %v1335 = vld [vmem:[%s374 + $0x1048] sm:$0xff]
        %v1336 = vld [vmem:[%s374 + $0x1050] sm:$0xff]
        %v1337 = vld [vmem:[%s374 + $0x1058] sm:$0xff]
        %v1338 = vld [vmem:[%s374 + $0x1060] sm:$0xff]
        %v1339 = vld [vmem:[%s374 + $0x1068] sm:$0xff]
        %v1340 = vld [vmem:[%s374 + $0x1070] sm:$0xff]
        %v1341 = vld [vmem:[%s374 + $0x1078] sm:$0xff]
        %v1342 = vld [vmem:[%s374 + $0x1080] sm:$0xff]
        %v1343 = vld [vmem:[%s374 + $0x1088] sm:$0xff]
        %v1344 = vld [vmem:[%s374 + $0x1090] sm:$0xff]
        %v1345 = vld [vmem:[%s374 + $0x1098] sm:$0xff]
        %v1346 = vld [vmem:[%s374 + $0x10a0] sm:$0xff]
        %v1347 = vld [vmem:[%s374 + $0x10a8] sm:$0xff]
        %v1348 = vld [vmem:[%s374 + $0x10b0] sm:$0xff]
        %v1349 = vld [vmem:[%s374 + $0x10b8] sm:$0xff]
        %v1350 = vld [vmem:[%s374 + $0x10c0] sm:$0xff]
        %v1351 = vld [vmem:[%s374 + $0x10c8] sm:$0xff]
        %v1352 = vld [vmem:[%s374 + $0x10d0] sm:$0xff]
        %v1353 = vld [vmem:[%s374 + $0x10d8] sm:$0xff]
        %v1354 = vld [vmem:[%s374 + $0x10e0] sm:$0xff]
        %v1355 = vld [vmem:[%s374 + $0x10e8] sm:$0xff]
        %v1356 = vld [vmem:[%s374 + $0x10f0] sm:$0xff]
        %v1357 = vld [vmem:[%s374 + $0x10f8] sm:$0xff]
        %v1358 = vld [vmem:[%s374 + $0x1100] sm:$0xff]
        %v1359 = vld [vmem:[%s374 + $0x1108] sm:$0xff]
        %v1360 = vld [vmem:[%s374 + $0x1110] sm:$0xff]
        %v1361 = vld [vmem:[%s374 + $0x1118] sm:$0xff]
        %v1362 = vld [vmem:[%s374 + $0x1120] sm:$0xff]
        %v1363 = vld [vmem:[%s374 + $0x1128] sm:$0xff]
        %v1364 = vld [vmem:[%s374 + $0x1130] sm:$0xff]
        %v1365 = vld [vmem:[%s374 + $0x1138] sm:$0xff]
        %v1366 = vld [vmem:[%s374 + $0x1140] sm:$0xff]
        %v1367 = vld [vmem:[%s374 + $0x1148] sm:$0xff]
        %v1368 = vld [vmem:[%s374 + $0x1150] sm:$0xff]
        %v1369 = vld [vmem:[%s374 + $0x1158] sm:$0xff]
        %v1370 = vld [vmem:[%s374 + $0x1160] sm:$0xff]
        %v1371 = vld [vmem:[%s374 + $0x1168] sm:$0xff]
        %v1372 = vld [vmem:[%s374 + $0x1170] sm:$0xff]
        %v1373 = vld [vmem:[%s374 + $0x1178] sm:$0xff]
        %v1374 = vld [vmem:[%s374 + $0x1180] sm:$0xff]
        %v1375 = vld [vmem:[%s374 + $0x1188] sm:$0xff]
        %v1376 = vld [vmem:[%s374 + $0x1190] sm:$0xff]
        %v1377 = vld [vmem:[%s374 + $0x1198] sm:$0xff]
        %v1378 = vld [vmem:[%s374 + $0x11a0] sm:$0xff]
        %v1379 = vld [vmem:[%s374 + $0x11a8] sm:$0xff]
        %v1380 = vld [vmem:[%s374 + $0x11b0] sm:$0xff]
        %v1381 = vld [vmem:[%s374 + $0x11b8] sm:$0xff]
        %v1382 = vld [vmem:[%s374 + $0x11c0] sm:$0xff]
        %v1383 = vld [vmem:[%s374 + $0x11c8] sm:$0xff]
        %v1384 = vld [vmem:[%s374 + $0x11d0] sm:$0xff]
        %v1385 = vld [vmem:[%s374 + $0x11d8] sm:$0xff]
        %v1386 = vld [vmem:[%s374 + $0x11e0] sm:$0xff]
        %v1387 = vld [vmem:[%s374 + $0x11e8] sm:$0xff]
        %v1388 = vld [vmem:[%s374 + $0x11f0] sm:$0xff]
        %v1389 = vld [vmem:[%s374 + $0x11f8] sm:$0xff]
        %v1390 = vld [vmem:[%s374 + $0x1200] sm:$0xff]
        %v1391 = vld [vmem:[%s374 + $0x1208] sm:$0xff]
        %v1392 = vld [vmem:[%s374 + $0x1210] sm:$0xff]
        %v1393 = vld [vmem:[%s374 + $0x1218] sm:$0xff]
        %v1394 = vld [vmem:[%s374 + $0x1220] sm:$0xff]
        %v1395 = vld [vmem:[%s374 + $0x1228] sm:$0xff]
        %v1396 = vld [vmem:[%s374 + $0x1230] sm:$0xff]
        %v1397 = vld [vmem:[%s374 + $0x1238] sm:$0xff]
        %v1398 = vld [vmem:[%s374 + $0x1240] sm:$0xff]
        %v1399 = vld [vmem:[%s374 + $0x1248] sm:$0xff]
        %v1400 = vld [vmem:[%s374 + $0x1250] sm:$0xff]
        %v1401 = vld [vmem:[%s374 + $0x1258] sm:$0xff]
        %v1402 = vld [vmem:[%s374 + $0x1260] sm:$0xff]
        %v1403 = vld [vmem:[%s374 + $0x1268] sm:$0xff]
        %v1404 = vld [vmem:[%s374 + $0x1270] sm:$0xff]
        %v1405 = vld [vmem:[%s374 + $0x1278] sm:$0xff]
        %v1406 = vld [vmem:[%s374 + $0x1280] sm:$0xff]
        %v1407 = vld [vmem:[%s374 + $0x1288] sm:$0xff]
        %v1408 = vld [vmem:[%s374 + $0x1290] sm:$0xff]
        %v1409 = vld [vmem:[%s374 + $0x1298] sm:$0xff]
        %v1410 = vld [vmem:[%s374 + $0x12a0] sm:$0xff]
        %v1411 = vld [vmem:[%s374 + $0x12a8] sm:$0xff]
        %v1412 = vld [vmem:[%s374 + $0x12b0] sm:$0xff]
        %v1413 = vld [vmem:[%s374 + $0x12b8] sm:$0xff]
        %v1414 = vld [vmem:[%s374 + $0x12c0] sm:$0xff]
        %v1415 = vld [vmem:[%s374 + $0x12c8] sm:$0xff]
        %v1416 = vld [vmem:[%s374 + $0x12d0] sm:$0xff]
        %v1417 = vld [vmem:[%s374 + $0x12d8] sm:$0xff]
        %v1418 = vld [vmem:[%s374 + $0x12e0] sm:$0xff]
        %v1419 = vld [vmem:[%s374 + $0x12e8] sm:$0xff]
        %v1420 = vld [vmem:[%s374 + $0x12f0] sm:$0xff]
        %v1421 = vld [vmem:[%s374 + $0x12f8] sm:$0xff]
        %v1422 = vld [vmem:[%s374 + $0x1300] sm:$0xff]
        %v1423 = vld [vmem:[%s374 + $0x1308] sm:$0xff]
        %v1424 = vld [vmem:[%s374 + $0x1310] sm:$0xff]
        %v1425 = vld [vmem:[%s374 + $0x1318] sm:$0xff]
        %v1426 = vld [vmem:[%s374 + $0x1320] sm:$0xff]
        %v1427 = vld [vmem:[%s374 + $0x1328] sm:$0xff]
        %v1428 = vld [vmem:[%s374 + $0x1330] sm:$0xff]
        %v1429 = vld [vmem:[%s374 + $0x1338] sm:$0xff]
        %v1430 = vld [vmem:[%s374 + $0x1340] sm:$0xff]
        %v1431 = vld [vmem:[%s374 + $0x1348] sm:$0xff]
        %v1432 = vld [vmem:[%s374 + $0x1350] sm:$0xff]
        %v1433 = vld [vmem:[%s374 + $0x1358] sm:$0xff]
        %v1434 = vld [vmem:[%s374 + $0x1360] sm:$0xff]
        %v1435 = vld [vmem:[%s374 + $0x1368] sm:$0xff]
        %v1436 = vld [vmem:[%s374 + $0x1370] sm:$0xff]
        %v1437 = vld [vmem:[%s374 + $0x1378] sm:$0xff]
        %v1438 = vld [vmem:[%s374 + $0x1380] sm:$0xff]
        %v1439 = vld [vmem:[%s374 + $0x1388] sm:$0xff]
        %v1440 = vld [vmem:[%s374 + $0x1390] sm:$0xff]
        %v1441 = vld [vmem:[%s374 + $0x1398] sm:$0xff]
        %v1442 = vld [vmem:[%s374 + $0x13a0] sm:$0xff]
        %v1443 = vld [vmem:[%s374 + $0x13a8] sm:$0xff]
        %v1444 = vld [vmem:[%s374 + $0x13b0] sm:$0xff]
        %v1445 = vld [vmem:[%s374 + $0x13b8] sm:$0xff]
        %v1446 = vld [vmem:[%s374 + $0x13c0] sm:$0xff]
        %v1447 = vld [vmem:[%s374 + $0x13c8] sm:$0xff]
        %v1448 = vld [vmem:[%s374 + $0x13d0] sm:$0xff]
        %v1449 = vld [vmem:[%s374 + $0x13d8] sm:$0xff]
        %v1450 = vld [vmem:[%s374 + $0x13e0] sm:$0xff]
        %v1451 = vld [vmem:[%s374 + $0x13e8] sm:$0xff]
        %v1452 = vld [vmem:[%s374 + $0x13f0] sm:$0xff]
        %v1453 = vld [vmem:[%s374 + $0x13f8] sm:$0xff]
        %v1454 = vld [vmem:[%s374 + $0x1400] sm:$0xff]
        %v1455 = vld [vmem:[%s374 + $0x1408] sm:$0xff]
        %v1456 = vld [vmem:[%s374 + $0x1410] sm:$0xff]
        %v1457 = vld [vmem:[%s374 + $0x1418] sm:$0xff]
        %v1458 = vld [vmem:[%s374 + $0x1420] sm:$0xff]
        %v1459 = vld [vmem:[%s374 + $0x1428] sm:$0xff]
        %v1460 = vld [vmem:[%s374 + $0x1430] sm:$0xff]
        %v1461 = vld [vmem:[%s374 + $0x1438] sm:$0xff]
        %v1462 = vld [vmem:[%s374 + $0x1440] sm:$0xff]
        %v1463 = vld [vmem:[%s374 + $0x1448] sm:$0xff]
        %v1464 = vld [vmem:[%s374 + $0x1450] sm:$0xff]
        %v1465 = vld [vmem:[%s374 + $0x1458] sm:$0xff]
        %v1466 = vld [vmem:[%s374 + $0x1460] sm:$0xff]
        %v1467 = vld [vmem:[%s374 + $0x1468] sm:$0xff]
        %v1468 = vld [vmem:[%s374 + $0x1470] sm:$0xff]
        %v1469 = vld [vmem:[%s374 + $0x1478] sm:$0xff]
        %v1470 = vld [vmem:[%s374 + $0x1480] sm:$0xff]
        %v1471 = vld [vmem:[%s374 + $0x1488] sm:$0xff]
        %v1472 = vld [vmem:[%s374 + $0x1490] sm:$0xff]
        %v1473 = vld [vmem:[%s374 + $0x1498] sm:$0xff]
        %v1474 = vld [vmem:[%s374 + $0x14a0] sm:$0xff]
        %v1475 = vld [vmem:[%s374 + $0x14a8] sm:$0xff]
        %v1476 = vld [vmem:[%s374 + $0x14b0] sm:$0xff]
        %v1477 = vld [vmem:[%s374 + $0x14b8] sm:$0xff]
        %v1478 = vld [vmem:[%s374 + $0x14c0] sm:$0xff]
        %v1479 = vld [vmem:[%s374 + $0x14c8] sm:$0xff]
        %v1480 = vld [vmem:[%s374 + $0x14d0] sm:$0xff]
        %v1481 = vld [vmem:[%s374 + $0x14d8] sm:$0xff]
        %v1482 = vld [vmem:[%s374 + $0x14e0] sm:$0xff]
        %v1483 = vld [vmem:[%s374 + $0x14e8] sm:$0xff]
        %v1484 = vld [vmem:[%s374 + $0x14f0] sm:$0xff]
        %v1485 = vld [vmem:[%s374 + $0x14f8] sm:$0xff]
        %v1486 = vld [vmem:[%s374 + $0x1500] sm:$0xff]
        %v1487 = vld [vmem:[%s374 + $0x1508] sm:$0xff]
        %v1488 = vld [vmem:[%s374 + $0x1510] sm:$0xff]
        %v1489 = vld [vmem:[%s374 + $0x1518] sm:$0xff]
        %v1490 = vld [vmem:[%s374 + $0x1520] sm:$0xff]
        %v1491 = vld [vmem:[%s374 + $0x1528] sm:$0xff]
        %v1492 = vld [vmem:[%s374 + $0x1530] sm:$0xff]
        %v1493 = vld [vmem:[%s374 + $0x1538] sm:$0xff]
        %v1494 = vld [vmem:[%s374 + $0x1540] sm:$0xff]
        %v1495 = vld [vmem:[%s374 + $0x1548] sm:$0xff]
        %v1496 = vld [vmem:[%s374 + $0x1550] sm:$0xff]
        %v1497 = vld [vmem:[%s374 + $0x1558] sm:$0xff]
        %v1498 = vld [vmem:[%s374 + $0x1560] sm:$0xff]
        %v1499 = vld [vmem:[%s374 + $0x1568] sm:$0xff]
        %v1500 = vld [vmem:[%s374 + $0x1570] sm:$0xff]
        %v1501 = vld [vmem:[%s374 + $0x1578] sm:$0xff]
        %v1502 = vld [vmem:[%s374 + $0x1580] sm:$0xff]
        %v1503 = vld [vmem:[%s374 + $0x1588] sm:$0xff]
        %v1504 = vld [vmem:[%s374 + $0x1590] sm:$0xff]
        %v1505 = vld [vmem:[%s374 + $0x1598] sm:$0xff]
        %v1506 = vld [vmem:[%s374 + $0x15a0] sm:$0xff]
        %v1507 = vld [vmem:[%s374 + $0x15a8] sm:$0xff]
        %v1508 = vld [vmem:[%s374 + $0x15b0] sm:$0xff]
        %v1509 = vld [vmem:[%s374 + $0x15b8] sm:$0xff]
        %v1510 = vld [vmem:[%s374 + $0x15c0] sm:$0xff]
        %v1511 = vld [vmem:[%s374 + $0x15c8] sm:$0xff]
        %v1512 = vld [vmem:[%s374 + $0x15d0] sm:$0xff]
        %v1513 = vld [vmem:[%s374 + $0x15d8] sm:$0xff]
        %v1514 = vld [vmem:[%s374 + $0x15e0] sm:$0xff]
        %v1515 = vld [vmem:[%s374 + $0x15e8] sm:$0xff]
        %v1516 = vld [vmem:[%s374 + $0x15f0] sm:$0xff]
        %v1517 = vld [vmem:[%s374 + $0x15f8] sm:$0xff]
        %v1518 = vld [vmem:[%s374 + $0x1600] sm:$0xff]
        %v1519 = vld [vmem:[%s374 + $0x1608] sm:$0xff]
        %v1520 = vld [vmem:[%s374 + $0x1610] sm:$0xff]
        %v1521 = vld [vmem:[%s374 + $0x1618] sm:$0xff]
        %v1522 = vld [vmem:[%s374 + $0x1620] sm:$0xff]
        %v1523 = vld [vmem:[%s374 + $0x1628] sm:$0xff]
        %v1524 = vld [vmem:[%s374 + $0x1630] sm:$0xff]
        %v1525 = vld [vmem:[%s374 + $0x1638] sm:$0xff]
        %v1526 = vld [vmem:[%s374 + $0x1640] sm:$0xff]
        %v1527 = vld [vmem:[%s374 + $0x1648] sm:$0xff]
        %v1528 = vld [vmem:[%s374 + $0x1650] sm:$0xff]
        %v1529 = vld [vmem:[%s374 + $0x1658] sm:$0xff]
        %v1530 = vld [vmem:[%s374 + $0x1660] sm:$0xff]
        %v1531 = vld [vmem:[%s374 + $0x1668] sm:$0xff]
        %v1532 = vld [vmem:[%s374 + $0x1670] sm:$0xff]
        %v1533 = vld [vmem:[%s374 + $0x1678] sm:$0xff]
        %v1534 = vld [vmem:[%s374 + $0x1680] sm:$0xff]
        %v1535 = vld [vmem:[%s374 + $0x1688] sm:$0xff]
        %v1536 = vld [vmem:[%s374 + $0x1690] sm:$0xff]
        %v1537 = vld [vmem:[%s374 + $0x1698] sm:$0xff]
        %v1538 = vld [vmem:[%s374 + $0x16a0] sm:$0xff]
        %v1539 = vld [vmem:[%s374 + $0x16a8] sm:$0xff]
        %v1540 = vld [vmem:[%s374 + $0x16b0] sm:$0xff]
        %v1541 = vld [vmem:[%s374 + $0x16b8] sm:$0xff]
        %v1542 = vld [vmem:[%s374 + $0x16c0] sm:$0xff]
        %v1543 = vld [vmem:[%s374 + $0x16c8] sm:$0xff]
        %v1544 = vld [vmem:[%s374 + $0x16d0] sm:$0xff]
        %v1545 = vld [vmem:[%s374 + $0x16d8] sm:$0xff]
        %v1546 = vld [vmem:[%s374 + $0x16e0] sm:$0xff]
        %v1547 = vld [vmem:[%s374 + $0x16e8] sm:$0xff]
        %v1548 = vld [vmem:[%s374 + $0x16f0] sm:$0xff]
        %v1549 = vld [vmem:[%s374 + $0x16f8] sm:$0xff]
        %v1550 = vld [vmem:[%s374 + $0x1700] sm:$0xff]
        %v1551 = vld [vmem:[%s374 + $0x1708] sm:$0xff]
        %v1552 = vld [vmem:[%s374 + $0x1710] sm:$0xff]
        %v1553 = vld [vmem:[%s374 + $0x1718] sm:$0xff]
        %v1554 = vld [vmem:[%s374 + $0x1720] sm:$0xff]
        %v1555 = vld [vmem:[%s374 + $0x1728] sm:$0xff]
        %v1556 = vld [vmem:[%s374 + $0x1730] sm:$0xff]
        %v1557 = vld [vmem:[%s374 + $0x1738] sm:$0xff]
        %v1558 = vld [vmem:[%s374 + $0x1740] sm:$0xff]
        %v1559 = vld [vmem:[%s374 + $0x1748] sm:$0xff]
        %v1560 = vld [vmem:[%s374 + $0x1750] sm:$0xff]
        %v1561 = vld [vmem:[%s374 + $0x1758] sm:$0xff]
        %v1562 = vld [vmem:[%s374 + $0x1760] sm:$0xff]
        %v1563 = vld [vmem:[%s374 + $0x1768] sm:$0xff]
        %v1564 = vld [vmem:[%s374 + $0x1770] sm:$0xff]
        %v1565 = vld [vmem:[%s374 + $0x1778] sm:$0xff]
        %v1566 = vld [vmem:[%s374 + $0x1780] sm:$0xff]
        %v1567 = vld [vmem:[%s374 + $0x1788] sm:$0xff]
        %v1568 = vld [vmem:[%s374 + $0x1790] sm:$0xff]
        %v1569 = vld [vmem:[%s374 + $0x1798] sm:$0xff]
        %v1570 = vld [vmem:[%s374 + $0x17a0] sm:$0xff]
        %v1571 = vld [vmem:[%s374 + $0x17a8] sm:$0xff]
        %v1572 = vld [vmem:[%s374 + $0x17b0] sm:$0xff]
        %v1573 = vld [vmem:[%s374 + $0x17b8] sm:$0xff]
        %v1574 = vld [vmem:[%s374 + $0x17c0] sm:$0xff]
        %v1575 = vld [vmem:[%s374 + $0x17c8] sm:$0xff]
        %v1576 = vld [vmem:[%s374 + $0x17d0] sm:$0xff]
        %v1577 = vld [vmem:[%s374 + $0x17d8] sm:$0xff]
        %v1578 = vld [vmem:[%s374 + $0x17e0] sm:$0xff]
        %v1579 = vld [vmem:[%s374 + $0x17e8] sm:$0xff]
        %v1580 = vld [vmem:[%s374 + $0x17f0] sm:$0xff]
        %v1581 = vld [vmem:[%s374 + $0x17f8] sm:$0xff]
        %v1582 = vld [vmem:[%s374 + $0x1800] sm:$0xff]
        %v1583 = vld [vmem:[%s374 + $0x1808] sm:$0xff]
        %v1584 = vld [vmem:[%s374 + $0x1810] sm:$0xff]
        %v1585 = vld [vmem:[%s374 + $0x1818] sm:$0xff]
        %v1586 = vld [vmem:[%s374 + $0x1820] sm:$0xff]
        %v1587 = vld [vmem:[%s374 + $0x1828] sm:$0xff]
        %v1588 = vld [vmem:[%s374 + $0x1830] sm:$0xff]
        %v1589 = vld [vmem:[%s374 + $0x1838] sm:$0xff]
        %v1590 = vld [vmem:[%s374 + $0x1840] sm:$0xff]
        %v1591 = vld [vmem:[%s374 + $0x1848] sm:$0xff]
        %v1592 = vld [vmem:[%s374 + $0x1850] sm:$0xff]
        %v1593 = vld [vmem:[%s374 + $0x1858] sm:$0xff]
        %v1594 = vld [vmem:[%s374 + $0x1860] sm:$0xff]
        %v1595 = vld [vmem:[%s374 + $0x1868] sm:$0xff]
        %v1596 = vld [vmem:[%s374 + $0x1870] sm:$0xff]
        %v1597 = vld [vmem:[%s374 + $0x1878] sm:$0xff]
        %v1598 = vld [vmem:[%s374 + $0x1880] sm:$0xff]
        %v1599 = vld [vmem:[%s374 + $0x1888] sm:$0xff]
        %v1600 = vld [vmem:[%s374 + $0x1890] sm:$0xff]
        %v1601 = vld [vmem:[%s374 + $0x1898] sm:$0xff]
        %v1602 = vld [vmem:[%s374 + $0x18a0] sm:$0xff]
        %v1603 = vld [vmem:[%s374 + $0x18a8] sm:$0xff]
        %v1604 = vld [vmem:[%s374 + $0x18b0] sm:$0xff]
        %v1605 = vld [vmem:[%s374 + $0x18b8] sm:$0xff]
        %v1606 = vld [vmem:[%s374 + $0x18c0] sm:$0xff]
        %v1607 = vld [vmem:[%s374 + $0x18c8] sm:$0xff]
        %v1608 = vld [vmem:[%s374 + $0x18d0] sm:$0xff]
        %v1609 = vld [vmem:[%s374 + $0x18d8] sm:$0xff]
        %v1610 = vld [vmem:[%s374 + $0x18e0] sm:$0xff]
        %v1611 = vld [vmem:[%s374 + $0x18e8] sm:$0xff]
        %v1612 = vld [vmem:[%s374 + $0x18f0] sm:$0xff]
        %v1613 = vld [vmem:[%s374 + $0x18f8] sm:$0xff]
        %v1614 = vld [vmem:[%s374 + $0x1900] sm:$0xff]
        %v1615 = vld [vmem:[%s374 + $0x1908] sm:$0xff]
        %v1616 = vld [vmem:[%s374 + $0x1910] sm:$0xff]
        %v1617 = vld [vmem:[%s374 + $0x1918] sm:$0xff]
        %v1618 = vld [vmem:[%s374 + $0x1920] sm:$0xff]
        %v1619 = vld [vmem:[%s374 + $0x1928] sm:$0xff]
        %v1620 = vld [vmem:[%s374 + $0x1930] sm:$0xff]
        %v1621 = vld [vmem:[%s374 + $0x1938] sm:$0xff]
        %v1622 = vld [vmem:[%s374 + $0x1940] sm:$0xff]
        %v1623 = vld [vmem:[%s374 + $0x1948] sm:$0xff]
        %v1624 = vld [vmem:[%s374 + $0x1950] sm:$0xff]
        %v1625 = vld [vmem:[%s374 + $0x1958] sm:$0xff]
        %v1626 = vld [vmem:[%s374 + $0x1960] sm:$0xff]
        %v1627 = vld [vmem:[%s374 + $0x1968] sm:$0xff]
        %v1628 = vld [vmem:[%s374 + $0x1970] sm:$0xff]
        %v1629 = vld [vmem:[%s374 + $0x1978] sm:$0xff]
        %v1630 = vld [vmem:[%s374 + $0x1980] sm:$0xff]
        %v1631 = vld [vmem:[%s374 + $0x1988] sm:$0xff]
        %v1632 = vld [vmem:[%s374 + $0x1990] sm:$0xff]
        %v1633 = vld [vmem:[%s374 + $0x1998] sm:$0xff]
        %v1634 = vld [vmem:[%s374 + $0x19a0] sm:$0xff]
        %v1635 = vld [vmem:[%s374 + $0x19a8] sm:$0xff]
        %v1636 = vld [vmem:[%s374 + $0x19b0] sm:$0xff]
        %v1637 = vld [vmem:[%s374 + $0x19b8] sm:$0xff]
        %v1638 = vld [vmem:[%s374 + $0x19c0] sm:$0xff]
        %v1639 = vld [vmem:[%s374 + $0x19c8] sm:$0xff]
        %v1640 = vld [vmem:[%s374 + $0x19d0] sm:$0xff]
        %v1641 = vld [vmem:[%s374 + $0x19d8] sm:$0xff]
        %v1642 = vld [vmem:[%s374 + $0x19e0] sm:$0xff]
        %v1643 = vld [vmem:[%s374 + $0x19e8] sm:$0xff]
        %v1644 = vld [vmem:[%s374 + $0x19f0] sm:$0xff]
        %v1645 = vld [vmem:[%s374 + $0x19f8] sm:$0xff]
        %v1646 = vld [vmem:[%s374 + $0x1a00] sm:$0xff]
        %v1647 = vld [vmem:[%s374 + $0x1a08] sm:$0xff]
        %v1648 = vld [vmem:[%s374 + $0x1a10] sm:$0xff]
        %v1649 = vld [vmem:[%s374 + $0x1a18] sm:$0xff]
        %v1650 = vld [vmem:[%s374 + $0x1a20] sm:$0xff]
        %v1651 = vld [vmem:[%s374 + $0x1a28] sm:$0xff]
        %v1652 = vld [vmem:[%s374 + $0x1a30] sm:$0xff]
        %v1653 = vld [vmem:[%s374 + $0x1a38] sm:$0xff]
        %v1654 = vld [vmem:[%s374 + $0x1a40] sm:$0xff]
        %v1655 = vld [vmem:[%s374 + $0x1a48] sm:$0xff]
        %v1656 = vld [vmem:[%s374 + $0x1a50] sm:$0xff]
        %v1657 = vld [vmem:[%s374 + $0x1a58] sm:$0xff]
        %v1658 = vld [vmem:[%s374 + $0x1a60] sm:$0xff]
        %v1659 = vld [vmem:[%s374 + $0x1a68] sm:$0xff]
        %v1660 = vld [vmem:[%s374 + $0x1a70] sm:$0xff]
        %v1661 = vld [vmem:[%s374 + $0x1a78] sm:$0xff]
        %v1662 = vld [vmem:[%s374 + $0x1a80] sm:$0xff]
        %v1663 = vld [vmem:[%s374 + $0x1a88] sm:$0xff]
        %v1664 = vld [vmem:[%s374 + $0x1a90] sm:$0xff]
        %v1665 = vld [vmem:[%s374 + $0x1a98] sm:$0xff]
        %v1666 = vld [vmem:[%s374 + $0x1aa0] sm:$0xff]
        %v1667 = vld [vmem:[%s374 + $0x1aa8] sm:$0xff]
        %v1668 = vld [vmem:[%s374 + $0x1ab0] sm:$0xff]
        %v1669 = vld [vmem:[%s374 + $0x1ab8] sm:$0xff]
        %v1670 = vld [vmem:[%s374 + $0x1ac0] sm:$0xff]
        %v1671 = vld [vmem:[%s374 + $0x1ac8] sm:$0xff]
        %v1672 = vld [vmem:[%s374 + $0x1ad0] sm:$0xff]
        %v1673 = vld [vmem:[%s374 + $0x1ad8] sm:$0xff]
        %v1674 = vld [vmem:[%s374 + $0x1ae0] sm:$0xff]
        %v1675 = vld [vmem:[%s374 + $0x1ae8] sm:$0xff]
        %v1676 = vld [vmem:[%s374 + $0x1af0] sm:$0xff]
        %v1677 = vld [vmem:[%s374 + $0x1af8] sm:$0xff]
        %v1678 = vld [vmem:[%s374 + $0x1b00] sm:$0xff]
        %v1679 = vld [vmem:[%s374 + $0x1b08] sm:$0xff]
        %v1680 = vld [vmem:[%s374 + $0x1b10] sm:$0xff]
        %v1681 = vld [vmem:[%s374 + $0x1b18] sm:$0xff]
        %v1682 = vld [vmem:[%s374 + $0x1b20] sm:$0xff]
        %v1683 = vld [vmem:[%s374 + $0x1b28] sm:$0xff]
        %v1684 = vld [vmem:[%s374 + $0x1b30] sm:$0xff]
        %v1685 = vld [vmem:[%s374 + $0x1b38] sm:$0xff]
        %v1686 = vld [vmem:[%s374 + $0x1b40] sm:$0xff]
        %v1687 = vld [vmem:[%s374 + $0x1b48] sm:$0xff]
        %v1688 = vld [vmem:[%s374 + $0x1b50] sm:$0xff]
        %v1689 = vld [vmem:[%s374 + $0x1b58] sm:$0xff]
        %v1690 = vld [vmem:[%s374 + $0x1b60] sm:$0xff]
        %v1691 = vld [vmem:[%s374 + $0x1b68] sm:$0xff]
        %v1692 = vld [vmem:[%s374 + $0x1b70] sm:$0xff]
        %v1693 = vld [vmem:[%s374 + $0x1b78] sm:$0xff]
        %v1694 = vld [vmem:[%s374 + $0x1b80] sm:$0xff]
        %v1695 = vld [vmem:[%s374 + $0x1b88] sm:$0xff]
        %v1696 = vld [vmem:[%s374 + $0x1b90] sm:$0xff]
        %v1697 = vld [vmem:[%s374 + $0x1b98] sm:$0xff]
        %v1698 = vld [vmem:[%s374 + $0x1ba0] sm:$0xff]
        %v1699 = vld [vmem:[%s374 + $0x1ba8] sm:$0xff]
        %v1700 = vld [vmem:[%s374 + $0x1bb0] sm:$0xff]
        %v1701 = vld [vmem:[%s374 + $0x1bb8] sm:$0xff]
        %v1702 = vld [vmem:[%s374 + $0x1bc0] sm:$0xff]
        %v1703 = vld [vmem:[%s374 + $0x1bc8] sm:$0xff]
        %v1704 = vld [vmem:[%s374 + $0x1bd0] sm:$0xff]
        %v1705 = vld [vmem:[%s374 + $0x1bd8] sm:$0xff]
        %v1706 = vld [vmem:[%s374 + $0x1be0] sm:$0xff]
        %v1707 = vld [vmem:[%s374 + $0x1be8] sm:$0xff]
        %v1708 = vld [vmem:[%s374 + $0x1bf0] sm:$0xff]
        %v1709 = vld [vmem:[%s374 + $0x1bf8] sm:$0xff]
        %v1710 = vld [vmem:[%s374 + $0x1c00] sm:$0xff]
        %v1711 = vld [vmem:[%s374 + $0x1c08] sm:$0xff]
        %v1712 = vld [vmem:[%s374 + $0x1c10] sm:$0xff]
        %v1713 = vld [vmem:[%s374 + $0x1c18] sm:$0xff]
        %v1714 = vld [vmem:[%s374 + $0x1c20] sm:$0xff]
        %v1715 = vld [vmem:[%s374 + $0x1c28] sm:$0xff]
        %v1716 = vld [vmem:[%s374 + $0x1c30] sm:$0xff]
        %v1717 = vld [vmem:[%s374 + $0x1c38] sm:$0xff]
        %v1718 = vld [vmem:[%s374 + $0x1c40] sm:$0xff]
        %v1719 = vld [vmem:[%s374 + $0x1c48] sm:$0xff]
        %v1720 = vld [vmem:[%s374 + $0x1c50] sm:$0xff]
        %v1721 = vld [vmem:[%s374 + $0x1c58] sm:$0xff]
        %v1722 = vld [vmem:[%s374 + $0x1c60] sm:$0xff]
        %v1723 = vld [vmem:[%s374 + $0x1c68] sm:$0xff]
        %v1724 = vld [vmem:[%s374 + $0x1c70] sm:$0xff]
        %v1725 = vld [vmem:[%s374 + $0x1c78] sm:$0xff]
        %v1726 = vld [vmem:[%s374 + $0x1c80] sm:$0xff]
        %v1727 = vld [vmem:[%s374 + $0x1c88] sm:$0xff]
        %v1728 = vld [vmem:[%s374 + $0x1c90] sm:$0xff]
        %v1729 = vld [vmem:[%s374 + $0x1c98] sm:$0xff]
        %v1730 = vld [vmem:[%s374 + $0x1ca0] sm:$0xff]
        %v1731 = vld [vmem:[%s374 + $0x1ca8] sm:$0xff]
        %v1732 = vld [vmem:[%s374 + $0x1cb0] sm:$0xff]
        %v1733 = vld [vmem:[%s374 + $0x1cb8] sm:$0xff]
        %v1734 = vld [vmem:[%s374 + $0x1cc0] sm:$0xff]
        %v1735 = vld [vmem:[%s374 + $0x1cc8] sm:$0xff]
        %v1736 = vld [vmem:[%s374 + $0x1cd0] sm:$0xff]
        %v1737 = vld [vmem:[%s374 + $0x1cd8] sm:$0xff]
        %v1738 = vld [vmem:[%s374 + $0x1ce0] sm:$0xff]
        %v1739 = vld [vmem:[%s374 + $0x1ce8] sm:$0xff]
        %v1740 = vld [vmem:[%s374 + $0x1cf0] sm:$0xff]
        %v1741 = vld [vmem:[%s374 + $0x1cf8] sm:$0xff]
        %v1742 = vld [vmem:[%s374 + $0x1d00] sm:$0xff]
        %v1743 = vld [vmem:[%s374 + $0x1d08] sm:$0xff]
        %v1744 = vld [vmem:[%s374 + $0x1d10] sm:$0xff]
        %v1745 = vld [vmem:[%s374 + $0x1d18] sm:$0xff]
        %v1746 = vld [vmem:[%s374 + $0x1d20] sm:$0xff]
        %v1747 = vld [vmem:[%s374 + $0x1d28] sm:$0xff]
        %v1748 = vld [vmem:[%s374 + $0x1d30] sm:$0xff]
        %v1749 = vld [vmem:[%s374 + $0x1d38] sm:$0xff]
        %v1750 = vld [vmem:[%s374 + $0x1d40] sm:$0xff]
        %v1751 = vld [vmem:[%s374 + $0x1d48] sm:$0xff]
        %v1752 = vld [vmem:[%s374 + $0x1d50] sm:$0xff]
        %v1753 = vld [vmem:[%s374 + $0x1d58] sm:$0xff]
        %v1754 = vld [vmem:[%s374 + $0x1d60] sm:$0xff]
        %v1755 = vld [vmem:[%s374 + $0x1d68] sm:$0xff]
        %v1756 = vld [vmem:[%s374 + $0x1d70] sm:$0xff]
        %v1757 = vld [vmem:[%s374 + $0x1d78] sm:$0xff]
        %v1758 = vld [vmem:[%s374 + $0x1d80] sm:$0xff]
        %v1759 = vld [vmem:[%s374 + $0x1d88] sm:$0xff]
        %v1760 = vld [vmem:[%s374 + $0x1d90] sm:$0xff]
        %v1761 = vld [vmem:[%s374 + $0x1d98] sm:$0xff]
        %v1762 = vld [vmem:[%s374 + $0x1da0] sm:$0xff]
        %v1763 = vld [vmem:[%s374 + $0x1da8] sm:$0xff]
        %v1764 = vld [vmem:[%s374 + $0x1db0] sm:$0xff]
        %v1765 = vld [vmem:[%s374 + $0x1db8] sm:$0xff]
        %v1766 = vld [vmem:[%s374 + $0x1dc0] sm:$0xff]
        %v1767 = vld [vmem:[%s374 + $0x1dc8] sm:$0xff]
        %v1768 = vld [vmem:[%s374 + $0x1dd0] sm:$0xff]
        %v1769 = vld [vmem:[%s374 + $0x1dd8] sm:$0xff]
        %v1770 = vld [vmem:[%s374 + $0x1de0] sm:$0xff]
        %v1771 = vld [vmem:[%s374 + $0x1de8] sm:$0xff]
        %v1772 = vld [vmem:[%s374 + $0x1df0] sm:$0xff]
        %v1773 = vld [vmem:[%s374 + $0x1df8] sm:$0xff]
        %v1774 = vld [vmem:[%s374 + $0x1e00] sm:$0xff]
        %v1775 = vld [vmem:[%s374 + $0x1e08] sm:$0xff]
        %v1776 = vld [vmem:[%s374 + $0x1e10] sm:$0xff]
        %v1777 = vld [vmem:[%s374 + $0x1e18] sm:$0xff]
        %v1778 = vld [vmem:[%s374 + $0x1e20] sm:$0xff]
        %v1779 = vld [vmem:[%s374 + $0x1e28] sm:$0xff]
        %v1780 = vld [vmem:[%s374 + $0x1e30] sm:$0xff]
        %v1781 = vld [vmem:[%s374 + $0x1e38] sm:$0xff]
        %v1782 = vld [vmem:[%s374 + $0x1e40] sm:$0xff]
        %v1783 = vld [vmem:[%s374 + $0x1e48] sm:$0xff]
        %v1784 = vld [vmem:[%s374 + $0x1e50] sm:$0xff]
        %v1785 = vld [vmem:[%s374 + $0x1e58] sm:$0xff]
        %v1786 = vld [vmem:[%s374 + $0x1e60] sm:$0xff]
        %v1787 = vld [vmem:[%s374 + $0x1e68] sm:$0xff]
        %v1788 = vld [vmem:[%s374 + $0x1e70] sm:$0xff]
        %v1789 = vld [vmem:[%s374 + $0x1e78] sm:$0xff]
        %v1790 = vld [vmem:[%s374 + $0x1e80] sm:$0xff]
        %v1791 = vld [vmem:[%s374 + $0x1e88] sm:$0xff]
        %v1792 = vld [vmem:[%s374 + $0x1e90] sm:$0xff]
        %v1793 = vld [vmem:[%s374 + $0x1e98] sm:$0xff]
        %v1794 = vld [vmem:[%s374 + $0x1ea0] sm:$0xff]
        %v1795 = vld [vmem:[%s374 + $0x1ea8] sm:$0xff]
        %v1796 = vld [vmem:[%s374 + $0x1eb0] sm:$0xff]
        %v1797 = vld [vmem:[%s374 + $0x1eb8] sm:$0xff]
        %v1798 = vld [vmem:[%s374 + $0x1ec0] sm:$0xff]
        %v1799 = vld [vmem:[%s374 + $0x1ec8] sm:$0xff]
        %v1800 = vld [vmem:[%s374 + $0x1ed0] sm:$0xff]
        %v1801 = vld [vmem:[%s374 + $0x1ed8] sm:$0xff]
        %v1802 = vld [vmem:[%s374 + $0x1ee0] sm:$0xff]
        %v1803 = vld [vmem:[%s374 + $0x1ee8] sm:$0xff]
        %v1804 = vld [vmem:[%s374 + $0x1ef0] sm:$0xff]
        %v1805 = vld [vmem:[%s374 + $0x1ef8] sm:$0xff]
        %v1806 = vld [vmem:[%s374 + $0x1f00] sm:$0xff]
        %v1807 = vld [vmem:[%s374 + $0x1f08] sm:$0xff]
        %v1808 = vld [vmem:[%s374 + $0x1f10] sm:$0xff]
        %v1809 = vld [vmem:[%s374 + $0x1f18] sm:$0xff]
        %v1810 = vld [vmem:[%s374 + $0x1f20] sm:$0xff]
        %v1811 = vld [vmem:[%s374 + $0x1f28] sm:$0xff]
        %v1812 = vld [vmem:[%s374 + $0x1f30] sm:$0xff]
        %v1813 = vld [vmem:[%s374 + $0x1f38] sm:$0xff]
        %v1814 = vld [vmem:[%s374 + $0x1f40] sm:$0xff]
        %v1815 = vld [vmem:[%s374 + $0x1f48] sm:$0xff]
        %v1816 = vld [vmem:[%s374 + $0x1f50] sm:$0xff]
        %v1817 = vld [vmem:[%s374 + $0x1f58] sm:$0xff]
        %v1818 = vld [vmem:[%s374 + $0x1f60] sm:$0xff]
        %v1819 = vld [vmem:[%s374 + $0x1f68] sm:$0xff]
        %v1820 = vld [vmem:[%s374 + $0x1f70] sm:$0xff]
        %v1821 = vld [vmem:[%s374 + $0x1f78] sm:$0xff]
        %v1822 = vld [vmem:[%s374 + $0x1f80] sm:$0xff]
        %v1823 = vld [vmem:[%s374 + $0x1f88] sm:$0xff]
        %v1824 = vld [vmem:[%s374 + $0x1f90] sm:$0xff]
        %v1825 = vld [vmem:[%s374 + $0x1f98] sm:$0xff]
        %v1826 = vld [vmem:[%s374 + $0x1fa0] sm:$0xff]
        %v1827 = vld [vmem:[%s374 + $0x1fa8] sm:$0xff]
        %v1828 = vld [vmem:[%s374 + $0x1fb0] sm:$0xff]
        %v1829 = vld [vmem:[%s374 + $0x1fb8] sm:$0xff]
        %v1830 = vld [vmem:[%s374 + $0x1fc0] sm:$0xff]
        %v1831 = vld [vmem:[%s374 + $0x1fc8] sm:$0xff]
        %v1832 = vld [vmem:[%s374 + $0x1fd0] sm:$0xff]
        %v1833 = vld [vmem:[%s374 + $0x1fd8] sm:$0xff]
        %v1834 = vld [vmem:[%s374 + $0x1fe0] sm:$0xff]
        %v1835 = vld [vmem:[%s374 + $0x1fe8] sm:$0xff]
        %v1836 = vld [vmem:[%s374 + $0x1ff0] sm:$0xff]
        %v1837 = vld [vmem:[%s374 + $0x1ff8] sm:$0xff]
        %v2862 = vunpack.c.l.b16 %v814
        %v2863 = vunpack.c.h.b16 %v814
        %v2864 = vunpack.c.l.b16 %v815
        %v2865 = vunpack.c.h.b16 %v815
        %v2866 = vunpack.c.l.b16 %v816
        %v2867 = vunpack.c.h.b16 %v816
        %v2868 = vunpack.c.l.b16 %v817
        %v2869 = vunpack.c.h.b16 %v817
        %v2870 = vunpack.c.l.b16 %v818
        %v2871 = vunpack.c.h.b16 %v818
        %v2872 = vunpack.c.l.b16 %v819
        %v2873 = vunpack.c.h.b16 %v819
        %v2874 = vunpack.c.l.b16 %v820
        %v2875 = vunpack.c.h.b16 %v820
        %v2876 = vunpack.c.l.b16 %v821
        %v2877 = vunpack.c.h.b16 %v821
        %v2878 = vunpack.c.l.b16 %v822
        %v2879 = vunpack.c.h.b16 %v822
        %v2880 = vunpack.c.l.b16 %v823
        %v2881 = vunpack.c.h.b16 %v823
        %v2882 = vunpack.c.l.b16 %v824
        %v2883 = vunpack.c.h.b16 %v824
        %v2884 = vunpack.c.l.b16 %v825
        %v2885 = vunpack.c.h.b16 %v825
        %v2886 = vunpack.c.l.b16 %v826
        %v2887 = vunpack.c.h.b16 %v826
        %v2888 = vunpack.c.l.b16 %v827
        %v2889 = vunpack.c.h.b16 %v827
        %v2890 = vunpack.c.l.b16 %v828
        %v2891 = vunpack.c.h.b16 %v828
        %v2892 = vunpack.c.l.b16 %v829
        %v2893 = vunpack.c.h.b16 %v829
        %v2894 = vunpack.c.l.b16 %v830
        %v2895 = vunpack.c.h.b16 %v830
        %v2896 = vunpack.c.l.b16 %v831
        %v2897 = vunpack.c.h.b16 %v831
        %v2898 = vunpack.c.l.b16 %v832
        %v2899 = vunpack.c.h.b16 %v832
        %v2900 = vunpack.c.l.b16 %v833
        %v2901 = vunpack.c.h.b16 %v833
        %v2902 = vunpack.c.l.b16 %v834
        %v2903 = vunpack.c.h.b16 %v834
        %v2904 = vunpack.c.l.b16 %v835
        %v2905 = vunpack.c.h.b16 %v835
        %v2906 = vunpack.c.l.b16 %v836
        %v2907 = vunpack.c.h.b16 %v836
        %v2908 = vunpack.c.l.b16 %v837
        %v2909 = vunpack.c.h.b16 %v837
        %v2910 = vunpack.c.l.b16 %v838
        %v2911 = vunpack.c.h.b16 %v838
        %v2912 = vunpack.c.l.b16 %v839
        %v2913 = vunpack.c.h.b16 %v839
        %v2914 = vunpack.c.l.b16 %v840
        %v2915 = vunpack.c.h.b16 %v840
        %v2916 = vunpack.c.l.b16 %v841
        %v2917 = vunpack.c.h.b16 %v841
        %v2918 = vunpack.c.l.b16 %v842
        %v2919 = vunpack.c.h.b16 %v842
        %v2920 = vunpack.c.l.b16 %v843
        %v2921 = vunpack.c.h.b16 %v843
        %v2922 = vunpack.c.l.b16 %v844
        %v2923 = vunpack.c.h.b16 %v844
        %v2924 = vunpack.c.l.b16 %v845
        %v2925 = vunpack.c.h.b16 %v845
        %v2926 = vunpack.c.l.b16 %v846
        %v2927 = vunpack.c.h.b16 %v846
        %v2928 = vunpack.c.l.b16 %v847
        %v2929 = vunpack.c.h.b16 %v847
        %v2930 = vunpack.c.l.b16 %v848
        %v2931 = vunpack.c.h.b16 %v848
        %v2932 = vunpack.c.l.b16 %v849
        %v2933 = vunpack.c.h.b16 %v849
        %v2934 = vunpack.c.l.b16 %v850
        %v2935 = vunpack.c.h.b16 %v850
        %v2936 = vunpack.c.l.b16 %v851
        %v2937 = vunpack.c.h.b16 %v851
        %v2938 = vunpack.c.l.b16 %v852
        %v2939 = vunpack.c.h.b16 %v852
        %v2940 = vunpack.c.l.b16 %v853
        %v2941 = vunpack.c.h.b16 %v853
        %v2942 = vunpack.c.l.b16 %v854
        %v2943 = vunpack.c.h.b16 %v854
        %v2944 = vunpack.c.l.b16 %v855
        %v2945 = vunpack.c.h.b16 %v855
        %v2946 = vunpack.c.l.b16 %v856
        %v2947 = vunpack.c.h.b16 %v856
        %v2948 = vunpack.c.l.b16 %v857
        %v2949 = vunpack.c.h.b16 %v857
        %v2950 = vunpack.c.l.b16 %v858
        %v2951 = vunpack.c.h.b16 %v858
        %v2952 = vunpack.c.l.b16 %v859
        %v2953 = vunpack.c.h.b16 %v859
        %v2954 = vunpack.c.l.b16 %v860
        %v2955 = vunpack.c.h.b16 %v860
        %v2956 = vunpack.c.l.b16 %v861
        %v2957 = vunpack.c.h.b16 %v861
        %v2958 = vunpack.c.l.b16 %v862
        %v2959 = vunpack.c.h.b16 %v862
        %v2960 = vunpack.c.l.b16 %v863
        %v2961 = vunpack.c.h.b16 %v863
        %v2962 = vunpack.c.l.b16 %v864
        %v2963 = vunpack.c.h.b16 %v864
        %v2964 = vunpack.c.l.b16 %v865
        %v2965 = vunpack.c.h.b16 %v865
        %v2966 = vunpack.c.l.b16 %v866
        %v2967 = vunpack.c.h.b16 %v866
        %v2968 = vunpack.c.l.b16 %v867
        %v2969 = vunpack.c.h.b16 %v867
        %v2970 = vunpack.c.l.b16 %v868
        %v2971 = vunpack.c.h.b16 %v868
        %v2972 = vunpack.c.l.b16 %v869
        %v2973 = vunpack.c.h.b16 %v869
        %v2974 = vunpack.c.l.b16 %v870
        %v2975 = vunpack.c.h.b16 %v870
        %v2976 = vunpack.c.l.b16 %v871
        %v2977 = vunpack.c.h.b16 %v871
        %v2978 = vunpack.c.l.b16 %v872
        %v2979 = vunpack.c.h.b16 %v872
        %v2980 = vunpack.c.l.b16 %v873
        %v2981 = vunpack.c.h.b16 %v873
        %v2982 = vunpack.c.l.b16 %v874
        %v2983 = vunpack.c.h.b16 %v874
        %v2984 = vunpack.c.l.b16 %v875
        %v2985 = vunpack.c.h.b16 %v875
        %v2986 = vunpack.c.l.b16 %v876
        %v2987 = vunpack.c.h.b16 %v876
        %v2988 = vunpack.c.l.b16 %v877
        %v2989 = vunpack.c.h.b16 %v877
        %v2990 = vunpack.c.l.b16 %v878
        %v2991 = vunpack.c.h.b16 %v878
        %v2992 = vunpack.c.l.b16 %v879
        %v2993 = vunpack.c.h.b16 %v879
        %v2994 = vunpack.c.l.b16 %v880
        %v2995 = vunpack.c.h.b16 %v880
        %v2996 = vunpack.c.l.b16 %v881
        %v2997 = vunpack.c.h.b16 %v881
        %v2998 = vunpack.c.l.b16 %v882
        %v2999 = vunpack.c.h.b16 %v882
        %v3000 = vunpack.c.l.b16 %v883
        %v3001 = vunpack.c.h.b16 %v883
        %v3002 = vunpack.c.l.b16 %v884
        %v3003 = vunpack.c.h.b16 %v884
        %v3004 = vunpack.c.l.b16 %v885
        %v3005 = vunpack.c.h.b16 %v885
        %v3006 = vunpack.c.l.b16 %v886
        %v3007 = vunpack.c.h.b16 %v886
        %v3008 = vunpack.c.l.b16 %v887
        %v3009 = vunpack.c.h.b16 %v887
        %v3010 = vunpack.c.l.b16 %v888
        %v3011 = vunpack.c.h.b16 %v888
        %v3012 = vunpack.c.l.b16 %v889
        %v3013 = vunpack.c.h.b16 %v889
        %v3014 = vunpack.c.l.b16 %v890
        %v3015 = vunpack.c.h.b16 %v890
        %v3016 = vunpack.c.l.b16 %v891
        %v3017 = vunpack.c.h.b16 %v891
        %v3018 = vunpack.c.l.b16 %v892
        %v3019 = vunpack.c.h.b16 %v892
        %v3020 = vunpack.c.l.b16 %v893
        %v3021 = vunpack.c.h.b16 %v893
        %v3022 = vunpack.c.l.b16 %v894
        %v3023 = vunpack.c.h.b16 %v894
        %v3024 = vunpack.c.l.b16 %v895
        %v3025 = vunpack.c.h.b16 %v895
        %v3026 = vunpack.c.l.b16 %v896
        %v3027 = vunpack.c.h.b16 %v896
        %v3028 = vunpack.c.l.b16 %v897
        %v3029 = vunpack.c.h.b16 %v897
        %v3030 = vunpack.c.l.b16 %v898
        %v3031 = vunpack.c.h.b16 %v898
        %v3032 = vunpack.c.l.b16 %v899
        %v3033 = vunpack.c.h.b16 %v899
        %v3034 = vunpack.c.l.b16 %v900
        %v3035 = vunpack.c.h.b16 %v900
        %v3036 = vunpack.c.l.b16 %v901
        %v3037 = vunpack.c.h.b16 %v901
        %v3038 = vunpack.c.l.b16 %v902
        %v3039 = vunpack.c.h.b16 %v902
        %v3040 = vunpack.c.l.b16 %v903
        %v3041 = vunpack.c.h.b16 %v903
        %v3042 = vunpack.c.l.b16 %v904
        %v3043 = vunpack.c.h.b16 %v904
        %v3044 = vunpack.c.l.b16 %v905
        %v3045 = vunpack.c.h.b16 %v905
        %v3046 = vunpack.c.l.b16 %v906
        %v3047 = vunpack.c.h.b16 %v906
        %v3048 = vunpack.c.l.b16 %v907
        %v3049 = vunpack.c.h.b16 %v907
        %v3050 = vunpack.c.l.b16 %v908
        %v3051 = vunpack.c.h.b16 %v908
        %v3052 = vunpack.c.l.b16 %v909
        %v3053 = vunpack.c.h.b16 %v909
        %v3054 = vunpack.c.l.b16 %v910
        %v3055 = vunpack.c.h.b16 %v910
        %v3056 = vunpack.c.l.b16 %v911
        %v3057 = vunpack.c.h.b16 %v911
        %v3058 = vunpack.c.l.b16 %v912
        %v3059 = vunpack.c.h.b16 %v912
        %v3060 = vunpack.c.l.b16 %v913
        %v3061 = vunpack.c.h.b16 %v913
        %v3062 = vunpack.c.l.b16 %v914
        %v3063 = vunpack.c.h.b16 %v914
        %v3064 = vunpack.c.l.b16 %v915
        %v3065 = vunpack.c.h.b16 %v915
        %v3066 = vunpack.c.l.b16 %v916
        %v3067 = vunpack.c.h.b16 %v916
        %v3068 = vunpack.c.l.b16 %v917
        %v3069 = vunpack.c.h.b16 %v917
        %v3070 = vunpack.c.l.b16 %v918
        %v3071 = vunpack.c.h.b16 %v918
        %v3072 = vunpack.c.l.b16 %v919
        %v3073 = vunpack.c.h.b16 %v919
        %v3074 = vunpack.c.l.b16 %v920
        %v3075 = vunpack.c.h.b16 %v920
        %v3076 = vunpack.c.l.b16 %v921
        %v3077 = vunpack.c.h.b16 %v921
        %v3078 = vunpack.c.l.b16 %v922
        %v3079 = vunpack.c.h.b16 %v922
        %v3080 = vunpack.c.l.b16 %v923
        %v3081 = vunpack.c.h.b16 %v923
        %v3082 = vunpack.c.l.b16 %v924
        %v3083 = vunpack.c.h.b16 %v924
        %v3084 = vunpack.c.l.b16 %v925
        %v3085 = vunpack.c.h.b16 %v925
        %v3086 = vunpack.c.l.b16 %v926
        %v3087 = vunpack.c.h.b16 %v926
        %v3088 = vunpack.c.l.b16 %v927
        %v3089 = vunpack.c.h.b16 %v927
        %v3090 = vunpack.c.l.b16 %v928
        %v3091 = vunpack.c.h.b16 %v928
        %v3092 = vunpack.c.l.b16 %v929
        %v3093 = vunpack.c.h.b16 %v929
        %v3094 = vunpack.c.l.b16 %v930
        %v3095 = vunpack.c.h.b16 %v930
        %v3096 = vunpack.c.l.b16 %v931
        %v3097 = vunpack.c.h.b16 %v931
        %v3098 = vunpack.c.l.b16 %v932
        %v3099 = vunpack.c.h.b16 %v932
        %v3100 = vunpack.c.l.b16 %v933
        %v3101 = vunpack.c.h.b16 %v933
        %v3102 = vunpack.c.l.b16 %v934
        %v3103 = vunpack.c.h.b16 %v934
        %v3104 = vunpack.c.l.b16 %v935
        %v3105 = vunpack.c.h.b16 %v935
        %v3106 = vunpack.c.l.b16 %v936
        %v3107 = vunpack.c.h.b16 %v936
        %v3108 = vunpack.c.l.b16 %v937
        %v3109 = vunpack.c.h.b16 %v937
        %v3110 = vunpack.c.l.b16 %v938
        %v3111 = vunpack.c.h.b16 %v938
        %v3112 = vunpack.c.l.b16 %v939
        %v3113 = vunpack.c.h.b16 %v939
        %v3114 = vunpack.c.l.b16 %v940
        %v3115 = vunpack.c.h.b16 %v940
        %v3116 = vunpack.c.l.b16 %v941
        %v3117 = vunpack.c.h.b16 %v941
        %v3118 = vunpack.c.l.b16 %v942
        %v3119 = vunpack.c.h.b16 %v942
        %v3120 = vunpack.c.l.b16 %v943
        %v3121 = vunpack.c.h.b16 %v943
        %v3122 = vunpack.c.l.b16 %v944
        %v3123 = vunpack.c.h.b16 %v944
        %v3124 = vunpack.c.l.b16 %v945
        %v3125 = vunpack.c.h.b16 %v945
        %v3126 = vunpack.c.l.b16 %v946
        %v3127 = vunpack.c.h.b16 %v946
        %v3128 = vunpack.c.l.b16 %v947
        %v3129 = vunpack.c.h.b16 %v947
        %v3130 = vunpack.c.l.b16 %v948
        %v3131 = vunpack.c.h.b16 %v948
        %v3132 = vunpack.c.l.b16 %v949
        %v3133 = vunpack.c.h.b16 %v949
        %v3134 = vunpack.c.l.b16 %v950
        %v3135 = vunpack.c.h.b16 %v950
        %v3136 = vunpack.c.l.b16 %v951
        %v3137 = vunpack.c.h.b16 %v951
        %v3138 = vunpack.c.l.b16 %v952
        %v3139 = vunpack.c.h.b16 %v952
        %v3140 = vunpack.c.l.b16 %v953
        %v3141 = vunpack.c.h.b16 %v953
        %v3142 = vunpack.c.l.b16 %v954
        %v3143 = vunpack.c.h.b16 %v954
        %v3144 = vunpack.c.l.b16 %v955
        %v3145 = vunpack.c.h.b16 %v955
        %v3146 = vunpack.c.l.b16 %v956
        %v3147 = vunpack.c.h.b16 %v956
        %v3148 = vunpack.c.l.b16 %v957
        %v3149 = vunpack.c.h.b16 %v957
        %v3150 = vunpack.c.l.b16 %v958
        %v3151 = vunpack.c.h.b16 %v958
        %v3152 = vunpack.c.l.b16 %v959
        %v3153 = vunpack.c.h.b16 %v959
        %v3154 = vunpack.c.l.b16 %v960
        %v3155 = vunpack.c.h.b16 %v960
        %v3156 = vunpack.c.l.b16 %v961
        %v3157 = vunpack.c.h.b16 %v961
        %v3158 = vunpack.c.l.b16 %v962
        %v3159 = vunpack.c.h.b16 %v962
        %v3160 = vunpack.c.l.b16 %v963
        %v3161 = vunpack.c.h.b16 %v963
        %v3162 = vunpack.c.l.b16 %v964
        %v3163 = vunpack.c.h.b16 %v964
        %v3164 = vunpack.c.l.b16 %v965
        %v3165 = vunpack.c.h.b16 %v965
        %v3166 = vunpack.c.l.b16 %v966
        %v3167 = vunpack.c.h.b16 %v966
        %v3168 = vunpack.c.l.b16 %v967
        %v3169 = vunpack.c.h.b16 %v967
        %v3170 = vunpack.c.l.b16 %v968
        %v3171 = vunpack.c.h.b16 %v968
        %v3172 = vunpack.c.l.b16 %v969
        %v3173 = vunpack.c.h.b16 %v969
        %v3174 = vunpack.c.l.b16 %v970
        %v3175 = vunpack.c.h.b16 %v970
        %v3176 = vunpack.c.l.b16 %v971
        %v3177 = vunpack.c.h.b16 %v971
        %v3178 = vunpack.c.l.b16 %v972
        %v3179 = vunpack.c.h.b16 %v972
        %v3180 = vunpack.c.l.b16 %v973
        %v3181 = vunpack.c.h.b16 %v973
        %v3182 = vunpack.c.l.b16 %v974
        %v3183 = vunpack.c.h.b16 %v974
        %v3184 = vunpack.c.l.b16 %v975
        %v3185 = vunpack.c.h.b16 %v975
        %v3186 = vunpack.c.l.b16 %v976
        %v3187 = vunpack.c.h.b16 %v976
        %v3188 = vunpack.c.l.b16 %v977
        %v3189 = vunpack.c.h.b16 %v977
        %v3190 = vunpack.c.l.b16 %v978
        %v3191 = vunpack.c.h.b16 %v978
        %v3192 = vunpack.c.l.b16 %v979
        %v3193 = vunpack.c.h.b16 %v979
        %v3194 = vunpack.c.l.b16 %v980
        %v3195 = vunpack.c.h.b16 %v980
        %v3196 = vunpack.c.l.b16 %v981
        %v3197 = vunpack.c.h.b16 %v981
        %v3198 = vunpack.c.l.b16 %v982
        %v3199 = vunpack.c.h.b16 %v982
        %v3200 = vunpack.c.l.b16 %v983
        %v3201 = vunpack.c.h.b16 %v983
        %v3202 = vunpack.c.l.b16 %v984
        %v3203 = vunpack.c.h.b16 %v984
        %v3204 = vunpack.c.l.b16 %v985
        %v3205 = vunpack.c.h.b16 %v985
        %v3206 = vunpack.c.l.b16 %v986
        %v3207 = vunpack.c.h.b16 %v986
        %v3208 = vunpack.c.l.b16 %v987
        %v3209 = vunpack.c.h.b16 %v987
        %v3210 = vunpack.c.l.b16 %v988
        %v3211 = vunpack.c.h.b16 %v988
        %v3212 = vunpack.c.l.b16 %v989
        %v3213 = vunpack.c.h.b16 %v989
        %v3214 = vunpack.c.l.b16 %v990
        %v3215 = vunpack.c.h.b16 %v990
        %v3216 = vunpack.c.l.b16 %v991
        %v3217 = vunpack.c.h.b16 %v991
        %v3218 = vunpack.c.l.b16 %v992
        %v3219 = vunpack.c.h.b16 %v992
        %v3220 = vunpack.c.l.b16 %v993
        %v3221 = vunpack.c.h.b16 %v993
        %v3222 = vunpack.c.l.b16 %v994
        %v3223 = vunpack.c.h.b16 %v994
        %v3224 = vunpack.c.l.b16 %v995
        %v3225 = vunpack.c.h.b16 %v995
        %v3226 = vunpack.c.l.b16 %v996
        %v3227 = vunpack.c.h.b16 %v996
        %v3228 = vunpack.c.l.b16 %v997
        %v3229 = vunpack.c.h.b16 %v997
        %v3230 = vunpack.c.l.b16 %v998
        %v3231 = vunpack.c.h.b16 %v998
        %v3232 = vunpack.c.l.b16 %v999
        %v3233 = vunpack.c.h.b16 %v999
        %v3234 = vunpack.c.l.b16 %v1000
        %v3235 = vunpack.c.h.b16 %v1000
        %v3236 = vunpack.c.l.b16 %v1001
        %v3237 = vunpack.c.h.b16 %v1001
        %v3238 = vunpack.c.l.b16 %v1002
        %v3239 = vunpack.c.h.b16 %v1002
        %v3240 = vunpack.c.l.b16 %v1003
        %v3241 = vunpack.c.h.b16 %v1003
        %v3242 = vunpack.c.l.b16 %v1004
        %v3243 = vunpack.c.h.b16 %v1004
        %v3244 = vunpack.c.l.b16 %v1005
        %v3245 = vunpack.c.h.b16 %v1005
        %v3246 = vunpack.c.l.b16 %v1006
        %v3247 = vunpack.c.h.b16 %v1006
        %v3248 = vunpack.c.l.b16 %v1007
        %v3249 = vunpack.c.h.b16 %v1007
        %v3250 = vunpack.c.l.b16 %v1008
        %v3251 = vunpack.c.h.b16 %v1008
        %v3252 = vunpack.c.l.b16 %v1009
        %v3253 = vunpack.c.h.b16 %v1009
        %v3254 = vunpack.c.l.b16 %v1010
        %v3255 = vunpack.c.h.b16 %v1010
        %v3256 = vunpack.c.l.b16 %v1011
        %v3257 = vunpack.c.h.b16 %v1011
        %v3258 = vunpack.c.l.b16 %v1012
        %v3259 = vunpack.c.h.b16 %v1012
        %v3260 = vunpack.c.l.b16 %v1013
        %v3261 = vunpack.c.h.b16 %v1013
        %v3262 = vunpack.c.l.b16 %v1014
        %v3263 = vunpack.c.h.b16 %v1014
        %v3264 = vunpack.c.l.b16 %v1015
        %v3265 = vunpack.c.h.b16 %v1015
        %v3266 = vunpack.c.l.b16 %v1016
        %v3267 = vunpack.c.h.b16 %v1016
        %v3268 = vunpack.c.l.b16 %v1017
        %v3269 = vunpack.c.h.b16 %v1017
        %v3270 = vunpack.c.l.b16 %v1018
        %v3271 = vunpack.c.h.b16 %v1018
        %v3272 = vunpack.c.l.b16 %v1019
        %v3273 = vunpack.c.h.b16 %v1019
        %v3274 = vunpack.c.l.b16 %v1020
        %v3275 = vunpack.c.h.b16 %v1020
        %v3276 = vunpack.c.l.b16 %v1021
        %v3277 = vunpack.c.h.b16 %v1021
        %v3278 = vunpack.c.l.b16 %v1022
        %v3279 = vunpack.c.h.b16 %v1022
        %v3280 = vunpack.c.l.b16 %v1023
        %v3281 = vunpack.c.h.b16 %v1023
        %v3282 = vunpack.c.l.b16 %v1024
        %v3283 = vunpack.c.h.b16 %v1024
        %v3284 = vunpack.c.l.b16 %v1025
        %v3285 = vunpack.c.h.b16 %v1025
        %v3286 = vunpack.c.l.b16 %v1026
        %v3287 = vunpack.c.h.b16 %v1026
        %v3288 = vunpack.c.l.b16 %v1027
        %v3289 = vunpack.c.h.b16 %v1027
        %v3290 = vunpack.c.l.b16 %v1028
        %v3291 = vunpack.c.h.b16 %v1028
        %v3292 = vunpack.c.l.b16 %v1029
        %v3293 = vunpack.c.h.b16 %v1029
        %v3294 = vunpack.c.l.b16 %v1030
        %v3295 = vunpack.c.h.b16 %v1030
        %v3296 = vunpack.c.l.b16 %v1031
        %v3297 = vunpack.c.h.b16 %v1031
        %v3298 = vunpack.c.l.b16 %v1032
        %v3299 = vunpack.c.h.b16 %v1032
        %v3300 = vunpack.c.l.b16 %v1033
        %v3301 = vunpack.c.h.b16 %v1033
        %v3302 = vunpack.c.l.b16 %v1034
        %v3303 = vunpack.c.h.b16 %v1034
        %v3304 = vunpack.c.l.b16 %v1035
        %v3305 = vunpack.c.h.b16 %v1035
        %v3306 = vunpack.c.l.b16 %v1036
        %v3307 = vunpack.c.h.b16 %v1036
        %v3308 = vunpack.c.l.b16 %v1037
        %v3309 = vunpack.c.h.b16 %v1037
        %v3310 = vunpack.c.l.b16 %v1038
        %v3311 = vunpack.c.h.b16 %v1038
        %v3312 = vunpack.c.l.b16 %v1039
        %v3313 = vunpack.c.h.b16 %v1039
        %v3314 = vunpack.c.l.b16 %v1040
        %v3315 = vunpack.c.h.b16 %v1040
        %v3316 = vunpack.c.l.b16 %v1041
        %v3317 = vunpack.c.h.b16 %v1041
        %v3318 = vunpack.c.l.b16 %v1042
        %v3319 = vunpack.c.h.b16 %v1042
        %v3320 = vunpack.c.l.b16 %v1043
        %v3321 = vunpack.c.h.b16 %v1043
        %v3322 = vunpack.c.l.b16 %v1044
        %v3323 = vunpack.c.h.b16 %v1044
        %v3324 = vunpack.c.l.b16 %v1045
        %v3325 = vunpack.c.h.b16 %v1045
        %v3326 = vunpack.c.l.b16 %v1046
        %v3327 = vunpack.c.h.b16 %v1046
        %v3328 = vunpack.c.l.b16 %v1047
        %v3329 = vunpack.c.h.b16 %v1047
        %v3330 = vunpack.c.l.b16 %v1048
        %v3331 = vunpack.c.h.b16 %v1048
        %v3332 = vunpack.c.l.b16 %v1049
        %v3333 = vunpack.c.h.b16 %v1049
        %v3334 = vunpack.c.l.b16 %v1050
        %v3335 = vunpack.c.h.b16 %v1050
        %v3336 = vunpack.c.l.b16 %v1051
        %v3337 = vunpack.c.h.b16 %v1051
        %v3338 = vunpack.c.l.b16 %v1052
        %v3339 = vunpack.c.h.b16 %v1052
        %v3340 = vunpack.c.l.b16 %v1053
        %v3341 = vunpack.c.h.b16 %v1053
        %v3342 = vunpack.c.l.b16 %v1054
        %v3343 = vunpack.c.h.b16 %v1054
        %v3344 = vunpack.c.l.b16 %v1055
        %v3345 = vunpack.c.h.b16 %v1055
        %v3346 = vunpack.c.l.b16 %v1056
        %v3347 = vunpack.c.h.b16 %v1056
        %v3348 = vunpack.c.l.b16 %v1057
        %v3349 = vunpack.c.h.b16 %v1057
        %v3350 = vunpack.c.l.b16 %v1058
        %v3351 = vunpack.c.h.b16 %v1058
        %v3352 = vunpack.c.l.b16 %v1059
        %v3353 = vunpack.c.h.b16 %v1059
        %v3354 = vunpack.c.l.b16 %v1060
        %v3355 = vunpack.c.h.b16 %v1060
        %v3356 = vunpack.c.l.b16 %v1061
        %v3357 = vunpack.c.h.b16 %v1061
        %v3358 = vunpack.c.l.b16 %v1062
        %v3359 = vunpack.c.h.b16 %v1062
        %v3360 = vunpack.c.l.b16 %v1063
        %v3361 = vunpack.c.h.b16 %v1063
        %v3362 = vunpack.c.l.b16 %v1064
        %v3363 = vunpack.c.h.b16 %v1064
        %v3364 = vunpack.c.l.b16 %v1065
        %v3365 = vunpack.c.h.b16 %v1065
        %v3366 = vunpack.c.l.b16 %v1066
        %v3367 = vunpack.c.h.b16 %v1066
        %v3368 = vunpack.c.l.b16 %v1067
        %v3369 = vunpack.c.h.b16 %v1067
        %v3370 = vunpack.c.l.b16 %v1068
        %v3371 = vunpack.c.h.b16 %v1068
        %v3372 = vunpack.c.l.b16 %v1069
        %v3373 = vunpack.c.h.b16 %v1069
        %v3374 = vunpack.c.l.b16 %v1070
        %v3375 = vunpack.c.h.b16 %v1070
        %v3376 = vunpack.c.l.b16 %v1071
        %v3377 = vunpack.c.h.b16 %v1071
        %v3378 = vunpack.c.l.b16 %v1072
        %v3379 = vunpack.c.h.b16 %v1072
        %v3380 = vunpack.c.l.b16 %v1073
        %v3381 = vunpack.c.h.b16 %v1073
        %v3382 = vunpack.c.l.b16 %v1074
        %v3383 = vunpack.c.h.b16 %v1074
        %v3384 = vunpack.c.l.b16 %v1075
        %v3385 = vunpack.c.h.b16 %v1075
        %v3386 = vunpack.c.l.b16 %v1076
        %v3387 = vunpack.c.h.b16 %v1076
        %v3388 = vunpack.c.l.b16 %v1077
        %v3389 = vunpack.c.h.b16 %v1077
        %v3390 = vunpack.c.l.b16 %v1078
        %v3391 = vunpack.c.h.b16 %v1078
        %v3392 = vunpack.c.l.b16 %v1079
        %v3393 = vunpack.c.h.b16 %v1079
        %v3394 = vunpack.c.l.b16 %v1080
        %v3395 = vunpack.c.h.b16 %v1080
        %v3396 = vunpack.c.l.b16 %v1081
        %v3397 = vunpack.c.h.b16 %v1081
        %v3398 = vunpack.c.l.b16 %v1082
        %v3399 = vunpack.c.h.b16 %v1082
        %v3400 = vunpack.c.l.b16 %v1083
        %v3401 = vunpack.c.h.b16 %v1083
        %v3402 = vunpack.c.l.b16 %v1084
        %v3403 = vunpack.c.h.b16 %v1084
        %v3404 = vunpack.c.l.b16 %v1085
        %v3405 = vunpack.c.h.b16 %v1085
        %v3406 = vunpack.c.l.b16 %v1086
        %v3407 = vunpack.c.h.b16 %v1086
        %v3408 = vunpack.c.l.b16 %v1087
        %v3409 = vunpack.c.h.b16 %v1087
        %v3410 = vunpack.c.l.b16 %v1088
        %v3411 = vunpack.c.h.b16 %v1088
        %v3412 = vunpack.c.l.b16 %v1089
        %v3413 = vunpack.c.h.b16 %v1089
        %v3414 = vunpack.c.l.b16 %v1090
        %v3415 = vunpack.c.h.b16 %v1090
        %v3416 = vunpack.c.l.b16 %v1091
        %v3417 = vunpack.c.h.b16 %v1091
        %v3418 = vunpack.c.l.b16 %v1092
        %v3419 = vunpack.c.h.b16 %v1092
        %v3420 = vunpack.c.l.b16 %v1093
        %v3421 = vunpack.c.h.b16 %v1093
        %v3422 = vunpack.c.l.b16 %v1094
        %v3423 = vunpack.c.h.b16 %v1094
        %v3424 = vunpack.c.l.b16 %v1095
        %v3425 = vunpack.c.h.b16 %v1095
        %v3426 = vunpack.c.l.b16 %v1096
        %v3427 = vunpack.c.h.b16 %v1096
        %v3428 = vunpack.c.l.b16 %v1097
        %v3429 = vunpack.c.h.b16 %v1097
        %v3430 = vunpack.c.l.b16 %v1098
        %v3431 = vunpack.c.h.b16 %v1098
        %v3432 = vunpack.c.l.b16 %v1099
        %v3433 = vunpack.c.h.b16 %v1099
        %v3434 = vunpack.c.l.b16 %v1100
        %v3435 = vunpack.c.h.b16 %v1100
        %v3436 = vunpack.c.l.b16 %v1101
        %v3437 = vunpack.c.h.b16 %v1101
        %v3438 = vunpack.c.l.b16 %v1102
        %v3439 = vunpack.c.h.b16 %v1102
        %v3440 = vunpack.c.l.b16 %v1103
        %v3441 = vunpack.c.h.b16 %v1103
        %v3442 = vunpack.c.l.b16 %v1104
        %v3443 = vunpack.c.h.b16 %v1104
        %v3444 = vunpack.c.l.b16 %v1105
        %v3445 = vunpack.c.h.b16 %v1105
        %v3446 = vunpack.c.l.b16 %v1106
        %v3447 = vunpack.c.h.b16 %v1106
        %v3448 = vunpack.c.l.b16 %v1107
        %v3449 = vunpack.c.h.b16 %v1107
        %v3450 = vunpack.c.l.b16 %v1108
        %v3451 = vunpack.c.h.b16 %v1108
        %v3452 = vunpack.c.l.b16 %v1109
        %v3453 = vunpack.c.h.b16 %v1109
        %v3454 = vunpack.c.l.b16 %v1110
        %v3455 = vunpack.c.h.b16 %v1110
        %v3456 = vunpack.c.l.b16 %v1111
        %v3457 = vunpack.c.h.b16 %v1111
        %v3458 = vunpack.c.l.b16 %v1112
        %v3459 = vunpack.c.h.b16 %v1112
        %v3460 = vunpack.c.l.b16 %v1113
        %v3461 = vunpack.c.h.b16 %v1113
        %v3462 = vunpack.c.l.b16 %v1114
        %v3463 = vunpack.c.h.b16 %v1114
        %v3464 = vunpack.c.l.b16 %v1115
        %v3465 = vunpack.c.h.b16 %v1115
        %v3466 = vunpack.c.l.b16 %v1116
        %v3467 = vunpack.c.h.b16 %v1116
        %v3468 = vunpack.c.l.b16 %v1117
        %v3469 = vunpack.c.h.b16 %v1117
        %v3470 = vunpack.c.l.b16 %v1118
        %v3471 = vunpack.c.h.b16 %v1118
        %v3472 = vunpack.c.l.b16 %v1119
        %v3473 = vunpack.c.h.b16 %v1119
        %v3474 = vunpack.c.l.b16 %v1120
        %v3475 = vunpack.c.h.b16 %v1120
        %v3476 = vunpack.c.l.b16 %v1121
        %v3477 = vunpack.c.h.b16 %v1121
        %v3478 = vunpack.c.l.b16 %v1122
        %v3479 = vunpack.c.h.b16 %v1122
        %v3480 = vunpack.c.l.b16 %v1123
        %v3481 = vunpack.c.h.b16 %v1123
        %v3482 = vunpack.c.l.b16 %v1124
        %v3483 = vunpack.c.h.b16 %v1124
        %v3484 = vunpack.c.l.b16 %v1125
        %v3485 = vunpack.c.h.b16 %v1125
        %v3486 = vunpack.c.l.b16 %v1126
        %v3487 = vunpack.c.h.b16 %v1126
        %v3488 = vunpack.c.l.b16 %v1127
        %v3489 = vunpack.c.h.b16 %v1127
        %v3490 = vunpack.c.l.b16 %v1128
        %v3491 = vunpack.c.h.b16 %v1128
        %v3492 = vunpack.c.l.b16 %v1129
        %v3493 = vunpack.c.h.b16 %v1129
        %v3494 = vunpack.c.l.b16 %v1130
        %v3495 = vunpack.c.h.b16 %v1130
        %v3496 = vunpack.c.l.b16 %v1131
        %v3497 = vunpack.c.h.b16 %v1131
        %v3498 = vunpack.c.l.b16 %v1132
        %v3499 = vunpack.c.h.b16 %v1132
        %v3500 = vunpack.c.l.b16 %v1133
        %v3501 = vunpack.c.h.b16 %v1133
        %v3502 = vunpack.c.l.b16 %v1134
        %v3503 = vunpack.c.h.b16 %v1134
        %v3504 = vunpack.c.l.b16 %v1135
        %v3505 = vunpack.c.h.b16 %v1135
        %v3506 = vunpack.c.l.b16 %v1136
        %v3507 = vunpack.c.h.b16 %v1136
        %v3508 = vunpack.c.l.b16 %v1137
        %v3509 = vunpack.c.h.b16 %v1137
        %v3510 = vunpack.c.l.b16 %v1138
        %v3511 = vunpack.c.h.b16 %v1138
        %v3512 = vunpack.c.l.b16 %v1139
        %v3513 = vunpack.c.h.b16 %v1139
        %v3514 = vunpack.c.l.b16 %v1140
        %v3515 = vunpack.c.h.b16 %v1140
        %v3516 = vunpack.c.l.b16 %v1141
        %v3517 = vunpack.c.h.b16 %v1141
        %v3518 = vunpack.c.l.b16 %v1142
        %v3519 = vunpack.c.h.b16 %v1142
        %v3520 = vunpack.c.l.b16 %v1143
        %v3521 = vunpack.c.h.b16 %v1143
        %v3522 = vunpack.c.l.b16 %v1144
        %v3523 = vunpack.c.h.b16 %v1144
        %v3524 = vunpack.c.l.b16 %v1145
        %v3525 = vunpack.c.h.b16 %v1145
        %v3526 = vunpack.c.l.b16 %v1146
        %v3527 = vunpack.c.h.b16 %v1146
        %v3528 = vunpack.c.l.b16 %v1147
        %v3529 = vunpack.c.h.b16 %v1147
        %v3530 = vunpack.c.l.b16 %v1148
        %v3531 = vunpack.c.h.b16 %v1148
        %v3532 = vunpack.c.l.b16 %v1149
        %v3533 = vunpack.c.h.b16 %v1149
        %v3534 = vunpack.c.l.b16 %v1150
        %v3535 = vunpack.c.h.b16 %v1150
        %v3536 = vunpack.c.l.b16 %v1151
        %v3537 = vunpack.c.h.b16 %v1151
        %v3538 = vunpack.c.l.b16 %v1152
        %v3539 = vunpack.c.h.b16 %v1152
        %v3540 = vunpack.c.l.b16 %v1153
        %v3541 = vunpack.c.h.b16 %v1153
        %v3542 = vunpack.c.l.b16 %v1154
        %v3543 = vunpack.c.h.b16 %v1154
        %v3544 = vunpack.c.l.b16 %v1155
        %v3545 = vunpack.c.h.b16 %v1155
        %v3546 = vunpack.c.l.b16 %v1156
        %v3547 = vunpack.c.h.b16 %v1156
        %v3548 = vunpack.c.l.b16 %v1157
        %v3549 = vunpack.c.h.b16 %v1157
        %v3550 = vunpack.c.l.b16 %v1158
        %v3551 = vunpack.c.h.b16 %v1158
        %v3552 = vunpack.c.l.b16 %v1159
        %v3553 = vunpack.c.h.b16 %v1159
        %v3554 = vunpack.c.l.b16 %v1160
        %v3555 = vunpack.c.h.b16 %v1160
        %v3556 = vunpack.c.l.b16 %v1161
        %v3557 = vunpack.c.h.b16 %v1161
        %v3558 = vunpack.c.l.b16 %v1162
        %v3559 = vunpack.c.h.b16 %v1162
        %v3560 = vunpack.c.l.b16 %v1163
        %v3561 = vunpack.c.h.b16 %v1163
        %v3562 = vunpack.c.l.b16 %v1164
        %v3563 = vunpack.c.h.b16 %v1164
        %v3564 = vunpack.c.l.b16 %v1165
        %v3565 = vunpack.c.h.b16 %v1165
        %v3566 = vunpack.c.l.b16 %v1166
        %v3567 = vunpack.c.h.b16 %v1166
        %v3568 = vunpack.c.l.b16 %v1167
        %v3569 = vunpack.c.h.b16 %v1167
        %v3570 = vunpack.c.l.b16 %v1168
        %v3571 = vunpack.c.h.b16 %v1168
        %v3572 = vunpack.c.l.b16 %v1169
        %v3573 = vunpack.c.h.b16 %v1169
        %v3574 = vunpack.c.l.b16 %v1170
        %v3575 = vunpack.c.h.b16 %v1170
        %v3576 = vunpack.c.l.b16 %v1171
        %v3577 = vunpack.c.h.b16 %v1171
        %v3578 = vunpack.c.l.b16 %v1172
        %v3579 = vunpack.c.h.b16 %v1172
        %v3580 = vunpack.c.l.b16 %v1173
        %v3581 = vunpack.c.h.b16 %v1173
        %v3582 = vunpack.c.l.b16 %v1174
        %v3583 = vunpack.c.h.b16 %v1174
        %v3584 = vunpack.c.l.b16 %v1175
        %v3585 = vunpack.c.h.b16 %v1175
        %v3586 = vunpack.c.l.b16 %v1176
        %v3587 = vunpack.c.h.b16 %v1176
        %v3588 = vunpack.c.l.b16 %v1177
        %v3589 = vunpack.c.h.b16 %v1177
        %v3590 = vunpack.c.l.b16 %v1178
        %v3591 = vunpack.c.h.b16 %v1178
        %v3592 = vunpack.c.l.b16 %v1179
        %v3593 = vunpack.c.h.b16 %v1179
        %v3594 = vunpack.c.l.b16 %v1180
        %v3595 = vunpack.c.h.b16 %v1180
        %v3596 = vunpack.c.l.b16 %v1181
        %v3597 = vunpack.c.h.b16 %v1181
        %v3598 = vunpack.c.l.b16 %v1182
        %v3599 = vunpack.c.h.b16 %v1182
        %v3600 = vunpack.c.l.b16 %v1183
        %v3601 = vunpack.c.h.b16 %v1183
        %v3602 = vunpack.c.l.b16 %v1184
        %v3603 = vunpack.c.h.b16 %v1184
        %v3604 = vunpack.c.l.b16 %v1185
        %v3605 = vunpack.c.h.b16 %v1185
        %v3606 = vunpack.c.l.b16 %v1186
        %v3607 = vunpack.c.h.b16 %v1186
        %v3608 = vunpack.c.l.b16 %v1187
        %v3609 = vunpack.c.h.b16 %v1187
        %v3610 = vunpack.c.l.b16 %v1188
        %v3611 = vunpack.c.h.b16 %v1188
        %v3612 = vunpack.c.l.b16 %v1189
        %v3613 = vunpack.c.h.b16 %v1189
        %v3614 = vunpack.c.l.b16 %v1190
        %v3615 = vunpack.c.h.b16 %v1190
        %v3616 = vunpack.c.l.b16 %v1191
        %v3617 = vunpack.c.h.b16 %v1191
        %v3618 = vunpack.c.l.b16 %v1192
        %v3619 = vunpack.c.h.b16 %v1192
        %v3620 = vunpack.c.l.b16 %v1193
        %v3621 = vunpack.c.h.b16 %v1193
        %v3622 = vunpack.c.l.b16 %v1194
        %v3623 = vunpack.c.h.b16 %v1194
        %v3624 = vunpack.c.l.b16 %v1195
        %v3625 = vunpack.c.h.b16 %v1195
        %v3626 = vunpack.c.l.b16 %v1196
        %v3627 = vunpack.c.h.b16 %v1196
        %v3628 = vunpack.c.l.b16 %v1197
        %v3629 = vunpack.c.h.b16 %v1197
        %v3630 = vunpack.c.l.b16 %v1198
        %v3631 = vunpack.c.h.b16 %v1198
        %v3632 = vunpack.c.l.b16 %v1199
        %v3633 = vunpack.c.h.b16 %v1199
        %v3634 = vunpack.c.l.b16 %v1200
        %v3635 = vunpack.c.h.b16 %v1200
        %v3636 = vunpack.c.l.b16 %v1201
        %v3637 = vunpack.c.h.b16 %v1201
        %v3638 = vunpack.c.l.b16 %v1202
        %v3639 = vunpack.c.h.b16 %v1202
        %v3640 = vunpack.c.l.b16 %v1203
        %v3641 = vunpack.c.h.b16 %v1203
        %v3642 = vunpack.c.l.b16 %v1204
        %v3643 = vunpack.c.h.b16 %v1204
        %v3644 = vunpack.c.l.b16 %v1205
        %v3645 = vunpack.c.h.b16 %v1205
        %v3646 = vunpack.c.l.b16 %v1206
        %v3647 = vunpack.c.h.b16 %v1206
        %v3648 = vunpack.c.l.b16 %v1207
        %v3649 = vunpack.c.h.b16 %v1207
        %v3650 = vunpack.c.l.b16 %v1208
        %v3651 = vunpack.c.h.b16 %v1208
        %v3652 = vunpack.c.l.b16 %v1209
        %v3653 = vunpack.c.h.b16 %v1209
        %v3654 = vunpack.c.l.b16 %v1210
        %v3655 = vunpack.c.h.b16 %v1210
        %v3656 = vunpack.c.l.b16 %v1211
        %v3657 = vunpack.c.h.b16 %v1211
        %v3658 = vunpack.c.l.b16 %v1212
        %v3659 = vunpack.c.h.b16 %v1212
        %v3660 = vunpack.c.l.b16 %v1213
        %v3661 = vunpack.c.h.b16 %v1213
        %v3662 = vunpack.c.l.b16 %v1214
        %v3663 = vunpack.c.h.b16 %v1214
        %v3664 = vunpack.c.l.b16 %v1215
        %v3665 = vunpack.c.h.b16 %v1215
        %v3666 = vunpack.c.l.b16 %v1216
        %v3667 = vunpack.c.h.b16 %v1216
        %v3668 = vunpack.c.l.b16 %v1217
        %v3669 = vunpack.c.h.b16 %v1217
        %v3670 = vunpack.c.l.b16 %v1218
        %v3671 = vunpack.c.h.b16 %v1218
        %v3672 = vunpack.c.l.b16 %v1219
        %v3673 = vunpack.c.h.b16 %v1219
        %v3674 = vunpack.c.l.b16 %v1220
        %v3675 = vunpack.c.h.b16 %v1220
        %v3676 = vunpack.c.l.b16 %v1221
        %v3677 = vunpack.c.h.b16 %v1221
        %v3678 = vunpack.c.l.b16 %v1222
        %v3679 = vunpack.c.h.b16 %v1222
        %v3680 = vunpack.c.l.b16 %v1223
        %v3681 = vunpack.c.h.b16 %v1223
        %v3682 = vunpack.c.l.b16 %v1224
        %v3683 = vunpack.c.h.b16 %v1224
        %v3684 = vunpack.c.l.b16 %v1225
        %v3685 = vunpack.c.h.b16 %v1225
        %v3686 = vunpack.c.l.b16 %v1226
        %v3687 = vunpack.c.h.b16 %v1226
        %v3688 = vunpack.c.l.b16 %v1227
        %v3689 = vunpack.c.h.b16 %v1227
        %v3690 = vunpack.c.l.b16 %v1228
        %v3691 = vunpack.c.h.b16 %v1228
        %v3692 = vunpack.c.l.b16 %v1229
        %v3693 = vunpack.c.h.b16 %v1229
        %v3694 = vunpack.c.l.b16 %v1230
        %v3695 = vunpack.c.h.b16 %v1230
        %v3696 = vunpack.c.l.b16 %v1231
        %v3697 = vunpack.c.h.b16 %v1231
        %v3698 = vunpack.c.l.b16 %v1232
        %v3699 = vunpack.c.h.b16 %v1232
        %v3700 = vunpack.c.l.b16 %v1233
        %v3701 = vunpack.c.h.b16 %v1233
        %v3702 = vunpack.c.l.b16 %v1234
        %v3703 = vunpack.c.h.b16 %v1234
        %v3704 = vunpack.c.l.b16 %v1235
        %v3705 = vunpack.c.h.b16 %v1235
        %v3706 = vunpack.c.l.b16 %v1236
        %v3707 = vunpack.c.h.b16 %v1236
        %v3708 = vunpack.c.l.b16 %v1237
        %v3709 = vunpack.c.h.b16 %v1237
        %v3710 = vunpack.c.l.b16 %v1238
        %v3711 = vunpack.c.h.b16 %v1238
        %v3712 = vunpack.c.l.b16 %v1239
        %v3713 = vunpack.c.h.b16 %v1239
        %v3714 = vunpack.c.l.b16 %v1240
        %v3715 = vunpack.c.h.b16 %v1240
        %v3716 = vunpack.c.l.b16 %v1241
        %v3717 = vunpack.c.h.b16 %v1241
        %v3718 = vunpack.c.l.b16 %v1242
        %v3719 = vunpack.c.h.b16 %v1242
        %v3720 = vunpack.c.l.b16 %v1243
        %v3721 = vunpack.c.h.b16 %v1243
        %v3722 = vunpack.c.l.b16 %v1244
        %v3723 = vunpack.c.h.b16 %v1244
        %v3724 = vunpack.c.l.b16 %v1245
        %v3725 = vunpack.c.h.b16 %v1245
        %v3726 = vunpack.c.l.b16 %v1246
        %v3727 = vunpack.c.h.b16 %v1246
        %v3728 = vunpack.c.l.b16 %v1247
        %v3729 = vunpack.c.h.b16 %v1247
        %v3730 = vunpack.c.l.b16 %v1248
        %v3731 = vunpack.c.h.b16 %v1248
        %v3732 = vunpack.c.l.b16 %v1249
        %v3733 = vunpack.c.h.b16 %v1249
        %v3734 = vunpack.c.l.b16 %v1250
        %v3735 = vunpack.c.h.b16 %v1250
        %v3736 = vunpack.c.l.b16 %v1251
        %v3737 = vunpack.c.h.b16 %v1251
        %v3738 = vunpack.c.l.b16 %v1252
        %v3739 = vunpack.c.h.b16 %v1252
        %v3740 = vunpack.c.l.b16 %v1253
        %v3741 = vunpack.c.h.b16 %v1253
        %v3742 = vunpack.c.l.b16 %v1254
        %v3743 = vunpack.c.h.b16 %v1254
        %v3744 = vunpack.c.l.b16 %v1255
        %v3745 = vunpack.c.h.b16 %v1255
        %v3746 = vunpack.c.l.b16 %v1256
        %v3747 = vunpack.c.h.b16 %v1256
        %v3748 = vunpack.c.l.b16 %v1257
        %v3749 = vunpack.c.h.b16 %v1257
        %v3750 = vunpack.c.l.b16 %v1258
        %v3751 = vunpack.c.h.b16 %v1258
        %v3752 = vunpack.c.l.b16 %v1259
        %v3753 = vunpack.c.h.b16 %v1259
        %v3754 = vunpack.c.l.b16 %v1260
        %v3755 = vunpack.c.h.b16 %v1260
        %v3756 = vunpack.c.l.b16 %v1261
        %v3757 = vunpack.c.h.b16 %v1261
        %v3758 = vunpack.c.l.b16 %v1262
        %v3759 = vunpack.c.h.b16 %v1262
        %v3760 = vunpack.c.l.b16 %v1263
        %v3761 = vunpack.c.h.b16 %v1263
        %v3762 = vunpack.c.l.b16 %v1264
        %v3763 = vunpack.c.h.b16 %v1264
        %v3764 = vunpack.c.l.b16 %v1265
        %v3765 = vunpack.c.h.b16 %v1265
        %v3766 = vunpack.c.l.b16 %v1266
        %v3767 = vunpack.c.h.b16 %v1266
        %v3768 = vunpack.c.l.b16 %v1267
        %v3769 = vunpack.c.h.b16 %v1267
        %v3770 = vunpack.c.l.b16 %v1268
        %v3771 = vunpack.c.h.b16 %v1268
        %v3772 = vunpack.c.l.b16 %v1269
        %v3773 = vunpack.c.h.b16 %v1269
        %v3774 = vunpack.c.l.b16 %v1270
        %v3775 = vunpack.c.h.b16 %v1270
        %v3776 = vunpack.c.l.b16 %v1271
        %v3777 = vunpack.c.h.b16 %v1271
        %v3778 = vunpack.c.l.b16 %v1272
        %v3779 = vunpack.c.h.b16 %v1272
        %v3780 = vunpack.c.l.b16 %v1273
        %v3781 = vunpack.c.h.b16 %v1273
        %v3782 = vunpack.c.l.b16 %v1274
        %v3783 = vunpack.c.h.b16 %v1274
        %v3784 = vunpack.c.l.b16 %v1275
        %v3785 = vunpack.c.h.b16 %v1275
        %v3786 = vunpack.c.l.b16 %v1276
        %v3787 = vunpack.c.h.b16 %v1276
        %v3788 = vunpack.c.l.b16 %v1277
        %v3789 = vunpack.c.h.b16 %v1277
        %v3790 = vunpack.c.l.b16 %v1278
        %v3791 = vunpack.c.h.b16 %v1278
        %v3792 = vunpack.c.l.b16 %v1279
        %v3793 = vunpack.c.h.b16 %v1279
        %v3794 = vunpack.c.l.b16 %v1280
        %v3795 = vunpack.c.h.b16 %v1280
        %v3796 = vunpack.c.l.b16 %v1281
        %v3797 = vunpack.c.h.b16 %v1281
        %v3798 = vunpack.c.l.b16 %v1282
        %v3799 = vunpack.c.h.b16 %v1282
        %v3800 = vunpack.c.l.b16 %v1283
        %v3801 = vunpack.c.h.b16 %v1283
        %v3802 = vunpack.c.l.b16 %v1284
        %v3803 = vunpack.c.h.b16 %v1284
        %v3804 = vunpack.c.l.b16 %v1285
        %v3805 = vunpack.c.h.b16 %v1285
        %v3806 = vunpack.c.l.b16 %v1286
        %v3807 = vunpack.c.h.b16 %v1286
        %v3808 = vunpack.c.l.b16 %v1287
        %v3809 = vunpack.c.h.b16 %v1287
        %v3810 = vunpack.c.l.b16 %v1288
        %v3811 = vunpack.c.h.b16 %v1288
        %v3812 = vunpack.c.l.b16 %v1289
        %v3813 = vunpack.c.h.b16 %v1289
        %v3814 = vunpack.c.l.b16 %v1290
        %v3815 = vunpack.c.h.b16 %v1290
        %v3816 = vunpack.c.l.b16 %v1291
        %v3817 = vunpack.c.h.b16 %v1291
        %v3818 = vunpack.c.l.b16 %v1292
        %v3819 = vunpack.c.h.b16 %v1292
        %v3820 = vunpack.c.l.b16 %v1293
        %v3821 = vunpack.c.h.b16 %v1293
        %v3822 = vunpack.c.l.b16 %v1294
        %v3823 = vunpack.c.h.b16 %v1294
        %v3824 = vunpack.c.l.b16 %v1295
        %v3825 = vunpack.c.h.b16 %v1295
        %v3826 = vunpack.c.l.b16 %v1296
        %v3827 = vunpack.c.h.b16 %v1296
        %v3828 = vunpack.c.l.b16 %v1297
        %v3829 = vunpack.c.h.b16 %v1297
        %v3830 = vunpack.c.l.b16 %v1298
        %v3831 = vunpack.c.h.b16 %v1298
        %v3832 = vunpack.c.l.b16 %v1299
        %v3833 = vunpack.c.h.b16 %v1299
        %v3834 = vunpack.c.l.b16 %v1300
        %v3835 = vunpack.c.h.b16 %v1300
        %v3836 = vunpack.c.l.b16 %v1301
        %v3837 = vunpack.c.h.b16 %v1301
        %v3838 = vunpack.c.l.b16 %v1302
        %v3839 = vunpack.c.h.b16 %v1302
        %v3840 = vunpack.c.l.b16 %v1303
        %v3841 = vunpack.c.h.b16 %v1303
        %v3842 = vunpack.c.l.b16 %v1304
        %v3843 = vunpack.c.h.b16 %v1304
        %v3844 = vunpack.c.l.b16 %v1305
        %v3845 = vunpack.c.h.b16 %v1305
        %v3846 = vunpack.c.l.b16 %v1306
        %v3847 = vunpack.c.h.b16 %v1306
        %v3848 = vunpack.c.l.b16 %v1307
        %v3849 = vunpack.c.h.b16 %v1307
        %v3850 = vunpack.c.l.b16 %v1308
        %v3851 = vunpack.c.h.b16 %v1308
        %v3852 = vunpack.c.l.b16 %v1309
        %v3853 = vunpack.c.h.b16 %v1309
        %v3854 = vunpack.c.l.b16 %v1310
        %v3855 = vunpack.c.h.b16 %v1310
        %v3856 = vunpack.c.l.b16 %v1311
        %v3857 = vunpack.c.h.b16 %v1311
        %v3858 = vunpack.c.l.b16 %v1312
        %v3859 = vunpack.c.h.b16 %v1312
        %v3860 = vunpack.c.l.b16 %v1313
        %v3861 = vunpack.c.h.b16 %v1313
        %v3862 = vunpack.c.l.b16 %v1314
        %v3863 = vunpack.c.h.b16 %v1314
        %v3864 = vunpack.c.l.b16 %v1315
        %v3865 = vunpack.c.h.b16 %v1315
        %v3866 = vunpack.c.l.b16 %v1316
        %v3867 = vunpack.c.h.b16 %v1316
        %v3868 = vunpack.c.l.b16 %v1317
        %v3869 = vunpack.c.h.b16 %v1317
        %v3870 = vunpack.c.l.b16 %v1318
        %v3871 = vunpack.c.h.b16 %v1318
        %v3872 = vunpack.c.l.b16 %v1319
        %v3873 = vunpack.c.h.b16 %v1319
        %v3874 = vunpack.c.l.b16 %v1320
        %v3875 = vunpack.c.h.b16 %v1320
        %v3876 = vunpack.c.l.b16 %v1321
        %v3877 = vunpack.c.h.b16 %v1321
        %v3878 = vunpack.c.l.b16 %v1322
        %v3879 = vunpack.c.h.b16 %v1322
        %v3880 = vunpack.c.l.b16 %v1323
        %v3881 = vunpack.c.h.b16 %v1323
        %v3882 = vunpack.c.l.b16 %v1324
        %v3883 = vunpack.c.h.b16 %v1324
        %v3884 = vunpack.c.l.b16 %v1325
        %v3885 = vunpack.c.h.b16 %v1325
        %v3886 = vunpack.c.l.b16 %v1326
        %v3887 = vunpack.c.h.b16 %v1326
        %v3888 = vunpack.c.l.b16 %v1327
        %v3889 = vunpack.c.h.b16 %v1327
        %v3890 = vunpack.c.l.b16 %v1328
        %v3891 = vunpack.c.h.b16 %v1328
        %v3892 = vunpack.c.l.b16 %v1329
        %v3893 = vunpack.c.h.b16 %v1329
        %v3894 = vunpack.c.l.b16 %v1330
        %v3895 = vunpack.c.h.b16 %v1330
        %v3896 = vunpack.c.l.b16 %v1331
        %v3897 = vunpack.c.h.b16 %v1331
        %v3898 = vunpack.c.l.b16 %v1332
        %v3899 = vunpack.c.h.b16 %v1332
        %v3900 = vunpack.c.l.b16 %v1333
        %v3901 = vunpack.c.h.b16 %v1333
        %v3902 = vunpack.c.l.b16 %v1334
        %v3903 = vunpack.c.h.b16 %v1334
        %v3904 = vunpack.c.l.b16 %v1335
        %v3905 = vunpack.c.h.b16 %v1335
        %v3906 = vunpack.c.l.b16 %v1336
        %v3907 = vunpack.c.h.b16 %v1336
        %v3908 = vunpack.c.l.b16 %v1337
        %v3909 = vunpack.c.h.b16 %v1337
        %v3910 = vunpack.c.l.b16 %v1338
        %v3911 = vunpack.c.h.b16 %v1338
        %v3912 = vunpack.c.l.b16 %v1339
        %v3913 = vunpack.c.h.b16 %v1339
        %v3914 = vunpack.c.l.b16 %v1340
        %v3915 = vunpack.c.h.b16 %v1340
        %v3916 = vunpack.c.l.b16 %v1341
        %v3917 = vunpack.c.h.b16 %v1341
        %v3918 = vunpack.c.l.b16 %v1342
        %v3919 = vunpack.c.h.b16 %v1342
        %v3920 = vunpack.c.l.b16 %v1343
        %v3921 = vunpack.c.h.b16 %v1343
        %v3922 = vunpack.c.l.b16 %v1344
        %v3923 = vunpack.c.h.b16 %v1344
        %v3924 = vunpack.c.l.b16 %v1345
        %v3925 = vunpack.c.h.b16 %v1345
        %v3926 = vunpack.c.l.b16 %v1346
        %v3927 = vunpack.c.h.b16 %v1346
        %v3928 = vunpack.c.l.b16 %v1347
        %v3929 = vunpack.c.h.b16 %v1347
        %v3930 = vunpack.c.l.b16 %v1348
        %v3931 = vunpack.c.h.b16 %v1348
        %v3932 = vunpack.c.l.b16 %v1349
        %v3933 = vunpack.c.h.b16 %v1349
        %v3934 = vunpack.c.l.b16 %v1350
        %v3935 = vunpack.c.h.b16 %v1350
        %v3936 = vunpack.c.l.b16 %v1351
        %v3937 = vunpack.c.h.b16 %v1351
        %v3938 = vunpack.c.l.b16 %v1352
        %v3939 = vunpack.c.h.b16 %v1352
        %v3940 = vunpack.c.l.b16 %v1353
        %v3941 = vunpack.c.h.b16 %v1353
        %v3942 = vunpack.c.l.b16 %v1354
        %v3943 = vunpack.c.h.b16 %v1354
        %v3944 = vunpack.c.l.b16 %v1355
        %v3945 = vunpack.c.h.b16 %v1355
        %v3946 = vunpack.c.l.b16 %v1356
        %v3947 = vunpack.c.h.b16 %v1356
        %v3948 = vunpack.c.l.b16 %v1357
        %v3949 = vunpack.c.h.b16 %v1357
        %v3950 = vunpack.c.l.b16 %v1358
        %v3951 = vunpack.c.h.b16 %v1358
        %v3952 = vunpack.c.l.b16 %v1359
        %v3953 = vunpack.c.h.b16 %v1359
        %v3954 = vunpack.c.l.b16 %v1360
        %v3955 = vunpack.c.h.b16 %v1360
        %v3956 = vunpack.c.l.b16 %v1361
        %v3957 = vunpack.c.h.b16 %v1361
        %v3958 = vunpack.c.l.b16 %v1362
        %v3959 = vunpack.c.h.b16 %v1362
        %v3960 = vunpack.c.l.b16 %v1363
        %v3961 = vunpack.c.h.b16 %v1363
        %v3962 = vunpack.c.l.b16 %v1364
        %v3963 = vunpack.c.h.b16 %v1364
        %v3964 = vunpack.c.l.b16 %v1365
        %v3965 = vunpack.c.h.b16 %v1365
        %v3966 = vunpack.c.l.b16 %v1366
        %v3967 = vunpack.c.h.b16 %v1366
        %v3968 = vunpack.c.l.b16 %v1367
        %v3969 = vunpack.c.h.b16 %v1367
        %v3970 = vunpack.c.l.b16 %v1368
        %v3971 = vunpack.c.h.b16 %v1368
        %v3972 = vunpack.c.l.b16 %v1369
        %v3973 = vunpack.c.h.b16 %v1369
        %v3974 = vunpack.c.l.b16 %v1370
        %v3975 = vunpack.c.h.b16 %v1370
        %v3976 = vunpack.c.l.b16 %v1371
        %v3977 = vunpack.c.h.b16 %v1371
        %v3978 = vunpack.c.l.b16 %v1372
        %v3979 = vunpack.c.h.b16 %v1372
        %v3980 = vunpack.c.l.b16 %v1373
        %v3981 = vunpack.c.h.b16 %v1373
        %v3982 = vunpack.c.l.b16 %v1374
        %v3983 = vunpack.c.h.b16 %v1374
        %v3984 = vunpack.c.l.b16 %v1375
        %v3985 = vunpack.c.h.b16 %v1375
        %v3986 = vunpack.c.l.b16 %v1376
        %v3987 = vunpack.c.h.b16 %v1376
        %v3988 = vunpack.c.l.b16 %v1377
        %v3989 = vunpack.c.h.b16 %v1377
        %v3990 = vunpack.c.l.b16 %v1378
        %v3991 = vunpack.c.h.b16 %v1378
        %v3992 = vunpack.c.l.b16 %v1379
        %v3993 = vunpack.c.h.b16 %v1379
        %v3994 = vunpack.c.l.b16 %v1380
        %v3995 = vunpack.c.h.b16 %v1380
        %v3996 = vunpack.c.l.b16 %v1381
        %v3997 = vunpack.c.h.b16 %v1381
        %v3998 = vunpack.c.l.b16 %v1382
        %v3999 = vunpack.c.h.b16 %v1382
        %v4000 = vunpack.c.l.b16 %v1383
        %v4001 = vunpack.c.h.b16 %v1383
        %v4002 = vunpack.c.l.b16 %v1384
        %v4003 = vunpack.c.h.b16 %v1384
        %v4004 = vunpack.c.l.b16 %v1385
        %v4005 = vunpack.c.h.b16 %v1385
        %v4006 = vunpack.c.l.b16 %v1386
        %v4007 = vunpack.c.h.b16 %v1386
        %v4008 = vunpack.c.l.b16 %v1387
        %v4009 = vunpack.c.h.b16 %v1387
        %v4010 = vunpack.c.l.b16 %v1388
        %v4011 = vunpack.c.h.b16 %v1388
        %v4012 = vunpack.c.l.b16 %v1389
        %v4013 = vunpack.c.h.b16 %v1389
        %v4014 = vunpack.c.l.b16 %v1390
        %v4015 = vunpack.c.h.b16 %v1390
        %v4016 = vunpack.c.l.b16 %v1391
        %v4017 = vunpack.c.h.b16 %v1391
        %v4018 = vunpack.c.l.b16 %v1392
        %v4019 = vunpack.c.h.b16 %v1392
        %v4020 = vunpack.c.l.b16 %v1393
        %v4021 = vunpack.c.h.b16 %v1393
        %v4022 = vunpack.c.l.b16 %v1394
        %v4023 = vunpack.c.h.b16 %v1394
        %v4024 = vunpack.c.l.b16 %v1395
        %v4025 = vunpack.c.h.b16 %v1395
        %v4026 = vunpack.c.l.b16 %v1396
        %v4027 = vunpack.c.h.b16 %v1396
        %v4028 = vunpack.c.l.b16 %v1397
        %v4029 = vunpack.c.h.b16 %v1397
        %v4030 = vunpack.c.l.b16 %v1398
        %v4031 = vunpack.c.h.b16 %v1398
        %v4032 = vunpack.c.l.b16 %v1399
        %v4033 = vunpack.c.h.b16 %v1399
        %v4034 = vunpack.c.l.b16 %v1400
        %v4035 = vunpack.c.h.b16 %v1400
        %v4036 = vunpack.c.l.b16 %v1401
        %v4037 = vunpack.c.h.b16 %v1401
        %v4038 = vunpack.c.l.b16 %v1402
        %v4039 = vunpack.c.h.b16 %v1402
        %v4040 = vunpack.c.l.b16 %v1403
        %v4041 = vunpack.c.h.b16 %v1403
        %v4042 = vunpack.c.l.b16 %v1404
        %v4043 = vunpack.c.h.b16 %v1404
        %v4044 = vunpack.c.l.b16 %v1405
        %v4045 = vunpack.c.h.b16 %v1405
        %v4046 = vunpack.c.l.b16 %v1406
        %v4047 = vunpack.c.h.b16 %v1406
        %v4048 = vunpack.c.l.b16 %v1407
        %v4049 = vunpack.c.h.b16 %v1407
        %v4050 = vunpack.c.l.b16 %v1408
        %v4051 = vunpack.c.h.b16 %v1408
        %v4052 = vunpack.c.l.b16 %v1409
        %v4053 = vunpack.c.h.b16 %v1409
        %v4054 = vunpack.c.l.b16 %v1410
        %v4055 = vunpack.c.h.b16 %v1410
        %v4056 = vunpack.c.l.b16 %v1411
        %v4057 = vunpack.c.h.b16 %v1411
        %v4058 = vunpack.c.l.b16 %v1412
        %v4059 = vunpack.c.h.b16 %v1412
        %v4060 = vunpack.c.l.b16 %v1413
        %v4061 = vunpack.c.h.b16 %v1413
        %v4062 = vunpack.c.l.b16 %v1414
        %v4063 = vunpack.c.h.b16 %v1414
        %v4064 = vunpack.c.l.b16 %v1415
        %v4065 = vunpack.c.h.b16 %v1415
        %v4066 = vunpack.c.l.b16 %v1416
        %v4067 = vunpack.c.h.b16 %v1416
        %v4068 = vunpack.c.l.b16 %v1417
        %v4069 = vunpack.c.h.b16 %v1417
        %v4070 = vunpack.c.l.b16 %v1418
        %v4071 = vunpack.c.h.b16 %v1418
        %v4072 = vunpack.c.l.b16 %v1419
        %v4073 = vunpack.c.h.b16 %v1419
        %v4074 = vunpack.c.l.b16 %v1420
        %v4075 = vunpack.c.h.b16 %v1420
        %v4076 = vunpack.c.l.b16 %v1421
        %v4077 = vunpack.c.h.b16 %v1421
        %v4078 = vunpack.c.l.b16 %v1422
        %v4079 = vunpack.c.h.b16 %v1422
        %v4080 = vunpack.c.l.b16 %v1423
        %v4081 = vunpack.c.h.b16 %v1423
        %v4082 = vunpack.c.l.b16 %v1424
        %v4083 = vunpack.c.h.b16 %v1424
        %v4084 = vunpack.c.l.b16 %v1425
        %v4085 = vunpack.c.h.b16 %v1425
        %v4086 = vunpack.c.l.b16 %v1426
        %v4087 = vunpack.c.h.b16 %v1426
        %v4088 = vunpack.c.l.b16 %v1427
        %v4089 = vunpack.c.h.b16 %v1427
        %v4090 = vunpack.c.l.b16 %v1428
        %v4091 = vunpack.c.h.b16 %v1428
        %v4092 = vunpack.c.l.b16 %v1429
        %v4093 = vunpack.c.h.b16 %v1429
        %v4094 = vunpack.c.l.b16 %v1430
        %v4095 = vunpack.c.h.b16 %v1430
        %v4096 = vunpack.c.l.b16 %v1431
        %v4097 = vunpack.c.h.b16 %v1431
        %v4098 = vunpack.c.l.b16 %v1432
        %v4099 = vunpack.c.h.b16 %v1432
        %v4100 = vunpack.c.l.b16 %v1433
        %v4101 = vunpack.c.h.b16 %v1433
        %v4102 = vunpack.c.l.b16 %v1434
        %v4103 = vunpack.c.h.b16 %v1434
        %v4104 = vunpack.c.l.b16 %v1435
        %v4105 = vunpack.c.h.b16 %v1435
        %v4106 = vunpack.c.l.b16 %v1436
        %v4107 = vunpack.c.h.b16 %v1436
        %v4108 = vunpack.c.l.b16 %v1437
        %v4109 = vunpack.c.h.b16 %v1437
        %v4110 = vunpack.c.l.b16 %v1438
        %v4111 = vunpack.c.h.b16 %v1438
        %v4112 = vunpack.c.l.b16 %v1439
        %v4113 = vunpack.c.h.b16 %v1439
        %v4114 = vunpack.c.l.b16 %v1440
        %v4115 = vunpack.c.h.b16 %v1440
        %v4116 = vunpack.c.l.b16 %v1441
        %v4117 = vunpack.c.h.b16 %v1441
        %v4118 = vunpack.c.l.b16 %v1442
        %v4119 = vunpack.c.h.b16 %v1442
        %v4120 = vunpack.c.l.b16 %v1443
        %v4121 = vunpack.c.h.b16 %v1443
        %v4122 = vunpack.c.l.b16 %v1444
        %v4123 = vunpack.c.h.b16 %v1444
        %v4124 = vunpack.c.l.b16 %v1445
        %v4125 = vunpack.c.h.b16 %v1445
        %v4126 = vunpack.c.l.b16 %v1446
        %v4127 = vunpack.c.h.b16 %v1446
        %v4128 = vunpack.c.l.b16 %v1447
        %v4129 = vunpack.c.h.b16 %v1447
        %v4130 = vunpack.c.l.b16 %v1448
        %v4131 = vunpack.c.h.b16 %v1448
        %v4132 = vunpack.c.l.b16 %v1449
        %v4133 = vunpack.c.h.b16 %v1449
        %v4134 = vunpack.c.l.b16 %v1450
        %v4135 = vunpack.c.h.b16 %v1450
        %v4136 = vunpack.c.l.b16 %v1451
        %v4137 = vunpack.c.h.b16 %v1451
        %v4138 = vunpack.c.l.b16 %v1452
        %v4139 = vunpack.c.h.b16 %v1452
        %v4140 = vunpack.c.l.b16 %v1453
        %v4141 = vunpack.c.h.b16 %v1453
        %v4142 = vunpack.c.l.b16 %v1454
        %v4143 = vunpack.c.h.b16 %v1454
        %v4144 = vunpack.c.l.b16 %v1455
        %v4145 = vunpack.c.h.b16 %v1455
        %v4146 = vunpack.c.l.b16 %v1456
        %v4147 = vunpack.c.h.b16 %v1456
        %v4148 = vunpack.c.l.b16 %v1457
        %v4149 = vunpack.c.h.b16 %v1457
        %v4150 = vunpack.c.l.b16 %v1458
        %v4151 = vunpack.c.h.b16 %v1458
        %v4152 = vunpack.c.l.b16 %v1459
        %v4153 = vunpack.c.h.b16 %v1459
        %v4154 = vunpack.c.l.b16 %v1460
        %v4155 = vunpack.c.h.b16 %v1460
        %v4156 = vunpack.c.l.b16 %v1461
        %v4157 = vunpack.c.h.b16 %v1461
        %v4158 = vunpack.c.l.b16 %v1462
        %v4159 = vunpack.c.h.b16 %v1462
        %v4160 = vunpack.c.l.b16 %v1463
        %v4161 = vunpack.c.h.b16 %v1463
        %v4162 = vunpack.c.l.b16 %v1464
        %v4163 = vunpack.c.h.b16 %v1464
        %v4164 = vunpack.c.l.b16 %v1465
        %v4165 = vunpack.c.h.b16 %v1465
        %v4166 = vunpack.c.l.b16 %v1466
        %v4167 = vunpack.c.h.b16 %v1466
        %v4168 = vunpack.c.l.b16 %v1467
        %v4169 = vunpack.c.h.b16 %v1467
        %v4170 = vunpack.c.l.b16 %v1468
        %v4171 = vunpack.c.h.b16 %v1468
        %v4172 = vunpack.c.l.b16 %v1469
        %v4173 = vunpack.c.h.b16 %v1469
        %v4174 = vunpack.c.l.b16 %v1470
        %v4175 = vunpack.c.h.b16 %v1470
        %v4176 = vunpack.c.l.b16 %v1471
        %v4177 = vunpack.c.h.b16 %v1471
        %v4178 = vunpack.c.l.b16 %v1472
        %v4179 = vunpack.c.h.b16 %v1472
        %v4180 = vunpack.c.l.b16 %v1473
        %v4181 = vunpack.c.h.b16 %v1473
        %v4182 = vunpack.c.l.b16 %v1474
        %v4183 = vunpack.c.h.b16 %v1474
        %v4184 = vunpack.c.l.b16 %v1475
        %v4185 = vunpack.c.h.b16 %v1475
        %v4186 = vunpack.c.l.b16 %v1476
        %v4187 = vunpack.c.h.b16 %v1476
        %v4188 = vunpack.c.l.b16 %v1477
        %v4189 = vunpack.c.h.b16 %v1477
        %v4190 = vunpack.c.l.b16 %v1478
        %v4191 = vunpack.c.h.b16 %v1478
        %v4192 = vunpack.c.l.b16 %v1479
        %v4193 = vunpack.c.h.b16 %v1479
        %v4194 = vunpack.c.l.b16 %v1480
        %v4195 = vunpack.c.h.b16 %v1480
        %v4196 = vunpack.c.l.b16 %v1481
        %v4197 = vunpack.c.h.b16 %v1481
        %v4198 = vunpack.c.l.b16 %v1482
        %v4199 = vunpack.c.h.b16 %v1482
        %v4200 = vunpack.c.l.b16 %v1483
        %v4201 = vunpack.c.h.b16 %v1483
        %v4202 = vunpack.c.l.b16 %v1484
        %v4203 = vunpack.c.h.b16 %v1484
        %v4204 = vunpack.c.l.b16 %v1485
        %v4205 = vunpack.c.h.b16 %v1485
        %v4206 = vunpack.c.l.b16 %v1486
        %v4207 = vunpack.c.h.b16 %v1486
        %v4208 = vunpack.c.l.b16 %v1487
        %v4209 = vunpack.c.h.b16 %v1487
        %v4210 = vunpack.c.l.b16 %v1488
        %v4211 = vunpack.c.h.b16 %v1488
        %v4212 = vunpack.c.l.b16 %v1489
        %v4213 = vunpack.c.h.b16 %v1489
        %v4214 = vunpack.c.l.b16 %v1490
        %v4215 = vunpack.c.h.b16 %v1490
        %v4216 = vunpack.c.l.b16 %v1491
        %v4217 = vunpack.c.h.b16 %v1491
        %v4218 = vunpack.c.l.b16 %v1492
        %v4219 = vunpack.c.h.b16 %v1492
        %v4220 = vunpack.c.l.b16 %v1493
        %v4221 = vunpack.c.h.b16 %v1493
        %v4222 = vunpack.c.l.b16 %v1494
        %v4223 = vunpack.c.h.b16 %v1494
        %v4224 = vunpack.c.l.b16 %v1495
        %v4225 = vunpack.c.h.b16 %v1495
        %v4226 = vunpack.c.l.b16 %v1496
        %v4227 = vunpack.c.h.b16 %v1496
        %v4228 = vunpack.c.l.b16 %v1497
        %v4229 = vunpack.c.h.b16 %v1497
        %v4230 = vunpack.c.l.b16 %v1498
        %v4231 = vunpack.c.h.b16 %v1498
        %v4232 = vunpack.c.l.b16 %v1499
        %v4233 = vunpack.c.h.b16 %v1499
        %v4234 = vunpack.c.l.b16 %v1500
        %v4235 = vunpack.c.h.b16 %v1500
        %v4236 = vunpack.c.l.b16 %v1501
        %v4237 = vunpack.c.h.b16 %v1501
        %v4238 = vunpack.c.l.b16 %v1502
        %v4239 = vunpack.c.h.b16 %v1502
        %v4240 = vunpack.c.l.b16 %v1503
        %v4241 = vunpack.c.h.b16 %v1503
        %v4242 = vunpack.c.l.b16 %v1504
        %v4243 = vunpack.c.h.b16 %v1504
        %v4244 = vunpack.c.l.b16 %v1505
        %v4245 = vunpack.c.h.b16 %v1505
        %v4246 = vunpack.c.l.b16 %v1506
        %v4247 = vunpack.c.h.b16 %v1506
        %v4248 = vunpack.c.l.b16 %v1507
        %v4249 = vunpack.c.h.b16 %v1507
        %v4250 = vunpack.c.l.b16 %v1508
        %v4251 = vunpack.c.h.b16 %v1508
        %v4252 = vunpack.c.l.b16 %v1509
        %v4253 = vunpack.c.h.b16 %v1509
        %v4254 = vunpack.c.l.b16 %v1510
        %v4255 = vunpack.c.h.b16 %v1510
        %v4256 = vunpack.c.l.b16 %v1511
        %v4257 = vunpack.c.h.b16 %v1511
        %v4258 = vunpack.c.l.b16 %v1512
        %v4259 = vunpack.c.h.b16 %v1512
        %v4260 = vunpack.c.l.b16 %v1513
        %v4261 = vunpack.c.h.b16 %v1513
        %v4262 = vunpack.c.l.b16 %v1514
        %v4263 = vunpack.c.h.b16 %v1514
        %v4264 = vunpack.c.l.b16 %v1515
        %v4265 = vunpack.c.h.b16 %v1515
        %v4266 = vunpack.c.l.b16 %v1516
        %v4267 = vunpack.c.h.b16 %v1516
        %v4268 = vunpack.c.l.b16 %v1517
        %v4269 = vunpack.c.h.b16 %v1517
        %v4270 = vunpack.c.l.b16 %v1518
        %v4271 = vunpack.c.h.b16 %v1518
        %v4272 = vunpack.c.l.b16 %v1519
        %v4273 = vunpack.c.h.b16 %v1519
        %v4274 = vunpack.c.l.b16 %v1520
        %v4275 = vunpack.c.h.b16 %v1520
        %v4276 = vunpack.c.l.b16 %v1521
        %v4277 = vunpack.c.h.b16 %v1521
        %v4278 = vunpack.c.l.b16 %v1522
        %v4279 = vunpack.c.h.b16 %v1522
        %v4280 = vunpack.c.l.b16 %v1523
        %v4281 = vunpack.c.h.b16 %v1523
        %v4282 = vunpack.c.l.b16 %v1524
        %v4283 = vunpack.c.h.b16 %v1524
        %v4284 = vunpack.c.l.b16 %v1525
        %v4285 = vunpack.c.h.b16 %v1525
        %v4286 = vunpack.c.l.b16 %v1526
        %v4287 = vunpack.c.h.b16 %v1526
        %v4288 = vunpack.c.l.b16 %v1527
        %v4289 = vunpack.c.h.b16 %v1527
        %v4290 = vunpack.c.l.b16 %v1528
        %v4291 = vunpack.c.h.b16 %v1528
        %v4292 = vunpack.c.l.b16 %v1529
        %v4293 = vunpack.c.h.b16 %v1529
        %v4294 = vunpack.c.l.b16 %v1530
        %v4295 = vunpack.c.h.b16 %v1530
        %v4296 = vunpack.c.l.b16 %v1531
        %v4297 = vunpack.c.h.b16 %v1531
        %v4298 = vunpack.c.l.b16 %v1532
        %v4299 = vunpack.c.h.b16 %v1532
        %v4300 = vunpack.c.l.b16 %v1533
        %v4301 = vunpack.c.h.b16 %v1533
        %v4302 = vunpack.c.l.b16 %v1534
        %v4303 = vunpack.c.h.b16 %v1534
        %v4304 = vunpack.c.l.b16 %v1535
        %v4305 = vunpack.c.h.b16 %v1535
        %v4306 = vunpack.c.l.b16 %v1536
        %v4307 = vunpack.c.h.b16 %v1536
        %v4308 = vunpack.c.l.b16 %v1537
        %v4309 = vunpack.c.h.b16 %v1537
        %v4310 = vunpack.c.l.b16 %v1538
        %v4311 = vunpack.c.h.b16 %v1538
        %v4312 = vunpack.c.l.b16 %v1539
        %v4313 = vunpack.c.h.b16 %v1539
        %v4314 = vunpack.c.l.b16 %v1540
        %v4315 = vunpack.c.h.b16 %v1540
        %v4316 = vunpack.c.l.b16 %v1541
        %v4317 = vunpack.c.h.b16 %v1541
        %v4318 = vunpack.c.l.b16 %v1542
        %v4319 = vunpack.c.h.b16 %v1542
        %v4320 = vunpack.c.l.b16 %v1543
        %v4321 = vunpack.c.h.b16 %v1543
        %v4322 = vunpack.c.l.b16 %v1544
        %v4323 = vunpack.c.h.b16 %v1544
        %v4324 = vunpack.c.l.b16 %v1545
        %v4325 = vunpack.c.h.b16 %v1545
        %v4326 = vunpack.c.l.b16 %v1546
        %v4327 = vunpack.c.h.b16 %v1546
        %v4328 = vunpack.c.l.b16 %v1547
        %v4329 = vunpack.c.h.b16 %v1547
        %v4330 = vunpack.c.l.b16 %v1548
        %v4331 = vunpack.c.h.b16 %v1548
        %v4332 = vunpack.c.l.b16 %v1549
        %v4333 = vunpack.c.h.b16 %v1549
        %v4334 = vunpack.c.l.b16 %v1550
        %v4335 = vunpack.c.h.b16 %v1550
        %v4336 = vunpack.c.l.b16 %v1551
        %v4337 = vunpack.c.h.b16 %v1551
        %v4338 = vunpack.c.l.b16 %v1552
        %v4339 = vunpack.c.h.b16 %v1552
        %v4340 = vunpack.c.l.b16 %v1553
        %v4341 = vunpack.c.h.b16 %v1553
        %v4342 = vunpack.c.l.b16 %v1554
        %v4343 = vunpack.c.h.b16 %v1554
        %v4344 = vunpack.c.l.b16 %v1555
        %v4345 = vunpack.c.h.b16 %v1555
        %v4346 = vunpack.c.l.b16 %v1556
        %v4347 = vunpack.c.h.b16 %v1556
        %v4348 = vunpack.c.l.b16 %v1557
        %v4349 = vunpack.c.h.b16 %v1557
        %v4350 = vunpack.c.l.b16 %v1558
        %v4351 = vunpack.c.h.b16 %v1558
        %v4352 = vunpack.c.l.b16 %v1559
        %v4353 = vunpack.c.h.b16 %v1559
        %v4354 = vunpack.c.l.b16 %v1560
        %v4355 = vunpack.c.h.b16 %v1560
        %v4356 = vunpack.c.l.b16 %v1561
        %v4357 = vunpack.c.h.b16 %v1561
        %v4358 = vunpack.c.l.b16 %v1562
        %v4359 = vunpack.c.h.b16 %v1562
        %v4360 = vunpack.c.l.b16 %v1563
        %v4361 = vunpack.c.h.b16 %v1563
        %v4362 = vunpack.c.l.b16 %v1564
        %v4363 = vunpack.c.h.b16 %v1564
        %v4364 = vunpack.c.l.b16 %v1565
        %v4365 = vunpack.c.h.b16 %v1565
        %v4366 = vunpack.c.l.b16 %v1566
        %v4367 = vunpack.c.h.b16 %v1566
        %v4368 = vunpack.c.l.b16 %v1567
        %v4369 = vunpack.c.h.b16 %v1567
        %v4370 = vunpack.c.l.b16 %v1568
        %v4371 = vunpack.c.h.b16 %v1568
        %v4372 = vunpack.c.l.b16 %v1569
        %v4373 = vunpack.c.h.b16 %v1569
        %v4374 = vunpack.c.l.b16 %v1570
        %v4375 = vunpack.c.h.b16 %v1570
        %v4376 = vunpack.c.l.b16 %v1571
        %v4377 = vunpack.c.h.b16 %v1571
        %v4378 = vunpack.c.l.b16 %v1572
        %v4379 = vunpack.c.h.b16 %v1572
        %v4380 = vunpack.c.l.b16 %v1573
        %v4381 = vunpack.c.h.b16 %v1573
        %v4382 = vunpack.c.l.b16 %v1574
        %v4383 = vunpack.c.h.b16 %v1574
        %v4384 = vunpack.c.l.b16 %v1575
        %v4385 = vunpack.c.h.b16 %v1575
        %v4386 = vunpack.c.l.b16 %v1576
        %v4387 = vunpack.c.h.b16 %v1576
        %v4388 = vunpack.c.l.b16 %v1577
        %v4389 = vunpack.c.h.b16 %v1577
        %v4390 = vunpack.c.l.b16 %v1578
        %v4391 = vunpack.c.h.b16 %v1578
        %v4392 = vunpack.c.l.b16 %v1579
        %v4393 = vunpack.c.h.b16 %v1579
        %v4394 = vunpack.c.l.b16 %v1580
        %v4395 = vunpack.c.h.b16 %v1580
        %v4396 = vunpack.c.l.b16 %v1581
        %v4397 = vunpack.c.h.b16 %v1581
        %v4398 = vunpack.c.l.b16 %v1582
        %v4399 = vunpack.c.h.b16 %v1582
        %v4400 = vunpack.c.l.b16 %v1583
        %v4401 = vunpack.c.h.b16 %v1583
        %v4402 = vunpack.c.l.b16 %v1584
        %v4403 = vunpack.c.h.b16 %v1584
        %v4404 = vunpack.c.l.b16 %v1585
        %v4405 = vunpack.c.h.b16 %v1585
        %v4406 = vunpack.c.l.b16 %v1586
        %v4407 = vunpack.c.h.b16 %v1586
        %v4408 = vunpack.c.l.b16 %v1587
        %v4409 = vunpack.c.h.b16 %v1587
        %v4410 = vunpack.c.l.b16 %v1588
        %v4411 = vunpack.c.h.b16 %v1588
        %v4412 = vunpack.c.l.b16 %v1589
        %v4413 = vunpack.c.h.b16 %v1589
        %v4414 = vunpack.c.l.b16 %v1590
        %v4415 = vunpack.c.h.b16 %v1590
        %v4416 = vunpack.c.l.b16 %v1591
        %v4417 = vunpack.c.h.b16 %v1591
        %v4418 = vunpack.c.l.b16 %v1592
        %v4419 = vunpack.c.h.b16 %v1592
        %v4420 = vunpack.c.l.b16 %v1593
        %v4421 = vunpack.c.h.b16 %v1593
        %v4422 = vunpack.c.l.b16 %v1594
        %v4423 = vunpack.c.h.b16 %v1594
        %v4424 = vunpack.c.l.b16 %v1595
        %v4425 = vunpack.c.h.b16 %v1595
        %v4426 = vunpack.c.l.b16 %v1596
        %v4427 = vunpack.c.h.b16 %v1596
        %v4428 = vunpack.c.l.b16 %v1597
        %v4429 = vunpack.c.h.b16 %v1597
        %v4430 = vunpack.c.l.b16 %v1598
        %v4431 = vunpack.c.h.b16 %v1598
        %v4432 = vunpack.c.l.b16 %v1599
        %v4433 = vunpack.c.h.b16 %v1599
        %v4434 = vunpack.c.l.b16 %v1600
        %v4435 = vunpack.c.h.b16 %v1600
        %v4436 = vunpack.c.l.b16 %v1601
        %v4437 = vunpack.c.h.b16 %v1601
        %v4438 = vunpack.c.l.b16 %v1602
        %v4439 = vunpack.c.h.b16 %v1602
        %v4440 = vunpack.c.l.b16 %v1603
        %v4441 = vunpack.c.h.b16 %v1603
        %v4442 = vunpack.c.l.b16 %v1604
        %v4443 = vunpack.c.h.b16 %v1604
        %v4444 = vunpack.c.l.b16 %v1605
        %v4445 = vunpack.c.h.b16 %v1605
        %v4446 = vunpack.c.l.b16 %v1606
        %v4447 = vunpack.c.h.b16 %v1606
        %v4448 = vunpack.c.l.b16 %v1607
        %v4449 = vunpack.c.h.b16 %v1607
        %v4450 = vunpack.c.l.b16 %v1608
        %v4451 = vunpack.c.h.b16 %v1608
        %v4452 = vunpack.c.l.b16 %v1609
        %v4453 = vunpack.c.h.b16 %v1609
        %v4454 = vunpack.c.l.b16 %v1610
        %v4455 = vunpack.c.h.b16 %v1610
        %v4456 = vunpack.c.l.b16 %v1611
        %v4457 = vunpack.c.h.b16 %v1611
        %v4458 = vunpack.c.l.b16 %v1612
        %v4459 = vunpack.c.h.b16 %v1612
        %v4460 = vunpack.c.l.b16 %v1613
        %v4461 = vunpack.c.h.b16 %v1613
        %v4462 = vunpack.c.l.b16 %v1614
        %v4463 = vunpack.c.h.b16 %v1614
        %v4464 = vunpack.c.l.b16 %v1615
        %v4465 = vunpack.c.h.b16 %v1615
        %v4466 = vunpack.c.l.b16 %v1616
        %v4467 = vunpack.c.h.b16 %v1616
        %v4468 = vunpack.c.l.b16 %v1617
        %v4469 = vunpack.c.h.b16 %v1617
        %v4470 = vunpack.c.l.b16 %v1618
        %v4471 = vunpack.c.h.b16 %v1618
        %v4472 = vunpack.c.l.b16 %v1619
        %v4473 = vunpack.c.h.b16 %v1619
        %v4474 = vunpack.c.l.b16 %v1620
        %v4475 = vunpack.c.h.b16 %v1620
        %v4476 = vunpack.c.l.b16 %v1621
        %v4477 = vunpack.c.h.b16 %v1621
        %v4478 = vunpack.c.l.b16 %v1622
        %v4479 = vunpack.c.h.b16 %v1622
        %v4480 = vunpack.c.l.b16 %v1623
        %v4481 = vunpack.c.h.b16 %v1623
        %v4482 = vunpack.c.l.b16 %v1624
        %v4483 = vunpack.c.h.b16 %v1624
        %v4484 = vunpack.c.l.b16 %v1625
        %v4485 = vunpack.c.h.b16 %v1625
        %v4486 = vunpack.c.l.b16 %v1626
        %v4487 = vunpack.c.h.b16 %v1626
        %v4488 = vunpack.c.l.b16 %v1627
        %v4489 = vunpack.c.h.b16 %v1627
        %v4490 = vunpack.c.l.b16 %v1628
        %v4491 = vunpack.c.h.b16 %v1628
        %v4492 = vunpack.c.l.b16 %v1629
        %v4493 = vunpack.c.h.b16 %v1629
        %v4494 = vunpack.c.l.b16 %v1630
        %v4495 = vunpack.c.h.b16 %v1630
        %v4496 = vunpack.c.l.b16 %v1631
        %v4497 = vunpack.c.h.b16 %v1631
        %v4498 = vunpack.c.l.b16 %v1632
        %v4499 = vunpack.c.h.b16 %v1632
        %v4500 = vunpack.c.l.b16 %v1633
        %v4501 = vunpack.c.h.b16 %v1633
        %v4502 = vunpack.c.l.b16 %v1634
        %v4503 = vunpack.c.h.b16 %v1634
        %v4504 = vunpack.c.l.b16 %v1635
        %v4505 = vunpack.c.h.b16 %v1635
        %v4506 = vunpack.c.l.b16 %v1636
        %v4507 = vunpack.c.h.b16 %v1636
        %v4508 = vunpack.c.l.b16 %v1637
        %v4509 = vunpack.c.h.b16 %v1637
        %v4510 = vunpack.c.l.b16 %v1638
        %v4511 = vunpack.c.h.b16 %v1638
        %v4512 = vunpack.c.l.b16 %v1639
        %v4513 = vunpack.c.h.b16 %v1639
        %v4514 = vunpack.c.l.b16 %v1640
        %v4515 = vunpack.c.h.b16 %v1640
        %v4516 = vunpack.c.l.b16 %v1641
        %v4517 = vunpack.c.h.b16 %v1641
        %v4518 = vunpack.c.l.b16 %v1642
        %v4519 = vunpack.c.h.b16 %v1642
        %v4520 = vunpack.c.l.b16 %v1643
        %v4521 = vunpack.c.h.b16 %v1643
        %v4522 = vunpack.c.l.b16 %v1644
        %v4523 = vunpack.c.h.b16 %v1644
        %v4524 = vunpack.c.l.b16 %v1645
        %v4525 = vunpack.c.h.b16 %v1645
        %v4526 = vunpack.c.l.b16 %v1646
        %v4527 = vunpack.c.h.b16 %v1646
        %v4528 = vunpack.c.l.b16 %v1647
        %v4529 = vunpack.c.h.b16 %v1647
        %v4530 = vunpack.c.l.b16 %v1648
        %v4531 = vunpack.c.h.b16 %v1648
        %v4532 = vunpack.c.l.b16 %v1649
        %v4533 = vunpack.c.h.b16 %v1649
        %v4534 = vunpack.c.l.b16 %v1650
        %v4535 = vunpack.c.h.b16 %v1650
        %v4536 = vunpack.c.l.b16 %v1651
        %v4537 = vunpack.c.h.b16 %v1651
        %v4538 = vunpack.c.l.b16 %v1652
        %v4539 = vunpack.c.h.b16 %v1652
        %v4540 = vunpack.c.l.b16 %v1653
        %v4541 = vunpack.c.h.b16 %v1653
        %v4542 = vunpack.c.l.b16 %v1654
        %v4543 = vunpack.c.h.b16 %v1654
        %v4544 = vunpack.c.l.b16 %v1655
        %v4545 = vunpack.c.h.b16 %v1655
        %v4546 = vunpack.c.l.b16 %v1656
        %v4547 = vunpack.c.h.b16 %v1656
        %v4548 = vunpack.c.l.b16 %v1657
        %v4549 = vunpack.c.h.b16 %v1657
        %v4550 = vunpack.c.l.b16 %v1658
        %v4551 = vunpack.c.h.b16 %v1658
        %v4552 = vunpack.c.l.b16 %v1659
        %v4553 = vunpack.c.h.b16 %v1659
        %v4554 = vunpack.c.l.b16 %v1660
        %v4555 = vunpack.c.h.b16 %v1660
        %v4556 = vunpack.c.l.b16 %v1661
        %v4557 = vunpack.c.h.b16 %v1661
        %v4558 = vunpack.c.l.b16 %v1662
        %v4559 = vunpack.c.h.b16 %v1662
        %v4560 = vunpack.c.l.b16 %v1663
        %v4561 = vunpack.c.h.b16 %v1663
        %v4562 = vunpack.c.l.b16 %v1664
        %v4563 = vunpack.c.h.b16 %v1664
        %v4564 = vunpack.c.l.b16 %v1665
        %v4565 = vunpack.c.h.b16 %v1665
        %v4566 = vunpack.c.l.b16 %v1666
        %v4567 = vunpack.c.h.b16 %v1666
        %v4568 = vunpack.c.l.b16 %v1667
        %v4569 = vunpack.c.h.b16 %v1667
        %v4570 = vunpack.c.l.b16 %v1668
        %v4571 = vunpack.c.h.b16 %v1668
        %v4572 = vunpack.c.l.b16 %v1669
        %v4573 = vunpack.c.h.b16 %v1669
        %v4574 = vunpack.c.l.b16 %v1670
        %v4575 = vunpack.c.h.b16 %v1670
        %v4576 = vunpack.c.l.b16 %v1671
        %v4577 = vunpack.c.h.b16 %v1671
        %v4578 = vunpack.c.l.b16 %v1672
        %v4579 = vunpack.c.h.b16 %v1672
        %v4580 = vunpack.c.l.b16 %v1673
        %v4581 = vunpack.c.h.b16 %v1673
        %v4582 = vunpack.c.l.b16 %v1674
        %v4583 = vunpack.c.h.b16 %v1674
        %v4584 = vunpack.c.l.b16 %v1675
        %v4585 = vunpack.c.h.b16 %v1675
        %v4586 = vunpack.c.l.b16 %v1676
        %v4587 = vunpack.c.h.b16 %v1676
        %v4588 = vunpack.c.l.b16 %v1677
        %v4589 = vunpack.c.h.b16 %v1677
        %v4590 = vunpack.c.l.b16 %v1678
        %v4591 = vunpack.c.h.b16 %v1678
        %v4592 = vunpack.c.l.b16 %v1679
        %v4593 = vunpack.c.h.b16 %v1679
        %v4594 = vunpack.c.l.b16 %v1680
        %v4595 = vunpack.c.h.b16 %v1680
        %v4596 = vunpack.c.l.b16 %v1681
        %v4597 = vunpack.c.h.b16 %v1681
        %v4598 = vunpack.c.l.b16 %v1682
        %v4599 = vunpack.c.h.b16 %v1682
        %v4600 = vunpack.c.l.b16 %v1683
        %v4601 = vunpack.c.h.b16 %v1683
        %v4602 = vunpack.c.l.b16 %v1684
        %v4603 = vunpack.c.h.b16 %v1684
        %v4604 = vunpack.c.l.b16 %v1685
        %v4605 = vunpack.c.h.b16 %v1685
        %v4606 = vunpack.c.l.b16 %v1686
        %v4607 = vunpack.c.h.b16 %v1686
        %v4608 = vunpack.c.l.b16 %v1687
        %v4609 = vunpack.c.h.b16 %v1687
        %v4610 = vunpack.c.l.b16 %v1688
        %v4611 = vunpack.c.h.b16 %v1688
        %v4612 = vunpack.c.l.b16 %v1689
        %v4613 = vunpack.c.h.b16 %v1689
        %v4614 = vunpack.c.l.b16 %v1690
        %v4615 = vunpack.c.h.b16 %v1690
        %v4616 = vunpack.c.l.b16 %v1691
        %v4617 = vunpack.c.h.b16 %v1691
        %v4618 = vunpack.c.l.b16 %v1692
        %v4619 = vunpack.c.h.b16 %v1692
        %v4620 = vunpack.c.l.b16 %v1693
        %v4621 = vunpack.c.h.b16 %v1693
        %v4622 = vunpack.c.l.b16 %v1694
        %v4623 = vunpack.c.h.b16 %v1694
        %v4624 = vunpack.c.l.b16 %v1695
        %v4625 = vunpack.c.h.b16 %v1695
        %v4626 = vunpack.c.l.b16 %v1696
        %v4627 = vunpack.c.h.b16 %v1696
        %v4628 = vunpack.c.l.b16 %v1697
        %v4629 = vunpack.c.h.b16 %v1697
        %v4630 = vunpack.c.l.b16 %v1698
        %v4631 = vunpack.c.h.b16 %v1698
        %v4632 = vunpack.c.l.b16 %v1699
        %v4633 = vunpack.c.h.b16 %v1699
        %v4634 = vunpack.c.l.b16 %v1700
        %v4635 = vunpack.c.h.b16 %v1700
        %v4636 = vunpack.c.l.b16 %v1701
        %v4637 = vunpack.c.h.b16 %v1701
        %v4638 = vunpack.c.l.b16 %v1702
        %v4639 = vunpack.c.h.b16 %v1702
        %v4640 = vunpack.c.l.b16 %v1703
        %v4641 = vunpack.c.h.b16 %v1703
        %v4642 = vunpack.c.l.b16 %v1704
        %v4643 = vunpack.c.h.b16 %v1704
        %v4644 = vunpack.c.l.b16 %v1705
        %v4645 = vunpack.c.h.b16 %v1705
        %v4646 = vunpack.c.l.b16 %v1706
        %v4647 = vunpack.c.h.b16 %v1706
        %v4648 = vunpack.c.l.b16 %v1707
        %v4649 = vunpack.c.h.b16 %v1707
        %v4650 = vunpack.c.l.b16 %v1708
        %v4651 = vunpack.c.h.b16 %v1708
        %v4652 = vunpack.c.l.b16 %v1709
        %v4653 = vunpack.c.h.b16 %v1709
        %v4654 = vunpack.c.l.b16 %v1710
        %v4655 = vunpack.c.h.b16 %v1710
        %v4656 = vunpack.c.l.b16 %v1711
        %v4657 = vunpack.c.h.b16 %v1711
        %v4658 = vunpack.c.l.b16 %v1712
        %v4659 = vunpack.c.h.b16 %v1712
        %v4660 = vunpack.c.l.b16 %v1713
        %v4661 = vunpack.c.h.b16 %v1713
        %v4662 = vunpack.c.l.b16 %v1714
        %v4663 = vunpack.c.h.b16 %v1714
        %v4664 = vunpack.c.l.b16 %v1715
        %v4665 = vunpack.c.h.b16 %v1715
        %v4666 = vunpack.c.l.b16 %v1716
        %v4667 = vunpack.c.h.b16 %v1716
        %v4668 = vunpack.c.l.b16 %v1717
        %v4669 = vunpack.c.h.b16 %v1717
        %v4670 = vunpack.c.l.b16 %v1718
        %v4671 = vunpack.c.h.b16 %v1718
        %v4672 = vunpack.c.l.b16 %v1719
        %v4673 = vunpack.c.h.b16 %v1719
        %v4674 = vunpack.c.l.b16 %v1720
        %v4675 = vunpack.c.h.b16 %v1720
        %v4676 = vunpack.c.l.b16 %v1721
        %v4677 = vunpack.c.h.b16 %v1721
        %v4678 = vunpack.c.l.b16 %v1722
        %v4679 = vunpack.c.h.b16 %v1722
        %v4680 = vunpack.c.l.b16 %v1723
        %v4681 = vunpack.c.h.b16 %v1723
        %v4682 = vunpack.c.l.b16 %v1724
        %v4683 = vunpack.c.h.b16 %v1724
        %v4684 = vunpack.c.l.b16 %v1725
        %v4685 = vunpack.c.h.b16 %v1725
        %v4686 = vunpack.c.l.b16 %v1726
        %v4687 = vunpack.c.h.b16 %v1726
        %v4688 = vunpack.c.l.b16 %v1727
        %v4689 = vunpack.c.h.b16 %v1727
        %v4690 = vunpack.c.l.b16 %v1728
        %v4691 = vunpack.c.h.b16 %v1728
        %v4692 = vunpack.c.l.b16 %v1729
        %v4693 = vunpack.c.h.b16 %v1729
        %v4694 = vunpack.c.l.b16 %v1730
        %v4695 = vunpack.c.h.b16 %v1730
        %v4696 = vunpack.c.l.b16 %v1731
        %v4697 = vunpack.c.h.b16 %v1731
        %v4698 = vunpack.c.l.b16 %v1732
        %v4699 = vunpack.c.h.b16 %v1732
        %v4700 = vunpack.c.l.b16 %v1733
        %v4701 = vunpack.c.h.b16 %v1733
        %v4702 = vunpack.c.l.b16 %v1734
        %v4703 = vunpack.c.h.b16 %v1734
        %v4704 = vunpack.c.l.b16 %v1735
        %v4705 = vunpack.c.h.b16 %v1735
        %v4706 = vunpack.c.l.b16 %v1736
        %v4707 = vunpack.c.h.b16 %v1736
        %v4708 = vunpack.c.l.b16 %v1737
        %v4709 = vunpack.c.h.b16 %v1737
        %v4710 = vunpack.c.l.b16 %v1738
        %v4711 = vunpack.c.h.b16 %v1738
        %v4712 = vunpack.c.l.b16 %v1739
        %v4713 = vunpack.c.h.b16 %v1739
        %v4714 = vunpack.c.l.b16 %v1740
        %v4715 = vunpack.c.h.b16 %v1740
        %v4716 = vunpack.c.l.b16 %v1741
        %v4717 = vunpack.c.h.b16 %v1741
        %v4718 = vunpack.c.l.b16 %v1742
        %v4719 = vunpack.c.h.b16 %v1742
        %v4720 = vunpack.c.l.b16 %v1743
        %v4721 = vunpack.c.h.b16 %v1743
        %v4722 = vunpack.c.l.b16 %v1744
        %v4723 = vunpack.c.h.b16 %v1744
        %v4724 = vunpack.c.l.b16 %v1745
        %v4725 = vunpack.c.h.b16 %v1745
        %v4726 = vunpack.c.l.b16 %v1746
        %v4727 = vunpack.c.h.b16 %v1746
        %v4728 = vunpack.c.l.b16 %v1747
        %v4729 = vunpack.c.h.b16 %v1747
        %v4730 = vunpack.c.l.b16 %v1748
        %v4731 = vunpack.c.h.b16 %v1748
        %v4732 = vunpack.c.l.b16 %v1749
        %v4733 = vunpack.c.h.b16 %v1749
        %v4734 = vunpack.c.l.b16 %v1750
        %v4735 = vunpack.c.h.b16 %v1750
        %v4736 = vunpack.c.l.b16 %v1751
        %v4737 = vunpack.c.h.b16 %v1751
        %v4738 = vunpack.c.l.b16 %v1752
        %v4739 = vunpack.c.h.b16 %v1752
        %v4740 = vunpack.c.l.b16 %v1753
        %v4741 = vunpack.c.h.b16 %v1753
        %v4742 = vunpack.c.l.b16 %v1754
        %v4743 = vunpack.c.h.b16 %v1754
        %v4744 = vunpack.c.l.b16 %v1755
        %v4745 = vunpack.c.h.b16 %v1755
        %v4746 = vunpack.c.l.b16 %v1756
        %v4747 = vunpack.c.h.b16 %v1756
        %v4748 = vunpack.c.l.b16 %v1757
        %v4749 = vunpack.c.h.b16 %v1757
        %v4750 = vunpack.c.l.b16 %v1758
        %v4751 = vunpack.c.h.b16 %v1758
        %v4752 = vunpack.c.l.b16 %v1759
        %v4753 = vunpack.c.h.b16 %v1759
        %v4754 = vunpack.c.l.b16 %v1760
        %v4755 = vunpack.c.h.b16 %v1760
        %v4756 = vunpack.c.l.b16 %v1761
        %v4757 = vunpack.c.h.b16 %v1761
        %v4758 = vunpack.c.l.b16 %v1762
        %v4759 = vunpack.c.h.b16 %v1762
        %v4760 = vunpack.c.l.b16 %v1763
        %v4761 = vunpack.c.h.b16 %v1763
        %v4762 = vunpack.c.l.b16 %v1764
        %v4763 = vunpack.c.h.b16 %v1764
        %v4764 = vunpack.c.l.b16 %v1765
        %v4765 = vunpack.c.h.b16 %v1765
        %v4766 = vunpack.c.l.b16 %v1766
        %v4767 = vunpack.c.h.b16 %v1766
        %v4768 = vunpack.c.l.b16 %v1767
        %v4769 = vunpack.c.h.b16 %v1767
        %v4770 = vunpack.c.l.b16 %v1768
        %v4771 = vunpack.c.h.b16 %v1768
        %v4772 = vunpack.c.l.b16 %v1769
        %v4773 = vunpack.c.h.b16 %v1769
        %v4774 = vunpack.c.l.b16 %v1770
        %v4775 = vunpack.c.h.b16 %v1770
        %v4776 = vunpack.c.l.b16 %v1771
        %v4777 = vunpack.c.h.b16 %v1771
        %v4778 = vunpack.c.l.b16 %v1772
        %v4779 = vunpack.c.h.b16 %v1772
        %v4780 = vunpack.c.l.b16 %v1773
        %v4781 = vunpack.c.h.b16 %v1773
        %v4782 = vunpack.c.l.b16 %v1774
        %v4783 = vunpack.c.h.b16 %v1774
        %v4784 = vunpack.c.l.b16 %v1775
        %v4785 = vunpack.c.h.b16 %v1775
        %v4786 = vunpack.c.l.b16 %v1776
        %v4787 = vunpack.c.h.b16 %v1776
        %v4788 = vunpack.c.l.b16 %v1777
        %v4789 = vunpack.c.h.b16 %v1777
        %v4790 = vunpack.c.l.b16 %v1778
        %v4791 = vunpack.c.h.b16 %v1778
        %v4792 = vunpack.c.l.b16 %v1779
        %v4793 = vunpack.c.h.b16 %v1779
        %v4794 = vunpack.c.l.b16 %v1780
        %v4795 = vunpack.c.h.b16 %v1780
        %v4796 = vunpack.c.l.b16 %v1781
        %v4797 = vunpack.c.h.b16 %v1781
        %v4798 = vunpack.c.l.b16 %v1782
        %v4799 = vunpack.c.h.b16 %v1782
        %v4800 = vunpack.c.l.b16 %v1783
        %v4801 = vunpack.c.h.b16 %v1783
        %v4802 = vunpack.c.l.b16 %v1784
        %v4803 = vunpack.c.h.b16 %v1784
        %v4804 = vunpack.c.l.b16 %v1785
        %v4805 = vunpack.c.h.b16 %v1785
        %v4806 = vunpack.c.l.b16 %v1786
        %v4807 = vunpack.c.h.b16 %v1786
        %v4808 = vunpack.c.l.b16 %v1787
        %v4809 = vunpack.c.h.b16 %v1787
        %v4810 = vunpack.c.l.b16 %v1788
        %v4811 = vunpack.c.h.b16 %v1788
        %v4812 = vunpack.c.l.b16 %v1789
        %v4813 = vunpack.c.h.b16 %v1789
        %v4814 = vunpack.c.l.b16 %v1790
        %v4815 = vunpack.c.h.b16 %v1790
        %v4816 = vunpack.c.l.b16 %v1791
        %v4817 = vunpack.c.h.b16 %v1791
        %v4818 = vunpack.c.l.b16 %v1792
        %v4819 = vunpack.c.h.b16 %v1792
        %v4820 = vunpack.c.l.b16 %v1793
        %v4821 = vunpack.c.h.b16 %v1793
        %v4822 = vunpack.c.l.b16 %v1794
        %v4823 = vunpack.c.h.b16 %v1794
        %v4824 = vunpack.c.l.b16 %v1795
        %v4825 = vunpack.c.h.b16 %v1795
        %v4826 = vunpack.c.l.b16 %v1796
        %v4827 = vunpack.c.h.b16 %v1796
        %v4828 = vunpack.c.l.b16 %v1797
        %v4829 = vunpack.c.h.b16 %v1797
        %v4830 = vunpack.c.l.b16 %v1798
        %v4831 = vunpack.c.h.b16 %v1798
        %v4832 = vunpack.c.l.b16 %v1799
        %v4833 = vunpack.c.h.b16 %v1799
        %v4834 = vunpack.c.l.b16 %v1800
        %v4835 = vunpack.c.h.b16 %v1800
        %v4836 = vunpack.c.l.b16 %v1801
        %v4837 = vunpack.c.h.b16 %v1801
        %v4838 = vunpack.c.l.b16 %v1802
        %v4839 = vunpack.c.h.b16 %v1802
        %v4840 = vunpack.c.l.b16 %v1803
        %v4841 = vunpack.c.h.b16 %v1803
        %v4842 = vunpack.c.l.b16 %v1804
        %v4843 = vunpack.c.h.b16 %v1804
        %v4844 = vunpack.c.l.b16 %v1805
        %v4845 = vunpack.c.h.b16 %v1805
        %v4846 = vunpack.c.l.b16 %v1806
        %v4847 = vunpack.c.h.b16 %v1806
        %v4848 = vunpack.c.l.b16 %v1807
        %v4849 = vunpack.c.h.b16 %v1807
        %v4850 = vunpack.c.l.b16 %v1808
        %v4851 = vunpack.c.h.b16 %v1808
        %v4852 = vunpack.c.l.b16 %v1809
        %v4853 = vunpack.c.h.b16 %v1809
        %v4854 = vunpack.c.l.b16 %v1810
        %v4855 = vunpack.c.h.b16 %v1810
        %v4856 = vunpack.c.l.b16 %v1811
        %v4857 = vunpack.c.h.b16 %v1811
        %v4858 = vunpack.c.l.b16 %v1812
        %v4859 = vunpack.c.h.b16 %v1812
        %v4860 = vunpack.c.l.b16 %v1813
        %v4861 = vunpack.c.h.b16 %v1813
        %v4862 = vunpack.c.l.b16 %v1814
        %v4863 = vunpack.c.h.b16 %v1814
        %v4864 = vunpack.c.l.b16 %v1815
        %v4865 = vunpack.c.h.b16 %v1815
        %v4866 = vunpack.c.l.b16 %v1816
        %v4867 = vunpack.c.h.b16 %v1816
        %v4868 = vunpack.c.l.b16 %v1817
        %v4869 = vunpack.c.h.b16 %v1817
        %v4870 = vunpack.c.l.b16 %v1818
        %v4871 = vunpack.c.h.b16 %v1818
        %v4872 = vunpack.c.l.b16 %v1819
        %v4873 = vunpack.c.h.b16 %v1819
        %v4874 = vunpack.c.l.b16 %v1820
        %v4875 = vunpack.c.h.b16 %v1820
        %v4876 = vunpack.c.l.b16 %v1821
        %v4877 = vunpack.c.h.b16 %v1821
        %v4878 = vunpack.c.l.b16 %v1822
        %v4879 = vunpack.c.h.b16 %v1822
        %v4880 = vunpack.c.l.b16 %v1823
        %v4881 = vunpack.c.h.b16 %v1823
        %v4882 = vunpack.c.l.b16 %v1824
        %v4883 = vunpack.c.h.b16 %v1824
        %v4884 = vunpack.c.l.b16 %v1825
        %v4885 = vunpack.c.h.b16 %v1825
        %v4886 = vunpack.c.l.b16 %v1826
        %v4887 = vunpack.c.h.b16 %v1826
        %v4888 = vunpack.c.l.b16 %v1827
        %v4889 = vunpack.c.h.b16 %v1827
        %v4890 = vunpack.c.l.b16 %v1828
        %v4891 = vunpack.c.h.b16 %v1828
        %v4892 = vunpack.c.l.b16 %v1829
        %v4893 = vunpack.c.h.b16 %v1829
        %v4894 = vunpack.c.l.b16 %v1830
        %v4895 = vunpack.c.h.b16 %v1830
        %v4896 = vunpack.c.l.b16 %v1831
        %v4897 = vunpack.c.h.b16 %v1831
        %v4898 = vunpack.c.l.b16 %v1832
        %v4899 = vunpack.c.h.b16 %v1832
        %v4900 = vunpack.c.l.b16 %v1833
        %v4901 = vunpack.c.h.b16 %v1833
        %v4902 = vunpack.c.l.b16 %v1834
        %v4903 = vunpack.c.h.b16 %v1834
        %v4904 = vunpack.c.l.b16 %v1835
        %v4905 = vunpack.c.h.b16 %v1835
        %v4906 = vunpack.c.l.b16 %v1836
        %v4907 = vunpack.c.h.b16 %v1836
        %v4908 = vunpack.c.l.b16 %v1837
        %v4909 = vunpack.c.h.b16 %v1837
        %v4910 = vpack.c.b16 %v2864, %v2862
        %v4911 = vpack.c.b16 %v2865, %v2863
        %v4912 = vpack.c.b16 %v2868, %v2866
        %v4913 = vpack.c.b16 %v2869, %v2867
        %v4914 = vpack.c.b16 %v2872, %v2870
        %v4915 = vpack.c.b16 %v2873, %v2871
        %v4916 = vpack.c.b16 %v2876, %v2874
        %v4917 = vpack.c.b16 %v2877, %v2875
        %v4918 = vpack.c.b16 %v2880, %v2878
        %v4919 = vpack.c.b16 %v2881, %v2879
        %v4920 = vpack.c.b16 %v2884, %v2882
        %v4921 = vpack.c.b16 %v2885, %v2883
        %v4922 = vpack.c.b16 %v2888, %v2886
        %v4923 = vpack.c.b16 %v2889, %v2887
        %v4924 = vpack.c.b16 %v2892, %v2890
        %v4925 = vpack.c.b16 %v2893, %v2891
        %v4926 = vpack.c.b16 %v2896, %v2894
        %v4927 = vpack.c.b16 %v2897, %v2895
        %v4928 = vpack.c.b16 %v2900, %v2898
        %v4929 = vpack.c.b16 %v2901, %v2899
        %v4930 = vpack.c.b16 %v2904, %v2902
        %v4931 = vpack.c.b16 %v2905, %v2903
        %v4932 = vpack.c.b16 %v2908, %v2906
        %v4933 = vpack.c.b16 %v2909, %v2907
        %v4934 = vpack.c.b16 %v2912, %v2910
        %v4935 = vpack.c.b16 %v2913, %v2911
        %v4936 = vpack.c.b16 %v2916, %v2914
        %v4937 = vpack.c.b16 %v2917, %v2915
        %v4938 = vpack.c.b16 %v2920, %v2918
        %v4939 = vpack.c.b16 %v2921, %v2919
        %v4940 = vpack.c.b16 %v2924, %v2922
        %v4941 = vpack.c.b16 %v2925, %v2923
        %v4942 = vpack.c.b16 %v2928, %v2926
        %v4943 = vpack.c.b16 %v2929, %v2927
        %v4944 = vpack.c.b16 %v2932, %v2930
        %v4945 = vpack.c.b16 %v2933, %v2931
        %v4946 = vpack.c.b16 %v2936, %v2934
        %v4947 = vpack.c.b16 %v2937, %v2935
        %v4948 = vpack.c.b16 %v2940, %v2938
        %v4949 = vpack.c.b16 %v2941, %v2939
        %v4950 = vpack.c.b16 %v2944, %v2942
        %v4951 = vpack.c.b16 %v2945, %v2943
        %v4952 = vpack.c.b16 %v2948, %v2946
        %v4953 = vpack.c.b16 %v2949, %v2947
        %v4954 = vpack.c.b16 %v2952, %v2950
        %v4955 = vpack.c.b16 %v2953, %v2951
        %v4956 = vpack.c.b16 %v2956, %v2954
        %v4957 = vpack.c.b16 %v2957, %v2955
        %v4958 = vpack.c.b16 %v2960, %v2958
        %v4959 = vpack.c.b16 %v2961, %v2959
        %v4960 = vpack.c.b16 %v2964, %v2962
        %v4961 = vpack.c.b16 %v2965, %v2963
        %v4962 = vpack.c.b16 %v2968, %v2966
        %v4963 = vpack.c.b16 %v2969, %v2967
        %v4964 = vpack.c.b16 %v2972, %v2970
        %v4965 = vpack.c.b16 %v2973, %v2971
        %v4966 = vpack.c.b16 %v2976, %v2974
        %v4967 = vpack.c.b16 %v2977, %v2975
        %v4968 = vpack.c.b16 %v2980, %v2978
        %v4969 = vpack.c.b16 %v2981, %v2979
        %v4970 = vpack.c.b16 %v2984, %v2982
        %v4971 = vpack.c.b16 %v2985, %v2983
        %v4972 = vpack.c.b16 %v2988, %v2986
        %v4973 = vpack.c.b16 %v2989, %v2987
        %v4974 = vpack.c.b16 %v2992, %v2990
        %v4975 = vpack.c.b16 %v2993, %v2991
        %v4976 = vpack.c.b16 %v2996, %v2994
        %v4977 = vpack.c.b16 %v2997, %v2995
        %v4978 = vpack.c.b16 %v3000, %v2998
        %v4979 = vpack.c.b16 %v3001, %v2999
        %v4980 = vpack.c.b16 %v3004, %v3002
        %v4981 = vpack.c.b16 %v3005, %v3003
        %v4982 = vpack.c.b16 %v3008, %v3006
        %v4983 = vpack.c.b16 %v3009, %v3007
        %v4984 = vpack.c.b16 %v3012, %v3010
        %v4985 = vpack.c.b16 %v3013, %v3011
        %v4986 = vpack.c.b16 %v3016, %v3014
        %v4987 = vpack.c.b16 %v3017, %v3015
        %v4988 = vpack.c.b16 %v3020, %v3018
        %v4989 = vpack.c.b16 %v3021, %v3019
        %v4990 = vpack.c.b16 %v3024, %v3022
        %v4991 = vpack.c.b16 %v3025, %v3023
        %v4992 = vpack.c.b16 %v3028, %v3026
        %v4993 = vpack.c.b16 %v3029, %v3027
        %v4994 = vpack.c.b16 %v3032, %v3030
        %v4995 = vpack.c.b16 %v3033, %v3031
        %v4996 = vpack.c.b16 %v3036, %v3034
        %v4997 = vpack.c.b16 %v3037, %v3035
        %v4998 = vpack.c.b16 %v3040, %v3038
        %v4999 = vpack.c.b16 %v3041, %v3039
        %v5000 = vpack.c.b16 %v3044, %v3042
        %v5001 = vpack.c.b16 %v3045, %v3043
        %v5002 = vpack.c.b16 %v3048, %v3046
        %v5003 = vpack.c.b16 %v3049, %v3047
        %v5004 = vpack.c.b16 %v3052, %v3050
        %v5005 = vpack.c.b16 %v3053, %v3051
        %v5006 = vpack.c.b16 %v3056, %v3054
        %v5007 = vpack.c.b16 %v3057, %v3055
        %v5008 = vpack.c.b16 %v3060, %v3058
        %v5009 = vpack.c.b16 %v3061, %v3059
        %v5010 = vpack.c.b16 %v3064, %v3062
        %v5011 = vpack.c.b16 %v3065, %v3063
        %v5012 = vpack.c.b16 %v3068, %v3066
        %v5013 = vpack.c.b16 %v3069, %v3067
        %v5014 = vpack.c.b16 %v3072, %v3070
        %v5015 = vpack.c.b16 %v3073, %v3071
        %v5016 = vpack.c.b16 %v3076, %v3074
        %v5017 = vpack.c.b16 %v3077, %v3075
        %v5018 = vpack.c.b16 %v3080, %v3078
        %v5019 = vpack.c.b16 %v3081, %v3079
        %v5020 = vpack.c.b16 %v3084, %v3082
        %v5021 = vpack.c.b16 %v3085, %v3083
        %v5022 = vpack.c.b16 %v3088, %v3086
        %v5023 = vpack.c.b16 %v3089, %v3087
        %v5024 = vpack.c.b16 %v3092, %v3090
        %v5025 = vpack.c.b16 %v3093, %v3091
        %v5026 = vpack.c.b16 %v3096, %v3094
        %v5027 = vpack.c.b16 %v3097, %v3095
        %v5028 = vpack.c.b16 %v3100, %v3098
        %v5029 = vpack.c.b16 %v3101, %v3099
        %v5030 = vpack.c.b16 %v3104, %v3102
        %v5031 = vpack.c.b16 %v3105, %v3103
        %v5032 = vpack.c.b16 %v3108, %v3106
        %v5033 = vpack.c.b16 %v3109, %v3107
        %v5034 = vpack.c.b16 %v3112, %v3110
        %v5035 = vpack.c.b16 %v3113, %v3111
        %v5036 = vpack.c.b16 %v3116, %v3114
        %v5037 = vpack.c.b16 %v3117, %v3115
        %v5038 = vpack.c.b16 %v3120, %v3118
        %v5039 = vpack.c.b16 %v3121, %v3119
        %v5040 = vpack.c.b16 %v3124, %v3122
        %v5041 = vpack.c.b16 %v3125, %v3123
        %v5042 = vpack.c.b16 %v3128, %v3126
        %v5043 = vpack.c.b16 %v3129, %v3127
        %v5044 = vpack.c.b16 %v3132, %v3130
        %v5045 = vpack.c.b16 %v3133, %v3131
        %v5046 = vpack.c.b16 %v3136, %v3134
        %v5047 = vpack.c.b16 %v3137, %v3135
        %v5048 = vpack.c.b16 %v3140, %v3138
        %v5049 = vpack.c.b16 %v3141, %v3139
        %v5050 = vpack.c.b16 %v3144, %v3142
        %v5051 = vpack.c.b16 %v3145, %v3143
        %v5052 = vpack.c.b16 %v3148, %v3146
        %v5053 = vpack.c.b16 %v3149, %v3147
        %v5054 = vpack.c.b16 %v3152, %v3150
        %v5055 = vpack.c.b16 %v3153, %v3151
        %v5056 = vpack.c.b16 %v3156, %v3154
        %v5057 = vpack.c.b16 %v3157, %v3155
        %v5058 = vpack.c.b16 %v3160, %v3158
        %v5059 = vpack.c.b16 %v3161, %v3159
        %v5060 = vpack.c.b16 %v3164, %v3162
        %v5061 = vpack.c.b16 %v3165, %v3163
        %v5062 = vpack.c.b16 %v3168, %v3166
        %v5063 = vpack.c.b16 %v3169, %v3167
        %v5064 = vpack.c.b16 %v3172, %v3170
        %v5065 = vpack.c.b16 %v3173, %v3171
        %v5066 = vpack.c.b16 %v3176, %v3174
        %v5067 = vpack.c.b16 %v3177, %v3175
        %v5068 = vpack.c.b16 %v3180, %v3178
        %v5069 = vpack.c.b16 %v3181, %v3179
        %v5070 = vpack.c.b16 %v3184, %v3182
        %v5071 = vpack.c.b16 %v3185, %v3183
        %v5072 = vpack.c.b16 %v3188, %v3186
        %v5073 = vpack.c.b16 %v3189, %v3187
        %v5074 = vpack.c.b16 %v3192, %v3190
        %v5075 = vpack.c.b16 %v3193, %v3191
        %v5076 = vpack.c.b16 %v3196, %v3194
        %v5077 = vpack.c.b16 %v3197, %v3195
        %v5078 = vpack.c.b16 %v3200, %v3198
        %v5079 = vpack.c.b16 %v3201, %v3199
        %v5080 = vpack.c.b16 %v3204, %v3202
        %v5081 = vpack.c.b16 %v3205, %v3203
        %v5082 = vpack.c.b16 %v3208, %v3206
        %v5083 = vpack.c.b16 %v3209, %v3207
        %v5084 = vpack.c.b16 %v3212, %v3210
        %v5085 = vpack.c.b16 %v3213, %v3211
        %v5086 = vpack.c.b16 %v3216, %v3214
        %v5087 = vpack.c.b16 %v3217, %v3215
        %v5088 = vpack.c.b16 %v3220, %v3218
        %v5089 = vpack.c.b16 %v3221, %v3219
        %v5090 = vpack.c.b16 %v3224, %v3222
        %v5091 = vpack.c.b16 %v3225, %v3223
        %v5092 = vpack.c.b16 %v3228, %v3226
        %v5093 = vpack.c.b16 %v3229, %v3227
        %v5094 = vpack.c.b16 %v3232, %v3230
        %v5095 = vpack.c.b16 %v3233, %v3231
        %v5096 = vpack.c.b16 %v3236, %v3234
        %v5097 = vpack.c.b16 %v3237, %v3235
        %v5098 = vpack.c.b16 %v3240, %v3238
        %v5099 = vpack.c.b16 %v3241, %v3239
        %v5100 = vpack.c.b16 %v3244, %v3242
        %v5101 = vpack.c.b16 %v3245, %v3243
        %v5102 = vpack.c.b16 %v3248, %v3246
        %v5103 = vpack.c.b16 %v3249, %v3247
        %v5104 = vpack.c.b16 %v3252, %v3250
        %v5105 = vpack.c.b16 %v3253, %v3251
        %v5106 = vpack.c.b16 %v3256, %v3254
        %v5107 = vpack.c.b16 %v3257, %v3255
        %v5108 = vpack.c.b16 %v3260, %v3258
        %v5109 = vpack.c.b16 %v3261, %v3259
        %v5110 = vpack.c.b16 %v3264, %v3262
        %v5111 = vpack.c.b16 %v3265, %v3263
        %v5112 = vpack.c.b16 %v3268, %v3266
        %v5113 = vpack.c.b16 %v3269, %v3267
        %v5114 = vpack.c.b16 %v3272, %v3270
        %v5115 = vpack.c.b16 %v3273, %v3271
        %v5116 = vpack.c.b16 %v3276, %v3274
        %v5117 = vpack.c.b16 %v3277, %v3275
        %v5118 = vpack.c.b16 %v3280, %v3278
        %v5119 = vpack.c.b16 %v3281, %v3279
        %v5120 = vpack.c.b16 %v3284, %v3282
        %v5121 = vpack.c.b16 %v3285, %v3283
        %v5122 = vpack.c.b16 %v3288, %v3286
        %v5123 = vpack.c.b16 %v3289, %v3287
        %v5124 = vpack.c.b16 %v3292, %v3290
        %v5125 = vpack.c.b16 %v3293, %v3291
        %v5126 = vpack.c.b16 %v3296, %v3294
        %v5127 = vpack.c.b16 %v3297, %v3295
        %v5128 = vpack.c.b16 %v3300, %v3298
        %v5129 = vpack.c.b16 %v3301, %v3299
        %v5130 = vpack.c.b16 %v3304, %v3302
        %v5131 = vpack.c.b16 %v3305, %v3303
        %v5132 = vpack.c.b16 %v3308, %v3306
        %v5133 = vpack.c.b16 %v3309, %v3307
        %v5134 = vpack.c.b16 %v3312, %v3310
        %v5135 = vpack.c.b16 %v3313, %v3311
        %v5136 = vpack.c.b16 %v3316, %v3314
        %v5137 = vpack.c.b16 %v3317, %v3315
        %v5138 = vpack.c.b16 %v3320, %v3318
        %v5139 = vpack.c.b16 %v3321, %v3319
        %v5140 = vpack.c.b16 %v3324, %v3322
        %v5141 = vpack.c.b16 %v3325, %v3323
        %v5142 = vpack.c.b16 %v3328, %v3326
        %v5143 = vpack.c.b16 %v3329, %v3327
        %v5144 = vpack.c.b16 %v3332, %v3330
        %v5145 = vpack.c.b16 %v3333, %v3331
        %v5146 = vpack.c.b16 %v3336, %v3334
        %v5147 = vpack.c.b16 %v3337, %v3335
        %v5148 = vpack.c.b16 %v3340, %v3338
        %v5149 = vpack.c.b16 %v3341, %v3339
        %v5150 = vpack.c.b16 %v3344, %v3342
        %v5151 = vpack.c.b16 %v3345, %v3343
        %v5152 = vpack.c.b16 %v3348, %v3346
        %v5153 = vpack.c.b16 %v3349, %v3347
        %v5154 = vpack.c.b16 %v3352, %v3350
        %v5155 = vpack.c.b16 %v3353, %v3351
        %v5156 = vpack.c.b16 %v3356, %v3354
        %v5157 = vpack.c.b16 %v3357, %v3355
        %v5158 = vpack.c.b16 %v3360, %v3358
        %v5159 = vpack.c.b16 %v3361, %v3359
        %v5160 = vpack.c.b16 %v3364, %v3362
        %v5161 = vpack.c.b16 %v3365, %v3363
        %v5162 = vpack.c.b16 %v3368, %v3366
        %v5163 = vpack.c.b16 %v3369, %v3367
        %v5164 = vpack.c.b16 %v3372, %v3370
        %v5165 = vpack.c.b16 %v3373, %v3371
        %v5166 = vpack.c.b16 %v3376, %v3374
        %v5167 = vpack.c.b16 %v3377, %v3375
        %v5168 = vpack.c.b16 %v3380, %v3378
        %v5169 = vpack.c.b16 %v3381, %v3379
        %v5170 = vpack.c.b16 %v3384, %v3382
        %v5171 = vpack.c.b16 %v3385, %v3383
        %v5172 = vpack.c.b16 %v3388, %v3386
        %v5173 = vpack.c.b16 %v3389, %v3387
        %v5174 = vpack.c.b16 %v3392, %v3390
        %v5175 = vpack.c.b16 %v3393, %v3391
        %v5176 = vpack.c.b16 %v3396, %v3394
        %v5177 = vpack.c.b16 %v3397, %v3395
        %v5178 = vpack.c.b16 %v3400, %v3398
        %v5179 = vpack.c.b16 %v3401, %v3399
        %v5180 = vpack.c.b16 %v3404, %v3402
        %v5181 = vpack.c.b16 %v3405, %v3403
        %v5182 = vpack.c.b16 %v3408, %v3406
        %v5183 = vpack.c.b16 %v3409, %v3407
        %v5184 = vpack.c.b16 %v3412, %v3410
        %v5185 = vpack.c.b16 %v3413, %v3411
        %v5186 = vpack.c.b16 %v3416, %v3414
        %v5187 = vpack.c.b16 %v3417, %v3415
        %v5188 = vpack.c.b16 %v3420, %v3418
        %v5189 = vpack.c.b16 %v3421, %v3419
        %v5190 = vpack.c.b16 %v3424, %v3422
        %v5191 = vpack.c.b16 %v3425, %v3423
        %v5192 = vpack.c.b16 %v3428, %v3426
        %v5193 = vpack.c.b16 %v3429, %v3427
        %v5194 = vpack.c.b16 %v3432, %v3430
        %v5195 = vpack.c.b16 %v3433, %v3431
        %v5196 = vpack.c.b16 %v3436, %v3434
        %v5197 = vpack.c.b16 %v3437, %v3435
        %v5198 = vpack.c.b16 %v3440, %v3438
        %v5199 = vpack.c.b16 %v3441, %v3439
        %v5200 = vpack.c.b16 %v3444, %v3442
        %v5201 = vpack.c.b16 %v3445, %v3443
        %v5202 = vpack.c.b16 %v3448, %v3446
        %v5203 = vpack.c.b16 %v3449, %v3447
        %v5204 = vpack.c.b16 %v3452, %v3450
        %v5205 = vpack.c.b16 %v3453, %v3451
        %v5206 = vpack.c.b16 %v3456, %v3454
        %v5207 = vpack.c.b16 %v3457, %v3455
        %v5208 = vpack.c.b16 %v3460, %v3458
        %v5209 = vpack.c.b16 %v3461, %v3459
        %v5210 = vpack.c.b16 %v3464, %v3462
        %v5211 = vpack.c.b16 %v3465, %v3463
        %v5212 = vpack.c.b16 %v3468, %v3466
        %v5213 = vpack.c.b16 %v3469, %v3467
        %v5214 = vpack.c.b16 %v3472, %v3470
        %v5215 = vpack.c.b16 %v3473, %v3471
        %v5216 = vpack.c.b16 %v3476, %v3474
        %v5217 = vpack.c.b16 %v3477, %v3475
        %v5218 = vpack.c.b16 %v3480, %v3478
        %v5219 = vpack.c.b16 %v3481, %v3479
        %v5220 = vpack.c.b16 %v3484, %v3482
        %v5221 = vpack.c.b16 %v3485, %v3483
        %v5222 = vpack.c.b16 %v3488, %v3486
        %v5223 = vpack.c.b16 %v3489, %v3487
        %v5224 = vpack.c.b16 %v3492, %v3490
        %v5225 = vpack.c.b16 %v3493, %v3491
        %v5226 = vpack.c.b16 %v3496, %v3494
        %v5227 = vpack.c.b16 %v3497, %v3495
        %v5228 = vpack.c.b16 %v3500, %v3498
        %v5229 = vpack.c.b16 %v3501, %v3499
        %v5230 = vpack.c.b16 %v3504, %v3502
        %v5231 = vpack.c.b16 %v3505, %v3503
        %v5232 = vpack.c.b16 %v3508, %v3506
        %v5233 = vpack.c.b16 %v3509, %v3507
        %v5234 = vpack.c.b16 %v3512, %v3510
        %v5235 = vpack.c.b16 %v3513, %v3511
        %v5236 = vpack.c.b16 %v3516, %v3514
        %v5237 = vpack.c.b16 %v3517, %v3515
        %v5238 = vpack.c.b16 %v3520, %v3518
        %v5239 = vpack.c.b16 %v3521, %v3519
        %v5240 = vpack.c.b16 %v3524, %v3522
        %v5241 = vpack.c.b16 %v3525, %v3523
        %v5242 = vpack.c.b16 %v3528, %v3526
        %v5243 = vpack.c.b16 %v3529, %v3527
        %v5244 = vpack.c.b16 %v3532, %v3530
        %v5245 = vpack.c.b16 %v3533, %v3531
        %v5246 = vpack.c.b16 %v3536, %v3534
        %v5247 = vpack.c.b16 %v3537, %v3535
        %v5248 = vpack.c.b16 %v3540, %v3538
        %v5249 = vpack.c.b16 %v3541, %v3539
        %v5250 = vpack.c.b16 %v3544, %v3542
        %v5251 = vpack.c.b16 %v3545, %v3543
        %v5252 = vpack.c.b16 %v3548, %v3546
        %v5253 = vpack.c.b16 %v3549, %v3547
        %v5254 = vpack.c.b16 %v3552, %v3550
        %v5255 = vpack.c.b16 %v3553, %v3551
        %v5256 = vpack.c.b16 %v3556, %v3554
        %v5257 = vpack.c.b16 %v3557, %v3555
        %v5258 = vpack.c.b16 %v3560, %v3558
        %v5259 = vpack.c.b16 %v3561, %v3559
        %v5260 = vpack.c.b16 %v3564, %v3562
        %v5261 = vpack.c.b16 %v3565, %v3563
        %v5262 = vpack.c.b16 %v3568, %v3566
        %v5263 = vpack.c.b16 %v3569, %v3567
        %v5264 = vpack.c.b16 %v3572, %v3570
        %v5265 = vpack.c.b16 %v3573, %v3571
        %v5266 = vpack.c.b16 %v3576, %v3574
        %v5267 = vpack.c.b16 %v3577, %v3575
        %v5268 = vpack.c.b16 %v3580, %v3578
        %v5269 = vpack.c.b16 %v3581, %v3579
        %v5270 = vpack.c.b16 %v3584, %v3582
        %v5271 = vpack.c.b16 %v3585, %v3583
        %v5272 = vpack.c.b16 %v3588, %v3586
        %v5273 = vpack.c.b16 %v3589, %v3587
        %v5274 = vpack.c.b16 %v3592, %v3590
        %v5275 = vpack.c.b16 %v3593, %v3591
        %v5276 = vpack.c.b16 %v3596, %v3594
        %v5277 = vpack.c.b16 %v3597, %v3595
        %v5278 = vpack.c.b16 %v3600, %v3598
        %v5279 = vpack.c.b16 %v3601, %v3599
        %v5280 = vpack.c.b16 %v3604, %v3602
        %v5281 = vpack.c.b16 %v3605, %v3603
        %v5282 = vpack.c.b16 %v3608, %v3606
        %v5283 = vpack.c.b16 %v3609, %v3607
        %v5284 = vpack.c.b16 %v3612, %v3610
        %v5285 = vpack.c.b16 %v3613, %v3611
        %v5286 = vpack.c.b16 %v3616, %v3614
        %v5287 = vpack.c.b16 %v3617, %v3615
        %v5288 = vpack.c.b16 %v3620, %v3618
        %v5289 = vpack.c.b16 %v3621, %v3619
        %v5290 = vpack.c.b16 %v3624, %v3622
        %v5291 = vpack.c.b16 %v3625, %v3623
        %v5292 = vpack.c.b16 %v3628, %v3626
        %v5293 = vpack.c.b16 %v3629, %v3627
        %v5294 = vpack.c.b16 %v3632, %v3630
        %v5295 = vpack.c.b16 %v3633, %v3631
        %v5296 = vpack.c.b16 %v3636, %v3634
        %v5297 = vpack.c.b16 %v3637, %v3635
        %v5298 = vpack.c.b16 %v3640, %v3638
        %v5299 = vpack.c.b16 %v3641, %v3639
        %v5300 = vpack.c.b16 %v3644, %v3642
        %v5301 = vpack.c.b16 %v3645, %v3643
        %v5302 = vpack.c.b16 %v3648, %v3646
        %v5303 = vpack.c.b16 %v3649, %v3647
        %v5304 = vpack.c.b16 %v3652, %v3650
        %v5305 = vpack.c.b16 %v3653, %v3651
        %v5306 = vpack.c.b16 %v3656, %v3654
        %v5307 = vpack.c.b16 %v3657, %v3655
        %v5308 = vpack.c.b16 %v3660, %v3658
        %v5309 = vpack.c.b16 %v3661, %v3659
        %v5310 = vpack.c.b16 %v3664, %v3662
        %v5311 = vpack.c.b16 %v3665, %v3663
        %v5312 = vpack.c.b16 %v3668, %v3666
        %v5313 = vpack.c.b16 %v3669, %v3667
        %v5314 = vpack.c.b16 %v3672, %v3670
        %v5315 = vpack.c.b16 %v3673, %v3671
        %v5316 = vpack.c.b16 %v3676, %v3674
        %v5317 = vpack.c.b16 %v3677, %v3675
        %v5318 = vpack.c.b16 %v3680, %v3678
        %v5319 = vpack.c.b16 %v3681, %v3679
        %v5320 = vpack.c.b16 %v3684, %v3682
        %v5321 = vpack.c.b16 %v3685, %v3683
        %v5322 = vpack.c.b16 %v3688, %v3686
        %v5323 = vpack.c.b16 %v3689, %v3687
        %v5324 = vpack.c.b16 %v3692, %v3690
        %v5325 = vpack.c.b16 %v3693, %v3691
        %v5326 = vpack.c.b16 %v3696, %v3694
        %v5327 = vpack.c.b16 %v3697, %v3695
        %v5328 = vpack.c.b16 %v3700, %v3698
        %v5329 = vpack.c.b16 %v3701, %v3699
        %v5330 = vpack.c.b16 %v3704, %v3702
        %v5331 = vpack.c.b16 %v3705, %v3703
        %v5332 = vpack.c.b16 %v3708, %v3706
        %v5333 = vpack.c.b16 %v3709, %v3707
        %v5334 = vpack.c.b16 %v3712, %v3710
        %v5335 = vpack.c.b16 %v3713, %v3711
        %v5336 = vpack.c.b16 %v3716, %v3714
        %v5337 = vpack.c.b16 %v3717, %v3715
        %v5338 = vpack.c.b16 %v3720, %v3718
        %v5339 = vpack.c.b16 %v3721, %v3719
        %v5340 = vpack.c.b16 %v3724, %v3722
        %v5341 = vpack.c.b16 %v3725, %v3723
        %v5342 = vpack.c.b16 %v3728, %v3726
        %v5343 = vpack.c.b16 %v3729, %v3727
        %v5344 = vpack.c.b16 %v3732, %v3730
        %v5345 = vpack.c.b16 %v3733, %v3731
        %v5346 = vpack.c.b16 %v3736, %v3734
        %v5347 = vpack.c.b16 %v3737, %v3735
        %v5348 = vpack.c.b16 %v3740, %v3738
        %v5349 = vpack.c.b16 %v3741, %v3739
        %v5350 = vpack.c.b16 %v3744, %v3742
        %v5351 = vpack.c.b16 %v3745, %v3743
        %v5352 = vpack.c.b16 %v3748, %v3746
        %v5353 = vpack.c.b16 %v3749, %v3747
        %v5354 = vpack.c.b16 %v3752, %v3750
        %v5355 = vpack.c.b16 %v3753, %v3751
        %v5356 = vpack.c.b16 %v3756, %v3754
        %v5357 = vpack.c.b16 %v3757, %v3755
        %v5358 = vpack.c.b16 %v3760, %v3758
        %v5359 = vpack.c.b16 %v3761, %v3759
        %v5360 = vpack.c.b16 %v3764, %v3762
        %v5361 = vpack.c.b16 %v3765, %v3763
        %v5362 = vpack.c.b16 %v3768, %v3766
        %v5363 = vpack.c.b16 %v3769, %v3767
        %v5364 = vpack.c.b16 %v3772, %v3770
        %v5365 = vpack.c.b16 %v3773, %v3771
        %v5366 = vpack.c.b16 %v3776, %v3774
        %v5367 = vpack.c.b16 %v3777, %v3775
        %v5368 = vpack.c.b16 %v3780, %v3778
        %v5369 = vpack.c.b16 %v3781, %v3779
        %v5370 = vpack.c.b16 %v3784, %v3782
        %v5371 = vpack.c.b16 %v3785, %v3783
        %v5372 = vpack.c.b16 %v3788, %v3786
        %v5373 = vpack.c.b16 %v3789, %v3787
        %v5374 = vpack.c.b16 %v3792, %v3790
        %v5375 = vpack.c.b16 %v3793, %v3791
        %v5376 = vpack.c.b16 %v3796, %v3794
        %v5377 = vpack.c.b16 %v3797, %v3795
        %v5378 = vpack.c.b16 %v3800, %v3798
        %v5379 = vpack.c.b16 %v3801, %v3799
        %v5380 = vpack.c.b16 %v3804, %v3802
        %v5381 = vpack.c.b16 %v3805, %v3803
        %v5382 = vpack.c.b16 %v3808, %v3806
        %v5383 = vpack.c.b16 %v3809, %v3807
        %v5384 = vpack.c.b16 %v3812, %v3810
        %v5385 = vpack.c.b16 %v3813, %v3811
        %v5386 = vpack.c.b16 %v3816, %v3814
        %v5387 = vpack.c.b16 %v3817, %v3815
        %v5388 = vpack.c.b16 %v3820, %v3818
        %v5389 = vpack.c.b16 %v3821, %v3819
        %v5390 = vpack.c.b16 %v3824, %v3822
        %v5391 = vpack.c.b16 %v3825, %v3823
        %v5392 = vpack.c.b16 %v3828, %v3826
        %v5393 = vpack.c.b16 %v3829, %v3827
        %v5394 = vpack.c.b16 %v3832, %v3830
        %v5395 = vpack.c.b16 %v3833, %v3831
        %v5396 = vpack.c.b16 %v3836, %v3834
        %v5397 = vpack.c.b16 %v3837, %v3835
        %v5398 = vpack.c.b16 %v3840, %v3838
        %v5399 = vpack.c.b16 %v3841, %v3839
        %v5400 = vpack.c.b16 %v3844, %v3842
        %v5401 = vpack.c.b16 %v3845, %v3843
        %v5402 = vpack.c.b16 %v3848, %v3846
        %v5403 = vpack.c.b16 %v3849, %v3847
        %v5404 = vpack.c.b16 %v3852, %v3850
        %v5405 = vpack.c.b16 %v3853, %v3851
        %v5406 = vpack.c.b16 %v3856, %v3854
        %v5407 = vpack.c.b16 %v3857, %v3855
        %v5408 = vpack.c.b16 %v3860, %v3858
        %v5409 = vpack.c.b16 %v3861, %v3859
        %v5410 = vpack.c.b16 %v3864, %v3862
        %v5411 = vpack.c.b16 %v3865, %v3863
        %v5412 = vpack.c.b16 %v3868, %v3866
        %v5413 = vpack.c.b16 %v3869, %v3867
        %v5414 = vpack.c.b16 %v3872, %v3870
        %v5415 = vpack.c.b16 %v3873, %v3871
        %v5416 = vpack.c.b16 %v3876, %v3874
        %v5417 = vpack.c.b16 %v3877, %v3875
        %v5418 = vpack.c.b16 %v3880, %v3878
        %v5419 = vpack.c.b16 %v3881, %v3879
        %v5420 = vpack.c.b16 %v3884, %v3882
        %v5421 = vpack.c.b16 %v3885, %v3883
        %v5422 = vpack.c.b16 %v3888, %v3886
        %v5423 = vpack.c.b16 %v3889, %v3887
        %v5424 = vpack.c.b16 %v3892, %v3890
        %v5425 = vpack.c.b16 %v3893, %v3891
        %v5426 = vpack.c.b16 %v3896, %v3894
        %v5427 = vpack.c.b16 %v3897, %v3895
        %v5428 = vpack.c.b16 %v3900, %v3898
        %v5429 = vpack.c.b16 %v3901, %v3899
        %v5430 = vpack.c.b16 %v3904, %v3902
        %v5431 = vpack.c.b16 %v3905, %v3903
        %v5432 = vpack.c.b16 %v3908, %v3906
        %v5433 = vpack.c.b16 %v3909, %v3907
        %v5434 = vpack.c.b16 %v3912, %v3910
        %v5435 = vpack.c.b16 %v3913, %v3911
        %v5436 = vpack.c.b16 %v3916, %v3914
        %v5437 = vpack.c.b16 %v3917, %v3915
        %v5438 = vpack.c.b16 %v3920, %v3918
        %v5439 = vpack.c.b16 %v3921, %v3919
        %v5440 = vpack.c.b16 %v3924, %v3922
        %v5441 = vpack.c.b16 %v3925, %v3923
        %v5442 = vpack.c.b16 %v3928, %v3926
        %v5443 = vpack.c.b16 %v3929, %v3927
        %v5444 = vpack.c.b16 %v3932, %v3930
        %v5445 = vpack.c.b16 %v3933, %v3931
        %v5446 = vpack.c.b16 %v3936, %v3934
        %v5447 = vpack.c.b16 %v3937, %v3935
        %v5448 = vpack.c.b16 %v3940, %v3938
        %v5449 = vpack.c.b16 %v3941, %v3939
        %v5450 = vpack.c.b16 %v3944, %v3942
        %v5451 = vpack.c.b16 %v3945, %v3943
        %v5452 = vpack.c.b16 %v3948, %v3946
        %v5453 = vpack.c.b16 %v3949, %v3947
        %v5454 = vpack.c.b16 %v3952, %v3950
        %v5455 = vpack.c.b16 %v3953, %v3951
        %v5456 = vpack.c.b16 %v3956, %v3954
        %v5457 = vpack.c.b16 %v3957, %v3955
        %v5458 = vpack.c.b16 %v3960, %v3958
        %v5459 = vpack.c.b16 %v3961, %v3959
        %v5460 = vpack.c.b16 %v3964, %v3962
        %v5461 = vpack.c.b16 %v3965, %v3963
        %v5462 = vpack.c.b16 %v3968, %v3966
        %v5463 = vpack.c.b16 %v3969, %v3967
        %v5464 = vpack.c.b16 %v3972, %v3970
        %v5465 = vpack.c.b16 %v3973, %v3971
        %v5466 = vpack.c.b16 %v3976, %v3974
        %v5467 = vpack.c.b16 %v3977, %v3975
        %v5468 = vpack.c.b16 %v3980, %v3978
        %v5469 = vpack.c.b16 %v3981, %v3979
        %v5470 = vpack.c.b16 %v3984, %v3982
        %v5471 = vpack.c.b16 %v3985, %v3983
        %v5472 = vpack.c.b16 %v3988, %v3986
        %v5473 = vpack.c.b16 %v3989, %v3987
        %v5474 = vpack.c.b16 %v3992, %v3990
        %v5475 = vpack.c.b16 %v3993, %v3991
        %v5476 = vpack.c.b16 %v3996, %v3994
        %v5477 = vpack.c.b16 %v3997, %v3995
        %v5478 = vpack.c.b16 %v4000, %v3998
        %v5479 = vpack.c.b16 %v4001, %v3999
        %v5480 = vpack.c.b16 %v4004, %v4002
        %v5481 = vpack.c.b16 %v4005, %v4003
        %v5482 = vpack.c.b16 %v4008, %v4006
        %v5483 = vpack.c.b16 %v4009, %v4007
        %v5484 = vpack.c.b16 %v4012, %v4010
        %v5485 = vpack.c.b16 %v4013, %v4011
        %v5486 = vpack.c.b16 %v4016, %v4014
        %v5487 = vpack.c.b16 %v4017, %v4015
        %v5488 = vpack.c.b16 %v4020, %v4018
        %v5489 = vpack.c.b16 %v4021, %v4019
        %v5490 = vpack.c.b16 %v4024, %v4022
        %v5491 = vpack.c.b16 %v4025, %v4023
        %v5492 = vpack.c.b16 %v4028, %v4026
        %v5493 = vpack.c.b16 %v4029, %v4027
        %v5494 = vpack.c.b16 %v4032, %v4030
        %v5495 = vpack.c.b16 %v4033, %v4031
        %v5496 = vpack.c.b16 %v4036, %v4034
        %v5497 = vpack.c.b16 %v4037, %v4035
        %v5498 = vpack.c.b16 %v4040, %v4038
        %v5499 = vpack.c.b16 %v4041, %v4039
        %v5500 = vpack.c.b16 %v4044, %v4042
        %v5501 = vpack.c.b16 %v4045, %v4043
        %v5502 = vpack.c.b16 %v4048, %v4046
        %v5503 = vpack.c.b16 %v4049, %v4047
        %v5504 = vpack.c.b16 %v4052, %v4050
        %v5505 = vpack.c.b16 %v4053, %v4051
        %v5506 = vpack.c.b16 %v4056, %v4054
        %v5507 = vpack.c.b16 %v4057, %v4055
        %v5508 = vpack.c.b16 %v4060, %v4058
        %v5509 = vpack.c.b16 %v4061, %v4059
        %v5510 = vpack.c.b16 %v4064, %v4062
        %v5511 = vpack.c.b16 %v4065, %v4063
        %v5512 = vpack.c.b16 %v4068, %v4066
        %v5513 = vpack.c.b16 %v4069, %v4067
        %v5514 = vpack.c.b16 %v4072, %v4070
        %v5515 = vpack.c.b16 %v4073, %v4071
        %v5516 = vpack.c.b16 %v4076, %v4074
        %v5517 = vpack.c.b16 %v4077, %v4075
        %v5518 = vpack.c.b16 %v4080, %v4078
        %v5519 = vpack.c.b16 %v4081, %v4079
        %v5520 = vpack.c.b16 %v4084, %v4082
        %v5521 = vpack.c.b16 %v4085, %v4083
        %v5522 = vpack.c.b16 %v4088, %v4086
        %v5523 = vpack.c.b16 %v4089, %v4087
        %v5524 = vpack.c.b16 %v4092, %v4090
        %v5525 = vpack.c.b16 %v4093, %v4091
        %v5526 = vpack.c.b16 %v4096, %v4094
        %v5527 = vpack.c.b16 %v4097, %v4095
        %v5528 = vpack.c.b16 %v4100, %v4098
        %v5529 = vpack.c.b16 %v4101, %v4099
        %v5530 = vpack.c.b16 %v4104, %v4102
        %v5531 = vpack.c.b16 %v4105, %v4103
        %v5532 = vpack.c.b16 %v4108, %v4106
        %v5533 = vpack.c.b16 %v4109, %v4107
        %v5534 = vpack.c.b16 %v4112, %v4110
        %v5535 = vpack.c.b16 %v4113, %v4111
        %v5536 = vpack.c.b16 %v4116, %v4114
        %v5537 = vpack.c.b16 %v4117, %v4115
        %v5538 = vpack.c.b16 %v4120, %v4118
        %v5539 = vpack.c.b16 %v4121, %v4119
        %v5540 = vpack.c.b16 %v4124, %v4122
        %v5541 = vpack.c.b16 %v4125, %v4123
        %v5542 = vpack.c.b16 %v4128, %v4126
        %v5543 = vpack.c.b16 %v4129, %v4127
        %v5544 = vpack.c.b16 %v4132, %v4130
        %v5545 = vpack.c.b16 %v4133, %v4131
        %v5546 = vpack.c.b16 %v4136, %v4134
        %v5547 = vpack.c.b16 %v4137, %v4135
        %v5548 = vpack.c.b16 %v4140, %v4138
        %v5549 = vpack.c.b16 %v4141, %v4139
        %v5550 = vpack.c.b16 %v4144, %v4142
        %v5551 = vpack.c.b16 %v4145, %v4143
        %v5552 = vpack.c.b16 %v4148, %v4146
        %v5553 = vpack.c.b16 %v4149, %v4147
        %v5554 = vpack.c.b16 %v4152, %v4150
        %v5555 = vpack.c.b16 %v4153, %v4151
        %v5556 = vpack.c.b16 %v4156, %v4154
        %v5557 = vpack.c.b16 %v4157, %v4155
        %v5558 = vpack.c.b16 %v4160, %v4158
        %v5559 = vpack.c.b16 %v4161, %v4159
        %v5560 = vpack.c.b16 %v4164, %v4162
        %v5561 = vpack.c.b16 %v4165, %v4163
        %v5562 = vpack.c.b16 %v4168, %v4166
        %v5563 = vpack.c.b16 %v4169, %v4167
        %v5564 = vpack.c.b16 %v4172, %v4170
        %v5565 = vpack.c.b16 %v4173, %v4171
        %v5566 = vpack.c.b16 %v4176, %v4174
        %v5567 = vpack.c.b16 %v4177, %v4175
        %v5568 = vpack.c.b16 %v4180, %v4178
        %v5569 = vpack.c.b16 %v4181, %v4179
        %v5570 = vpack.c.b16 %v4184, %v4182
        %v5571 = vpack.c.b16 %v4185, %v4183
        %v5572 = vpack.c.b16 %v4188, %v4186
        %v5573 = vpack.c.b16 %v4189, %v4187
        %v5574 = vpack.c.b16 %v4192, %v4190
        %v5575 = vpack.c.b16 %v4193, %v4191
        %v5576 = vpack.c.b16 %v4196, %v4194
        %v5577 = vpack.c.b16 %v4197, %v4195
        %v5578 = vpack.c.b16 %v4200, %v4198
        %v5579 = vpack.c.b16 %v4201, %v4199
        %v5580 = vpack.c.b16 %v4204, %v4202
        %v5581 = vpack.c.b16 %v4205, %v4203
        %v5582 = vpack.c.b16 %v4208, %v4206
        %v5583 = vpack.c.b16 %v4209, %v4207
        %v5584 = vpack.c.b16 %v4212, %v4210
        %v5585 = vpack.c.b16 %v4213, %v4211
        %v5586 = vpack.c.b16 %v4216, %v4214
        %v5587 = vpack.c.b16 %v4217, %v4215
        %v5588 = vpack.c.b16 %v4220, %v4218
        %v5589 = vpack.c.b16 %v4221, %v4219
        %v5590 = vpack.c.b16 %v4224, %v4222
        %v5591 = vpack.c.b16 %v4225, %v4223
        %v5592 = vpack.c.b16 %v4228, %v4226
        %v5593 = vpack.c.b16 %v4229, %v4227
        %v5594 = vpack.c.b16 %v4232, %v4230
        %v5595 = vpack.c.b16 %v4233, %v4231
        %v5596 = vpack.c.b16 %v4236, %v4234
        %v5597 = vpack.c.b16 %v4237, %v4235
        %v5598 = vpack.c.b16 %v4240, %v4238
        %v5599 = vpack.c.b16 %v4241, %v4239
        %v5600 = vpack.c.b16 %v4244, %v4242
        %v5601 = vpack.c.b16 %v4245, %v4243
        %v5602 = vpack.c.b16 %v4248, %v4246
        %v5603 = vpack.c.b16 %v4249, %v4247
        %v5604 = vpack.c.b16 %v4252, %v4250
        %v5605 = vpack.c.b16 %v4253, %v4251
        %v5606 = vpack.c.b16 %v4256, %v4254
        %v5607 = vpack.c.b16 %v4257, %v4255
        %v5608 = vpack.c.b16 %v4260, %v4258
        %v5609 = vpack.c.b16 %v4261, %v4259
        %v5610 = vpack.c.b16 %v4264, %v4262
        %v5611 = vpack.c.b16 %v4265, %v4263
        %v5612 = vpack.c.b16 %v4268, %v4266
        %v5613 = vpack.c.b16 %v4269, %v4267
        %v5614 = vpack.c.b16 %v4272, %v4270
        %v5615 = vpack.c.b16 %v4273, %v4271
        %v5616 = vpack.c.b16 %v4276, %v4274
        %v5617 = vpack.c.b16 %v4277, %v4275
        %v5618 = vpack.c.b16 %v4280, %v4278
        %v5619 = vpack.c.b16 %v4281, %v4279
        %v5620 = vpack.c.b16 %v4284, %v4282
        %v5621 = vpack.c.b16 %v4285, %v4283
        %v5622 = vpack.c.b16 %v4288, %v4286
        %v5623 = vpack.c.b16 %v4289, %v4287
        %v5624 = vpack.c.b16 %v4292, %v4290
        %v5625 = vpack.c.b16 %v4293, %v4291
        %v5626 = vpack.c.b16 %v4296, %v4294
        %v5627 = vpack.c.b16 %v4297, %v4295
        %v5628 = vpack.c.b16 %v4300, %v4298
        %v5629 = vpack.c.b16 %v4301, %v4299
        %v5630 = vpack.c.b16 %v4304, %v4302
        %v5631 = vpack.c.b16 %v4305, %v4303
        %v5632 = vpack.c.b16 %v4308, %v4306
        %v5633 = vpack.c.b16 %v4309, %v4307
        %v5634 = vpack.c.b16 %v4312, %v4310
        %v5635 = vpack.c.b16 %v4313, %v4311
        %v5636 = vpack.c.b16 %v4316, %v4314
        %v5637 = vpack.c.b16 %v4317, %v4315
        %v5638 = vpack.c.b16 %v4320, %v4318
        %v5639 = vpack.c.b16 %v4321, %v4319
        %v5640 = vpack.c.b16 %v4324, %v4322
        %v5641 = vpack.c.b16 %v4325, %v4323
        %v5642 = vpack.c.b16 %v4328, %v4326
        %v5643 = vpack.c.b16 %v4329, %v4327
        %v5644 = vpack.c.b16 %v4332, %v4330
        %v5645 = vpack.c.b16 %v4333, %v4331
        %v5646 = vpack.c.b16 %v4336, %v4334
        %v5647 = vpack.c.b16 %v4337, %v4335
        %v5648 = vpack.c.b16 %v4340, %v4338
        %v5649 = vpack.c.b16 %v4341, %v4339
        %v5650 = vpack.c.b16 %v4344, %v4342
        %v5651 = vpack.c.b16 %v4345, %v4343
        %v5652 = vpack.c.b16 %v4348, %v4346
        %v5653 = vpack.c.b16 %v4349, %v4347
        %v5654 = vpack.c.b16 %v4352, %v4350
        %v5655 = vpack.c.b16 %v4353, %v4351
        %v5656 = vpack.c.b16 %v4356, %v4354
        %v5657 = vpack.c.b16 %v4357, %v4355
        %v5658 = vpack.c.b16 %v4360, %v4358
        %v5659 = vpack.c.b16 %v4361, %v4359
        %v5660 = vpack.c.b16 %v4364, %v4362
        %v5661 = vpack.c.b16 %v4365, %v4363
        %v5662 = vpack.c.b16 %v4368, %v4366
        %v5663 = vpack.c.b16 %v4369, %v4367
        %v5664 = vpack.c.b16 %v4372, %v4370
        %v5665 = vpack.c.b16 %v4373, %v4371
        %v5666 = vpack.c.b16 %v4376, %v4374
        %v5667 = vpack.c.b16 %v4377, %v4375
        %v5668 = vpack.c.b16 %v4380, %v4378
        %v5669 = vpack.c.b16 %v4381, %v4379
        %v5670 = vpack.c.b16 %v4384, %v4382
        %v5671 = vpack.c.b16 %v4385, %v4383
        %v5672 = vpack.c.b16 %v4388, %v4386
        %v5673 = vpack.c.b16 %v4389, %v4387
        %v5674 = vpack.c.b16 %v4392, %v4390
        %v5675 = vpack.c.b16 %v4393, %v4391
        %v5676 = vpack.c.b16 %v4396, %v4394
        %v5677 = vpack.c.b16 %v4397, %v4395
        %v5678 = vpack.c.b16 %v4400, %v4398
        %v5679 = vpack.c.b16 %v4401, %v4399
        %v5680 = vpack.c.b16 %v4404, %v4402
        %v5681 = vpack.c.b16 %v4405, %v4403
        %v5682 = vpack.c.b16 %v4408, %v4406
        %v5683 = vpack.c.b16 %v4409, %v4407
        %v5684 = vpack.c.b16 %v4412, %v4410
        %v5685 = vpack.c.b16 %v4413, %v4411
        %v5686 = vpack.c.b16 %v4416, %v4414
        %v5687 = vpack.c.b16 %v4417, %v4415
        %v5688 = vpack.c.b16 %v4420, %v4418
        %v5689 = vpack.c.b16 %v4421, %v4419
        %v5690 = vpack.c.b16 %v4424, %v4422
        %v5691 = vpack.c.b16 %v4425, %v4423
        %v5692 = vpack.c.b16 %v4428, %v4426
        %v5693 = vpack.c.b16 %v4429, %v4427
        %v5694 = vpack.c.b16 %v4432, %v4430
        %v5695 = vpack.c.b16 %v4433, %v4431
        %v5696 = vpack.c.b16 %v4436, %v4434
        %v5697 = vpack.c.b16 %v4437, %v4435
        %v5698 = vpack.c.b16 %v4440, %v4438
        %v5699 = vpack.c.b16 %v4441, %v4439
        %v5700 = vpack.c.b16 %v4444, %v4442
        %v5701 = vpack.c.b16 %v4445, %v4443
        %v5702 = vpack.c.b16 %v4448, %v4446
        %v5703 = vpack.c.b16 %v4449, %v4447
        %v5704 = vpack.c.b16 %v4452, %v4450
        %v5705 = vpack.c.b16 %v4453, %v4451
        %v5706 = vpack.c.b16 %v4456, %v4454
        %v5707 = vpack.c.b16 %v4457, %v4455
        %v5708 = vpack.c.b16 %v4460, %v4458
        %v5709 = vpack.c.b16 %v4461, %v4459
        %v5710 = vpack.c.b16 %v4464, %v4462
        %v5711 = vpack.c.b16 %v4465, %v4463
        %v5712 = vpack.c.b16 %v4468, %v4466
        %v5713 = vpack.c.b16 %v4469, %v4467
        %v5714 = vpack.c.b16 %v4472, %v4470
        %v5715 = vpack.c.b16 %v4473, %v4471
        %v5716 = vpack.c.b16 %v4476, %v4474
        %v5717 = vpack.c.b16 %v4477, %v4475
        %v5718 = vpack.c.b16 %v4480, %v4478
        %v5719 = vpack.c.b16 %v4481, %v4479
        %v5720 = vpack.c.b16 %v4484, %v4482
        %v5721 = vpack.c.b16 %v4485, %v4483
        %v5722 = vpack.c.b16 %v4488, %v4486
        %v5723 = vpack.c.b16 %v4489, %v4487
        %v5724 = vpack.c.b16 %v4492, %v4490
        %v5725 = vpack.c.b16 %v4493, %v4491
        %v5726 = vpack.c.b16 %v4496, %v4494
        %v5727 = vpack.c.b16 %v4497, %v4495
        %v5728 = vpack.c.b16 %v4500, %v4498
        %v5729 = vpack.c.b16 %v4501, %v4499
        %v5730 = vpack.c.b16 %v4504, %v4502
        %v5731 = vpack.c.b16 %v4505, %v4503
        %v5732 = vpack.c.b16 %v4508, %v4506
        %v5733 = vpack.c.b16 %v4509, %v4507
        %v5734 = vpack.c.b16 %v4512, %v4510
        %v5735 = vpack.c.b16 %v4513, %v4511
        %v5736 = vpack.c.b16 %v4516, %v4514
        %v5737 = vpack.c.b16 %v4517, %v4515
        %v5738 = vpack.c.b16 %v4520, %v4518
        %v5739 = vpack.c.b16 %v4521, %v4519
        %v5740 = vpack.c.b16 %v4524, %v4522
        %v5741 = vpack.c.b16 %v4525, %v4523
        %v5742 = vpack.c.b16 %v4528, %v4526
        %v5743 = vpack.c.b16 %v4529, %v4527
        %v5744 = vpack.c.b16 %v4532, %v4530
        %v5745 = vpack.c.b16 %v4533, %v4531
        %v5746 = vpack.c.b16 %v4536, %v4534
        %v5747 = vpack.c.b16 %v4537, %v4535
        %v5748 = vpack.c.b16 %v4540, %v4538
        %v5749 = vpack.c.b16 %v4541, %v4539
        %v5750 = vpack.c.b16 %v4544, %v4542
        %v5751 = vpack.c.b16 %v4545, %v4543
        %v5752 = vpack.c.b16 %v4548, %v4546
        %v5753 = vpack.c.b16 %v4549, %v4547
        %v5754 = vpack.c.b16 %v4552, %v4550
        %v5755 = vpack.c.b16 %v4553, %v4551
        %v5756 = vpack.c.b16 %v4556, %v4554
        %v5757 = vpack.c.b16 %v4557, %v4555
        %v5758 = vpack.c.b16 %v4560, %v4558
        %v5759 = vpack.c.b16 %v4561, %v4559
        %v5760 = vpack.c.b16 %v4564, %v4562
        %v5761 = vpack.c.b16 %v4565, %v4563
        %v5762 = vpack.c.b16 %v4568, %v4566
        %v5763 = vpack.c.b16 %v4569, %v4567
        %v5764 = vpack.c.b16 %v4572, %v4570
        %v5765 = vpack.c.b16 %v4573, %v4571
        %v5766 = vpack.c.b16 %v4576, %v4574
        %v5767 = vpack.c.b16 %v4577, %v4575
        %v5768 = vpack.c.b16 %v4580, %v4578
        %v5769 = vpack.c.b16 %v4581, %v4579
        %v5770 = vpack.c.b16 %v4584, %v4582
        %v5771 = vpack.c.b16 %v4585, %v4583
        %v5772 = vpack.c.b16 %v4588, %v4586
        %v5773 = vpack.c.b16 %v4589, %v4587
        %v5774 = vpack.c.b16 %v4592, %v4590
        %v5775 = vpack.c.b16 %v4593, %v4591
        %v5776 = vpack.c.b16 %v4596, %v4594
        %v5777 = vpack.c.b16 %v4597, %v4595
        %v5778 = vpack.c.b16 %v4600, %v4598
        %v5779 = vpack.c.b16 %v4601, %v4599
        %v5780 = vpack.c.b16 %v4604, %v4602
        %v5781 = vpack.c.b16 %v4605, %v4603
        %v5782 = vpack.c.b16 %v4608, %v4606
        %v5783 = vpack.c.b16 %v4609, %v4607
        %v5784 = vpack.c.b16 %v4612, %v4610
        %v5785 = vpack.c.b16 %v4613, %v4611
        %v5786 = vpack.c.b16 %v4616, %v4614
        %v5787 = vpack.c.b16 %v4617, %v4615
        %v5788 = vpack.c.b16 %v4620, %v4618
        %v5789 = vpack.c.b16 %v4621, %v4619
        %v5790 = vpack.c.b16 %v4624, %v4622
        %v5791 = vpack.c.b16 %v4625, %v4623
        %v5792 = vpack.c.b16 %v4628, %v4626
        %v5793 = vpack.c.b16 %v4629, %v4627
        %v5794 = vpack.c.b16 %v4632, %v4630
        %v5795 = vpack.c.b16 %v4633, %v4631
        %v5796 = vpack.c.b16 %v4636, %v4634
        %v5797 = vpack.c.b16 %v4637, %v4635
        %v5798 = vpack.c.b16 %v4640, %v4638
        %v5799 = vpack.c.b16 %v4641, %v4639
        %v5800 = vpack.c.b16 %v4644, %v4642
        %v5801 = vpack.c.b16 %v4645, %v4643
        %v5802 = vpack.c.b16 %v4648, %v4646
        %v5803 = vpack.c.b16 %v4649, %v4647
        %v5804 = vpack.c.b16 %v4652, %v4650
        %v5805 = vpack.c.b16 %v4653, %v4651
        %v5806 = vpack.c.b16 %v4656, %v4654
        %v5807 = vpack.c.b16 %v4657, %v4655
        %v5808 = vpack.c.b16 %v4660, %v4658
        %v5809 = vpack.c.b16 %v4661, %v4659
        %v5810 = vpack.c.b16 %v4664, %v4662
        %v5811 = vpack.c.b16 %v4665, %v4663
        %v5812 = vpack.c.b16 %v4668, %v4666
        %v5813 = vpack.c.b16 %v4669, %v4667
        %v5814 = vpack.c.b16 %v4672, %v4670
        %v5815 = vpack.c.b16 %v4673, %v4671
        %v5816 = vpack.c.b16 %v4676, %v4674
        %v5817 = vpack.c.b16 %v4677, %v4675
        %v5818 = vpack.c.b16 %v4680, %v4678
        %v5819 = vpack.c.b16 %v4681, %v4679
        %v5820 = vpack.c.b16 %v4684, %v4682
        %v5821 = vpack.c.b16 %v4685, %v4683
        %v5822 = vpack.c.b16 %v4688, %v4686
        %v5823 = vpack.c.b16 %v4689, %v4687
        %v5824 = vpack.c.b16 %v4692, %v4690
        %v5825 = vpack.c.b16 %v4693, %v4691
        %v5826 = vpack.c.b16 %v4696, %v4694
        %v5827 = vpack.c.b16 %v4697, %v4695
        %v5828 = vpack.c.b16 %v4700, %v4698
        %v5829 = vpack.c.b16 %v4701, %v4699
        %v5830 = vpack.c.b16 %v4704, %v4702
        %v5831 = vpack.c.b16 %v4705, %v4703
        %v5832 = vpack.c.b16 %v4708, %v4706
        %v5833 = vpack.c.b16 %v4709, %v4707
        %v5834 = vpack.c.b16 %v4712, %v4710
        %v5835 = vpack.c.b16 %v4713, %v4711
        %v5836 = vpack.c.b16 %v4716, %v4714
        %v5837 = vpack.c.b16 %v4717, %v4715
        %v5838 = vpack.c.b16 %v4720, %v4718
        %v5839 = vpack.c.b16 %v4721, %v4719
        %v5840 = vpack.c.b16 %v4724, %v4722
        %v5841 = vpack.c.b16 %v4725, %v4723
        %v5842 = vpack.c.b16 %v4728, %v4726
        %v5843 = vpack.c.b16 %v4729, %v4727
        %v5844 = vpack.c.b16 %v4732, %v4730
        %v5845 = vpack.c.b16 %v4733, %v4731
        %v5846 = vpack.c.b16 %v4736, %v4734
        %v5847 = vpack.c.b16 %v4737, %v4735
        %v5848 = vpack.c.b16 %v4740, %v4738
        %v5849 = vpack.c.b16 %v4741, %v4739
        %v5850 = vpack.c.b16 %v4744, %v4742
        %v5851 = vpack.c.b16 %v4745, %v4743
        %v5852 = vpack.c.b16 %v4748, %v4746
        %v5853 = vpack.c.b16 %v4749, %v4747
        %v5854 = vpack.c.b16 %v4752, %v4750
        %v5855 = vpack.c.b16 %v4753, %v4751
        %v5856 = vpack.c.b16 %v4756, %v4754
        %v5857 = vpack.c.b16 %v4757, %v4755
        %v5858 = vpack.c.b16 %v4760, %v4758
        %v5859 = vpack.c.b16 %v4761, %v4759
        %v5860 = vpack.c.b16 %v4764, %v4762
        %v5861 = vpack.c.b16 %v4765, %v4763
        %v5862 = vpack.c.b16 %v4768, %v4766
        %v5863 = vpack.c.b16 %v4769, %v4767
        %v5864 = vpack.c.b16 %v4772, %v4770
        %v5865 = vpack.c.b16 %v4773, %v4771
        %v5866 = vpack.c.b16 %v4776, %v4774
        %v5867 = vpack.c.b16 %v4777, %v4775
        %v5868 = vpack.c.b16 %v4780, %v4778
        %v5869 = vpack.c.b16 %v4781, %v4779
        %v5870 = vpack.c.b16 %v4784, %v4782
        %v5871 = vpack.c.b16 %v4785, %v4783
        %v5872 = vpack.c.b16 %v4788, %v4786
        %v5873 = vpack.c.b16 %v4789, %v4787
        %v5874 = vpack.c.b16 %v4792, %v4790
        %v5875 = vpack.c.b16 %v4793, %v4791
        %v5876 = vpack.c.b16 %v4796, %v4794
        %v5877 = vpack.c.b16 %v4797, %v4795
        %v5878 = vpack.c.b16 %v4800, %v4798
        %v5879 = vpack.c.b16 %v4801, %v4799
        %v5880 = vpack.c.b16 %v4804, %v4802
        %v5881 = vpack.c.b16 %v4805, %v4803
        %v5882 = vpack.c.b16 %v4808, %v4806
        %v5883 = vpack.c.b16 %v4809, %v4807
        %v5884 = vpack.c.b16 %v4812, %v4810
        %v5885 = vpack.c.b16 %v4813, %v4811
        %v5886 = vpack.c.b16 %v4816, %v4814
        %v5887 = vpack.c.b16 %v4817, %v4815
        %v5888 = vpack.c.b16 %v4820, %v4818
        %v5889 = vpack.c.b16 %v4821, %v4819
        %v5890 = vpack.c.b16 %v4824, %v4822
        %v5891 = vpack.c.b16 %v4825, %v4823
        %v5892 = vpack.c.b16 %v4828, %v4826
        %v5893 = vpack.c.b16 %v4829, %v4827
        %v5894 = vpack.c.b16 %v4832, %v4830
        %v5895 = vpack.c.b16 %v4833, %v4831
        %v5896 = vpack.c.b16 %v4836, %v4834
        %v5897 = vpack.c.b16 %v4837, %v4835
        %v5898 = vpack.c.b16 %v4840, %v4838
        %v5899 = vpack.c.b16 %v4841, %v4839
        %v5900 = vpack.c.b16 %v4844, %v4842
        %v5901 = vpack.c.b16 %v4845, %v4843
        %v5902 = vpack.c.b16 %v4848, %v4846
        %v5903 = vpack.c.b16 %v4849, %v4847
        %v5904 = vpack.c.b16 %v4852, %v4850
        %v5905 = vpack.c.b16 %v4853, %v4851
        %v5906 = vpack.c.b16 %v4856, %v4854
        %v5907 = vpack.c.b16 %v4857, %v4855
        %v5908 = vpack.c.b16 %v4860, %v4858
        %v5909 = vpack.c.b16 %v4861, %v4859
        %v5910 = vpack.c.b16 %v4864, %v4862
        %v5911 = vpack.c.b16 %v4865, %v4863
        %v5912 = vpack.c.b16 %v4868, %v4866
        %v5913 = vpack.c.b16 %v4869, %v4867
        %v5914 = vpack.c.b16 %v4872, %v4870
        %v5915 = vpack.c.b16 %v4873, %v4871
        %v5916 = vpack.c.b16 %v4876, %v4874
        %v5917 = vpack.c.b16 %v4877, %v4875
        %v5918 = vpack.c.b16 %v4880, %v4878
        %v5919 = vpack.c.b16 %v4881, %v4879
        %v5920 = vpack.c.b16 %v4884, %v4882
        %v5921 = vpack.c.b16 %v4885, %v4883
        %v5922 = vpack.c.b16 %v4888, %v4886
        %v5923 = vpack.c.b16 %v4889, %v4887
        %v5924 = vpack.c.b16 %v4892, %v4890
        %v5925 = vpack.c.b16 %v4893, %v4891
        %v5926 = vpack.c.b16 %v4896, %v4894
        %v5927 = vpack.c.b16 %v4897, %v4895
        %v5928 = vpack.c.b16 %v4900, %v4898
        %v5929 = vpack.c.b16 %v4901, %v4899
        %v5930 = vpack.c.b16 %v4904, %v4902
        %v5931 = vpack.c.b16 %v4905, %v4903
        %v5932 = vpack.c.b16 %v4908, %v4906
        %v5933 = vpack.c.b16 %v4909, %v4907
        %6958 = vmatprep.subr.bf16.mxu0 %v4911
        %6959 = vmatpush1.bf16.msra.mxu0 %v4910
        %6960 = vmatprep.subr.bf16.mxu0 %v4913
        %6961 = vmatpush1.bf16.msra.mxu0 %v4912
        %6962 = vmatprep.subr.bf16.mxu0 %v4915
        %6963 = vmatpush1.bf16.msra.mxu0 %v4914
        %6964 = vmatprep.subr.bf16.mxu0 %v4917
        %6965 = vmatpush1.bf16.msra.mxu0 %v4916
        %6966 = vmatprep.subr.bf16.mxu0 %v4919
        %6967 = vmatpush1.bf16.msra.mxu0 %v4918
        %6968 = vmatprep.subr.bf16.mxu0 %v4921
        %6969 = vmatpush1.bf16.msra.mxu0 %v4920
        %6970 = vmatprep.subr.bf16.mxu0 %v4923
        %6971 = vmatpush1.bf16.msra.mxu0 %v4922
        %6972 = vmatprep.subr.bf16.mxu0 %v4925
        %6973 = vmatpush1.bf16.msra.mxu0 %v4924
        %6974 = vmatprep.subr.bf16.mxu0 %v4927
        %6975 = vmatpush1.bf16.msra.mxu0 %v4926
        %6976 = vmatprep.subr.bf16.mxu0 %v4929
        %6977 = vmatpush1.bf16.msra.mxu0 %v4928
        %6978 = vmatprep.subr.bf16.mxu0 %v4931
        %6979 = vmatpush1.bf16.msra.mxu0 %v4930
        %6980 = vmatprep.subr.bf16.mxu0 %v4933
        %6981 = vmatpush1.bf16.msra.mxu0 %v4932
        %6982 = vmatprep.subr.bf16.mxu0 %v4935
        %6983 = vmatpush1.bf16.msra.mxu0 %v4934
        %6984 = vmatprep.subr.bf16.mxu0 %v4937
        %6985 = vmatpush1.bf16.msra.mxu0 %v4936
        %6986 = vmatprep.subr.bf16.mxu0 %v4939
        %6987 = vmatpush1.bf16.msra.mxu0 %v4938
        %6988 = vmatprep.subr.bf16.mxu0 %v4941
        %6989 = vmatpush1.bf16.msra.mxu0 %v4940
        %6990 = vmatprep.mubr.bf16.mxu0 %v750
        %6991 = vmatmul.mubr.bf16.gmra.mrb[0].mxu0 %v749
        %v6992 = vpop.f32.mrb[0].mxu0
        %v6993 = vadd.f32 0.0, %v6992
        %v6994 = vpop.f32.mrb[0].mxu0
        %v6995 = vadd.f32 0.0, %v6994
        %v6996 = vpop.f32.mrb[0].mxu0
        %v6997 = vpop.f32.mrb[0].mxu0
        %6998 = vdwg.mxu0
        %6999 = vmatprep.subr.bf16.mxu0 %v4943
        %7000 = vmatpush1.bf16.msra.mxu0 %v4942
        %7001 = vmatprep.subr.bf16.mxu0 %v4945
        %7002 = vmatpush1.bf16.msra.mxu0 %v4944
        %7003 = vmatprep.subr.bf16.mxu0 %v4947
        %7004 = vmatpush1.bf16.msra.mxu0 %v4946
        %7005 = vmatprep.subr.bf16.mxu0 %v4949
        %7006 = vmatpush1.bf16.msra.mxu0 %v4948
        %7007 = vmatprep.subr.bf16.mxu0 %v4951
        %7008 = vmatpush1.bf16.msra.mxu0 %v4950
        %7009 = vmatprep.subr.bf16.mxu0 %v4953
        %7010 = vmatpush1.bf16.msra.mxu0 %v4952
        %7011 = vmatprep.subr.bf16.mxu0 %v4955
        %7012 = vmatpush1.bf16.msra.mxu0 %v4954
        %7013 = vmatprep.subr.bf16.mxu0 %v4957
        %7014 = vmatpush1.bf16.msra.mxu0 %v4956
        %7015 = vmatprep.subr.bf16.mxu0 %v4959
        %7016 = vmatpush1.bf16.msra.mxu0 %v4958
        %7017 = vmatprep.subr.bf16.mxu0 %v4961
        %7018 = vmatpush1.bf16.msra.mxu0 %v4960
        %7019 = vmatprep.subr.bf16.mxu0 %v4963
        %7020 = vmatpush1.bf16.msra.mxu0 %v4962
        %7021 = vmatprep.subr.bf16.mxu0 %v4965
        %7022 = vmatpush1.bf16.msra.mxu0 %v4964
        %7023 = vmatprep.subr.bf16.mxu0 %v4967
        %7024 = vmatpush1.bf16.msra.mxu0 %v4966
        %7025 = vmatprep.subr.bf16.mxu0 %v4969
        %7026 = vmatpush1.bf16.msra.mxu0 %v4968
        %7027 = vmatprep.subr.bf16.mxu0 %v4971
        %7028 = vmatpush1.bf16.msra.mxu0 %v4970
        %7029 = vmatprep.subr.bf16.mxu0 %v4973
        %7030 = vmatpush1.bf16.msra.mxu0 %v4972
        %7031 = vmatprep.mubr.bf16.mxu0 %v752
        %7032 = vmatmul.mubr.bf16.gmra.mrb[0].mxu0 %v751
        %v7033 = vpop.f32.mrb[0].mxu0
        %v7034 = vadd.f32 %v6993, %v7033
        %v7035 = vpop.f32.mrb[0].mxu0
        %v7036 = vadd.f32 %v6995, %v7035
        %v7037 = vpop.f32.mrb[0].mxu0
        %v7038 = vpop.f32.mrb[0].mxu0
        %7039 = vdwg.mxu0
        %7040 = vmatprep.subr.bf16.mxu0 %v4975
        %7041 = vmatpush1.bf16.msra.mxu0 %v4974
        %7042 = vmatprep.subr.bf16.mxu0 %v4977
        %7043 = vmatpush1.bf16.msra.mxu0 %v4976
        %7044 = vmatprep.subr.bf16.mxu0 %v4979
        %7045 = vmatpush1.bf16.msra.mxu0 %v4978
        %7046 = vmatprep.subr.bf16.mxu0 %v4981
        %7047 = vmatpush1.bf16.msra.mxu0 %v4980
        %7048 = vmatprep.subr.bf16.mxu0 %v4983
        %7049 = vmatpush1.bf16.msra.mxu0 %v4982
        %7050 = vmatprep.subr.bf16.mxu0 %v4985
        %7051 = vmatpush1.bf16.msra.mxu0 %v4984
        %7052 = vmatprep.subr.bf16.mxu0 %v4987
        %7053 = vmatpush1.bf16.msra.mxu0 %v4986
        %7054 = vmatprep.subr.bf16.mxu0 %v4989
        %7055 = vmatpush1.bf16.msra.mxu0 %v4988
        %7056 = vmatprep.subr.bf16.mxu0 %v4991
        %7057 = vmatpush1.bf16.msra.mxu0 %v4990
        %7058 = vmatprep.subr.bf16.mxu0 %v4993
        %7059 = vmatpush1.bf16.msra.mxu0 %v4992
        %7060 = vmatprep.subr.bf16.mxu0 %v4995
        %7061 = vmatpush1.bf16.msra.mxu0 %v4994
        %7062 = vmatprep.subr.bf16.mxu0 %v4997
        %7063 = vmatpush1.bf16.msra.mxu0 %v4996
        %7064 = vmatprep.subr.bf16.mxu0 %v4999
        %7065 = vmatpush1.bf16.msra.mxu0 %v4998
        %7066 = vmatprep.subr.bf16.mxu0 %v5001
        %7067 = vmatpush1.bf16.msra.mxu0 %v5000
        %7068 = vmatprep.subr.bf16.mxu0 %v5003
        %7069 = vmatpush1.bf16.msra.mxu0 %v5002
        %7070 = vmatprep.subr.bf16.mxu0 %v5005
        %7071 = vmatpush1.bf16.msra.mxu0 %v5004
        %7072 = vmatprep.mubr.bf16.mxu0 %v754
        %7073 = vmatmul.mubr.bf16.gmra.mrb[0].mxu0 %v753
        %v7074 = vpop.f32.mrb[0].mxu0
        %v7075 = vadd.f32 %v7034, %v7074
        %v7076 = vpop.f32.mrb[0].mxu0
        %v7077 = vadd.f32 %v7036, %v7076
        %v7078 = vpop.f32.mrb[0].mxu0
        %v7079 = vpop.f32.mrb[0].mxu0
        %7080 = vdwg.mxu0
        %7081 = vmatprep.subr.bf16.mxu0 %v5007
        %7082 = vmatpush1.bf16.msra.mxu0 %v5006
        %7083 = vmatprep.subr.bf16.mxu0 %v5009
        %7084 = vmatpush1.bf16.msra.mxu0 %v5008
        %7085 = vmatprep.subr.bf16.mxu0 %v5011
        %7086 = vmatpush1.bf16.msra.mxu0 %v5010
        %7087 = vmatprep.subr.bf16.mxu0 %v5013
        %7088 = vmatpush1.bf16.msra.mxu0 %v5012
        %7089 = vmatprep.subr.bf16.mxu0 %v5015
        %7090 = vmatpush1.bf16.msra.mxu0 %v5014
        %7091 = vmatprep.subr.bf16.mxu0 %v5017
        %7092 = vmatpush1.bf16.msra.mxu0 %v5016
        %7093 = vmatprep.subr.bf16.mxu0 %v5019
        %7094 = vmatpush1.bf16.msra.mxu0 %v5018
        %7095 = vmatprep.subr.bf16.mxu0 %v5021
        %7096 = vmatpush1.bf16.msra.mxu0 %v5020
        %7097 = vmatprep.subr.bf16.mxu0 %v5023
        %7098 = vmatpush1.bf16.msra.mxu0 %v5022
        %7099 = vmatprep.subr.bf16.mxu0 %v5025
        %7100 = vmatpush1.bf16.msra.mxu0 %v5024
        %7101 = vmatprep.subr.bf16.mxu0 %v5027
        %7102 = vmatpush1.bf16.msra.mxu0 %v5026
        %7103 = vmatprep.subr.bf16.mxu0 %v5029
        %7104 = vmatpush1.bf16.msra.mxu0 %v5028
        %7105 = vmatprep.subr.bf16.mxu0 %v5031
        %7106 = vmatpush1.bf16.msra.mxu0 %v5030
        %7107 = vmatprep.subr.bf16.mxu0 %v5033
        %7108 = vmatpush1.bf16.msra.mxu0 %v5032
        %7109 = vmatprep.subr.bf16.mxu0 %v5035
        %7110 = vmatpush1.bf16.msra.mxu0 %v5034
        %7111 = vmatprep.subr.bf16.mxu0 %v5037
        %7112 = vmatpush1.bf16.msra.mxu0 %v5036
        %7113 = vmatprep.mubr.bf16.mxu0 %v756
        %7114 = vmatmul.mubr.bf16.gmra.mrb[0].mxu0 %v755
        %v7115 = vpop.f32.mrb[0].mxu0
        %v7116 = vadd.f32 %v7075, %v7115
        %v7117 = vpop.f32.mrb[0].mxu0
        %v7118 = vadd.f32 %v7077, %v7117
        %v7119 = vpop.f32.mrb[0].mxu0
        %v7120 = vpop.f32.mrb[0].mxu0
        %7121 = vdwg.mxu0
        %7122 = vmatprep.subr.bf16.mxu0 %v5039
        %7123 = vmatpush1.bf16.msra.mxu0 %v5038
        %7124 = vmatprep.subr.bf16.mxu0 %v5041
        %7125 = vmatpush1.bf16.msra.mxu0 %v5040
        %7126 = vmatprep.subr.bf16.mxu0 %v5043
        %7127 = vmatpush1.bf16.msra.mxu0 %v5042
        %7128 = vmatprep.subr.bf16.mxu0 %v5045
        %7129 = vmatpush1.bf16.msra.mxu0 %v5044
        %7130 = vmatprep.subr.bf16.mxu0 %v5047
        %7131 = vmatpush1.bf16.msra.mxu0 %v5046
        %7132 = vmatprep.subr.bf16.mxu0 %v5049
        %7133 = vmatpush1.bf16.msra.mxu0 %v5048
        %7134 = vmatprep.subr.bf16.mxu0 %v5051
        %7135 = vmatpush1.bf16.msra.mxu0 %v5050
        %7136 = vmatprep.subr.bf16.mxu0 %v5053
        %7137 = vmatpush1.bf16.msra.mxu0 %v5052
        %7138 = vmatprep.subr.bf16.mxu0 %v5055
        %7139 = vmatpush1.bf16.msra.mxu0 %v5054
        %7140 = vmatprep.subr.bf16.mxu0 %v5057
        %7141 = vmatpush1.bf16.msra.mxu0 %v5056
        %7142 = vmatprep.subr.bf16.mxu0 %v5059
        %7143 = vmatpush1.bf16.msra.mxu0 %v5058
        %7144 = vmatprep.subr.bf16.mxu0 %v5061
        %7145 = vmatpush1.bf16.msra.mxu0 %v5060
        %7146 = vmatprep.subr.bf16.mxu0 %v5063
        %7147 = vmatpush1.bf16.msra.mxu0 %v5062
        %7148 = vmatprep.subr.bf16.mxu0 %v5065
        %7149 = vmatpush1.bf16.msra.mxu0 %v5064
        %7150 = vmatprep.subr.bf16.mxu0 %v5067
        %7151 = vmatpush1.bf16.msra.mxu0 %v5066
        %7152 = vmatprep.subr.bf16.mxu0 %v5069
        %7153 = vmatpush1.bf16.msra.mxu0 %v5068
        %7154 = vmatprep.mubr.bf16.mxu0 %v758
        %7155 = vmatmul.mubr.bf16.gmra.mrb[0].mxu0 %v757
        %v7156 = vpop.f32.mrb[0].mxu0
        %v7157 = vadd.f32 %v7116, %v7156
        %v7158 = vpop.f32.mrb[0].mxu0
        %v7159 = vadd.f32 %v7118, %v7158
        %v7160 = vpop.f32.mrb[0].mxu0
        %v7161 = vpop.f32.mrb[0].mxu0
        %7162 = vdwg.mxu0
        %7163 = vmatprep.subr.bf16.mxu0 %v5071
        %7164 = vmatpush1.bf16.msra.mxu0 %v5070
        %7165 = vmatprep.subr.bf16.mxu0 %v5073
        %7166 = vmatpush1.bf16.msra.mxu0 %v5072
        %7167 = vmatprep.subr.bf16.mxu0 %v5075
        %7168 = vmatpush1.bf16.msra.mxu0 %v5074
        %7169 = vmatprep.subr.bf16.mxu0 %v5077
        %7170 = vmatpush1.bf16.msra.mxu0 %v5076
        %7171 = vmatprep.subr.bf16.mxu0 %v5079
        %7172 = vmatpush1.bf16.msra.mxu0 %v5078
        %7173 = vmatprep.subr.bf16.mxu0 %v5081
        %7174 = vmatpush1.bf16.msra.mxu0 %v5080
        %7175 = vmatprep.subr.bf16.mxu0 %v5083
        %7176 = vmatpush1.bf16.msra.mxu0 %v5082
        %7177 = vmatprep.subr.bf16.mxu0 %v5085
        %7178 = vmatpush1.bf16.msra.mxu0 %v5084
        %7179 = vmatprep.subr.bf16.mxu0 %v5087
        %7180 = vmatpush1.bf16.msra.mxu0 %v5086
        %7181 = vmatprep.subr.bf16.mxu0 %v5089
        %7182 = vmatpush1.bf16.msra.mxu0 %v5088
        %7183 = vmatprep.subr.bf16.mxu0 %v5091
        %7184 = vmatpush1.bf16.msra.mxu0 %v5090
        %7185 = vmatprep.subr.bf16.mxu0 %v5093
        %7186 = vmatpush1.bf16.msra.mxu0 %v5092
        %7187 = vmatprep.subr.bf16.mxu0 %v5095
        %7188 = vmatpush1.bf16.msra.mxu0 %v5094
        %7189 = vmatprep.subr.bf16.mxu0 %v5097
        %7190 = vmatpush1.bf16.msra.mxu0 %v5096
        %7191 = vmatprep.subr.bf16.mxu0 %v5099
        %7192 = vmatpush1.bf16.msra.mxu0 %v5098
        %7193 = vmatprep.subr.bf16.mxu0 %v5101
        %7194 = vmatpush1.bf16.msra.mxu0 %v5100
        %7195 = vmatprep.mubr.bf16.mxu0 %v760
        %7196 = vmatmul.mubr.bf16.gmra.mrb[0].mxu0 %v759
        %v7197 = vpop.f32.mrb[0].mxu0
        %v7198 = vadd.f32 %v7157, %v7197
        %v7199 = vpop.f32.mrb[0].mxu0
        %v7200 = vadd.f32 %v7159, %v7199
        %v7201 = vpop.f32.mrb[0].mxu0
        %v7202 = vpop.f32.mrb[0].mxu0
        %7203 = vdwg.mxu0
        %7204 = vmatprep.subr.bf16.mxu0 %v5103
        %7205 = vmatpush1.bf16.msra.mxu0 %v5102
        %7206 = vmatprep.subr.bf16.mxu0 %v5105
        %7207 = vmatpush1.bf16.msra.mxu0 %v5104
        %7208 = vmatprep.subr.bf16.mxu0 %v5107
        %7209 = vmatpush1.bf16.msra.mxu0 %v5106
        %7210 = vmatprep.subr.bf16.mxu0 %v5109
        %7211 = vmatpush1.bf16.msra.mxu0 %v5108
        %7212 = vmatprep.subr.bf16.mxu0 %v5111
        %7213 = vmatpush1.bf16.msra.mxu0 %v5110
        %7214 = vmatprep.subr.bf16.mxu0 %v5113
        %7215 = vmatpush1.bf16.msra.mxu0 %v5112
        %7216 = vmatprep.subr.bf16.mxu0 %v5115
        %7217 = vmatpush1.bf16.msra.mxu0 %v5114
        %7218 = vmatprep.subr.bf16.mxu0 %v5117
        %7219 = vmatpush1.bf16.msra.mxu0 %v5116
        %7220 = vmatprep.subr.bf16.mxu0 %v5119
        %7221 = vmatpush1.bf16.msra.mxu0 %v5118
        %7222 = vmatprep.subr.bf16.mxu0 %v5121
        %7223 = vmatpush1.bf16.msra.mxu0 %v5120
        %7224 = vmatprep.subr.bf16.mxu0 %v5123
        %7225 = vmatpush1.bf16.msra.mxu0 %v5122
        %7226 = vmatprep.subr.bf16.mxu0 %v5125
        %7227 = vmatpush1.bf16.msra.mxu0 %v5124
        %7228 = vmatprep.subr.bf16.mxu0 %v5127
        %7229 = vmatpush1.bf16.msra.mxu0 %v5126
        %7230 = vmatprep.subr.bf16.mxu0 %v5129
        %7231 = vmatpush1.bf16.msra.mxu0 %v5128
        %7232 = vmatprep.subr.bf16.mxu0 %v5131
        %7233 = vmatpush1.bf16.msra.mxu0 %v5130
        %7234 = vmatprep.subr.bf16.mxu0 %v5133
        %7235 = vmatpush1.bf16.msra.mxu0 %v5132
        %7236 = vmatprep.mubr.bf16.mxu0 %v762
        %7237 = vmatmul.mubr.bf16.gmra.mrb[0].mxu0 %v761
        %v7238 = vpop.f32.mrb[0].mxu0
        %v7239 = vadd.f32 %v7198, %v7238
        %v7240 = vpop.f32.mrb[0].mxu0
        %v7241 = vadd.f32 %v7200, %v7240
        %v7242 = vpop.f32.mrb[0].mxu0
        %v7243 = vpop.f32.mrb[0].mxu0
        %7244 = vdwg.mxu0
        %7245 = vmatprep.subr.bf16.mxu0 %v5135
        %7246 = vmatpush1.bf16.msra.mxu0 %v5134
        %7247 = vmatprep.subr.bf16.mxu0 %v5137
        %7248 = vmatpush1.bf16.msra.mxu0 %v5136
        %7249 = vmatprep.subr.bf16.mxu0 %v5139
        %7250 = vmatpush1.bf16.msra.mxu0 %v5138
        %7251 = vmatprep.subr.bf16.mxu0 %v5141
        %7252 = vmatpush1.bf16.msra.mxu0 %v5140
        %7253 = vmatprep.subr.bf16.mxu0 %v5143
        %7254 = vmatpush1.bf16.msra.mxu0 %v5142
        %7255 = vmatprep.subr.bf16.mxu0 %v5145
        %7256 = vmatpush1.bf16.msra.mxu0 %v5144
        %7257 = vmatprep.subr.bf16.mxu0 %v5147
        %7258 = vmatpush1.bf16.msra.mxu0 %v5146
        %7259 = vmatprep.subr.bf16.mxu0 %v5149
        %7260 = vmatpush1.bf16.msra.mxu0 %v5148
        %7261 = vmatprep.subr.bf16.mxu0 %v5151
        %7262 = vmatpush1.bf16.msra.mxu0 %v5150
        %7263 = vmatprep.subr.bf16.mxu0 %v5153
        %7264 = vmatpush1.bf16.msra.mxu0 %v5152
        %7265 = vmatprep.subr.bf16.mxu0 %v5155
        %7266 = vmatpush1.bf16.msra.mxu0 %v5154
        %7267 = vmatprep.subr.bf16.mxu0 %v5157
        %7268 = vmatpush1.bf16.msra.mxu0 %v5156
        %7269 = vmatprep.subr.bf16.mxu0 %v5159
        %7270 = vmatpush1.bf16.msra.mxu0 %v5158
        %7271 = vmatprep.subr.bf16.mxu0 %v5161
        %7272 = vmatpush1.bf16.msra.mxu0 %v5160
        %7273 = vmatprep.subr.bf16.mxu0 %v5163
        %7274 = vmatpush1.bf16.msra.mxu0 %v5162
        %7275 = vmatprep.subr.bf16.mxu0 %v5165
        %7276 = vmatpush1.bf16.msra.mxu0 %v5164
        %7277 = vmatprep.mubr.bf16.mxu0 %v764
        %7278 = vmatmul.mubr.bf16.gmra.mrb[0].mxu0 %v763
        %v7279 = vpop.f32.mrb[0].mxu0
        %v7280 = vadd.f32 %v7239, %v7279
        %v7281 = vpop.f32.mrb[0].mxu0
        %v7282 = vadd.f32 %v7241, %v7281
        %v7283 = vpop.f32.mrb[0].mxu0
        %v7284 = vpop.f32.mrb[0].mxu0
        %7285 = vdwg.mxu0
        %7286 = vmatprep.subr.bf16.mxu0 %v5167
        %7287 = vmatpush1.bf16.msra.mxu0 %v5166
        %7288 = vmatprep.subr.bf16.mxu0 %v5169
        %7289 = vmatpush1.bf16.msra.mxu0 %v5168
        %7290 = vmatprep.subr.bf16.mxu0 %v5171
        %7291 = vmatpush1.bf16.msra.mxu0 %v5170
        %7292 = vmatprep.subr.bf16.mxu0 %v5173
        %7293 = vmatpush1.bf16.msra.mxu0 %v5172
        %7294 = vmatprep.subr.bf16.mxu0 %v5175
        %7295 = vmatpush1.bf16.msra.mxu0 %v5174
        %7296 = vmatprep.subr.bf16.mxu0 %v5177
        %7297 = vmatpush1.bf16.msra.mxu0 %v5176
        %7298 = vmatprep.subr.bf16.mxu0 %v5179
        %7299 = vmatpush1.bf16.msra.mxu0 %v5178
        %7300 = vmatprep.subr.bf16.mxu0 %v5181
        %7301 = vmatpush1.bf16.msra.mxu0 %v5180
        %7302 = vmatprep.subr.bf16.mxu0 %v5183
        %7303 = vmatpush1.bf16.msra.mxu0 %v5182
        %7304 = vmatprep.subr.bf16.mxu0 %v5185
        %7305 = vmatpush1.bf16.msra.mxu0 %v5184
        %7306 = vmatprep.subr.bf16.mxu0 %v5187
        %7307 = vmatpush1.bf16.msra.mxu0 %v5186
        %7308 = vmatprep.subr.bf16.mxu0 %v5189
        %7309 = vmatpush1.bf16.msra.mxu0 %v5188
        %7310 = vmatprep.subr.bf16.mxu0 %v5191
        %7311 = vmatpush1.bf16.msra.mxu0 %v5190
        %7312 = vmatprep.subr.bf16.mxu0 %v5193
        %7313 = vmatpush1.bf16.msra.mxu0 %v5192
        %7314 = vmatprep.subr.bf16.mxu0 %v5195
        %7315 = vmatpush1.bf16.msra.mxu0 %v5194
        %7316 = vmatprep.subr.bf16.mxu0 %v5197
        %7317 = vmatpush1.bf16.msra.mxu0 %v5196
        %7318 = vmatprep.mubr.bf16.mxu0 %v766
        %7319 = vmatmul.mubr.bf16.gmra.mrb[0].mxu0 %v765
        %v7320 = vpop.f32.mrb[0].mxu0
        %v7321 = vadd.f32 %v7280, %v7320
        %v7322 = vpop.f32.mrb[0].mxu0
        %v7323 = vadd.f32 %v7282, %v7322
        %v7324 = vpop.f32.mrb[0].mxu0
        %v7325 = vpop.f32.mrb[0].mxu0
        %7326 = vdwg.mxu0
        %7327 = vmatprep.subr.bf16.mxu0 %v5199
        %7328 = vmatpush1.bf16.msra.mxu0 %v5198
        %7329 = vmatprep.subr.bf16.mxu0 %v5201
        %7330 = vmatpush1.bf16.msra.mxu0 %v5200
        %7331 = vmatprep.subr.bf16.mxu0 %v5203
        %7332 = vmatpush1.bf16.msra.mxu0 %v5202
        %7333 = vmatprep.subr.bf16.mxu0 %v5205
        %7334 = vmatpush1.bf16.msra.mxu0 %v5204
        %7335 = vmatprep.subr.bf16.mxu0 %v5207
        %7336 = vmatpush1.bf16.msra.mxu0 %v5206
        %7337 = vmatprep.subr.bf16.mxu0 %v5209
        %7338 = vmatpush1.bf16.msra.mxu0 %v5208
        %7339 = vmatprep.subr.bf16.mxu0 %v5211
        %7340 = vmatpush1.bf16.msra.mxu0 %v5210
        %7341 = vmatprep.subr.bf16.mxu0 %v5213
        %7342 = vmatpush1.bf16.msra.mxu0 %v5212
        %7343 = vmatprep.subr.bf16.mxu0 %v5215
        %7344 = vmatpush1.bf16.msra.mxu0 %v5214
        %7345 = vmatprep.subr.bf16.mxu0 %v5217
        %7346 = vmatpush1.bf16.msra.mxu0 %v5216
        %7347 = vmatprep.subr.bf16.mxu0 %v5219
        %7348 = vmatpush1.bf16.msra.mxu0 %v5218
        %7349 = vmatprep.subr.bf16.mxu0 %v5221
        %7350 = vmatpush1.bf16.msra.mxu0 %v5220
        %7351 = vmatprep.subr.bf16.mxu0 %v5223
        %7352 = vmatpush1.bf16.msra.mxu0 %v5222
        %7353 = vmatprep.subr.bf16.mxu0 %v5225
        %7354 = vmatpush1.bf16.msra.mxu0 %v5224
        %7355 = vmatprep.subr.bf16.mxu0 %v5227
        %7356 = vmatpush1.bf16.msra.mxu0 %v5226
        %7357 = vmatprep.subr.bf16.mxu0 %v5229
        %7358 = vmatpush1.bf16.msra.mxu0 %v5228
        %7359 = vmatprep.mubr.bf16.mxu0 %v768
        %7360 = vmatmul.mubr.bf16.gmra.mrb[0].mxu0 %v767
        %v7361 = vpop.f32.mrb[0].mxu0
        %v7362 = vadd.f32 %v7321, %v7361
        %v7363 = vpop.f32.mrb[0].mxu0
        %v7364 = vadd.f32 %v7323, %v7363
        %v7365 = vpop.f32.mrb[0].mxu0
        %v7366 = vpop.f32.mrb[0].mxu0
        %7367 = vdwg.mxu0
        %7368 = vmatprep.subr.bf16.mxu0 %v5231
        %7369 = vmatpush1.bf16.msra.mxu0 %v5230
        %7370 = vmatprep.subr.bf16.mxu0 %v5233
        %7371 = vmatpush1.bf16.msra.mxu0 %v5232
        %7372 = vmatprep.subr.bf16.mxu0 %v5235
        %7373 = vmatpush1.bf16.msra.mxu0 %v5234
        %7374 = vmatprep.subr.bf16.mxu0 %v5237
        %7375 = vmatpush1.bf16.msra.mxu0 %v5236
        %7376 = vmatprep.subr.bf16.mxu0 %v5239
        %7377 = vmatpush1.bf16.msra.mxu0 %v5238
        %7378 = vmatprep.subr.bf16.mxu0 %v5241
        %7379 = vmatpush1.bf16.msra.mxu0 %v5240
        %7380 = vmatprep.subr.bf16.mxu0 %v5243
        %7381 = vmatpush1.bf16.msra.mxu0 %v5242
        %7382 = vmatprep.subr.bf16.mxu0 %v5245
        %7383 = vmatpush1.bf16.msra.mxu0 %v5244
        %7384 = vmatprep.subr.bf16.mxu0 %v5247
        %7385 = vmatpush1.bf16.msra.mxu0 %v5246
        %7386 = vmatprep.subr.bf16.mxu0 %v5249
        %7387 = vmatpush1.bf16.msra.mxu0 %v5248
        %7388 = vmatprep.subr.bf16.mxu0 %v5251
        %7389 = vmatpush1.bf16.msra.mxu0 %v5250
        %7390 = vmatprep.subr.bf16.mxu0 %v5253
        %7391 = vmatpush1.bf16.msra.mxu0 %v5252
        %7392 = vmatprep.subr.bf16.mxu0 %v5255
        %7393 = vmatpush1.bf16.msra.mxu0 %v5254
        %7394 = vmatprep.subr.bf16.mxu0 %v5257
        %7395 = vmatpush1.bf16.msra.mxu0 %v5256
        %7396 = vmatprep.subr.bf16.mxu0 %v5259
        %7397 = vmatpush1.bf16.msra.mxu0 %v5258
        %7398 = vmatprep.subr.bf16.mxu0 %v5261
        %7399 = vmatpush1.bf16.msra.mxu0 %v5260
        %7400 = vmatprep.mubr.bf16.mxu0 %v770
        %7401 = vmatmul.mubr.bf16.gmra.mrb[0].mxu0 %v769
        %v7402 = vpop.f32.mrb[0].mxu0
        %v7403 = vadd.f32 %v7362, %v7402
        %v7404 = vpop.f32.mrb[0].mxu0
        %v7405 = vadd.f32 %v7364, %v7404
        %v7406 = vpop.f32.mrb[0].mxu0
        %v7407 = vpop.f32.mrb[0].mxu0
        %7408 = vdwg.mxu0
        %7409 = vmatprep.subr.bf16.mxu0 %v5263
        %7410 = vmatpush1.bf16.msra.mxu0 %v5262
        %7411 = vmatprep.subr.bf16.mxu0 %v5265
        %7412 = vmatpush1.bf16.msra.mxu0 %v5264
        %7413 = vmatprep.subr.bf16.mxu0 %v5267
        %7414 = vmatpush1.bf16.msra.mxu0 %v5266
        %7415 = vmatprep.subr.bf16.mxu0 %v5269
        %7416 = vmatpush1.bf16.msra.mxu0 %v5268
        %7417 = vmatprep.subr.bf16.mxu0 %v5271
        %7418 = vmatpush1.bf16.msra.mxu0 %v5270
        %7419 = vmatprep.subr.bf16.mxu0 %v5273
        %7420 = vmatpush1.bf16.msra.mxu0 %v5272
        %7421 = vmatprep.subr.bf16.mxu0 %v5275
        %7422 = vmatpush1.bf16.msra.mxu0 %v5274
        %7423 = vmatprep.subr.bf16.mxu0 %v5277
        %7424 = vmatpush1.bf16.msra.mxu0 %v5276
        %7425 = vmatprep.subr.bf16.mxu0 %v5279
        %7426 = vmatpush1.bf16.msra.mxu0 %v5278
        %7427 = vmatprep.subr.bf16.mxu0 %v5281
        %7428 = vmatpush1.bf16.msra.mxu0 %v5280
        %7429 = vmatprep.subr.bf16.mxu0 %v5283
        %7430 = vmatpush1.bf16.msra.mxu0 %v5282
        %7431 = vmatprep.subr.bf16.mxu0 %v5285
        %7432 = vmatpush1.bf16.msra.mxu0 %v5284
        %7433 = vmatprep.subr.bf16.mxu0 %v5287
        %7434 = vmatpush1.bf16.msra.mxu0 %v5286
        %7435 = vmatprep.subr.bf16.mxu0 %v5289
        %7436 = vmatpush1.bf16.msra.mxu0 %v5288
        %7437 = vmatprep.subr.bf16.mxu0 %v5291
        %7438 = vmatpush1.bf16.msra.mxu0 %v5290
        %7439 = vmatprep.subr.bf16.mxu0 %v5293
        %7440 = vmatpush1.bf16.msra.mxu0 %v5292
        %7441 = vmatprep.mubr.bf16.mxu0 %v772
        %7442 = vmatmul.mubr.bf16.gmra.mrb[0].mxu0 %v771
        %v7443 = vpop.f32.mrb[0].mxu0
        %v7444 = vadd.f32 %v7403, %v7443
        %v7445 = vpop.f32.mrb[0].mxu0
        %v7446 = vadd.f32 %v7405, %v7445
        %v7447 = vpop.f32.mrb[0].mxu0
        %v7448 = vpop.f32.mrb[0].mxu0
        %7449 = vdwg.mxu0
        %7450 = vmatprep.subr.bf16.mxu0 %v5295
        %7451 = vmatpush1.bf16.msra.mxu0 %v5294
        %7452 = vmatprep.subr.bf16.mxu0 %v5297
        %7453 = vmatpush1.bf16.msra.mxu0 %v5296
        %7454 = vmatprep.subr.bf16.mxu0 %v5299
        %7455 = vmatpush1.bf16.msra.mxu0 %v5298
        %7456 = vmatprep.subr.bf16.mxu0 %v5301
        %7457 = vmatpush1.bf16.msra.mxu0 %v5300
        %7458 = vmatprep.subr.bf16.mxu0 %v5303
        %7459 = vmatpush1.bf16.msra.mxu0 %v5302
        %7460 = vmatprep.subr.bf16.mxu0 %v5305
        %7461 = vmatpush1.bf16.msra.mxu0 %v5304
        %7462 = vmatprep.subr.bf16.mxu0 %v5307
        %7463 = vmatpush1.bf16.msra.mxu0 %v5306
        %7464 = vmatprep.subr.bf16.mxu0 %v5309
        %7465 = vmatpush1.bf16.msra.mxu0 %v5308
        %7466 = vmatprep.subr.bf16.mxu0 %v5311
        %7467 = vmatpush1.bf16.msra.mxu0 %v5310
        %7468 = vmatprep.subr.bf16.mxu0 %v5313
        %7469 = vmatpush1.bf16.msra.mxu0 %v5312
        %7470 = vmatprep.subr.bf16.mxu0 %v5315
        %7471 = vmatpush1.bf16.msra.mxu0 %v5314
        %7472 = vmatprep.subr.bf16.mxu0 %v5317
        %7473 = vmatpush1.bf16.msra.mxu0 %v5316
        %7474 = vmatprep.subr.bf16.mxu0 %v5319
        %7475 = vmatpush1.bf16.msra.mxu0 %v5318
        %7476 = vmatprep.subr.bf16.mxu0 %v5321
        %7477 = vmatpush1.bf16.msra.mxu0 %v5320
        %7478 = vmatprep.subr.bf16.mxu0 %v5323
        %7479 = vmatpush1.bf16.msra.mxu0 %v5322
        %7480 = vmatprep.subr.bf16.mxu0 %v5325
        %7481 = vmatpush1.bf16.msra.mxu0 %v5324
        %7482 = vmatprep.mubr.bf16.mxu0 %v774
        %7483 = vmatmul.mubr.bf16.gmra.mrb[0].mxu0 %v773
        %v7484 = vpop.f32.mrb[0].mxu0
        %v7485 = vadd.f32 %v7444, %v7484
        %v7486 = vpop.f32.mrb[0].mxu0
        %v7487 = vadd.f32 %v7446, %v7486
        %v7488 = vpop.f32.mrb[0].mxu0
        %v7489 = vpop.f32.mrb[0].mxu0
        %7490 = vdwg.mxu0
        %7491 = vmatprep.subr.bf16.mxu0 %v5327
        %7492 = vmatpush1.bf16.msra.mxu0 %v5326
        %7493 = vmatprep.subr.bf16.mxu0 %v5329
        %7494 = vmatpush1.bf16.msra.mxu0 %v5328
        %7495 = vmatprep.subr.bf16.mxu0 %v5331
        %7496 = vmatpush1.bf16.msra.mxu0 %v5330
        %7497 = vmatprep.subr.bf16.mxu0 %v5333
        %7498 = vmatpush1.bf16.msra.mxu0 %v5332
        %7499 = vmatprep.subr.bf16.mxu0 %v5335
        %7500 = vmatpush1.bf16.msra.mxu0 %v5334
        %7501 = vmatprep.subr.bf16.mxu0 %v5337
        %7502 = vmatpush1.bf16.msra.mxu0 %v5336
        %7503 = vmatprep.subr.bf16.mxu0 %v5339
        %7504 = vmatpush1.bf16.msra.mxu0 %v5338
        %7505 = vmatprep.subr.bf16.mxu0 %v5341
        %7506 = vmatpush1.bf16.msra.mxu0 %v5340
        %7507 = vmatprep.subr.bf16.mxu0 %v5343
        %7508 = vmatpush1.bf16.msra.mxu0 %v5342
        %7509 = vmatprep.subr.bf16.mxu0 %v5345
        %7510 = vmatpush1.bf16.msra.mxu0 %v5344
        %7511 = vmatprep.subr.bf16.mxu0 %v5347
        %7512 = vmatpush1.bf16.msra.mxu0 %v5346
        %7513 = vmatprep.subr.bf16.mxu0 %v5349
        %7514 = vmatpush1.bf16.msra.mxu0 %v5348
        %7515 = vmatprep.subr.bf16.mxu0 %v5351
        %7516 = vmatpush1.bf16.msra.mxu0 %v5350
        %7517 = vmatprep.subr.bf16.mxu0 %v5353
        %7518 = vmatpush1.bf16.msra.mxu0 %v5352
        %7519 = vmatprep.subr.bf16.mxu0 %v5355
        %7520 = vmatpush1.bf16.msra.mxu0 %v5354
        %7521 = vmatprep.subr.bf16.mxu0 %v5357
        %7522 = vmatpush1.bf16.msra.mxu0 %v5356
        %7523 = vmatprep.mubr.bf16.mxu0 %v776
        %7524 = vmatmul.mubr.bf16.gmra.mrb[0].mxu0 %v775
        %v7525 = vpop.f32.mrb[0].mxu0
        %v7526 = vadd.f32 %v7485, %v7525
        %v7527 = vpop.f32.mrb[0].mxu0
        %v7528 = vadd.f32 %v7487, %v7527
        %v7529 = vpop.f32.mrb[0].mxu0
        %v7530 = vpop.f32.mrb[0].mxu0
        %7531 = vdwg.mxu0
        %7532 = vmatprep.subr.bf16.mxu0 %v5359
        %7533 = vmatpush1.bf16.msra.mxu0 %v5358
        %7534 = vmatprep.subr.bf16.mxu0 %v5361
        %7535 = vmatpush1.bf16.msra.mxu0 %v5360
        %7536 = vmatprep.subr.bf16.mxu0 %v5363
        %7537 = vmatpush1.bf16.msra.mxu0 %v5362
        %7538 = vmatprep.subr.bf16.mxu0 %v5365
        %7539 = vmatpush1.bf16.msra.mxu0 %v5364
        %7540 = vmatprep.subr.bf16.mxu0 %v5367
        %7541 = vmatpush1.bf16.msra.mxu0 %v5366
        %7542 = vmatprep.subr.bf16.mxu0 %v5369
        %7543 = vmatpush1.bf16.msra.mxu0 %v5368
        %7544 = vmatprep.subr.bf16.mxu0 %v5371
        %7545 = vmatpush1.bf16.msra.mxu0 %v5370
        %7546 = vmatprep.subr.bf16.mxu0 %v5373
        %7547 = vmatpush1.bf16.msra.mxu0 %v5372
        %7548 = vmatprep.subr.bf16.mxu0 %v5375
        %7549 = vmatpush1.bf16.msra.mxu0 %v5374
        %7550 = vmatprep.subr.bf16.mxu0 %v5377
        %7551 = vmatpush1.bf16.msra.mxu0 %v5376
        %7552 = vmatprep.subr.bf16.mxu0 %v5379
        %7553 = vmatpush1.bf16.msra.mxu0 %v5378
        %7554 = vmatprep.subr.bf16.mxu0 %v5381
        %7555 = vmatpush1.bf16.msra.mxu0 %v5380
        %7556 = vmatprep.subr.bf16.mxu0 %v5383
        %7557 = vmatpush1.bf16.msra.mxu0 %v5382
        %7558 = vmatprep.subr.bf16.mxu0 %v5385
        %7559 = vmatpush1.bf16.msra.mxu0 %v5384
        %7560 = vmatprep.subr.bf16.mxu0 %v5387
        %7561 = vmatpush1.bf16.msra.mxu0 %v5386
        %7562 = vmatprep.subr.bf16.mxu0 %v5389
        %7563 = vmatpush1.bf16.msra.mxu0 %v5388
        %7564 = vmatprep.mubr.bf16.mxu0 %v778
        %7565 = vmatmul.mubr.bf16.gmra.mrb[0].mxu0 %v777
        %v7566 = vpop.f32.mrb[0].mxu0
        %v7567 = vadd.f32 %v7526, %v7566
        %v7568 = vpop.f32.mrb[0].mxu0
        %v7569 = vadd.f32 %v7528, %v7568
        %v7570 = vpop.f32.mrb[0].mxu0
        %v7571 = vpop.f32.mrb[0].mxu0
        %7572 = vdwg.mxu0
        %7573 = vmatprep.subr.bf16.mxu0 %v5391
        %7574 = vmatpush1.bf16.msra.mxu0 %v5390
        %7575 = vmatprep.subr.bf16.mxu0 %v5393
        %7576 = vmatpush1.bf16.msra.mxu0 %v5392
        %7577 = vmatprep.subr.bf16.mxu0 %v5395
        %7578 = vmatpush1.bf16.msra.mxu0 %v5394
        %7579 = vmatprep.subr.bf16.mxu0 %v5397
        %7580 = vmatpush1.bf16.msra.mxu0 %v5396
        %7581 = vmatprep.subr.bf16.mxu0 %v5399
        %7582 = vmatpush1.bf16.msra.mxu0 %v5398
        %7583 = vmatprep.subr.bf16.mxu0 %v5401
        %7584 = vmatpush1.bf16.msra.mxu0 %v5400
        %7585 = vmatprep.subr.bf16.mxu0 %v5403
        %7586 = vmatpush1.bf16.msra.mxu0 %v5402
        %7587 = vmatprep.subr.bf16.mxu0 %v5405
        %7588 = vmatpush1.bf16.msra.mxu0 %v5404
        %7589 = vmatprep.subr.bf16.mxu0 %v5407
        %7590 = vmatpush1.bf16.msra.mxu0 %v5406
        %7591 = vmatprep.subr.bf16.mxu0 %v5409
        %7592 = vmatpush1.bf16.msra.mxu0 %v5408
        %7593 = vmatprep.subr.bf16.mxu0 %v5411
        %7594 = vmatpush1.bf16.msra.mxu0 %v5410
        %7595 = vmatprep.subr.bf16.mxu0 %v5413
        %7596 = vmatpush1.bf16.msra.mxu0 %v5412
        %7597 = vmatprep.subr.bf16.mxu0 %v5415
        %7598 = vmatpush1.bf16.msra.mxu0 %v5414
        %7599 = vmatprep.subr.bf16.mxu0 %v5417
        %7600 = vmatpush1.bf16.msra.mxu0 %v5416
        %7601 = vmatprep.subr.bf16.mxu0 %v5419
        %7602 = vmatpush1.bf16.msra.mxu0 %v5418
        %7603 = vmatprep.subr.bf16.mxu0 %v5421
        %7604 = vmatpush1.bf16.msra.mxu0 %v5420
        %7605 = vmatprep.mubr.bf16.mxu0 %v780
        %7606 = vmatmul.mubr.bf16.gmra.mrb[0].mxu0 %v779
        %v7607 = vpop.f32.mrb[0].mxu0
        %v7608 = vadd.f32 %v7567, %v7607
        %v7609 = vpop.f32.mrb[0].mxu0
        %v7610 = vadd.f32 %v7569, %v7609
        %v7611 = vpop.f32.mrb[0].mxu0
        %v7612 = vpop.f32.mrb[0].mxu0
        %7613 = vdwg.mxu0
        %7614 = vmatprep.subr.bf16.mxu0 %v5423
        %7615 = vmatpush1.bf16.msra.mxu0 %v5422
        %7616 = vmatprep.subr.bf16.mxu0 %v5425
        %7617 = vmatpush1.bf16.msra.mxu0 %v5424
        %7618 = vmatprep.subr.bf16.mxu0 %v5427
        %7619 = vmatpush1.bf16.msra.mxu0 %v5426
        %7620 = vmatprep.subr.bf16.mxu0 %v5429
        %7621 = vmatpush1.bf16.msra.mxu0 %v5428
        %7622 = vmatprep.subr.bf16.mxu0 %v5431
        %7623 = vmatpush1.bf16.msra.mxu0 %v5430
        %7624 = vmatprep.subr.bf16.mxu0 %v5433
        %7625 = vmatpush1.bf16.msra.mxu0 %v5432
        %7626 = vmatprep.subr.bf16.mxu0 %v5435
        %7627 = vmatpush1.bf16.msra.mxu0 %v5434
        %7628 = vmatprep.subr.bf16.mxu0 %v5437
        %7629 = vmatpush1.bf16.msra.mxu0 %v5436
        %7630 = vmatprep.subr.bf16.mxu0 %v5439
        %7631 = vmatpush1.bf16.msra.mxu0 %v5438
        %7632 = vmatprep.subr.bf16.mxu0 %v5441
        %7633 = vmatpush1.bf16.msra.mxu0 %v5440
        %7634 = vmatprep.subr.bf16.mxu0 %v5443
        %7635 = vmatpush1.bf16.msra.mxu0 %v5442
        %7636 = vmatprep.subr.bf16.mxu0 %v5445
        %7637 = vmatpush1.bf16.msra.mxu0 %v5444
        %7638 = vmatprep.subr.bf16.mxu0 %v5447
        %7639 = vmatpush1.bf16.msra.mxu0 %v5446
        %7640 = vmatprep.subr.bf16.mxu0 %v5449
        %7641 = vmatpush1.bf16.msra.mxu0 %v5448
        %7642 = vmatprep.subr.bf16.mxu0 %v5451
        %7643 = vmatpush1.bf16.msra.mxu0 %v5450
        %7644 = vmatprep.subr.bf16.mxu0 %v5453
        %7645 = vmatpush1.bf16.msra.mxu0 %v5452
        %7646 = vmatprep.mubr.bf16.mxu0 %v782
        %7647 = vmatmul.mubr.bf16.gmra.mrb[0].mxu0 %v781
        %v7648 = vpop.f32.mrb[0].mxu0
        %v7649 = vadd.f32 %v7608, %v7648
        %v7650 = vpop.f32.mrb[0].mxu0
        %v7651 = vadd.f32 %v7610, %v7650
        %v7652 = vpop.f32.mrb[0].mxu0
        %v7653 = vpop.f32.mrb[0].mxu0
        %7654 = vdwg.mxu0
        %7655 = vmatprep.subr.bf16.mxu0 %v5455
        %7656 = vmatpush1.bf16.msra.mxu0 %v5454
        %7657 = vmatprep.subr.bf16.mxu0 %v5457
        %7658 = vmatpush1.bf16.msra.mxu0 %v5456
        %7659 = vmatprep.subr.bf16.mxu0 %v5459
        %7660 = vmatpush1.bf16.msra.mxu0 %v5458
        %7661 = vmatprep.subr.bf16.mxu0 %v5461
        %7662 = vmatpush1.bf16.msra.mxu0 %v5460
        %7663 = vmatprep.subr.bf16.mxu0 %v5463
        %7664 = vmatpush1.bf16.msra.mxu0 %v5462
        %7665 = vmatprep.subr.bf16.mxu0 %v5465
        %7666 = vmatpush1.bf16.msra.mxu0 %v5464
        %7667 = vmatprep.subr.bf16.mxu0 %v5467
        %7668 = vmatpush1.bf16.msra.mxu0 %v5466
        %7669 = vmatprep.subr.bf16.mxu0 %v5469
        %7670 = vmatpush1.bf16.msra.mxu0 %v5468
        %7671 = vmatprep.subr.bf16.mxu0 %v5471
        %7672 = vmatpush1.bf16.msra.mxu0 %v5470
        %7673 = vmatprep.subr.bf16.mxu0 %v5473
        %7674 = vmatpush1.bf16.msra.mxu0 %v5472
        %7675 = vmatprep.subr.bf16.mxu0 %v5475
        %7676 = vmatpush1.bf16.msra.mxu0 %v5474
        %7677 = vmatprep.subr.bf16.mxu0 %v5477
        %7678 = vmatpush1.bf16.msra.mxu0 %v5476
        %7679 = vmatprep.subr.bf16.mxu0 %v5479
        %7680 = vmatpush1.bf16.msra.mxu0 %v5478
        %7681 = vmatprep.subr.bf16.mxu0 %v5481
        %7682 = vmatpush1.bf16.msra.mxu0 %v5480
        %7683 = vmatprep.subr.bf16.mxu0 %v5483
        %7684 = vmatpush1.bf16.msra.mxu0 %v5482
        %7685 = vmatprep.subr.bf16.mxu0 %v5485
        %7686 = vmatpush1.bf16.msra.mxu0 %v5484
        %7687 = vmatprep.mubr.bf16.mxu0 %v784
        %7688 = vmatmul.mubr.bf16.gmra.mrb[0].mxu0 %v783
        %v7689 = vpop.f32.mrb[0].mxu0
        %v7690 = vadd.f32 %v7649, %v7689
        %v7691 = vpop.f32.mrb[0].mxu0
        %v7692 = vadd.f32 %v7651, %v7691
        %v7693 = vpop.f32.mrb[0].mxu0
        %v7694 = vpop.f32.mrb[0].mxu0
        %7695 = vdwg.mxu0
        %7696 = vmatprep.subr.bf16.mxu0 %v5487
        %7697 = vmatpush1.bf16.msra.mxu0 %v5486
        %7698 = vmatprep.subr.bf16.mxu0 %v5489
        %7699 = vmatpush1.bf16.msra.mxu0 %v5488
        %7700 = vmatprep.subr.bf16.mxu0 %v5491
        %7701 = vmatpush1.bf16.msra.mxu0 %v5490
        %7702 = vmatprep.subr.bf16.mxu0 %v5493
        %7703 = vmatpush1.bf16.msra.mxu0 %v5492
        %7704 = vmatprep.subr.bf16.mxu0 %v5495
        %7705 = vmatpush1.bf16.msra.mxu0 %v5494
        %7706 = vmatprep.subr.bf16.mxu0 %v5497
        %7707 = vmatpush1.bf16.msra.mxu0 %v5496
        %7708 = vmatprep.subr.bf16.mxu0 %v5499
        %7709 = vmatpush1.bf16.msra.mxu0 %v5498
        %7710 = vmatprep.subr.bf16.mxu0 %v5501
        %7711 = vmatpush1.bf16.msra.mxu0 %v5500
        %7712 = vmatprep.subr.bf16.mxu0 %v5503
        %7713 = vmatpush1.bf16.msra.mxu0 %v5502
        %7714 = vmatprep.subr.bf16.mxu0 %v5505
        %7715 = vmatpush1.bf16.msra.mxu0 %v5504
        %7716 = vmatprep.subr.bf16.mxu0 %v5507
        %7717 = vmatpush1.bf16.msra.mxu0 %v5506
        %7718 = vmatprep.subr.bf16.mxu0 %v5509
        %7719 = vmatpush1.bf16.msra.mxu0 %v5508
        %7720 = vmatprep.subr.bf16.mxu0 %v5511
        %7721 = vmatpush1.bf16.msra.mxu0 %v5510
        %7722 = vmatprep.subr.bf16.mxu0 %v5513
        %7723 = vmatpush1.bf16.msra.mxu0 %v5512
        %7724 = vmatprep.subr.bf16.mxu0 %v5515
        %7725 = vmatpush1.bf16.msra.mxu0 %v5514
        %7726 = vmatprep.subr.bf16.mxu0 %v5517
        %7727 = vmatpush1.bf16.msra.mxu0 %v5516
        %7728 = vmatprep.mubr.bf16.mxu0 %v786
        %7729 = vmatmul.mubr.bf16.gmra.mrb[0].mxu0 %v785
        %v7730 = vpop.f32.mrb[0].mxu0
        %v7731 = vadd.f32 %v7690, %v7730
        %v7732 = vpop.f32.mrb[0].mxu0
        %v7733 = vadd.f32 %v7692, %v7732
        %v7734 = vpop.f32.mrb[0].mxu0
        %v7735 = vpop.f32.mrb[0].mxu0
        %7736 = vdwg.mxu0
        %7737 = vmatprep.subr.bf16.mxu0 %v5519
        %7738 = vmatpush1.bf16.msra.mxu0 %v5518
        %7739 = vmatprep.subr.bf16.mxu0 %v5521
        %7740 = vmatpush1.bf16.msra.mxu0 %v5520
        %7741 = vmatprep.subr.bf16.mxu0 %v5523
        %7742 = vmatpush1.bf16.msra.mxu0 %v5522
        %7743 = vmatprep.subr.bf16.mxu0 %v5525
        %7744 = vmatpush1.bf16.msra.mxu0 %v5524
        %7745 = vmatprep.subr.bf16.mxu0 %v5527
        %7746 = vmatpush1.bf16.msra.mxu0 %v5526
        %7747 = vmatprep.subr.bf16.mxu0 %v5529
        %7748 = vmatpush1.bf16.msra.mxu0 %v5528
        %7749 = vmatprep.subr.bf16.mxu0 %v5531
        %7750 = vmatpush1.bf16.msra.mxu0 %v5530
        %7751 = vmatprep.subr.bf16.mxu0 %v5533
        %7752 = vmatpush1.bf16.msra.mxu0 %v5532
        %7753 = vmatprep.subr.bf16.mxu0 %v5535
        %7754 = vmatpush1.bf16.msra.mxu0 %v5534
        %7755 = vmatprep.subr.bf16.mxu0 %v5537
        %7756 = vmatpush1.bf16.msra.mxu0 %v5536
        %7757 = vmatprep.subr.bf16.mxu0 %v5539
        %7758 = vmatpush1.bf16.msra.mxu0 %v5538
        %7759 = vmatprep.subr.bf16.mxu0 %v5541
        %7760 = vmatpush1.bf16.msra.mxu0 %v5540
        %7761 = vmatprep.subr.bf16.mxu0 %v5543
        %7762 = vmatpush1.bf16.msra.mxu0 %v5542
        %7763 = vmatprep.subr.bf16.mxu0 %v5545
        %7764 = vmatpush1.bf16.msra.mxu0 %v5544
        %7765 = vmatprep.subr.bf16.mxu0 %v5547
        %7766 = vmatpush1.bf16.msra.mxu0 %v5546
        %7767 = vmatprep.subr.bf16.mxu0 %v5549
        %7768 = vmatpush1.bf16.msra.mxu0 %v5548
        %7769 = vmatprep.mubr.bf16.mxu0 %v788
        %7770 = vmatmul.mubr.bf16.gmra.mrb[0].mxu0 %v787
        %v7771 = vpop.f32.mrb[0].mxu0
        %v7772 = vadd.f32 %v7731, %v7771
        %v7773 = vpop.f32.mrb[0].mxu0
        %v7774 = vadd.f32 %v7733, %v7773
        %v7775 = vpop.f32.mrb[0].mxu0
        %v7776 = vpop.f32.mrb[0].mxu0
        %7777 = vdwg.mxu0
        %7778 = vmatprep.subr.bf16.mxu0 %v5551
        %7779 = vmatpush1.bf16.msra.mxu0 %v5550
        %7780 = vmatprep.subr.bf16.mxu0 %v5553
        %7781 = vmatpush1.bf16.msra.mxu0 %v5552
        %7782 = vmatprep.subr.bf16.mxu0 %v5555
        %7783 = vmatpush1.bf16.msra.mxu0 %v5554
        %7784 = vmatprep.subr.bf16.mxu0 %v5557
        %7785 = vmatpush1.bf16.msra.mxu0 %v5556
        %7786 = vmatprep.subr.bf16.mxu0 %v5559
        %7787 = vmatpush1.bf16.msra.mxu0 %v5558
        %7788 = vmatprep.subr.bf16.mxu0 %v5561
        %7789 = vmatpush1.bf16.msra.mxu0 %v5560
        %7790 = vmatprep.subr.bf16.mxu0 %v5563
        %7791 = vmatpush1.bf16.msra.mxu0 %v5562
        %7792 = vmatprep.subr.bf16.mxu0 %v5565
        %7793 = vmatpush1.bf16.msra.mxu0 %v5564
        %7794 = vmatprep.subr.bf16.mxu0 %v5567
        %7795 = vmatpush1.bf16.msra.mxu0 %v5566
        %7796 = vmatprep.subr.bf16.mxu0 %v5569
        %7797 = vmatpush1.bf16.msra.mxu0 %v5568
        %7798 = vmatprep.subr.bf16.mxu0 %v5571
        %7799 = vmatpush1.bf16.msra.mxu0 %v5570
        %7800 = vmatprep.subr.bf16.mxu0 %v5573
        %7801 = vmatpush1.bf16.msra.mxu0 %v5572
        %7802 = vmatprep.subr.bf16.mxu0 %v5575
        %7803 = vmatpush1.bf16.msra.mxu0 %v5574
        %7804 = vmatprep.subr.bf16.mxu0 %v5577
        %7805 = vmatpush1.bf16.msra.mxu0 %v5576
        %7806 = vmatprep.subr.bf16.mxu0 %v5579
        %7807 = vmatpush1.bf16.msra.mxu0 %v5578
        %7808 = vmatprep.subr.bf16.mxu0 %v5581
        %7809 = vmatpush1.bf16.msra.mxu0 %v5580
        %7810 = vmatprep.mubr.bf16.mxu0 %v790
        %7811 = vmatmul.mubr.bf16.gmra.mrb[0].mxu0 %v789
        %v7812 = vpop.f32.mrb[0].mxu0
        %v7813 = vadd.f32 %v7772, %v7812
        %v7814 = vpop.f32.mrb[0].mxu0
        %v7815 = vadd.f32 %v7774, %v7814
        %v7816 = vpop.f32.mrb[0].mxu0
        %v7817 = vpop.f32.mrb[0].mxu0
        %7818 = vdwg.mxu0
        %7819 = vmatprep.subr.bf16.mxu0 %v5583
        %7820 = vmatpush1.bf16.msra.mxu0 %v5582
        %7821 = vmatprep.subr.bf16.mxu0 %v5585
        %7822 = vmatpush1.bf16.msra.mxu0 %v5584
        %7823 = vmatprep.subr.bf16.mxu0 %v5587
        %7824 = vmatpush1.bf16.msra.mxu0 %v5586
        %7825 = vmatprep.subr.bf16.mxu0 %v5589
        %7826 = vmatpush1.bf16.msra.mxu0 %v5588
        %7827 = vmatprep.subr.bf16.mxu0 %v5591
        %7828 = vmatpush1.bf16.msra.mxu0 %v5590
        %7829 = vmatprep.subr.bf16.mxu0 %v5593
        %7830 = vmatpush1.bf16.msra.mxu0 %v5592
        %7831 = vmatprep.subr.bf16.mxu0 %v5595
        %7832 = vmatpush1.bf16.msra.mxu0 %v5594
        %7833 = vmatprep.subr.bf16.mxu0 %v5597
        %7834 = vmatpush1.bf16.msra.mxu0 %v5596
        %7835 = vmatprep.subr.bf16.mxu0 %v5599
        %7836 = vmatpush1.bf16.msra.mxu0 %v5598
        %7837 = vmatprep.subr.bf16.mxu0 %v5601
        %7838 = vmatpush1.bf16.msra.mxu0 %v5600
        %7839 = vmatprep.subr.bf16.mxu0 %v5603
        %7840 = vmatpush1.bf16.msra.mxu0 %v5602
        %7841 = vmatprep.subr.bf16.mxu0 %v5605
        %7842 = vmatpush1.bf16.msra.mxu0 %v5604
        %7843 = vmatprep.subr.bf16.mxu0 %v5607
        %7844 = vmatpush1.bf16.msra.mxu0 %v5606
        %7845 = vmatprep.subr.bf16.mxu0 %v5609
        %7846 = vmatpush1.bf16.msra.mxu0 %v5608
        %7847 = vmatprep.subr.bf16.mxu0 %v5611
        %7848 = vmatpush1.bf16.msra.mxu0 %v5610
        %7849 = vmatprep.subr.bf16.mxu0 %v5613
        %7850 = vmatpush1.bf16.msra.mxu0 %v5612
        %7851 = vmatprep.mubr.bf16.mxu0 %v792
        %7852 = vmatmul.mubr.bf16.gmra.mrb[0].mxu0 %v791
        %v7853 = vpop.f32.mrb[0].mxu0
        %v7854 = vadd.f32 %v7813, %v7853
        %v7855 = vpop.f32.mrb[0].mxu0
        %v7856 = vadd.f32 %v7815, %v7855
        %v7857 = vpop.f32.mrb[0].mxu0
        %v7858 = vpop.f32.mrb[0].mxu0
        %7859 = vdwg.mxu0
        %7860 = vmatprep.subr.bf16.mxu0 %v5615
        %7861 = vmatpush1.bf16.msra.mxu0 %v5614
        %7862 = vmatprep.subr.bf16.mxu0 %v5617
        %7863 = vmatpush1.bf16.msra.mxu0 %v5616
        %7864 = vmatprep.subr.bf16.mxu0 %v5619
        %7865 = vmatpush1.bf16.msra.mxu0 %v5618
        %7866 = vmatprep.subr.bf16.mxu0 %v5621
        %7867 = vmatpush1.bf16.msra.mxu0 %v5620
        %7868 = vmatprep.subr.bf16.mxu0 %v5623
        %7869 = vmatpush1.bf16.msra.mxu0 %v5622
        %7870 = vmatprep.subr.bf16.mxu0 %v5625
        %7871 = vmatpush1.bf16.msra.mxu0 %v5624
        %7872 = vmatprep.subr.bf16.mxu0 %v5627
        %7873 = vmatpush1.bf16.msra.mxu0 %v5626
        %7874 = vmatprep.subr.bf16.mxu0 %v5629
        %7875 = vmatpush1.bf16.msra.mxu0 %v5628
        %7876 = vmatprep.subr.bf16.mxu0 %v5631
        %7877 = vmatpush1.bf16.msra.mxu0 %v5630
        %7878 = vmatprep.subr.bf16.mxu0 %v5633
        %7879 = vmatpush1.bf16.msra.mxu0 %v5632
        %7880 = vmatprep.subr.bf16.mxu0 %v5635
        %7881 = vmatpush1.bf16.msra.mxu0 %v5634
        %7882 = vmatprep.subr.bf16.mxu0 %v5637
        %7883 = vmatpush1.bf16.msra.mxu0 %v5636
        %7884 = vmatprep.subr.bf16.mxu0 %v5639
        %7885 = vmatpush1.bf16.msra.mxu0 %v5638
        %7886 = vmatprep.subr.bf16.mxu0 %v5641
        %7887 = vmatpush1.bf16.msra.mxu0 %v5640
        %7888 = vmatprep.subr.bf16.mxu0 %v5643
        %7889 = vmatpush1.bf16.msra.mxu0 %v5642
        %7890 = vmatprep.subr.bf16.mxu0 %v5645
        %7891 = vmatpush1.bf16.msra.mxu0 %v5644
        %7892 = vmatprep.mubr.bf16.mxu0 %v794
        %7893 = vmatmul.mubr.bf16.gmra.mrb[0].mxu0 %v793
        %v7894 = vpop.f32.mrb[0].mxu0
        %v7895 = vadd.f32 %v7854, %v7894
        %v7896 = vpop.f32.mrb[0].mxu0
        %v7897 = vadd.f32 %v7856, %v7896
        %v7898 = vpop.f32.mrb[0].mxu0
        %v7899 = vpop.f32.mrb[0].mxu0
        %7900 = vdwg.mxu0
        %7901 = vmatprep.subr.bf16.mxu0 %v5647
        %7902 = vmatpush1.bf16.msra.mxu0 %v5646
        %7903 = vmatprep.subr.bf16.mxu0 %v5649
        %7904 = vmatpush1.bf16.msra.mxu0 %v5648
        %7905 = vmatprep.subr.bf16.mxu0 %v5651
        %7906 = vmatpush1.bf16.msra.mxu0 %v5650
        %7907 = vmatprep.subr.bf16.mxu0 %v5653
        %7908 = vmatpush1.bf16.msra.mxu0 %v5652
        %7909 = vmatprep.subr.bf16.mxu0 %v5655
        %7910 = vmatpush1.bf16.msra.mxu0 %v5654
        %7911 = vmatprep.subr.bf16.mxu0 %v5657
        %7912 = vmatpush1.bf16.msra.mxu0 %v5656
        %7913 = vmatprep.subr.bf16.mxu0 %v5659
        %7914 = vmatpush1.bf16.msra.mxu0 %v5658
        %7915 = vmatprep.subr.bf16.mxu0 %v5661
        %7916 = vmatpush1.bf16.msra.mxu0 %v5660
        %7917 = vmatprep.subr.bf16.mxu0 %v5663
        %7918 = vmatpush1.bf16.msra.mxu0 %v5662
        %7919 = vmatprep.subr.bf16.mxu0 %v5665
        %7920 = vmatpush1.bf16.msra.mxu0 %v5664
        %7921 = vmatprep.subr.bf16.mxu0 %v5667
        %7922 = vmatpush1.bf16.msra.mxu0 %v5666
        %7923 = vmatprep.subr.bf16.mxu0 %v5669
        %7924 = vmatpush1.bf16.msra.mxu0 %v5668
        %7925 = vmatprep.subr.bf16.mxu0 %v5671
        %7926 = vmatpush1.bf16.msra.mxu0 %v5670
        %7927 = vmatprep.subr.bf16.mxu0 %v5673
        %7928 = vmatpush1.bf16.msra.mxu0 %v5672
        %7929 = vmatprep.subr.bf16.mxu0 %v5675
        %7930 = vmatpush1.bf16.msra.mxu0 %v5674
        %7931 = vmatprep.subr.bf16.mxu0 %v5677
        %7932 = vmatpush1.bf16.msra.mxu0 %v5676
        %7933 = vmatprep.mubr.bf16.mxu0 %v796
        %7934 = vmatmul.mubr.bf16.gmra.mrb[0].mxu0 %v795
        %v7935 = vpop.f32.mrb[0].mxu0
        %v7936 = vadd.f32 %v7895, %v7935
        %v7937 = vpop.f32.mrb[0].mxu0
        %v7938 = vadd.f32 %v7897, %v7937
        %v7939 = vpop.f32.mrb[0].mxu0
        %v7940 = vpop.f32.mrb[0].mxu0
        %7941 = vdwg.mxu0
        %7942 = vmatprep.subr.bf16.mxu0 %v5679
        %7943 = vmatpush1.bf16.msra.mxu0 %v5678
        %7944 = vmatprep.subr.bf16.mxu0 %v5681
        %7945 = vmatpush1.bf16.msra.mxu0 %v5680
        %7946 = vmatprep.subr.bf16.mxu0 %v5683
        %7947 = vmatpush1.bf16.msra.mxu0 %v5682
        %7948 = vmatprep.subr.bf16.mxu0 %v5685
        %7949 = vmatpush1.bf16.msra.mxu0 %v5684
        %7950 = vmatprep.subr.bf16.mxu0 %v5687
        %7951 = vmatpush1.bf16.msra.mxu0 %v5686
        %7952 = vmatprep.subr.bf16.mxu0 %v5689
        %7953 = vmatpush1.bf16.msra.mxu0 %v5688
        %7954 = vmatprep.subr.bf16.mxu0 %v5691
        %7955 = vmatpush1.bf16.msra.mxu0 %v5690
        %7956 = vmatprep.subr.bf16.mxu0 %v5693
        %7957 = vmatpush1.bf16.msra.mxu0 %v5692
        %7958 = vmatprep.subr.bf16.mxu0 %v5695
        %7959 = vmatpush1.bf16.msra.mxu0 %v5694
        %7960 = vmatprep.subr.bf16.mxu0 %v5697
        %7961 = vmatpush1.bf16.msra.mxu0 %v5696
        %7962 = vmatprep.subr.bf16.mxu0 %v5699
        %7963 = vmatpush1.bf16.msra.mxu0 %v5698
        %7964 = vmatprep.subr.bf16.mxu0 %v5701
        %7965 = vmatpush1.bf16.msra.mxu0 %v5700
        %7966 = vmatprep.subr.bf16.mxu0 %v5703
        %7967 = vmatpush1.bf16.msra.mxu0 %v5702
        %7968 = vmatprep.subr.bf16.mxu0 %v5705
        %7969 = vmatpush1.bf16.msra.mxu0 %v5704
        %7970 = vmatprep.subr.bf16.mxu0 %v5707
        %7971 = vmatpush1.bf16.msra.mxu0 %v5706
        %7972 = vmatprep.subr.bf16.mxu0 %v5709
        %7973 = vmatpush1.bf16.msra.mxu0 %v5708
        %7974 = vmatprep.mubr.bf16.mxu0 %v798
        %7975 = vmatmul.mubr.bf16.gmra.mrb[0].mxu0 %v797
        %v7976 = vpop.f32.mrb[0].mxu0
        %v7977 = vadd.f32 %v7936, %v7976
        %v7978 = vpop.f32.mrb[0].mxu0
        %v7979 = vadd.f32 %v7938, %v7978
        %v7980 = vpop.f32.mrb[0].mxu0
        %v7981 = vpop.f32.mrb[0].mxu0
        %7982 = vdwg.mxu0
        %7983 = vmatprep.subr.bf16.mxu0 %v5711
        %7984 = vmatpush1.bf16.msra.mxu0 %v5710
        %7985 = vmatprep.subr.bf16.mxu0 %v5713
        %7986 = vmatpush1.bf16.msra.mxu0 %v5712
        %7987 = vmatprep.subr.bf16.mxu0 %v5715
        %7988 = vmatpush1.bf16.msra.mxu0 %v5714
        %7989 = vmatprep.subr.bf16.mxu0 %v5717
        %7990 = vmatpush1.bf16.msra.mxu0 %v5716
        %7991 = vmatprep.subr.bf16.mxu0 %v5719
        %7992 = vmatpush1.bf16.msra.mxu0 %v5718
        %7993 = vmatprep.subr.bf16.mxu0 %v5721
        %7994 = vmatpush1.bf16.msra.mxu0 %v5720
        %7995 = vmatprep.subr.bf16.mxu0 %v5723
        %7996 = vmatpush1.bf16.msra.mxu0 %v5722
        %7997 = vmatprep.subr.bf16.mxu0 %v5725
        %7998 = vmatpush1.bf16.msra.mxu0 %v5724
        %7999 = vmatprep.subr.bf16.mxu0 %v5727
        %8000 = vmatpush1.bf16.msra.mxu0 %v5726
        %8001 = vmatprep.subr.bf16.mxu0 %v5729
        %8002 = vmatpush1.bf16.msra.mxu0 %v5728
        %8003 = vmatprep.subr.bf16.mxu0 %v5731
        %8004 = vmatpush1.bf16.msra.mxu0 %v5730
        %8005 = vmatprep.subr.bf16.mxu0 %v5733
        %8006 = vmatpush1.bf16.msra.mxu0 %v5732
        %8007 = vmatprep.subr.bf16.mxu0 %v5735
        %8008 = vmatpush1.bf16.msra.mxu0 %v5734
        %8009 = vmatprep.subr.bf16.mxu0 %v5737
        %8010 = vmatpush1.bf16.msra.mxu0 %v5736
        %8011 = vmatprep.subr.bf16.mxu0 %v5739
        %8012 = vmatpush1.bf16.msra.mxu0 %v5738
        %8013 = vmatprep.subr.bf16.mxu0 %v5741
        %8014 = vmatpush1.bf16.msra.mxu0 %v5740
        %8015 = vmatprep.mubr.bf16.mxu0 %v800
        %8016 = vmatmul.mubr.bf16.gmra.mrb[0].mxu0 %v799
        %v8017 = vpop.f32.mrb[0].mxu0
        %v8018 = vadd.f32 %v7977, %v8017
        %v8019 = vpop.f32.mrb[0].mxu0
        %v8020 = vadd.f32 %v7979, %v8019
        %v8021 = vpop.f32.mrb[0].mxu0
        %v8022 = vpop.f32.mrb[0].mxu0
        %8023 = vdwg.mxu0
        %8024 = vmatprep.subr.bf16.mxu0 %v5743
        %8025 = vmatpush1.bf16.msra.mxu0 %v5742
        %8026 = vmatprep.subr.bf16.mxu0 %v5745
        %8027 = vmatpush1.bf16.msra.mxu0 %v5744
        %8028 = vmatprep.subr.bf16.mxu0 %v5747
        %8029 = vmatpush1.bf16.msra.mxu0 %v5746
        %8030 = vmatprep.subr.bf16.mxu0 %v5749
        %8031 = vmatpush1.bf16.msra.mxu0 %v5748
        %8032 = vmatprep.subr.bf16.mxu0 %v5751
        %8033 = vmatpush1.bf16.msra.mxu0 %v5750
        %8034 = vmatprep.subr.bf16.mxu0 %v5753
        %8035 = vmatpush1.bf16.msra.mxu0 %v5752
        %8036 = vmatprep.subr.bf16.mxu0 %v5755
        %8037 = vmatpush1.bf16.msra.mxu0 %v5754
        %8038 = vmatprep.subr.bf16.mxu0 %v5757
        %8039 = vmatpush1.bf16.msra.mxu0 %v5756
        %8040 = vmatprep.subr.bf16.mxu0 %v5759
        %8041 = vmatpush1.bf16.msra.mxu0 %v5758
        %8042 = vmatprep.subr.bf16.mxu0 %v5761
        %8043 = vmatpush1.bf16.msra.mxu0 %v5760
        %8044 = vmatprep.subr.bf16.mxu0 %v5763
        %8045 = vmatpush1.bf16.msra.mxu0 %v5762
        %8046 = vmatprep.subr.bf16.mxu0 %v5765
        %8047 = vmatpush1.bf16.msra.mxu0 %v5764
        %8048 = vmatprep.subr.bf16.mxu0 %v5767
        %8049 = vmatpush1.bf16.msra.mxu0 %v5766
        %8050 = vmatprep.subr.bf16.mxu0 %v5769
        %8051 = vmatpush1.bf16.msra.mxu0 %v5768
        %8052 = vmatprep.subr.bf16.mxu0 %v5771
        %8053 = vmatpush1.bf16.msra.mxu0 %v5770
        %8054 = vmatprep.subr.bf16.mxu0 %v5773
        %8055 = vmatpush1.bf16.msra.mxu0 %v5772
        %8056 = vmatprep.mubr.bf16.mxu0 %v802
        %8057 = vmatmul.mubr.bf16.gmra.mrb[0].mxu0 %v801
        %v8058 = vpop.f32.mrb[0].mxu0
        %v8059 = vadd.f32 %v8018, %v8058
        %v8060 = vpop.f32.mrb[0].mxu0
        %v8061 = vadd.f32 %v8020, %v8060
        %v8062 = vpop.f32.mrb[0].mxu0
        %v8063 = vpop.f32.mrb[0].mxu0
        %8064 = vdwg.mxu0
        %8065 = vmatprep.subr.bf16.mxu0 %v5775
        %8066 = vmatpush1.bf16.msra.mxu0 %v5774
        %8067 = vmatprep.subr.bf16.mxu0 %v5777
        %8068 = vmatpush1.bf16.msra.mxu0 %v5776
        %8069 = vmatprep.subr.bf16.mxu0 %v5779
        %8070 = vmatpush1.bf16.msra.mxu0 %v5778
        %8071 = vmatprep.subr.bf16.mxu0 %v5781
        %8072 = vmatpush1.bf16.msra.mxu0 %v5780
        %8073 = vmatprep.subr.bf16.mxu0 %v5783
        %8074 = vmatpush1.bf16.msra.mxu0 %v5782
        %8075 = vmatprep.subr.bf16.mxu0 %v5785
        %8076 = vmatpush1.bf16.msra.mxu0 %v5784
        %8077 = vmatprep.subr.bf16.mxu0 %v5787
        %8078 = vmatpush1.bf16.msra.mxu0 %v5786
        %8079 = vmatprep.subr.bf16.mxu0 %v5789
        %8080 = vmatpush1.bf16.msra.mxu0 %v5788
        %8081 = vmatprep.subr.bf16.mxu0 %v5791
        %8082 = vmatpush1.bf16.msra.mxu0 %v5790
        %8083 = vmatprep.subr.bf16.mxu0 %v5793
        %8084 = vmatpush1.bf16.msra.mxu0 %v5792
        %8085 = vmatprep.subr.bf16.mxu0 %v5795
        %8086 = vmatpush1.bf16.msra.mxu0 %v5794
        %8087 = vmatprep.subr.bf16.mxu0 %v5797
        %8088 = vmatpush1.bf16.msra.mxu0 %v5796
        %8089 = vmatprep.subr.bf16.mxu0 %v5799
        %8090 = vmatpush1.bf16.msra.mxu0 %v5798
        %8091 = vmatprep.subr.bf16.mxu0 %v5801
        %8092 = vmatpush1.bf16.msra.mxu0 %v5800
        %8093 = vmatprep.subr.bf16.mxu0 %v5803
        %8094 = vmatpush1.bf16.msra.mxu0 %v5802
        %8095 = vmatprep.subr.bf16.mxu0 %v5805
        %8096 = vmatpush1.bf16.msra.mxu0 %v5804
        %8097 = vmatprep.mubr.bf16.mxu0 %v804
        %8098 = vmatmul.mubr.bf16.gmra.mrb[0].mxu0 %v803
        %v8099 = vpop.f32.mrb[0].mxu0
        %v8100 = vadd.f32 %v8059, %v8099
        %v8101 = vpop.f32.mrb[0].mxu0
        %v8102 = vadd.f32 %v8061, %v8101
        %v8103 = vpop.f32.mrb[0].mxu0
        %v8104 = vpop.f32.mrb[0].mxu0
        %8105 = vdwg.mxu0
        %8106 = vmatprep.subr.bf16.mxu0 %v5807
        %8107 = vmatpush1.bf16.msra.mxu0 %v5806
        %8108 = vmatprep.subr.bf16.mxu0 %v5809
        %8109 = vmatpush1.bf16.msra.mxu0 %v5808
        %8110 = vmatprep.subr.bf16.mxu0 %v5811
        %8111 = vmatpush1.bf16.msra.mxu0 %v5810
        %8112 = vmatprep.subr.bf16.mxu0 %v5813
        %8113 = vmatpush1.bf16.msra.mxu0 %v5812
        %8114 = vmatprep.subr.bf16.mxu0 %v5815
        %8115 = vmatpush1.bf16.msra.mxu0 %v5814
        %8116 = vmatprep.subr.bf16.mxu0 %v5817
        %8117 = vmatpush1.bf16.msra.mxu0 %v5816
        %8118 = vmatprep.subr.bf16.mxu0 %v5819
        %8119 = vmatpush1.bf16.msra.mxu0 %v5818
        %8120 = vmatprep.subr.bf16.mxu0 %v5821
        %8121 = vmatpush1.bf16.msra.mxu0 %v5820
        %8122 = vmatprep.subr.bf16.mxu0 %v5823
        %8123 = vmatpush1.bf16.msra.mxu0 %v5822
        %8124 = vmatprep.subr.bf16.mxu0 %v5825
        %8125 = vmatpush1.bf16.msra.mxu0 %v5824
        %8126 = vmatprep.subr.bf16.mxu0 %v5827
        %8127 = vmatpush1.bf16.msra.mxu0 %v5826
        %8128 = vmatprep.subr.bf16.mxu0 %v5829
        %8129 = vmatpush1.bf16.msra.mxu0 %v5828
        %8130 = vmatprep.subr.bf16.mxu0 %v5831
        %8131 = vmatpush1.bf16.msra.mxu0 %v5830
        %8132 = vmatprep.subr.bf16.mxu0 %v5833
        %8133 = vmatpush1.bf16.msra.mxu0 %v5832
        %8134 = vmatprep.subr.bf16.mxu0 %v5835
        %8135 = vmatpush1.bf16.msra.mxu0 %v5834
        %8136 = vmatprep.subr.bf16.mxu0 %v5837
        %8137 = vmatpush1.bf16.msra.mxu0 %v5836
        %8138 = vmatprep.mubr.bf16.mxu0 %v806
        %8139 = vmatmul.mubr.bf16.gmra.mrb[0].mxu0 %v805
        %v8140 = vpop.f32.mrb[0].mxu0
        %v8141 = vadd.f32 %v8100, %v8140
        %v8142 = vpop.f32.mrb[0].mxu0
        %v8143 = vadd.f32 %v8102, %v8142
        %v8144 = vpop.f32.mrb[0].mxu0
        %v8145 = vpop.f32.mrb[0].mxu0
        %8146 = vdwg.mxu0
        %8147 = vmatprep.subr.bf16.mxu0 %v5839
        %8148 = vmatpush1.bf16.msra.mxu0 %v5838
        %8149 = vmatprep.subr.bf16.mxu0 %v5841
        %8150 = vmatpush1.bf16.msra.mxu0 %v5840
        %8151 = vmatprep.subr.bf16.mxu0 %v5843
        %8152 = vmatpush1.bf16.msra.mxu0 %v5842
        %8153 = vmatprep.subr.bf16.mxu0 %v5845
        %8154 = vmatpush1.bf16.msra.mxu0 %v5844
        %8155 = vmatprep.subr.bf16.mxu0 %v5847
        %8156 = vmatpush1.bf16.msra.mxu0 %v5846
        %8157 = vmatprep.subr.bf16.mxu0 %v5849
        %8158 = vmatpush1.bf16.msra.mxu0 %v5848
        %8159 = vmatprep.subr.bf16.mxu0 %v5851
        %8160 = vmatpush1.bf16.msra.mxu0 %v5850
        %8161 = vmatprep.subr.bf16.mxu0 %v5853
        %8162 = vmatpush1.bf16.msra.mxu0 %v5852
        %8163 = vmatprep.subr.bf16.mxu0 %v5855
        %8164 = vmatpush1.bf16.msra.mxu0 %v5854
        %8165 = vmatprep.subr.bf16.mxu0 %v5857
        %8166 = vmatpush1.bf16.msra.mxu0 %v5856
        %8167 = vmatprep.subr.bf16.mxu0 %v5859
        %8168 = vmatpush1.bf16.msra.mxu0 %v5858
        %8169 = vmatprep.subr.bf16.mxu0 %v5861
        %8170 = vmatpush1.bf16.msra.mxu0 %v5860
        %8171 = vmatprep.subr.bf16.mxu0 %v5863
        %8172 = vmatpush1.bf16.msra.mxu0 %v5862
        %8173 = vmatprep.subr.bf16.mxu0 %v5865
        %8174 = vmatpush1.bf16.msra.mxu0 %v5864
        %8175 = vmatprep.subr.bf16.mxu0 %v5867
        %8176 = vmatpush1.bf16.msra.mxu0 %v5866
        %8177 = vmatprep.subr.bf16.mxu0 %v5869
        %8178 = vmatpush1.bf16.msra.mxu0 %v5868
        %8179 = vmatprep.mubr.bf16.mxu0 %v808
        %8180 = vmatmul.mubr.bf16.gmra.mrb[0].mxu0 %v807
        %v8181 = vpop.f32.mrb[0].mxu0
        %v8182 = vadd.f32 %v8141, %v8181
        %v8183 = vpop.f32.mrb[0].mxu0
        %v8184 = vadd.f32 %v8143, %v8183
        %v8185 = vpop.f32.mrb[0].mxu0
        %v8186 = vpop.f32.mrb[0].mxu0
        %8187 = vdwg.mxu0
        %8188 = vmatprep.subr.bf16.mxu0 %v5871
        %8189 = vmatpush1.bf16.msra.mxu0 %v5870
        %8190 = vmatprep.subr.bf16.mxu0 %v5873
        %8191 = vmatpush1.bf16.msra.mxu0 %v5872
        %8192 = vmatprep.subr.bf16.mxu0 %v5875
        %8193 = vmatpush1.bf16.msra.mxu0 %v5874
        %8194 = vmatprep.subr.bf16.mxu0 %v5877
        %8195 = vmatpush1.bf16.msra.mxu0 %v5876
        %8196 = vmatprep.subr.bf16.mxu0 %v5879
        %8197 = vmatpush1.bf16.msra.mxu0 %v5878
        %8198 = vmatprep.subr.bf16.mxu0 %v5881
        %8199 = vmatpush1.bf16.msra.mxu0 %v5880
        %8200 = vmatprep.subr.bf16.mxu0 %v5883
        %8201 = vmatpush1.bf16.msra.mxu0 %v5882
        %8202 = vmatprep.subr.bf16.mxu0 %v5885
        %8203 = vmatpush1.bf16.msra.mxu0 %v5884
        %8204 = vmatprep.subr.bf16.mxu0 %v5887
        %8205 = vmatpush1.bf16.msra.mxu0 %v5886
        %8206 = vmatprep.subr.bf16.mxu0 %v5889
        %8207 = vmatpush1.bf16.msra.mxu0 %v5888
        %8208 = vmatprep.subr.bf16.mxu0 %v5891
        %8209 = vmatpush1.bf16.msra.mxu0 %v5890
        %8210 = vmatprep.subr.bf16.mxu0 %v5893
        %8211 = vmatpush1.bf16.msra.mxu0 %v5892
        %8212 = vmatprep.subr.bf16.mxu0 %v5895
        %8213 = vmatpush1.bf16.msra.mxu0 %v5894
        %8214 = vmatprep.subr.bf16.mxu0 %v5897
        %8215 = vmatpush1.bf16.msra.mxu0 %v5896
        %8216 = vmatprep.subr.bf16.mxu0 %v5899
        %8217 = vmatpush1.bf16.msra.mxu0 %v5898
        %8218 = vmatprep.subr.bf16.mxu0 %v5901
        %8219 = vmatpush1.bf16.msra.mxu0 %v5900
        %8220 = vmatprep.mubr.bf16.mxu0 %v810
        %8221 = vmatmul.mubr.bf16.gmra.mrb[0].mxu0 %v809
        %v8222 = vpop.f32.mrb[0].mxu0
        %v8223 = vadd.f32 %v8182, %v8222
        %v8224 = vpop.f32.mrb[0].mxu0
        %v8225 = vadd.f32 %v8184, %v8224
        %v8226 = vpop.f32.mrb[0].mxu0
        %v8227 = vpop.f32.mrb[0].mxu0
        %8228 = vdwg.mxu0
        %8229 = vmatprep.subr.bf16.mxu0 %v5903
        %8230 = vmatpush1.bf16.msra.mxu0 %v5902
        %8231 = vmatprep.subr.bf16.mxu0 %v5905
        %8232 = vmatpush1.bf16.msra.mxu0 %v5904
        %8233 = vmatprep.subr.bf16.mxu0 %v5907
        %8234 = vmatpush1.bf16.msra.mxu0 %v5906
        %8235 = vmatprep.subr.bf16.mxu0 %v5909
        %8236 = vmatpush1.bf16.msra.mxu0 %v5908
        %8237 = vmatprep.subr.bf16.mxu0 %v5911
        %8238 = vmatpush1.bf16.msra.mxu0 %v5910
        %8239 = vmatprep.subr.bf16.mxu0 %v5913
        %8240 = vmatpush1.bf16.msra.mxu0 %v5912
        %8241 = vmatprep.subr.bf16.mxu0 %v5915
        %8242 = vmatpush1.bf16.msra.mxu0 %v5914
        %8243 = vmatprep.subr.bf16.mxu0 %v5917
        %8244 = vmatpush1.bf16.msra.mxu0 %v5916
        %8245 = vmatprep.subr.bf16.mxu0 %v5919
        %8246 = vmatpush1.bf16.msra.mxu0 %v5918
        %8247 = vmatprep.subr.bf16.mxu0 %v5921
        %8248 = vmatpush1.bf16.msra.mxu0 %v5920
        %8249 = vmatprep.subr.bf16.mxu0 %v5923
        %8250 = vmatpush1.bf16.msra.mxu0 %v5922
        %8251 = vmatprep.subr.bf16.mxu0 %v5925
        %8252 = vmatpush1.bf16.msra.mxu0 %v5924
        %8253 = vmatprep.subr.bf16.mxu0 %v5927
        %8254 = vmatpush1.bf16.msra.mxu0 %v5926
        %8255 = vmatprep.subr.bf16.mxu0 %v5929
        %8256 = vmatpush1.bf16.msra.mxu0 %v5928
        %8257 = vmatprep.subr.bf16.mxu0 %v5931
        %8258 = vmatpush1.bf16.msra.mxu0 %v5930
        %8259 = vmatprep.subr.bf16.mxu0 %v5933
        %8260 = vmatpush1.bf16.msra.mxu0 %v5932
        %8261 = vmatprep.mubr.bf16.mxu0 %v812
        %8262 = vmatmul.mubr.bf16.gmra.mrb[0].mxu0 %v811
        %v8263 = vpop.f32.mrb[0].mxu0
        %v8264 = vadd.f32 %v8223, %v8263
        %v8265 = vpop.f32.mrb[0].mxu0
        %v8266 = vadd.f32 %v8225, %v8265
        %v8267 = vpop.f32.mrb[0].mxu0
        %v8268 = vpop.f32.mrb[0].mxu0
        %8269 = vdwg.mxu0
        %v8272 = vcombine.low %v8264, %v8266
        %v8274 = vunpack.c.l.s4 1983009808
        %v8275 = vunpack.c.0.s8 %v8274
        %v8276 = vlaneseq
        %v8277 = vshrl.u32 %v8276, 7
        %v8278 = vsub.s32 %v8275, %v8277
        %v8279 = vrot.slane %v8272, %v8278
        %v8281 = vadd.f32 %v813, %v8279
        %8282 = vst [vmem:[#allocation2] sm:$0xf] %v8281
        %p8283 = scmp.eq.s32.totalorder %s25, 7
        // Predicated region
        $region77: #{forward.3} parent=47 // pred_check
          %p8284 = pneg %p8283
        $region78: #{forward.3} parent=47 // pred_check_branch
          %8286 = sbr.rel (%p8284) target = $region80
        $region79: #{forward.3} parent=47 // pred_region
          %v8287 = vld [vmem:[#allocation2] sm:$0xf]
          %v8288 = vld [vmem:[#allocation6] sm:$0x3]
          %v8290 = vlaneseq
          %v8291 = vshrl.u32 %v8290, 7
          %v8292 = vsub.s32 0, %v8291
          %v8293 = vrot.slane %v8288, %v8292
          %v8294 = vlaneseq
          %v8295 = vshrl.u32 %v8294, 7
          %v8296 = vsub.s32 1, %v8295
          %v8297 = vrot.slane %v8288, %v8296
          %v8298 = vcombine.low %v8293, %v8297
          %v8300 = vunpack.c.l.s4 1983009808
          %v8301 = vunpack.c.0.s8 %v8300
          %v8302 = vlaneseq
          %v8303 = vshrl.u32 %v8302, 7
          %v8304 = vsub.s32 %v8301, %v8303
          %v8305 = vrot.slane %v8298, %v8304
          %v8307 = vadd.f32 %v8287, %v8305
          %v8308 = vld [vmem:[#allocation8] sm:$0xff]
          %v8309 = vld [vmem:[#allocation8 + $0x8] sm:$0xff]
          %v8310 = vld [vmem:[#allocation8 + $0x10] sm:$0xff]
          %v8311 = vld [vmem:[#allocation8 + $0x18] sm:$0xff]
          %v8312 = vld [vmem:[#allocation8 + $0x20] sm:$0xff]
          %v8313 = vld [vmem:[#allocation8 + $0x28] sm:$0xff]
          %v8314 = vld [vmem:[#allocation8 + $0x30] sm:$0xff]
          %v8315 = vld [vmem:[#allocation8 + $0x38] sm:$0xff]
          %v8316 = vld [vmem:[#allocation8 + $0x40] sm:$0xff]
          %v8317 = vld [vmem:[#allocation8 + $0x48] sm:$0xff]
          %v8318 = vld [vmem:[#allocation8 + $0x50] sm:$0xff]
          %v8319 = vld [vmem:[#allocation8 + $0x58] sm:$0xff]
          %v8320 = vld [vmem:[#allocation8 + $0x60] sm:$0xff]
          %v8321 = vld [vmem:[#allocation8 + $0x68] sm:$0xff]
          %v8322 = vld [vmem:[#allocation8 + $0x70] sm:$0xff]
          %v8323 = vld [vmem:[#allocation8 + $0x78] sm:$0xff]
          %v8324 = vld [vmem:[#allocation8 + $0x80] sm:$0xff]
          %v8325 = vld [vmem:[#allocation8 + $0x88] sm:$0xff]
          %v8326 = vld [vmem:[#allocation8 + $0x90] sm:$0xff]
          %v8327 = vld [vmem:[#allocation8 + $0x98] sm:$0xff]
          %v8328 = vld [vmem:[#allocation8 + $0xa0] sm:$0xff]
          %v8329 = vld [vmem:[#allocation8 + $0xa8] sm:$0xff]
          %v8330 = vld [vmem:[#allocation8 + $0xb0] sm:$0xff]
          %v8331 = vld [vmem:[#allocation8 + $0xb8] sm:$0xff]
          %v8332 = vld [vmem:[#allocation8 + $0xc0] sm:$0xff]
          %v8333 = vld [vmem:[#allocation8 + $0xc8] sm:$0xff]
          %v8334 = vld [vmem:[#allocation8 + $0xd0] sm:$0xff]
          %v8335 = vld [vmem:[#allocation8 + $0xd8] sm:$0xff]
          %v8336 = vld [vmem:[#allocation8 + $0xe0] sm:$0xff]
          %v8337 = vld [vmem:[#allocation8 + $0xe8] sm:$0xff]
          %v8338 = vld [vmem:[#allocation8 + $0xf0] sm:$0xff]
          %v8339 = vld [vmem:[#allocation8 + $0xf8] sm:$0xff]
          %v8340 = vld [vmem:[#allocation8 + $0x100] sm:$0xff]
          %v8341 = vld [vmem:[#allocation8 + $0x108] sm:$0xff]
          %v8342 = vld [vmem:[#allocation8 + $0x110] sm:$0xff]
          %v8343 = vld [vmem:[#allocation8 + $0x118] sm:$0xff]
          %v8344 = vld [vmem:[#allocation8 + $0x120] sm:$0xff]
          %v8345 = vld [vmem:[#allocation8 + $0x128] sm:$0xff]
          %v8346 = vld [vmem:[#allocation8 + $0x130] sm:$0xff]
          %v8347 = vld [vmem:[#allocation8 + $0x138] sm:$0xff]
          %v8348 = vld [vmem:[#allocation8 + $0x140] sm:$0xff]
          %v8349 = vld [vmem:[#allocation8 + $0x148] sm:$0xff]
          %v8350 = vld [vmem:[#allocation8 + $0x150] sm:$0xff]
          %v8351 = vld [vmem:[#allocation8 + $0x158] sm:$0xff]
          %v8352 = vld [vmem:[#allocation8 + $0x160] sm:$0xff]
          %v8353 = vld [vmem:[#allocation8 + $0x168] sm:$0xff]
          %v8354 = vld [vmem:[#allocation8 + $0x170] sm:$0xff]
          %v8355 = vld [vmem:[#allocation8 + $0x178] sm:$0xff]
          %v8356 = vld [vmem:[#allocation8 + $0x180] sm:$0xff]
          %v8357 = vld [vmem:[#allocation8 + $0x188] sm:$0xff]
          %v8358 = vld [vmem:[#allocation8 + $0x190] sm:$0xff]
          %v8359 = vld [vmem:[#allocation8 + $0x198] sm:$0xff]
          %v8360 = vld [vmem:[#allocation8 + $0x1a0] sm:$0xff]
          %v8361 = vld [vmem:[#allocation8 + $0x1a8] sm:$0xff]
          %v8362 = vld [vmem:[#allocation8 + $0x1b0] sm:$0xff]
          %v8363 = vld [vmem:[#allocation8 + $0x1b8] sm:$0xff]
          %v8364 = vld [vmem:[#allocation8 + $0x1c0] sm:$0xff]
          %v8365 = vld [vmem:[#allocation8 + $0x1c8] sm:$0xff]
          %v8366 = vld [vmem:[#allocation8 + $0x1d0] sm:$0xff]
          %v8367 = vld [vmem:[#allocation8 + $0x1d8] sm:$0xff]
          %v8368 = vld [vmem:[#allocation8 + $0x1e0] sm:$0xff]
          %v8369 = vld [vmem:[#allocation8 + $0x1e8] sm:$0xff]
          %v8370 = vld [vmem:[#allocation8 + $0x1f0] sm:$0xff]
          %v8371 = vld [vmem:[#allocation8 + $0x1f8] sm:$0xff]
          %v8372 = vld [vmem:[#allocation9] sm:$0x3]
          %v8374 = vlaneseq
          %v8375 = vshrl.u32 %v8374, 7
          %v8376 = vsub.s32 0, %v8375
          %v8377 = vrot.slane %v8372, %v8376
          %v8378 = vlaneseq
          %v8379 = vshrl.u32 %v8378, 7
          %v8380 = vsub.s32 1, %v8379
          %v8381 = vrot.slane %v8372, %v8380
          %v8386 = vunpack.c.l.s4 1983009808
          %v8387 = vunpack.c.0.s8 %v8386
          %v8388 = vlaneseq
          %v8389 = vshrl.u32 %v8388, 7
          %v8390 = vsub.s32 %v8387, %v8389
          %v8391 = vrot.slane %v8307, %v8390
          %v8392 = vcombine.high %v8391, %v8391
          %8395 = vmatprep.subr.mxu0 %v8309
          %8396 = vmatpush1.msra.mxu0 %v8308
          %8397 = vmatprep.subr.mxu0 %v8311
          %8398 = vmatpush1.msra.mxu0 %v8310
          %8399 = vmatprep.subr.mxu0 %v8313
          %8400 = vmatpush1.msra.mxu0 %v8312
          %8401 = vmatprep.subr.mxu0 %v8315
          %8402 = vmatpush1.msra.mxu0 %v8314
          %8403 = vmatprep.subr.mxu0 %v8317
          %8404 = vmatpush1.msra.mxu0 %v8316
          %8405 = vmatprep.subr.mxu0 %v8319
          %8406 = vmatpush1.msra.mxu0 %v8318
          %8407 = vmatprep.subr.mxu0 %v8321
          %8408 = vmatpush1.msra.mxu0 %v8320
          %8409 = vmatprep.subr.mxu0 %v8323
          %8410 = vmatpush1.msra.mxu0 %v8322
          %8411 = vmatprep.subr.mxu0 %v8325
          %8412 = vmatpush1.msra.mxu0 %v8324
          %8413 = vmatprep.subr.mxu0 %v8327
          %8414 = vmatpush1.msra.mxu0 %v8326
          %8415 = vmatprep.subr.mxu0 %v8329
          %8416 = vmatpush1.msra.mxu0 %v8328
          %8417 = vmatprep.subr.mxu0 %v8331
          %8418 = vmatpush1.msra.mxu0 %v8330
          %8419 = vmatprep.subr.mxu0 %v8333
          %8420 = vmatpush1.msra.mxu0 %v8332
          %8421 = vmatprep.subr.mxu0 %v8335
          %8422 = vmatpush1.msra.mxu0 %v8334
          %8423 = vmatprep.subr.mxu0 %v8337
          %8424 = vmatpush1.msra.mxu0 %v8336
          %8425 = vmatprep.subr.mxu0 %v8339
          %8426 = vmatpush1.msra.mxu0 %v8338
          %8427 = vmatprep.subr.mxu0 %v8341
          %8428 = vmatpush1.msra.mxu0 %v8340
          %8429 = vmatprep.subr.mxu0 %v8343
          %8430 = vmatpush1.msra.mxu0 %v8342
          %8431 = vmatprep.subr.mxu0 %v8345
          %8432 = vmatpush1.msra.mxu0 %v8344
          %8433 = vmatprep.subr.mxu0 %v8347
          %8434 = vmatpush1.msra.mxu0 %v8346
          %8435 = vmatprep.subr.mxu0 %v8349
          %8436 = vmatpush1.msra.mxu0 %v8348
          %8437 = vmatprep.subr.mxu0 %v8351
          %8438 = vmatpush1.msra.mxu0 %v8350
          %8439 = vmatprep.subr.mxu0 %v8353
          %8440 = vmatpush1.msra.mxu0 %v8352
          %8441 = vmatprep.subr.mxu0 %v8355
          %8442 = vmatpush1.msra.mxu0 %v8354
          %8443 = vmatprep.subr.mxu0 %v8357
          %8444 = vmatpush1.msra.mxu0 %v8356
          %8445 = vmatprep.subr.mxu0 %v8359
          %8446 = vmatpush1.msra.mxu0 %v8358
          %8447 = vmatprep.subr.mxu0 %v8361
          %8448 = vmatpush1.msra.mxu0 %v8360
          %8449 = vmatprep.subr.mxu0 %v8363
          %8450 = vmatpush1.msra.mxu0 %v8362
          %8451 = vmatprep.subr.mxu0 %v8365
          %8452 = vmatpush1.msra.mxu0 %v8364
          %8453 = vmatprep.subr.mxu0 %v8367
          %8454 = vmatpush1.msra.mxu0 %v8366
          %8455 = vmatprep.subr.mxu0 %v8369
          %8456 = vmatpush1.msra.mxu0 %v8368
          %8457 = vmatprep.subr.mxu0 %v8371
          %8458 = vmatpush1.msra.mxu0 %v8370
          %8459 = vmatprep.mubr.f32.mxu0 %v8392
          %8460 = vmatmul.mubr.f32.gmra.mrb[0].mxu0 %v8391
          %v8461 = vpop.f32.mrb[0].mxu0
          %v8462 = vadd.f32 %v8377, %v8461
          %v8463 = vpop.f32.mrb[0].mxu0
          %v8464 = vadd.f32 %v8381, %v8463
          %8465 = vdwg.mxu0
          %v8466 = vld [vmem:[#allocation11] sm:$0xff]
          %v8467 = vld [vmem:[#allocation11 + $0x8] sm:$0xff]
          %v8468 = vld [vmem:[#allocation11 + $0x10] sm:$0xff]
          %v8469 = vld [vmem:[#allocation11 + $0x18] sm:$0xff]
          %v8470 = vld [vmem:[#allocation11 + $0x20] sm:$0xff]
          %v8471 = vld [vmem:[#allocation11 + $0x28] sm:$0xff]
          %v8472 = vld [vmem:[#allocation11 + $0x30] sm:$0xff]
          %v8473 = vld [vmem:[#allocation11 + $0x38] sm:$0xff]
          %v8474 = vld [vmem:[#allocation11 + $0x40] sm:$0xff]
          %v8475 = vld [vmem:[#allocation11 + $0x48] sm:$0xff]
          %v8476 = vld [vmem:[#allocation11 + $0x50] sm:$0xff]
          %v8477 = vld [vmem:[#allocation11 + $0x58] sm:$0xff]
          %v8478 = vld [vmem:[#allocation11 + $0x60] sm:$0xff]
          %v8479 = vld [vmem:[#allocation11 + $0x68] sm:$0xff]
          %v8480 = vld [vmem:[#allocation11 + $0x70] sm:$0xff]
          %v8481 = vld [vmem:[#allocation11 + $0x78] sm:$0xff]
          %v8482 = vld [vmem:[#allocation11 + $0x80] sm:$0xff]
          %v8483 = vld [vmem:[#allocation11 + $0x88] sm:$0xff]
          %v8484 = vld [vmem:[#allocation11 + $0x90] sm:$0xff]
          %v8485 = vld [vmem:[#allocation11 + $0x98] sm:$0xff]
          %v8486 = vld [vmem:[#allocation11 + $0xa0] sm:$0xff]
          %v8487 = vld [vmem:[#allocation11 + $0xa8] sm:$0xff]
          %v8488 = vld [vmem:[#allocation11 + $0xb0] sm:$0xff]
          %v8489 = vld [vmem:[#allocation11 + $0xb8] sm:$0xff]
          %v8490 = vld [vmem:[#allocation11 + $0xc0] sm:$0xff]
          %v8491 = vld [vmem:[#allocation11 + $0xc8] sm:$0xff]
          %v8492 = vld [vmem:[#allocation11 + $0xd0] sm:$0xff]
          %v8493 = vld [vmem:[#allocation11 + $0xd8] sm:$0xff]
          %v8494 = vld [vmem:[#allocation11 + $0xe0] sm:$0xff]
          %v8495 = vld [vmem:[#allocation11 + $0xe8] sm:$0xff]
          %v8496 = vld [vmem:[#allocation11 + $0xf0] sm:$0xff]
          %v8497 = vld [vmem:[#allocation11 + $0xf8] sm:$0xff]
          %v8498 = vld [vmem:[#allocation12] sm:$0x1]
          %v8500 = vlaneseq
          %v8501 = vshrl.u32 %v8500, 7
          %v8502 = vsub.s32 0, %v8501
          %v8503 = vrot.slane %v8498, %v8502
          %8505 = vmatprep.subr.mxu0 0.0
          %8506 = vmatpush1.msra.mxu0 %v8466
          %8507 = vmatprep.subr.mxu0 0.0
          %8508 = vmatpush1.msra.mxu0 %v8467
          %8509 = vmatprep.subr.mxu0 0.0
          %8510 = vmatpush1.msra.mxu0 %v8468
          %8511 = vmatprep.subr.mxu0 0.0
          %8512 = vmatpush1.msra.mxu0 %v8469
          %8513 = vmatprep.subr.mxu0 0.0
          %8514 = vmatpush1.msra.mxu0 %v8470
          %8515 = vmatprep.subr.mxu0 0.0
          %8516 = vmatpush1.msra.mxu0 %v8471
          %8517 = vmatprep.subr.mxu0 0.0
          %8518 = vmatpush1.msra.mxu0 %v8472
          %8519 = vmatprep.subr.mxu0 0.0
          %8520 = vmatpush1.msra.mxu0 %v8473
          %8521 = vmatprep.subr.mxu0 0.0
          %8522 = vmatpush1.msra.mxu0 %v8474
          %8523 = vmatprep.subr.mxu0 0.0
          %8524 = vmatpush1.msra.mxu0 %v8475
          %8525 = vmatprep.subr.mxu0 0.0
          %8526 = vmatpush1.msra.mxu0 %v8476
          %8527 = vmatprep.subr.mxu0 0.0
          %8528 = vmatpush1.msra.mxu0 %v8477
          %8529 = vmatprep.subr.mxu0 0.0
          %8530 = vmatpush1.msra.mxu0 %v8478
          %8531 = vmatprep.subr.mxu0 0.0
          %8532 = vmatpush1.msra.mxu0 %v8479
          %8533 = vmatprep.subr.mxu0 0.0
          %8534 = vmatpush1.msra.mxu0 %v8480
          %8535 = vmatprep.subr.mxu0 0.0
          %8536 = vmatpush1.msra.mxu0 %v8481
          %8537 = vmatprep.subr.mxu0 0.0
          %8538 = vmatpush1.msra.mxu0 %v8482
          %8539 = vmatprep.subr.mxu0 0.0
          %8540 = vmatpush1.msra.mxu0 %v8483
          %8541 = vmatprep.subr.mxu0 0.0
          %8542 = vmatpush1.msra.mxu0 %v8484
          %8543 = vmatprep.subr.mxu0 0.0
          %8544 = vmatpush1.msra.mxu0 %v8485
          %8545 = vmatprep.subr.mxu0 0.0
          %8546 = vmatpush1.msra.mxu0 %v8486
          %8547 = vmatprep.subr.mxu0 0.0
          %8548 = vmatpush1.msra.mxu0 %v8487
          %8549 = vmatprep.subr.mxu0 0.0
          %8550 = vmatpush1.msra.mxu0 %v8488
          %8551 = vmatprep.subr.mxu0 0.0
          %8552 = vmatpush1.msra.mxu0 %v8489
          %8553 = vmatprep.subr.mxu0 0.0
          %8554 = vmatpush1.msra.mxu0 %v8490
          %8555 = vmatprep.subr.mxu0 0.0
          %8556 = vmatpush1.msra.mxu0 %v8491
          %8557 = vmatprep.subr.mxu0 0.0
          %8558 = vmatpush1.msra.mxu0 %v8492
          %8559 = vmatprep.subr.mxu0 0.0
          %8560 = vmatpush1.msra.mxu0 %v8493
          %8561 = vmatprep.subr.mxu0 0.0
          %8562 = vmatpush1.msra.mxu0 %v8494
          %8563 = vmatprep.subr.mxu0 0.0
          %8564 = vmatpush1.msra.mxu0 %v8495
          %8565 = vmatprep.subr.mxu0 0.0
          %8566 = vmatpush1.msra.mxu0 %v8496
          %8567 = vmatprep.subr.mxu0 0.0
          %8568 = vmatpush1.msra.mxu0 %v8497
          %8569 = vmatprep.mubr.f32.mxu0 %v8464
          %8570 = vmatmul.mubr.f32.gmra.mrb[0].mxu0 %v8462
          %v8571 = vpop.f32.mrb[0].mxu0
          %v8572 = vadd.f32 %v8503, %v8571
          %v8573 = vpop.f32.mrb[0].mxu0
          %8574 = vdwg.mxu0
          %vm8575 = vcmask 74752
          %8576 = vst.msk [vmem:[#allocation14] sm:$0x3] %vm8575, %v8572
        $region80: #{forward.3} parent=47 // pred_fallthru
          _
        // Predicated region
        $region81: #{forward.3} parent=47 // pred_check
          %p8577 = pneg %p195
        $region82: #{forward.3} parent=47 // pred_check_branch
          %8579 = sbr.rel (%p8577) target = $region84
        $region83: #{forward.3} parent=47 // pred_region
          %s8581 = ssub.s32 32, 32
          %8582 = vsyncadd [#allocation5], %s8581
          %s8584 = sshll.u32 [#allocation14], 4
          %s8585 = int_to_ptr.vmem [resolvable:$true] %s8584
          %8587 = dma.vmem_to_hbm [thread:$0]  %s8585, 32, %s7, [#allocation5]
        $region84: #{forward.3} parent=47 // pred_fallthru
          _
        // Predicated region
        $region85: #{forward.3} parent=47 // pred_check
          %p8588 = pneg %p195
        $region86: #{forward.3} parent=47 // pred_check_branch
          %8590 = sbr.rel (%p8588) target = $region88
        $region87: #{forward.3} parent=47 // pred_region
          %8591 = dma.done [#allocation5], 32
        $region88: #{forward.3} parent=47 // pred_fallthru
          _
      $region48: #{forward.3} parent=5 // pred_fallthru
        _
      %p8592 = scmp.le.s32.totalorder 2, %s20
      // Predicated region
      $region89: #{forward.3} parent=5 // pred_check
        %p8593 = pneg %p8592
      $region90: #{forward.3} parent=5 // pred_check_branch
        %8595 = sbr.rel (%p8593) target = $region92
      $region91: #{forward.3} parent=5 // pred_region
        %s8596 = ssub.s32 %s20, 2
      $region92: #{forward.3} parent=5 // pred_fallthru
        _
    $region6: #{forward.3} parent=1 // loop_footer
      %s24 = sadd.s32 1, %s20
    $region7: #{forward.3} parent=1 // loop_footer_branch
      %19 = sbr.rel target = $region3
    $region8: #{forward.3} parent=1 // loop_exit
      _
    %8597 = vsyncpa [#allocation4], 1
    %s8598 = scalar_lea.sflag [#allocation4], 1
    %8599 = vsyncpa %s8598, 1
    %8600 = vsyncpa [#allocation7], 1
    %8601 = vsyncpa [#allocation10], 1
    %8602 = vsyncpa [#allocation13], 1
    %8603 = vsyncpa [#allocation5], 1
    %s8604 = scalar_lea.sflag [#allocation5], 1
    %8605 = vsyncpa %s8604, 1

</llo_original>
